<compile_context>
chip_gen: v7x
topology: tpu7x:2x2x1
jax: 0.10.0
libtpu: 0.0.40
codegen_flags: <defaults>
</compile_context>

<pallas_src>
import numpy as np
import jax
import jax.numpy as jnp
from jax import lax
from jax.experimental import pallas as pl
from jax.experimental.pallas import tpu as pltpu


# ----------------------------------------------------------------------------
# Fused kernel: conv1(5x5) -> conv2 -> conv3 -> conv4, reflection padding,
# bias/BN folded, ReLU after every layer.  One grid step = BT batch elements.
# ----------------------------------------------------------------------------
def _features4_kernel(x_ref, w1_ref, s1_ref, w2_ref, s2_ref, w3_ref, s3_ref,
                      w4_ref, s4_ref, o_ref, p1_ref, l1_ref, p_ref, lk_ref):
    # x_ref : (BT, H, W)  f32     BT batch elements, single input channel
    # w1_ref: (5*W, W*C)  bf16    conv1 banded weights, vertical taps K-stacked
    # wN_ref: (3*WC, WC)  bf16    conv2/3/4 banded weights (BN scale folded)
    # sN_ref: (1, WC)     f32     per-channel shift, tiled over W
    # o_ref : (BT, H, WC) f32     lane-dense output slab
    # p1_ref: (BT*(H+4), W)   f32  VMEM  row-reflection-padded conv1 input
    # l1_ref: (M1, 5*W)       bf16 VMEM  K-stacked conv1 LHS
    # p_ref : (BT*(H+2), WC)  f32  VMEM  row-reflection-padded activation (x3)
    # lk_ref: (M3, 3*WC)      bf16 VMEM  K-stacked 3x3 LHS (x3)
    BT, H, W = x_ref.shape
    WC = o_ref.shape[-1]
    S1, S3 = H + 4, H + 2            # padded rows per batch block
    M1 = l1_ref.shape[0]             # == (BT-1)*S1 + H
    M3 = lk_ref.shape[0]             # == (BT-1)*S3 + H
    wdt = w1_ref.dtype               # bfloat16

    # ---- layer 1: ReflectionPad2d(2) rows + 5x5 conv (Cin=1) + bias + ReLU --
    for b in range(BT):
        x = x_ref[b]                                     # (H, W)
        r = b * S1
        p1_ref[r + 2:r + H + 2, :] = x                   # interior rows
        p1_ref[r + 0:r + 1, :] = x[2:3, :]               # top reflection: 2, 1
        p1_ref[r + 1:r + 2, :] = x[1:2, :]
        p1_ref[r + H + 2:r + H + 3, :] = x[H - 2:H - 1, :]   # bottom: H-2, H-3
        p1_ref[r + H + 3:r + H + 4, :] = x[H - 3:H - 2, :]
    # K-stack the 5 vertical taps -> the whole layer is ONE MXU matmul
    # (bf16 operands, f32 accumulation).  Valid output rows of batch block b
    # sit at [b*S1, b*S1+H); the interleaved garbage rows are never stored.
    for dh in range(5):
        l1_ref[:, dh * W:(dh + 1) * W] = p1_ref[dh:dh + M1, :].astype(wdt)
    acc = jnp.dot(l1_ref[...], w1_ref[...], preferred_element_type=jnp.float32)
    h = jnp.maximum(acc + s1_ref[...], 0.0)              # (M1, WC) f32

    # ---- layers 2..4: ReflectionPad2d(1) rows + 3x3 conv (+folded BN) + ReLU
    def reflect_pad_rows(h_act, stride_in):
        # Write the valid rows of h_act (block stride `stride_in`) into p_ref
        # with a 1-row reflection pad per batch block (block stride S3).
        for b in range(BT):
            hb = h_act[b * stride_in:b * stride_in + H, :]
            r = b * S3
            p_ref[r + 1:r + H + 1, :] = hb               # interior rows
            p_ref[r:r + 1, :] = hb[1:2, :]               # top reflection: row 1
            p_ref[r + H + 1:r + H + 2, :] = hb[H - 2:H - 1, :]  # bottom: H-2

    def conv3x3(w_ref, s_ref):
        # K-stack the 3 vertical taps -> ONE (M3, 3*WC) @ (3*WC, WC) matmul.
        for dh in range(3):
            lk_ref[:, dh * WC:(dh + 1) * WC] = p_ref[dh:dh + M3, :].astype(wdt)
        a = jnp.dot(lk_ref[...], w_ref[...], preferred_element_type=jnp.float32)
        return jnp.maximum(a + s_ref[...], 0.0)          # (M3, WC) f32

    reflect_pad_rows(h, S1)
    h = conv3x3(w2_ref, s2_ref)                          # conv2 + bn2 + relu
    reflect_pad_rows(h, S3)
    h = conv3x3(w3_ref, s3_ref)                          # conv3 + bn3 + relu
    reflect_pad_rows(h, S3)
    h = conv3x3(w4_ref, s4_ref)                          # conv4 + relu

    for b in range(BT):
        o_ref[b] = h[b * S3:b * S3 + H, :].astype(o_ref.dtype)


# ----------------------------------------------------------------------------
# Host-side (one-time) weight preparation: BN folding + banded/reflect weights.
# ----------------------------------------------------------------------------
def _reflect_index(j, n):
    if j < 0:
        return -j
    if j >= n:
        return 2 * (n - 1) - j
    return j


def _banded_reflect_weights(w_hwio, W, pad):
    """Fold horizontal taps + horizontal reflection padding into a K-stacked
    banded matrix.  w_hwio: (kh, kw, Cin, Cout) -> (kh*W*Cin, W*Cout) with
        conv_out[m] = row_padded_Kstacked[m] @ result
    for activations laid out as (rows, W*Cin), channels fastest."""
    kh, kw, Cin, Cout = w_hwio.shape
    bands = []
    for dh in range(kh):
        band = np.zeros((W * Cin, W * Cout), np.float32)
        for dw in range(kw):
            for wo in range(W):
                wi = _reflect_index(wo + dw - pad, W)
                band[wi * Cin:(wi + 1) * Cin, wo * Cout:(wo + 1) * Cout] += \
                    w_hwio[dh, dw]
        bands.append(band)
    return np.concatenate(bands, axis=0)                 # (kh*W*Cin, W*Cout)


def prepare_features4_params(params, H, W, eps=1e-5, weight_dtype=jnp.bfloat16):
    """Precompute banded bf16 weights + folded shifts ONCE (outside the hot path)."""
    p = {k: np.asarray(v, np.float32) for k, v in params.items()}
    a2 = p["g2"] / np.sqrt(p["v2"] + eps)
    a3 = p["g3"] / np.sqrt(p["v3"] + eps)
    w2s = p["w2"] * a2[None, None, None, :]
    w3s = p["w3"] * a3[None, None, None, :]
    shift1 = p["b1"]
    shift2 = a2 * (p["b2"] - p["m2"]) + p["beta2"]
    shift3 = a3 * (p["b3"] - p["m3"]) + p["beta3"]
    shift4 = p["b4"]
    C = p["b1"].shape[0]
    WC = W * C
    tile = lambda s: jnp.asarray(np.tile(s, W).reshape(1, WC), jnp.float32)
    return {
        "w1": jnp.asarray(_banded_reflect_weights(p["w1"], W, 2), weight_dtype),
        "w2": jnp.asarray(_banded_reflect_weights(w2s, W, 1), weight_dtype),
        "w3": jnp.asarray(_banded_reflect_weights(w3s, W, 1), weight_dtype),
        "w4": jnp.asarray(_banded_reflect_weights(p["w4"], W, 1), weight_dtype),
        "s1": tile(shift1), "s2": tile(shift2),
        "s3": tile(shift3), "s4": tile(shift4),
    }


# ----------------------------------------------------------------------------
# Forward wrapper.
# ----------------------------------------------------------------------------
def features4layer_forward(x_nchw, prepared, *, grid_steps=None,
                           single_buffer_weights=True):
    """Features4Layer forward.  x_nchw: (B, 1, H, W) f32 -> (B, C, H, W) f32."""
    B, Cin, H, W = x_nchw.shape
    assert Cin == 1 and H >= 4 and W >= 4
    WC = prepared["w1"].shape[1]
    C = WC // W

    if grid_steps is None:
        # >=2 parallel grid steps keep both v7x TensorCores busy; on single-TC
        # v5e/v6e pass grid_steps=1 to stack the whole batch into one matmul M.
        grid_steps = 2 if (B >= 2 and B % 2 == 0) else 1
    assert B % grid_steps == 0
    BT = B // grid_steps
    S1, S3 = H + 4, H + 2
    M1 = (BT - 1) * S1 + H
    M3 = (BT - 1) * S3 + H

    def const_spec(shape):
        idx = lambda g: (0,) * len(shape)
        if single_buffer_weights:
            # Weights/shifts never change across the grid: single-buffer them
            # so their VMEM footprint is 1x (matters at module-default C=64).
            return pl.BlockSpec(shape, idx, pipeline_mode=pl.Buffered(1))
        return pl.BlockSpec(shape, idx)

    x3d = x_nchw[:, 0, :, :]                             # (B, H, W)
    w_args = (prepared["w1"], prepared["s1"], prepared["w2"], prepared["s2"],
              prepared["w3"], prepared["s3"], prepared["w4"], prepared["s4"])

    in_specs = [pl.BlockSpec((BT, H, W), lambda g: (g, 0, 0))]
    in_specs += [const_spec(a.shape) for a in w_args]

    # Explicit VMEM budget sized from the real working set (+ generous margin).
    weight_bytes = sum(int(np.prod(a.shape)) * a.dtype.itemsize for a in w_args)
    if not single_buffer_weights:
        weight_bytes *= 2
    io_bytes = 2 * (BT * H * W + BT * H * WC) * 4        # double-buffered x / out
    scratch_bytes = (BT * S1 * max(W, 128) * 4 + M1 * max(5 * W, 128) * 2
                     + BT * S3 * WC * 4 + M3 * 3 * WC * 2)
    vmem_limit = min(96 << 20,
                     2 * (weight_bytes + io_bytes + scratch_bytes) + (16 << 20))

    out = pl.pallas_call(
        _features4_kernel,
        out_shape=jax.ShapeDtypeStruct((B, H, WC), x_nchw.dtype),
        grid_spec=pltpu.PrefetchScalarGridSpec(
            num_scalar_prefetch=0,
            grid=(grid_steps,),
            in_specs=in_specs,
            out_specs=pl.BlockSpec((BT, H, WC), lambda g: (g, 0, 0)),
            scratch_shapes=[
                pltpu.VMEM((BT * S1, W), jnp.float32),       # conv1 padded rows
                pltpu.VMEM((M1, 5 * W), jnp.bfloat16),       # conv1 K-stacked LHS
                pltpu.VMEM((BT * S3, WC), jnp.float32),      # 3x3 padded rows
                pltpu.VMEM((M3, 3 * WC), jnp.bfloat16),      # 3x3 K-stacked LHS
            ],
        ),
        compiler_params=pltpu.CompilerParams(
            dimension_semantics=("parallel",),
            vmem_limit_bytes=int(vmem_limit)),
    )(x3d, *w_args)

    # (B, H, W*C) -> (B, C, H, W).  Drop this transpose if the consumer is NHWC.
    return jnp.transpose(out.reshape(B, H, W, C), (0, 3, 1, 2))


# ----------------------------------------------------------------------------
# Plain-JAX reference for validation.
# ----------------------------------------------------------------------------
def _reference_forward(x_nchw, params, eps=1e-5):
    dn = ("NHWC", "HWIO", "NHWC")
    rpad = lambda t, p: jnp.pad(t, ((0, 0), (p, p), (p, p), (0, 0)), mode="reflect")
    conv = lambda t, w: lax.conv_general_dilated(
        t, w, (1, 1), "VALID", dimension_numbers=dn,
        precision=lax.Precision.HIGHEST)
    bn = lambda t, g, bta, m, v: g * (t - m) * lax.rsqrt(v + eps) + bta

    x = jnp.transpose(x_nchw, (0, 2, 3, 1))
    h = jax.nn.relu(conv(rpad(x, 2), params["w1"]) + params["b1"])
    h = jax.nn.relu(bn(conv(rpad(h, 1), params["w2"]) + params["b2"],
                       params["g2"], params["beta2"], params["m2"], params["v2"]))
    h = jax.nn.relu(bn(conv(rpad(h, 1), params["w3"]) + params["b3"],
                       params["g3"], params["beta3"], params["m3"], params["v3"]))
    h = jax.nn.relu(conv(rpad(h, 1), params["w4"]) + params["b4"])
    return jnp.transpose(h, (0, 3, 1, 2))


if __name__ == "__main__":
    B, H, W, C = 4, 16, 16, 16     # features=16 demo (module default is 64)

    key = jax.random.PRNGKey(0)
    ks = jax.random.split(key, 17)
    params = {
        "w1": jax.random.normal(ks[0], (5, 5, 1, C), jnp.float32) * 0.1,
        "b1": jax.random.normal(ks[1], (C,), jnp.float32) * 0.1,
        "w2": jax.random.normal(ks[2], (3, 3, C, C), jnp.float32) * 0.1,
        "b2": jax.random.normal(ks[3], (C,), jnp.float32) * 0.1,
        "g2": 1.0 + 0.1 * jax.random.normal(ks[4], (C,), jnp.float32),
        "beta2": 0.1 * jax.random.normal(ks[5], (C,), jnp.float32),
        "m2": 0.1 * jax.random.normal(ks[6], (C,), jnp.float32),
        "v2": jax.random.uniform(ks[7], (C,), jnp.float32, 0.5, 1.5),
        "w3": jax.random.normal(ks[8], (3, 3, C, C), jnp.float32) * 0.1,
        "b3": jax.random.normal(ks[9], (C,), jnp.float32) * 0.1,
        "g3": 1.0 + 0.1 * jax.random.normal(ks[10], (C,), jnp.float32),
        "beta3": 0.1 * jax.random.normal(ks[11], (C,), jnp.float32),
        "m3": 0.1 * jax.random.normal(ks[12], (C,), jnp.float32),
        "v3": jax.random.uniform(ks[13], (C,), jnp.float32, 0.5, 1.5),
        "w4": jax.random.normal(ks[14], (3, 3, C, C), jnp.float32) * 0.1,
        "b4": jax.random.normal(ks[15], (C,), jnp.float32) * 0.1,
    }
    x = jax.random.normal(ks[16], (B, 1, H, W), jnp.float32)

    # One-time host-side weight prep (NOT inside the per-call hot path).
    prepared = prepare_features4_params(params, H, W)

    fwd = jax.jit(features4layer_forward,
                  static_argnames=("grid_steps", "single_buffer_weights"))
    try:
        out = jax.block_until_ready(fwd(x, prepared))
    except Exception:
        # Fallback if this JAX version rejects single-buffered (Buffered(1))
        # weight BlockSpecs: default double-buffered pipeline.
        out = jax.block_until_ready(fwd(x, prepared, single_buffer_weights=False))
    assert out.shape == (B, C, H, W), out.shape

    ref = jax.block_until_ready(_reference_forward(x, params))
    # bf16 weights/LHS with f32 accumulation -> relaxed tolerance vs f32 reference.
    np.testing.assert_allclose(np.asarray(out), np.asarray(ref),
                               rtol=2e-2, atol=2e-2)

    print("KERNEL_OK")
</pallas_src>

<mosaic_0001>
module attributes {stable_mosaic.version = 11 : i64} {
  func.func @_features4_kernel(%arg0: i32, %arg1: memref<2x16x16xf32, #tpu.memory_space<vmem>>, %arg2: memref<80x256xbf16, #tpu.memory_space<vmem>>, %arg3: memref<1x256xf32, #tpu.memory_space<vmem>>, %arg4: memref<768x256xbf16, #tpu.memory_space<vmem>>, %arg5: memref<1x256xf32, #tpu.memory_space<vmem>>, %arg6: memref<768x256xbf16, #tpu.memory_space<vmem>>, %arg7: memref<1x256xf32, #tpu.memory_space<vmem>>, %arg8: memref<768x256xbf16, #tpu.memory_space<vmem>>, %arg9: memref<1x256xf32, #tpu.memory_space<vmem>>, %arg10: memref<2x16x256xf32, #tpu.memory_space<vmem>>, %arg11: memref<40x16xf32, #tpu.memory_space<vmem>>, %arg12: memref<36x80xbf16, #tpu.memory_space<vmem>>, %arg13: memref<36x256xf32, #tpu.memory_space<vmem>>, %arg14: memref<34x768xbf16, #tpu.memory_space<vmem>>) attributes {dimension_semantics = [#tpu.dimension_semantics<parallel>], iteration_bounds = array<i64: 2>, scalar_prefetch = 0 : i64, scratch_operands = 4 : i64, tpu.core_type = #tpu.core_type<tc>, window_params = [{transform_indices = @transform_0, window_bounds = array<i64: 2, 16, 16>}, {pipeline_mode = #tpu.pipeline_mode<synchronous>, transform_indices = @transform_1, window_bounds = array<i64: 80, 256>}, {pipeline_mode = #tpu.pipeline_mode<synchronous>, transform_indices = @transform_2, window_bounds = array<i64: 1, 256>}, {pipeline_mode = #tpu.pipeline_mode<synchronous>, transform_indices = @transform_3, window_bounds = array<i64: 768, 256>}, {pipeline_mode = #tpu.pipeline_mode<synchronous>, transform_indices = @transform_4, window_bounds = array<i64: 1, 256>}, {pipeline_mode = #tpu.pipeline_mode<synchronous>, transform_indices = @transform_5, window_bounds = array<i64: 768, 256>}, {pipeline_mode = #tpu.pipeline_mode<synchronous>, transform_indices = @transform_6, window_bounds = array<i64: 1, 256>}, {pipeline_mode = #tpu.pipeline_mode<synchronous>, transform_indices = @transform_7, window_bounds = array<i64: 768, 256>}, {pipeline_mode = #tpu.pipeline_mode<synchronous>, transform_indices = @transform_8, window_bounds = array<i64: 1, 256>}, {transform_indices = @transform_9, window_bounds = array<i64: 2, 16, 256>}]} {
    %c0 = arith.constant 0 : index
    %c0_0 = arith.constant 0 : index
    %c0_1 = arith.constant 0 : index
    %0 = vector.load %arg1[%c0, %c0_0, %c0_1] : memref<2x16x16xf32, #tpu.memory_space<vmem>>, vector<1x16x16xf32>
    %1 = vector.shape_cast %0 : vector<1x16x16xf32> to vector<16x16xf32>
    %c2 = arith.constant 2 : index
    %c0_2 = arith.constant 0 : index
    %2 = vector.load %arg11[%c2, %c0_2] : memref<40x16xf32, #tpu.memory_space<vmem>>, vector<16x16xf32>
    tpu.vector_store %arg11[%c2, %c0_2], %1 {strides = array<i32>} : memref<40x16xf32, #tpu.memory_space<vmem>>, vector<16x16xf32>,
    %3 = vector.extract_strided_slice %1 {offsets = [2, 0], sizes = [1, 16], strides = [1, 1]} : vector<16x16xf32> to vector<1x16xf32>
    %c0_3 = arith.constant 0 : index
    %c0_4 = arith.constant 0 : index
    %4 = vector.load %arg11[%c0_3, %c0_4] : memref<40x16xf32, #tpu.memory_space<vmem>>, vector<1x16xf32>
    tpu.vector_store %arg11[%c0_3, %c0_4], %3 {strides = array<i32>} : memref<40x16xf32, #tpu.memory_space<vmem>>, vector<1x16xf32>,
    %5 = vector.extract_strided_slice %1 {offsets = [1, 0], sizes = [1, 16], strides = [1, 1]} : vector<16x16xf32> to vector<1x16xf32>
    %c1 = arith.constant 1 : index
    %c0_5 = arith.constant 0 : index
    %6 = vector.load %arg11[%c1, %c0_5] : memref<40x16xf32, #tpu.memory_space<vmem>>, vector<1x16xf32>
    tpu.vector_store %arg11[%c1, %c0_5], %5 {strides = array<i32>} : memref<40x16xf32, #tpu.memory_space<vmem>>, vector<1x16xf32>,
    %7 = vector.extract_strided_slice %1 {offsets = [14, 0], sizes = [1, 16], strides = [1, 1]} : vector<16x16xf32> to vector<1x16xf32>
    %c18 = arith.constant 18 : index
    %c0_6 = arith.constant 0 : index
    %8 = vector.load %arg11[%c18, %c0_6] : memref<40x16xf32, #tpu.memory_space<vmem>>, vector<1x16xf32>
    tpu.vector_store %arg11[%c18, %c0_6], %7 {strides = array<i32>} : memref<40x16xf32, #tpu.memory_space<vmem>>, vector<1x16xf32>,
    %9 = vector.extract_strided_slice %1 {offsets = [13, 0], sizes = [1, 16], strides = [1, 1]} : vector<16x16xf32> to vector<1x16xf32>
    %c19 = arith.constant 19 : index
    %c0_7 = arith.constant 0 : index
    %10 = vector.load %arg11[%c19, %c0_7] : memref<40x16xf32, #tpu.memory_space<vmem>>, vector<1x16xf32>
    tpu.vector_store %arg11[%c19, %c0_7], %9 {strides = array<i32>} : memref<40x16xf32, #tpu.memory_space<vmem>>, vector<1x16xf32>,
    %c1_8 = arith.constant 1 : index
    %c0_9 = arith.constant 0 : index
    %c0_10 = arith.constant 0 : index
    %11 = vector.load %arg1[%c1_8, %c0_9, %c0_10] : memref<2x16x16xf32, #tpu.memory_space<vmem>>, vector<1x16x16xf32>
    %12 = vector.shape_cast %11 : vector<1x16x16xf32> to vector<16x16xf32>
    %c22 = arith.constant 22 : index
    %c0_11 = arith.constant 0 : index
    %13 = vector.load %arg11[%c22, %c0_11] : memref<40x16xf32, #tpu.memory_space<vmem>>, vector<16x16xf32>
    tpu.vector_store %arg11[%c22, %c0_11], %12 {strides = array<i32>} : memref<40x16xf32, #tpu.memory_space<vmem>>, vector<16x16xf32>,
    %14 = vector.extract_strided_slice %12 {offsets = [2, 0], sizes = [1, 16], strides = [1, 1]} : vector<16x16xf32> to vector<1x16xf32>
    %c20 = arith.constant 20 : index
    %c0_12 = arith.constant 0 : index
    %15 = vector.load %arg11[%c20, %c0_12] : memref<40x16xf32, #tpu.memory_space<vmem>>, vector<1x16xf32>
    tpu.vector_store %arg11[%c20, %c0_12], %14 {strides = array<i32>} : memref<40x16xf32, #tpu.memory_space<vmem>>, vector<1x16xf32>,
    %16 = vector.extract_strided_slice %12 {offsets = [1, 0], sizes = [1, 16], strides = [1, 1]} : vector<16x16xf32> to vector<1x16xf32>
    %c21 = arith.constant 21 : index
    %c0_13 = arith.constant 0 : index
    %17 = vector.load %arg11[%c21, %c0_13] : memref<40x16xf32, #tpu.memory_space<vmem>>, vector<1x16xf32>
    tpu.vector_store %arg11[%c21, %c0_13], %16 {strides = array<i32>} : memref<40x16xf32, #tpu.memory_space<vmem>>, vector<1x16xf32>,
    %18 = vector.extract_strided_slice %12 {offsets = [14, 0], sizes = [1, 16], strides = [1, 1]} : vector<16x16xf32> to vector<1x16xf32>
    %c38 = arith.constant 38 : index
    %c0_14 = arith.constant 0 : index
    %19 = vector.load %arg11[%c38, %c0_14] : memref<40x16xf32, #tpu.memory_space<vmem>>, vector<1x16xf32>
    tpu.vector_store %arg11[%c38, %c0_14], %18 {strides = array<i32>} : memref<40x16xf32, #tpu.memory_space<vmem>>, vector<1x16xf32>,
    %20 = vector.extract_strided_slice %12 {offsets = [13, 0], sizes = [1, 16], strides = [1, 1]} : vector<16x16xf32> to vector<1x16xf32>
    %c39 = arith.constant 39 : index
    %c0_15 = arith.constant 0 : index
    %21 = vector.load %arg11[%c39, %c0_15] : memref<40x16xf32, #tpu.memory_space<vmem>>, vector<1x16xf32>
    tpu.vector_store %arg11[%c39, %c0_15], %20 {strides = array<i32>} : memref<40x16xf32, #tpu.memory_space<vmem>>, vector<1x16xf32>,
    %c0_16 = arith.constant 0 : index
    %c0_17 = arith.constant 0 : index
    %22 = vector.load %arg11[%c0_16, %c0_17] : memref<40x16xf32, #tpu.memory_space<vmem>>, vector<36x16xf32>
    %23 = arith.truncf %22 : vector<36x16xf32> to vector<36x16xbf16>
    %c0_18 = arith.constant 0 : index
    %c0_19 = arith.constant 0 : index
    %24 = vector.load %arg12[%c0_18, %c0_19] : memref<36x80xbf16, #tpu.memory_space<vmem>>, vector<36x16xbf16>
    tpu.vector_store %arg12[%c0_18, %c0_19], %23 {strides = array<i32>} : memref<36x80xbf16, #tpu.memory_space<vmem>>, vector<36x16xbf16>,
    %c1_20 = arith.constant 1 : index
    %c0_21 = arith.constant 0 : index
    %25 = vector.load %arg11[%c1_20, %c0_21] : memref<40x16xf32, #tpu.memory_space<vmem>>, vector<36x16xf32>
    %26 = arith.truncf %25 : vector<36x16xf32> to vector<36x16xbf16>
    %c0_22 = arith.constant 0 : index
    %c16 = arith.constant 16 : index
    %27 = vector.load %arg12[%c0_22, %c16] : memref<36x80xbf16, #tpu.memory_space<vmem>>, vector<36x16xbf16>
    tpu.vector_store %arg12[%c0_22, %c16], %26 {strides = array<i32>} : memref<36x80xbf16, #tpu.memory_space<vmem>>, vector<36x16xbf16>,
    %c2_23 = arith.constant 2 : index
    %c0_24 = arith.constant 0 : index
    %28 = vector.load %arg11[%c2_23, %c0_24] : memref<40x16xf32, #tpu.memory_space<vmem>>, vector<36x16xf32>
    %29 = arith.truncf %28 : vector<36x16xf32> to vector<36x16xbf16>
    %c0_25 = arith.constant 0 : index
    %c32 = arith.constant 32 : index
    %30 = vector.load %arg12[%c0_25, %c32] : memref<36x80xbf16, #tpu.memory_space<vmem>>, vector<36x16xbf16>
    tpu.vector_store %arg12[%c0_25, %c32], %29 {strides = array<i32>} : memref<36x80xbf16, #tpu.memory_space<vmem>>, vector<36x16xbf16>,
    %c3 = arith.constant 3 : index
    %c0_26 = arith.constant 0 : index
    %31 = vector.load %arg11[%c3, %c0_26] : memref<40x16xf32, #tpu.memory_space<vmem>>, vector<36x16xf32>
    %32 = arith.truncf %31 : vector<36x16xf32> to vector<36x16xbf16>
    %c0_27 = arith.constant 0 : index
    %c48 = arith.constant 48 : index
    %33 = vector.load %arg12[%c0_27, %c48] : memref<36x80xbf16, #tpu.memory_space<vmem>>, vector<36x16xbf16>
    tpu.vector_store %arg12[%c0_27, %c48], %32 {strides = array<i32>} : memref<36x80xbf16, #tpu.memory_space<vmem>>, vector<36x16xbf16>,
    %c4 = arith.constant 4 : index
    %c0_28 = arith.constant 0 : index
    %34 = vector.load %arg11[%c4, %c0_28] : memref<40x16xf32, #tpu.memory_space<vmem>>, vector<36x16xf32>
    %35 = arith.truncf %34 : vector<36x16xf32> to vector<36x16xbf16>
    %c0_29 = arith.constant 0 : index
    %c64 = arith.constant 64 : index
    %36 = vector.load %arg12[%c0_29, %c64] : memref<36x80xbf16, #tpu.memory_space<vmem>>, vector<36x16xbf16>
    tpu.vector_store %arg12[%c0_29, %c64], %35 {strides = array<i32>} : memref<36x80xbf16, #tpu.memory_space<vmem>>, vector<36x16xbf16>,
    %c0_30 = arith.constant 0 : index
    %c0_31 = arith.constant 0 : index
    %37 = vector.load %arg12[%c0_30, %c0_31] : memref<36x80xbf16, #tpu.memory_space<vmem>>, vector<36x80xbf16>
    %c0_32 = arith.constant 0 : index
    %c0_33 = arith.constant 0 : index
    %38 = vector.load %arg2[%c0_32, %c0_33] : memref<80x256xbf16, #tpu.memory_space<vmem>>, vector<80x256xbf16>
    %cst = arith.constant dense<0.000000e+00> : vector<36x256xf32>
    %39 = tpu.matmul %37, %38, %cst {dimension_numbers = #tpu.dot_dimension_numbers<[1], [0], [0], [1], [0, 0, 1, 1], [], []>} : vector<36x80xbf16>, vector<80x256xbf16>, vector<36x256xf32> -> vector<36x256xf32>
    %c0_34 = arith.constant 0 : index
    %c0_35 = arith.constant 0 : index
    %40 = vector.load %arg3[%c0_34, %c0_35] : memref<1x256xf32, #tpu.memory_space<vmem>>, vector<1x256xf32>
    %41 = vector.broadcast %40 : vector<1x256xf32> to vector<36x256xf32>
    %42 = arith.addf %39, %41 : vector<36x256xf32>
    %cst_36 = arith.constant 0.000000e+00 : f32
    %43 = vector.broadcast %cst_36 : f32 to vector<36x256xf32>
    %44 = arith.maximumf %42, %43 : vector<36x256xf32>
    %45 = vector.extract_strided_slice %44 {offsets = [0, 0], sizes = [16, 256], strides = [1, 1]} : vector<36x256xf32> to vector<16x256xf32>
    %c1_37 = arith.constant 1 : index
    %c0_38 = arith.constant 0 : index
    %46 = vector.load %arg13[%c1_37, %c0_38] : memref<36x256xf32, #tpu.memory_space<vmem>>, vector<16x256xf32>
    tpu.vector_store %arg13[%c1_37, %c0_38], %45 {strides = array<i32>} : memref<36x256xf32, #tpu.memory_space<vmem>>, vector<16x256xf32>,
    %47 = vector.extract_strided_slice %45 {offsets = [1, 0], sizes = [1, 256], strides = [1, 1]} : vector<16x256xf32> to vector<1x256xf32>
    %c0_39 = arith.constant 0 : index
    %c0_40 = arith.constant 0 : index
    %48 = vector.load %arg13[%c0_39, %c0_40] : memref<36x256xf32, #tpu.memory_space<vmem>>, vector<1x256xf32>
    tpu.vector_store %arg13[%c0_39, %c0_40], %47 {strides = array<i32>} : memref<36x256xf32, #tpu.memory_space<vmem>>, vector<1x256xf32>,
    %49 = vector.extract_strided_slice %45 {offsets = [14, 0], sizes = [1, 256], strides = [1, 1]} : vector<16x256xf32> to vector<1x256xf32>
    %c17 = arith.constant 17 : index
    %c0_41 = arith.constant 0 : index
    %50 = vector.load %arg13[%c17, %c0_41] : memref<36x256xf32, #tpu.memory_space<vmem>>, vector<1x256xf32>
    tpu.vector_store %arg13[%c17, %c0_41], %49 {strides = array<i32>} : memref<36x256xf32, #tpu.memory_space<vmem>>, vector<1x256xf32>,
    %51 = vector.extract_strided_slice %44 {offsets = [20, 0], sizes = [16, 256], strides = [1, 1]} : vector<36x256xf32> to vector<16x256xf32>
    %c19_42 = arith.constant 19 : index
    %c0_43 = arith.constant 0 : index
    %52 = vector.load %arg13[%c19_42, %c0_43] : memref<36x256xf32, #tpu.memory_space<vmem>>, vector<16x256xf32>
    tpu.vector_store %arg13[%c19_42, %c0_43], %51 {strides = array<i32>} : memref<36x256xf32, #tpu.memory_space<vmem>>, vector<16x256xf32>,
    %53 = vector.extract_strided_slice %51 {offsets = [1, 0], sizes = [1, 256], strides = [1, 1]} : vector<16x256xf32> to vector<1x256xf32>
    %c18_44 = arith.constant 18 : index
    %c0_45 = arith.constant 0 : index
    %54 = vector.load %arg13[%c18_44, %c0_45] : memref<36x256xf32, #tpu.memory_space<vmem>>, vector<1x256xf32>
    tpu.vector_store %arg13[%c18_44, %c0_45], %53 {strides = array<i32>} : memref<36x256xf32, #tpu.memory_space<vmem>>, vector<1x256xf32>,
    %55 = vector.extract_strided_slice %51 {offsets = [14, 0], sizes = [1, 256], strides = [1, 1]} : vector<16x256xf32> to vector<1x256xf32>
    %c35 = arith.constant 35 : index
    %c0_46 = arith.constant 0 : index
    %56 = vector.load %arg13[%c35, %c0_46] : memref<36x256xf32, #tpu.memory_space<vmem>>, vector<1x256xf32>
    tpu.vector_store %arg13[%c35, %c0_46], %55 {strides = array<i32>} : memref<36x256xf32, #tpu.memory_space<vmem>>, vector<1x256xf32>,
    %c0_47 = arith.constant 0 : index
    %c0_48 = arith.constant 0 : index
    %57 = vector.load %arg13[%c0_47, %c0_48] : memref<36x256xf32, #tpu.memory_space<vmem>>, vector<34x256xf32>
    %58 = arith.truncf %57 : vector<34x256xf32> to vector<34x256xbf16>
    %c0_49 = arith.constant 0 : index
    %c0_50 = arith.constant 0 : index
    %59 = vector.load %arg14[%c0_49, %c0_50] : memref<34x768xbf16, #tpu.memory_space<vmem>>, vector<34x256xbf16>
    tpu.vector_store %arg14[%c0_49, %c0_50], %58 {strides = array<i32>} : memref<34x768xbf16, #tpu.memory_space<vmem>>, vector<34x256xbf16>,
    %c1_51 = arith.constant 1 : index
    %c0_52 = arith.constant 0 : index
    %60 = vector.load %arg13[%c1_51, %c0_52] : memref<36x256xf32, #tpu.memory_space<vmem>>, vector<34x256xf32>
    %61 = arith.truncf %60 : vector<34x256xf32> to vector<34x256xbf16>
    %c0_53 = arith.constant 0 : index
    %c256 = arith.constant 256 : index
    %62 = vector.load %arg14[%c0_53, %c256] : memref<34x768xbf16, #tpu.memory_space<vmem>>, vector<34x256xbf16>
    tpu.vector_store %arg14[%c0_53, %c256], %61 {strides = array<i32>} : memref<34x768xbf16, #tpu.memory_space<vmem>>, vector<34x256xbf16>,
    %c2_54 = arith.constant 2 : index
    %c0_55 = arith.constant 0 : index
    %63 = vector.load %arg13[%c2_54, %c0_55] : memref<36x256xf32, #tpu.memory_space<vmem>>, vector<34x256xf32>
    %64 = arith.truncf %63 : vector<34x256xf32> to vector<34x256xbf16>
    %c0_56 = arith.constant 0 : index
    %c512 = arith.constant 512 : index
    %65 = vector.load %arg14[%c0_56, %c512] : memref<34x768xbf16, #tpu.memory_space<vmem>>, vector<34x256xbf16>
    tpu.vector_store %arg14[%c0_56, %c512], %64 {strides = array<i32>} : memref<34x768xbf16, #tpu.memory_space<vmem>>, vector<34x256xbf16>,
    %c0_57 = arith.constant 0 : index
    %c0_58 = arith.constant 0 : index
    %66 = vector.load %arg14[%c0_57, %c0_58] : memref<34x768xbf16, #tpu.memory_space<vmem>>, vector<34x768xbf16>
    %c0_59 = arith.constant 0 : index
    %c0_60 = arith.constant 0 : index
    %67 = vector.load %arg4[%c0_59, %c0_60] : memref<768x256xbf16, #tpu.memory_space<vmem>>, vector<768x256xbf16>
    %cst_61 = arith.constant dense<0.000000e+00> : vector<34x256xf32>
    %68 = tpu.matmul %66, %67, %cst_61 {dimension_numbers = #tpu.dot_dimension_numbers<[1], [0], [0], [1], [0, 0, 1, 1], [], []>} : vector<34x768xbf16>, vector<768x256xbf16>, vector<34x256xf32> -> vector<34x256xf32>
    %c0_62 = arith.constant 0 : index
    %c0_63 = arith.constant 0 : index
    %69 = vector.load %arg5[%c0_62, %c0_63] : memref<1x256xf32, #tpu.memory_space<vmem>>, vector<1x256xf32>
    %70 = vector.broadcast %69 : vector<1x256xf32> to vector<34x256xf32>
    %71 = arith.addf %68, %70 : vector<34x256xf32>
    %cst_64 = arith.constant 0.000000e+00 : f32
    %72 = vector.broadcast %cst_64 : f32 to vector<34x256xf32>
    %73 = arith.maximumf %71, %72 : vector<34x256xf32>
    %74 = vector.extract_strided_slice %73 {offsets = [0, 0], sizes = [16, 256], strides = [1, 1]} : vector<34x256xf32> to vector<16x256xf32>
    %c1_65 = arith.constant 1 : index
    %c0_66 = arith.constant 0 : index
    %75 = vector.load %arg13[%c1_65, %c0_66] : memref<36x256xf32, #tpu.memory_space<vmem>>, vector<16x256xf32>
    tpu.vector_store %arg13[%c1_65, %c0_66], %74 {strides = array<i32>} : memref<36x256xf32, #tpu.memory_space<vmem>>, vector<16x256xf32>,
    %76 = vector.extract_strided_slice %74 {offsets = [1, 0], sizes = [1, 256], strides = [1, 1]} : vector<16x256xf32> to vector<1x256xf32>
    %c0_67 = arith.constant 0 : index
    %c0_68 = arith.constant 0 : index
    %77 = vector.load %arg13[%c0_67, %c0_68] : memref<36x256xf32, #tpu.memory_space<vmem>>, vector<1x256xf32>
    tpu.vector_store %arg13[%c0_67, %c0_68], %76 {strides = array<i32>} : memref<36x256xf32, #tpu.memory_space<vmem>>, vector<1x256xf32>,
    %78 = vector.extract_strided_slice %74 {offsets = [14, 0], sizes = [1, 256], strides = [1, 1]} : vector<16x256xf32> to vector<1x256xf32>
    %c17_69 = arith.constant 17 : index
    %c0_70 = arith.constant 0 : index
    %79 = vector.load %arg13[%c17_69, %c0_70] : memref<36x256xf32, #tpu.memory_space<vmem>>, vector<1x256xf32>
    tpu.vector_store %arg13[%c17_69, %c0_70], %78 {strides = array<i32>} : memref<36x256xf32, #tpu.memory_space<vmem>>, vector<1x256xf32>,
    %80 = vector.extract_strided_slice %73 {offsets = [18, 0], sizes = [16, 256], strides = [1, 1]} : vector<34x256xf32> to vector<16x256xf32>
    %c19_71 = arith.constant 19 : index
    %c0_72 = arith.constant 0 : index
    %81 = vector.load %arg13[%c19_71, %c0_72] : memref<36x256xf32, #tpu.memory_space<vmem>>, vector<16x256xf32>
    tpu.vector_store %arg13[%c19_71, %c0_72], %80 {strides = array<i32>} : memref<36x256xf32, #tpu.memory_space<vmem>>, vector<16x256xf32>,
    %82 = vector.extract_strided_slice %80 {offsets = [1, 0], sizes = [1, 256], strides = [1, 1]} : vector<16x256xf32> to vector<1x256xf32>
    %c18_73 = arith.constant 18 : index
    %c0_74 = arith.constant 0 : index
    %83 = vector.load %arg13[%c18_73, %c0_74] : memref<36x256xf32, #tpu.memory_space<vmem>>, vector<1x256xf32>
    tpu.vector_store %arg13[%c18_73, %c0_74], %82 {strides = array<i32>} : memref<36x256xf32, #tpu.memory_space<vmem>>, vector<1x256xf32>,
    %84 = vector.extract_strided_slice %80 {offsets = [14, 0], sizes = [1, 256], strides = [1, 1]} : vector<16x256xf32> to vector<1x256xf32>
    %c35_75 = arith.constant 35 : index
    %c0_76 = arith.constant 0 : index
    %85 = vector.load %arg13[%c35_75, %c0_76] : memref<36x256xf32, #tpu.memory_space<vmem>>, vector<1x256xf32>
    tpu.vector_store %arg13[%c35_75, %c0_76], %84 {strides = array<i32>} : memref<36x256xf32, #tpu.memory_space<vmem>>, vector<1x256xf32>,
    %c0_77 = arith.constant 0 : index
    %c0_78 = arith.constant 0 : index
    %86 = vector.load %arg13[%c0_77, %c0_78] : memref<36x256xf32, #tpu.memory_space<vmem>>, vector<34x256xf32>
    %87 = arith.truncf %86 : vector<34x256xf32> to vector<34x256xbf16>
    %c0_79 = arith.constant 0 : index
    %c0_80 = arith.constant 0 : index
    %88 = vector.load %arg14[%c0_79, %c0_80] : memref<34x768xbf16, #tpu.memory_space<vmem>>, vector<34x256xbf16>
    tpu.vector_store %arg14[%c0_79, %c0_80], %87 {strides = array<i32>} : memref<34x768xbf16, #tpu.memory_space<vmem>>, vector<34x256xbf16>,
    %c1_81 = arith.constant 1 : index
    %c0_82 = arith.constant 0 : index
    %89 = vector.load %arg13[%c1_81, %c0_82] : memref<36x256xf32, #tpu.memory_space<vmem>>, vector<34x256xf32>
    %90 = arith.truncf %89 : vector<34x256xf32> to vector<34x256xbf16>
    %c0_83 = arith.constant 0 : index
    %c256_84 = arith.constant 256 : index
    %91 = vector.load %arg14[%c0_83, %c256_84] : memref<34x768xbf16, #tpu.memory_space<vmem>>, vector<34x256xbf16>
    tpu.vector_store %arg14[%c0_83, %c256_84], %90 {strides = array<i32>} : memref<34x768xbf16, #tpu.memory_space<vmem>>, vector<34x256xbf16>,
    %c2_85 = arith.constant 2 : index
    %c0_86 = arith.constant 0 : index
    %92 = vector.load %arg13[%c2_85, %c0_86] : memref<36x256xf32, #tpu.memory_space<vmem>>, vector<34x256xf32>
    %93 = arith.truncf %92 : vector<34x256xf32> to vector<34x256xbf16>
    %c0_87 = arith.constant 0 : index
    %c512_88 = arith.constant 512 : index
    %94 = vector.load %arg14[%c0_87, %c512_88] : memref<34x768xbf16, #tpu.memory_space<vmem>>, vector<34x256xbf16>
    tpu.vector_store %arg14[%c0_87, %c512_88], %93 {strides = array<i32>} : memref<34x768xbf16, #tpu.memory_space<vmem>>, vector<34x256xbf16>,
    %c0_89 = arith.constant 0 : index
    %c0_90 = arith.constant 0 : index
    %95 = vector.load %arg14[%c0_89, %c0_90] : memref<34x768xbf16, #tpu.memory_space<vmem>>, vector<34x768xbf16>
    %c0_91 = arith.constant 0 : index
    %c0_92 = arith.constant 0 : index
    %96 = vector.load %arg6[%c0_91, %c0_92] : memref<768x256xbf16, #tpu.memory_space<vmem>>, vector<768x256xbf16>
    %cst_93 = arith.constant dense<0.000000e+00> : vector<34x256xf32>
    %97 = tpu.matmul %95, %96, %cst_93 {dimension_numbers = #tpu.dot_dimension_numbers<[1], [0], [0], [1], [0, 0, 1, 1], [], []>} : vector<34x768xbf16>, vector<768x256xbf16>, vector<34x256xf32> -> vector<34x256xf32>
    %c0_94 = arith.constant 0 : index
    %c0_95 = arith.constant 0 : index
    %98 = vector.load %arg7[%c0_94, %c0_95] : memref<1x256xf32, #tpu.memory_space<vmem>>, vector<1x256xf32>
    %99 = vector.broadcast %98 : vector<1x256xf32> to vector<34x256xf32>
    %100 = arith.addf %97, %99 : vector<34x256xf32>
    %cst_96 = arith.constant 0.000000e+00 : f32
    %101 = vector.broadcast %cst_96 : f32 to vector<34x256xf32>
    %102 = arith.maximumf %100, %101 : vector<34x256xf32>
    %103 = vector.extract_strided_slice %102 {offsets = [0, 0], sizes = [16, 256], strides = [1, 1]} : vector<34x256xf32> to vector<16x256xf32>
    %c1_97 = arith.constant 1 : index
    %c0_98 = arith.constant 0 : index
    %104 = vector.load %arg13[%c1_97, %c0_98] : memref<36x256xf32, #tpu.memory_space<vmem>>, vector<16x256xf32>
    tpu.vector_store %arg13[%c1_97, %c0_98], %103 {strides = array<i32>} : memref<36x256xf32, #tpu.memory_space<vmem>>, vector<16x256xf32>,
    %105 = vector.extract_strided_slice %103 {offsets = [1, 0], sizes = [1, 256], strides = [1, 1]} : vector<16x256xf32> to vector<1x256xf32>
    %c0_99 = arith.constant 0 : index
    %c0_100 = arith.constant 0 : index
    %106 = vector.load %arg13[%c0_99, %c0_100] : memref<36x256xf32, #tpu.memory_space<vmem>>, vector<1x256xf32>
    tpu.vector_store %arg13[%c0_99, %c0_100], %105 {strides = array<i32>} : memref<36x256xf32, #tpu.memory_space<vmem>>, vector<1x256xf32>,
    %107 = vector.extract_strided_slice %103 {offsets = [14, 0], sizes = [1, 256], strides = [1, 1]} : vector<16x256xf32> to vector<1x256xf32>
    %c17_101 = arith.constant 17 : index
    %c0_102 = arith.constant 0 : index
    %108 = vector.load %arg13[%c17_101, %c0_102] : memref<36x256xf32, #tpu.memory_space<vmem>>, vector<1x256xf32>
    tpu.vector_store %arg13[%c17_101, %c0_102], %107 {strides = array<i32>} : memref<36x256xf32, #tpu.memory_space<vmem>>, vector<1x256xf32>,
    %109 = vector.extract_strided_slice %102 {offsets = [18, 0], sizes = [16, 256], strides = [1, 1]} : vector<34x256xf32> to vector<16x256xf32>
    %c19_103 = arith.constant 19 : index
    %c0_104 = arith.constant 0 : index
    %110 = vector.load %arg13[%c19_103, %c0_104] : memref<36x256xf32, #tpu.memory_space<vmem>>, vector<16x256xf32>
    tpu.vector_store %arg13[%c19_103, %c0_104], %109 {strides = array<i32>} : memref<36x256xf32, #tpu.memory_space<vmem>>, vector<16x256xf32>,
    %111 = vector.extract_strided_slice %109 {offsets = [1, 0], sizes = [1, 256], strides = [1, 1]} : vector<16x256xf32> to vector<1x256xf32>
    %c18_105 = arith.constant 18 : index
    %c0_106 = arith.constant 0 : index
    %112 = vector.load %arg13[%c18_105, %c0_106] : memref<36x256xf32, #tpu.memory_space<vmem>>, vector<1x256xf32>
    tpu.vector_store %arg13[%c18_105, %c0_106], %111 {strides = array<i32>} : memref<36x256xf32, #tpu.memory_space<vmem>>, vector<1x256xf32>,
    %113 = vector.extract_strided_slice %109 {offsets = [14, 0], sizes = [1, 256], strides = [1, 1]} : vector<16x256xf32> to vector<1x256xf32>
    %c35_107 = arith.constant 35 : index
    %c0_108 = arith.constant 0 : index
    %114 = vector.load %arg13[%c35_107, %c0_108] : memref<36x256xf32, #tpu.memory_space<vmem>>, vector<1x256xf32>
    tpu.vector_store %arg13[%c35_107, %c0_108], %113 {strides = array<i32>} : memref<36x256xf32, #tpu.memory_space<vmem>>, vector<1x256xf32>,
    %c0_109 = arith.constant 0 : index
    %c0_110 = arith.constant 0 : index
    %115 = vector.load %arg13[%c0_109, %c0_110] : memref<36x256xf32, #tpu.memory_space<vmem>>, vector<34x256xf32>
    %116 = arith.truncf %115 : vector<34x256xf32> to vector<34x256xbf16>
    %c0_111 = arith.constant 0 : index
    %c0_112 = arith.constant 0 : index
    %117 = vector.load %arg14[%c0_111, %c0_112] : memref<34x768xbf16, #tpu.memory_space<vmem>>, vector<34x256xbf16>
    tpu.vector_store %arg14[%c0_111, %c0_112], %116 {strides = array<i32>} : memref<34x768xbf16, #tpu.memory_space<vmem>>, vector<34x256xbf16>,
    %c1_113 = arith.constant 1 : index
    %c0_114 = arith.constant 0 : index
    %118 = vector.load %arg13[%c1_113, %c0_114] : memref<36x256xf32, #tpu.memory_space<vmem>>, vector<34x256xf32>
    %119 = arith.truncf %118 : vector<34x256xf32> to vector<34x256xbf16>
    %c0_115 = arith.constant 0 : index
    %c256_116 = arith.constant 256 : index
    %120 = vector.load %arg14[%c0_115, %c256_116] : memref<34x768xbf16, #tpu.memory_space<vmem>>, vector<34x256xbf16>
    tpu.vector_store %arg14[%c0_115, %c256_116], %119 {strides = array<i32>} : memref<34x768xbf16, #tpu.memory_space<vmem>>, vector<34x256xbf16>,
    %c2_117 = arith.constant 2 : index
    %c0_118 = arith.constant 0 : index
    %121 = vector.load %arg13[%c2_117, %c0_118] : memref<36x256xf32, #tpu.memory_space<vmem>>, vector<34x256xf32>
    %122 = arith.truncf %121 : vector<34x256xf32> to vector<34x256xbf16>
    %c0_119 = arith.constant 0 : index
    %c512_120 = arith.constant 512 : index
    %123 = vector.load %arg14[%c0_119, %c512_120] : memref<34x768xbf16, #tpu.memory_space<vmem>>, vector<34x256xbf16>
    tpu.vector_store %arg14[%c0_119, %c512_120], %122 {strides = array<i32>} : memref<34x768xbf16, #tpu.memory_space<vmem>>, vector<34x256xbf16>,
    %c0_121 = arith.constant 0 : index
    %c0_122 = arith.constant 0 : index
    %124 = vector.load %arg14[%c0_121, %c0_122] : memref<34x768xbf16, #tpu.memory_space<vmem>>, vector<34x768xbf16>
    %c0_123 = arith.constant 0 : index
    %c0_124 = arith.constant 0 : index
    %125 = vector.load %arg8[%c0_123, %c0_124] : memref<768x256xbf16, #tpu.memory_space<vmem>>, vector<768x256xbf16>
    %cst_125 = arith.constant dense<0.000000e+00> : vector<34x256xf32>
    %126 = tpu.matmul %124, %125, %cst_125 {dimension_numbers = #tpu.dot_dimension_numbers<[1], [0], [0], [1], [0, 0, 1, 1], [], []>} : vector<34x768xbf16>, vector<768x256xbf16>, vector<34x256xf32> -> vector<34x256xf32>
    %c0_126 = arith.constant 0 : index
    %c0_127 = arith.constant 0 : index
    %127 = vector.load %arg9[%c0_126, %c0_127] : memref<1x256xf32, #tpu.memory_space<vmem>>, vector<1x256xf32>
    %128 = vector.broadcast %127 : vector<1x256xf32> to vector<34x256xf32>
    %129 = arith.addf %126, %128 : vector<34x256xf32>
    %cst_128 = arith.constant 0.000000e+00 : f32
    %130 = vector.broadcast %cst_128 : f32 to vector<34x256xf32>
    %131 = arith.maximumf %129, %130 : vector<34x256xf32>
    %132 = vector.extract_strided_slice %131 {offsets = [0, 0], sizes = [16, 256], strides = [1, 1]} : vector<34x256xf32> to vector<16x256xf32>
    %c0_129 = arith.constant 0 : index
    %c0_130 = arith.constant 0 : index
    %c0_131 = arith.constant 0 : index
    %133 = vector.load %arg10[%c0_129, %c0_130, %c0_131] : memref<2x16x256xf32, #tpu.memory_space<vmem>>, vector<1x16x256xf32>
    %134 = vector.shape_cast %133 : vector<1x16x256xf32> to vector<16x256xf32>
    %135 = vector.shape_cast %132 : vector<16x256xf32> to vector<1x16x256xf32>
    tpu.vector_store %arg10[%c0_129, %c0_130, %c0_131], %135 {strides = array<i32>} : memref<2x16x256xf32, #tpu.memory_space<vmem>>, vector<1x16x256xf32>,
    %136 = vector.extract_strided_slice %131 {offsets = [18, 0], sizes = [16, 256], strides = [1, 1]} : vector<34x256xf32> to vector<16x256xf32>
    %c1_132 = arith.constant 1 : index
    %c0_133 = arith.constant 0 : index
    %c0_134 = arith.constant 0 : index
    %137 = vector.load %arg10[%c1_132, %c0_133, %c0_134] : memref<2x16x256xf32, #tpu.memory_space<vmem>>, vector<1x16x256xf32>
    %138 = vector.shape_cast %137 : vector<1x16x256xf32> to vector<16x256xf32>
    %139 = vector.shape_cast %136 : vector<16x256xf32> to vector<1x16x256xf32>
    tpu.vector_store %arg10[%c1_132, %c0_133, %c0_134], %139 {strides = array<i32>} : memref<2x16x256xf32, #tpu.memory_space<vmem>>, vector<1x16x256xf32>,
    return
  }
  func.func @transform_0(%arg0: i32) -> (i32, i32, i32) {
    %c0_i32 = arith.constant 0 : i32
    %c0_i32_0 = arith.constant 0 : i32
    %c0_i32_1 = arith.constant 0 : i32
    return %arg0, %c0_i32, %c0_i32_0 : i32, i32, i32
  }
  func.func @transform_1(%arg0: i32) -> (i32, i32) {
    %c0_i32 = arith.constant 0 : i32
    %c0_i32_0 = arith.constant 0 : i32
    %c0_i32_1 = arith.constant 0 : i32
    return %c0_i32, %c0_i32_0 : i32, i32
  }
  func.func @transform_2(%arg0: i32) -> (i32, i32) {
    %c0_i32 = arith.constant 0 : i32
    %c0_i32_0 = arith.constant 0 : i32
    %c0_i32_1 = arith.constant 0 : i32
    return %c0_i32, %c0_i32_0 : i32, i32
  }
  func.func @transform_3(%arg0: i32) -> (i32, i32) {
    %c0_i32 = arith.constant 0 : i32
    %c0_i32_0 = arith.constant 0 : i32
    %c0_i32_1 = arith.constant 0 : i32
    return %c0_i32, %c0_i32_0 : i32, i32
  }
  func.func @transform_4(%arg0: i32) -> (i32, i32) {
    %c0_i32 = arith.constant 0 : i32
    %c0_i32_0 = arith.constant 0 : i32
    %c0_i32_1 = arith.constant 0 : i32
    return %c0_i32, %c0_i32_0 : i32, i32
  }
  func.func @transform_5(%arg0: i32) -> (i32, i32) {
    %c0_i32 = arith.constant 0 : i32
    %c0_i32_0 = arith.constant 0 : i32
    %c0_i32_1 = arith.constant 0 : i32
    return %c0_i32, %c0_i32_0 : i32, i32
  }
  func.func @transform_6(%arg0: i32) -> (i32, i32) {
    %c0_i32 = arith.constant 0 : i32
    %c0_i32_0 = arith.constant 0 : i32
    %c0_i32_1 = arith.constant 0 : i32
    return %c0_i32, %c0_i32_0 : i32, i32
  }
  func.func @transform_7(%arg0: i32) -> (i32, i32) {
    %c0_i32 = arith.constant 0 : i32
    %c0_i32_0 = arith.constant 0 : i32
    %c0_i32_1 = arith.constant 0 : i32
    return %c0_i32, %c0_i32_0 : i32, i32
  }
  func.func @transform_8(%arg0: i32) -> (i32, i32) {
    %c0_i32 = arith.constant 0 : i32
    %c0_i32_0 = arith.constant 0 : i32
    %c0_i32_1 = arith.constant 0 : i32
    return %c0_i32, %c0_i32_0 : i32, i32
  }
  func.func @transform_9(%arg0: i32) -> (i32, i32, i32) {
    %c0_i32 = arith.constant 0 : i32
    %c0_i32_0 = arith.constant 0 : i32
    %c0_i32_1 = arith.constant 0 : i32
    return %arg0, %c0_i32, %c0_i32_0 : i32, i32, i32
  }
}

module attributes {stable_mosaic.version = 11 : i64} {
  func.func @_features4_kernel(%arg0: i32, %arg1: memref<2x16x16xf32, #tpu.memory_space<vmem>>, %arg2: memref<80x256xbf16, #tpu.memory_space<vmem>>, %arg3: memref<1x256xf32, #tpu.memory_space<vmem>>, %arg4: memref<768x256xbf16, #tpu.memory_space<vmem>>, %arg5: memref<1x256xf32, #tpu.memory_space<vmem>>, %arg6: memref<768x256xbf16, #tpu.memory_space<vmem>>, %arg7: memref<1x256xf32, #tpu.memory_space<vmem>>, %arg8: memref<768x256xbf16, #tpu.memory_space<vmem>>, %arg9: memref<1x256xf32, #tpu.memory_space<vmem>>, %arg10: memref<2x16x256xf32, #tpu.memory_space<vmem>>, %arg11: memref<40x16xf32, #tpu.memory_space<vmem>>, %arg12: memref<36x80xbf16, #tpu.memory_space<vmem>>, %arg13: memref<36x256xf32, #tpu.memory_space<vmem>>, %arg14: memref<34x768xbf16, #tpu.memory_space<vmem>>) attributes {dimension_semantics = [#tpu.dimension_semantics<parallel>], iteration_bounds = array<i64: 2>, scalar_prefetch = 0 : i64, scratch_operands = 4 : i64, tpu.core_type = #tpu.core_type<tc>, window_params = [{transform_indices = @transform_0, window_bounds = array<i64: 2, 16, 16>}, {pipeline_mode = #tpu.pipeline_mode<synchronous>, transform_indices = @transform_1, window_bounds = array<i64: 80, 256>}, {pipeline_mode = #tpu.pipeline_mode<synchronous>, transform_indices = @transform_2, window_bounds = array<i64: 1, 256>}, {pipeline_mode = #tpu.pipeline_mode<synchronous>, transform_indices = @transform_3, window_bounds = array<i64: 768, 256>}, {pipeline_mode = #tpu.pipeline_mode<synchronous>, transform_indices = @transform_4, window_bounds = array<i64: 1, 256>}, {pipeline_mode = #tpu.pipeline_mode<synchronous>, transform_indices = @transform_5, window_bounds = array<i64: 768, 256>}, {pipeline_mode = #tpu.pipeline_mode<synchronous>, transform_indices = @transform_6, window_bounds = array<i64: 1, 256>}, {pipeline_mode = #tpu.pipeline_mode<synchronous>, transform_indices = @transform_7, window_bounds = array<i64: 768, 256>}, {pipeline_mode = #tpu.pipeline_mode<synchronous>, transform_indices = @transform_8, window_bounds = array<i64: 1, 256>}, {transform_indices = @transform_9, window_bounds = array<i64: 2, 16, 256>}]} {
    %c0 = arith.constant 0 : index
    %c0_0 = arith.constant 0 : index
    %c0_1 = arith.constant 0 : index
    %0 = vector.load %arg1[%c0, %c0_0, %c0_1] : memref<2x16x16xf32, #tpu.memory_space<vmem>>, vector<1x16x16xf32>
    %1 = vector.shape_cast %0 : vector<1x16x16xf32> to vector<16x16xf32>
    %c2 = arith.constant 2 : index
    %c0_2 = arith.constant 0 : index
    %2 = vector.load %arg11[%c2, %c0_2] : memref<40x16xf32, #tpu.memory_space<vmem>>, vector<16x16xf32>
    tpu.vector_store %arg11[%c2, %c0_2], %1 {strides = array<i32>} : memref<40x16xf32, #tpu.memory_space<vmem>>, vector<16x16xf32>,
    %3 = vector.extract_strided_slice %1 {offsets = [2, 0], sizes = [1, 16], strides = [1, 1]} : vector<16x16xf32> to vector<1x16xf32>
    %c0_3 = arith.constant 0 : index
    %c0_4 = arith.constant 0 : index
    %4 = vector.load %arg11[%c0_3, %c0_4] : memref<40x16xf32, #tpu.memory_space<vmem>>, vector<1x16xf32>
    tpu.vector_store %arg11[%c0_3, %c0_4], %3 {strides = array<i32>} : memref<40x16xf32, #tpu.memory_space<vmem>>, vector<1x16xf32>,
    %5 = vector.extract_strided_slice %1 {offsets = [1, 0], sizes = [1, 16], strides = [1, 1]} : vector<16x16xf32> to vector<1x16xf32>
    %c1 = arith.constant 1 : index
    %c0_5 = arith.constant 0 : index
    %6 = vector.load %arg11[%c1, %c0_5] : memref<40x16xf32, #tpu.memory_space<vmem>>, vector<1x16xf32>
    tpu.vector_store %arg11[%c1, %c0_5], %5 {strides = array<i32>} : memref<40x16xf32, #tpu.memory_space<vmem>>, vector<1x16xf32>,
    %7 = vector.extract_strided_slice %1 {offsets = [14, 0], sizes = [1, 16], strides = [1, 1]} : vector<16x16xf32> to vector<1x16xf32>
    %c18 = arith.constant 18 : index
    %c0_6 = arith.constant 0 : index
    %8 = vector.load %arg11[%c18, %c0_6] : memref<40x16xf32, #tpu.memory_space<vmem>>, vector<1x16xf32>
    tpu.vector_store %arg11[%c18, %c0_6], %7 {strides = array<i32>} : memref<40x16xf32, #tpu.memory_space<vmem>>, vector<1x16xf32>,
    %9 = vector.extract_strided_slice %1 {offsets = [13, 0], sizes = [1, 16], strides = [1, 1]} : vector<16x16xf32> to vector<1x16xf32>
    %c19 = arith.constant 19 : index
    %c0_7 = arith.constant 0 : index
    %10 = vector.load %arg11[%c19, %c0_7] : memref<40x16xf32, #tpu.memory_space<vmem>>, vector<1x16xf32>
    tpu.vector_store %arg11[%c19, %c0_7], %9 {strides = array<i32>} : memref<40x16xf32, #tpu.memory_space<vmem>>, vector<1x16xf32>,
    %c1_8 = arith.constant 1 : index
    %c0_9 = arith.constant 0 : index
    %c0_10 = arith.constant 0 : index
    %11 = vector.load %arg1[%c1_8, %c0_9, %c0_10] : memref<2x16x16xf32, #tpu.memory_space<vmem>>, vector<1x16x16xf32>
    %12 = vector.shape_cast %11 : vector<1x16x16xf32> to vector<16x16xf32>
    %c22 = arith.constant 22 : index
    %c0_11 = arith.constant 0 : index
    %13 = vector.load %arg11[%c22, %c0_11] : memref<40x16xf32, #tpu.memory_space<vmem>>, vector<16x16xf32>
    tpu.vector_store %arg11[%c22, %c0_11], %12 {strides = array<i32>} : memref<40x16xf32, #tpu.memory_space<vmem>>, vector<16x16xf32>,
    %14 = vector.extract_strided_slice %12 {offsets = [2, 0], sizes = [1, 16], strides = [1, 1]} : vector<16x16xf32> to vector<1x16xf32>
    %c20 = arith.constant 20 : index
    %c0_12 = arith.constant 0 : index
    %15 = vector.load %arg11[%c20, %c0_12] : memref<40x16xf32, #tpu.memory_space<vmem>>, vector<1x16xf32>
    tpu.vector_store %arg11[%c20, %c0_12], %14 {strides = array<i32>} : memref<40x16xf32, #tpu.memory_space<vmem>>, vector<1x16xf32>,
    %16 = vector.extract_strided_slice %12 {offsets = [1, 0], sizes = [1, 16], strides = [1, 1]} : vector<16x16xf32> to vector<1x16xf32>
    %c21 = arith.constant 21 : index
    %c0_13 = arith.constant 0 : index
    %17 = vector.load %arg11[%c21, %c0_13] : memref<40x16xf32, #tpu.memory_space<vmem>>, vector<1x16xf32>
    tpu.vector_store %arg11[%c21, %c0_13], %16 {strides = array<i32>} : memref<40x16xf32, #tpu.memory_space<vmem>>, vector<1x16xf32>,
    %18 = vector.extract_strided_slice %12 {offsets = [14, 0], sizes = [1, 16], strides = [1, 1]} : vector<16x16xf32> to vector<1x16xf32>
    %c38 = arith.constant 38 : index
    %c0_14 = arith.constant 0 : index
    %19 = vector.load %arg11[%c38, %c0_14] : memref<40x16xf32, #tpu.memory_space<vmem>>, vector<1x16xf32>
    tpu.vector_store %arg11[%c38, %c0_14], %18 {strides = array<i32>} : memref<40x16xf32, #tpu.memory_space<vmem>>, vector<1x16xf32>,
    %20 = vector.extract_strided_slice %12 {offsets = [13, 0], sizes = [1, 16], strides = [1, 1]} : vector<16x16xf32> to vector<1x16xf32>
    %c39 = arith.constant 39 : index
    %c0_15 = arith.constant 0 : index
    %21 = vector.load %arg11[%c39, %c0_15] : memref<40x16xf32, #tpu.memory_space<vmem>>, vector<1x16xf32>
    tpu.vector_store %arg11[%c39, %c0_15], %20 {strides = array<i32>} : memref<40x16xf32, #tpu.memory_space<vmem>>, vector<1x16xf32>,
    %c0_16 = arith.constant 0 : index
    %c0_17 = arith.constant 0 : index
    %22 = vector.load %arg11[%c0_16, %c0_17] : memref<40x16xf32, #tpu.memory_space<vmem>>, vector<36x16xf32>
    %23 = arith.truncf %22 : vector<36x16xf32> to vector<36x16xbf16>
    %c0_18 = arith.constant 0 : index
    %c0_19 = arith.constant 0 : index
    %24 = vector.load %arg12[%c0_18, %c0_19] : memref<36x80xbf16, #tpu.memory_space<vmem>>, vector<36x16xbf16>
    tpu.vector_store %arg12[%c0_18, %c0_19], %23 {strides = array<i32>} : memref<36x80xbf16, #tpu.memory_space<vmem>>, vector<36x16xbf16>,
    %c1_20 = arith.constant 1 : index
    %c0_21 = arith.constant 0 : index
    %25 = vector.load %arg11[%c1_20, %c0_21] : memref<40x16xf32, #tpu.memory_space<vmem>>, vector<36x16xf32>
    %26 = arith.truncf %25 : vector<36x16xf32> to vector<36x16xbf16>
    %c0_22 = arith.constant 0 : index
    %c16 = arith.constant 16 : index
    %27 = vector.load %arg12[%c0_22, %c16] : memref<36x80xbf16, #tpu.memory_space<vmem>>, vector<36x16xbf16>
    tpu.vector_store %arg12[%c0_22, %c16], %26 {strides = array<i32>} : memref<36x80xbf16, #tpu.memory_space<vmem>>, vector<36x16xbf16>,
    %c2_23 = arith.constant 2 : index
    %c0_24 = arith.constant 0 : index
    %28 = vector.load %arg11[%c2_23, %c0_24] : memref<40x16xf32, #tpu.memory_space<vmem>>, vector<36x16xf32>
    %29 = arith.truncf %28 : vector<36x16xf32> to vector<36x16xbf16>
    %c0_25 = arith.constant 0 : index
    %c32 = arith.constant 32 : index
    %30 = vector.load %arg12[%c0_25, %c32] : memref<36x80xbf16, #tpu.memory_space<vmem>>, vector<36x16xbf16>
    tpu.vector_store %arg12[%c0_25, %c32], %29 {strides = array<i32>} : memref<36x80xbf16, #tpu.memory_space<vmem>>, vector<36x16xbf16>,
    %c3 = arith.constant 3 : index
    %c0_26 = arith.constant 0 : index
    %31 = vector.load %arg11[%c3, %c0_26] : memref<40x16xf32, #tpu.memory_space<vmem>>, vector<36x16xf32>
    %32 = arith.truncf %31 : vector<36x16xf32> to vector<36x16xbf16>
    %c0_27 = arith.constant 0 : index
    %c48 = arith.constant 48 : index
    %33 = vector.load %arg12[%c0_27, %c48] : memref<36x80xbf16, #tpu.memory_space<vmem>>, vector<36x16xbf16>
    tpu.vector_store %arg12[%c0_27, %c48], %32 {strides = array<i32>} : memref<36x80xbf16, #tpu.memory_space<vmem>>, vector<36x16xbf16>,
    %c4 = arith.constant 4 : index
    %c0_28 = arith.constant 0 : index
    %34 = vector.load %arg11[%c4, %c0_28] : memref<40x16xf32, #tpu.memory_space<vmem>>, vector<36x16xf32>
    %35 = arith.truncf %34 : vector<36x16xf32> to vector<36x16xbf16>
    %c0_29 = arith.constant 0 : index
    %c64 = arith.constant 64 : index
    %36 = vector.load %arg12[%c0_29, %c64] : memref<36x80xbf16, #tpu.memory_space<vmem>>, vector<36x16xbf16>
    tpu.vector_store %arg12[%c0_29, %c64], %35 {strides = array<i32>} : memref<36x80xbf16, #tpu.memory_space<vmem>>, vector<36x16xbf16>,
    %c0_30 = arith.constant 0 : index
    %c0_31 = arith.constant 0 : index
    %37 = vector.load %arg12[%c0_30, %c0_31] : memref<36x80xbf16, #tpu.memory_space<vmem>>, vector<36x80xbf16>
    %c0_32 = arith.constant 0 : index
    %c0_33 = arith.constant 0 : index
    %38 = vector.load %arg2[%c0_32, %c0_33] : memref<80x256xbf16, #tpu.memory_space<vmem>>, vector<80x256xbf16>
    %cst = arith.constant dense<0.000000e+00> : vector<36x256xf32>
    %39 = tpu.matmul %37, %38, %cst {dimension_numbers = #tpu.dot_dimension_numbers<[1], [0], [0], [1], [0, 0, 1, 1], [], []>} : vector<36x80xbf16>, vector<80x256xbf16>, vector<36x256xf32> -> vector<36x256xf32>
    %c0_34 = arith.constant 0 : index
    %c0_35 = arith.constant 0 : index
    %40 = vector.load %arg3[%c0_34, %c0_35] : memref<1x256xf32, #tpu.memory_space<vmem>>, vector<1x256xf32>
    %41 = vector.broadcast %40 : vector<1x256xf32> to vector<36x256xf32>
    %42 = arith.addf %39, %41 : vector<36x256xf32>
    %cst_36 = arith.constant 0.000000e+00 : f32
    %43 = vector.broadcast %cst_36 : f32 to vector<36x256xf32>
    %44 = arith.maximumf %42, %43 : vector<36x256xf32>
    %45 = vector.extract_strided_slice %44 {offsets = [0, 0], sizes = [16, 256], strides = [1, 1]} : vector<36x256xf32> to vector<16x256xf32>
    %c1_37 = arith.constant 1 : index
    %c0_38 = arith.constant 0 : index
    %46 = vector.load %arg13[%c1_37, %c0_38] : memref<36x256xf32, #tpu.memory_space<vmem>>, vector<16x256xf32>
    tpu.vector_store %arg13[%c1_37, %c0_38], %45 {strides = array<i32>} : memref<36x256xf32, #tpu.memory_space<vmem>>, vector<16x256xf32>,
    %47 = vector.extract_strided_slice %45 {offsets = [1, 0], sizes = [1, 256], strides = [1, 1]} : vector<16x256xf32> to vector<1x256xf32>
    %c0_39 = arith.constant 0 : index
    %c0_40 = arith.constant 0 : index
    %48 = vector.load %arg13[%c0_39, %c0_40] : memref<36x256xf32, #tpu.memory_space<vmem>>, vector<1x256xf32>
    tpu.vector_store %arg13[%c0_39, %c0_40], %47 {strides = array<i32>} : memref<36x256xf32, #tpu.memory_space<vmem>>, vector<1x256xf32>,
    %49 = vector.extract_strided_slice %45 {offsets = [14, 0], sizes = [1, 256], strides = [1, 1]} : vector<16x256xf32> to vector<1x256xf32>
    %c17 = arith.constant 17 : index
    %c0_41 = arith.constant 0 : index
    %50 = vector.load %arg13[%c17, %c0_41] : memref<36x256xf32, #tpu.memory_space<vmem>>, vector<1x256xf32>
    tpu.vector_store %arg13[%c17, %c0_41], %49 {strides = array<i32>} : memref<36x256xf32, #tpu.memory_space<vmem>>, vector<1x256xf32>,
    %51 = vector.extract_strided_slice %44 {offsets = [20, 0], sizes = [16, 256], strides = [1, 1]} : vector<36x256xf32> to vector<16x256xf32>
    %c19_42 = arith.constant 19 : index
    %c0_43 = arith.constant 0 : index
    %52 = vector.load %arg13[%c19_42, %c0_43] : memref<36x256xf32, #tpu.memory_space<vmem>>, vector<16x256xf32>
    tpu.vector_store %arg13[%c19_42, %c0_43], %51 {strides = array<i32>} : memref<36x256xf32, #tpu.memory_space<vmem>>, vector<16x256xf32>,
    %53 = vector.extract_strided_slice %51 {offsets = [1, 0], sizes = [1, 256], strides = [1, 1]} : vector<16x256xf32> to vector<1x256xf32>
    %c18_44 = arith.constant 18 : index
    %c0_45 = arith.constant 0 : index
    %54 = vector.load %arg13[%c18_44, %c0_45] : memref<36x256xf32, #tpu.memory_space<vmem>>, vector<1x256xf32>
    tpu.vector_store %arg13[%c18_44, %c0_45], %53 {strides = array<i32>} : memref<36x256xf32, #tpu.memory_space<vmem>>, vector<1x256xf32>,
    %55 = vector.extract_strided_slice %51 {offsets = [14, 0], sizes = [1, 256], strides = [1, 1]} : vector<16x256xf32> to vector<1x256xf32>
    %c35 = arith.constant 35 : index
    %c0_46 = arith.constant 0 : index
    %56 = vector.load %arg13[%c35, %c0_46] : memref<36x256xf32, #tpu.memory_space<vmem>>, vector<1x256xf32>
    tpu.vector_store %arg13[%c35, %c0_46], %55 {strides = array<i32>} : memref<36x256xf32, #tpu.memory_space<vmem>>, vector<1x256xf32>,
    %c0_47 = arith.constant 0 : index
    %c0_48 = arith.constant 0 : index
    %57 = vector.load %arg13[%c0_47, %c0_48] : memref<36x256xf32, #tpu.memory_space<vmem>>, vector<34x256xf32>
    %58 = arith.truncf %57 : vector<34x256xf32> to vector<34x256xbf16>
    %c0_49 = arith.constant 0 : index
    %c0_50 = arith.constant 0 : index
    %59 = vector.load %arg14[%c0_49, %c0_50] : memref<34x768xbf16, #tpu.memory_space<vmem>>, vector<34x256xbf16>
    tpu.vector_store %arg14[%c0_49, %c0_50], %58 {strides = array<i32>} : memref<34x768xbf16, #tpu.memory_space<vmem>>, vector<34x256xbf16>,
    %c1_51 = arith.constant 1 : index
    %c0_52 = arith.constant 0 : index
    %60 = vector.load %arg13[%c1_51, %c0_52] : memref<36x256xf32, #tpu.memory_space<vmem>>, vector<34x256xf32>
    %61 = arith.truncf %60 : vector<34x256xf32> to vector<34x256xbf16>
    %c0_53 = arith.constant 0 : index
    %c256 = arith.constant 256 : index
    %62 = vector.load %arg14[%c0_53, %c256] : memref<34x768xbf16, #tpu.memory_space<vmem>>, vector<34x256xbf16>
    tpu.vector_store %arg14[%c0_53, %c256], %61 {strides = array<i32>} : memref<34x768xbf16, #tpu.memory_space<vmem>>, vector<34x256xbf16>,
    %c2_54 = arith.constant 2 : index
    %c0_55 = arith.constant 0 : index
    %63 = vector.load %arg13[%c2_54, %c0_55] : memref<36x256xf32, #tpu.memory_space<vmem>>, vector<34x256xf32>
    %64 = arith.truncf %63 : vector<34x256xf32> to vector<34x256xbf16>
    %c0_56 = arith.constant 0 : index
    %c512 = arith.constant 512 : index
    %65 = vector.load %arg14[%c0_56, %c512] : memref<34x768xbf16, #tpu.memory_space<vmem>>, vector<34x256xbf16>
    tpu.vector_store %arg14[%c0_56, %c512], %64 {strides = array<i32>} : memref<34x768xbf16, #tpu.memory_space<vmem>>, vector<34x256xbf16>,
    %c0_57 = arith.constant 0 : index
    %c0_58 = arith.constant 0 : index
    %66 = vector.load %arg14[%c0_57, %c0_58] : memref<34x768xbf16, #tpu.memory_space<vmem>>, vector<34x768xbf16>
    %c0_59 = arith.constant 0 : index
    %c0_60 = arith.constant 0 : index
    %67 = vector.load %arg4[%c0_59, %c0_60] : memref<768x256xbf16, #tpu.memory_space<vmem>>, vector<768x256xbf16>
    %cst_61 = arith.constant dense<0.000000e+00> : vector<34x256xf32>
    %68 = tpu.matmul %66, %67, %cst_61 {dimension_numbers = #tpu.dot_dimension_numbers<[1], [0], [0], [1], [0, 0, 1, 1], [], []>} : vector<34x768xbf16>, vector<768x256xbf16>, vector<34x256xf32> -> vector<34x256xf32>
    %c0_62 = arith.constant 0 : index
    %c0_63 = arith.constant 0 : index
    %69 = vector.load %arg5[%c0_62, %c0_63] : memref<1x256xf32, #tpu.memory_space<vmem>>, vector<1x256xf32>
    %70 = vector.broadcast %69 : vector<1x256xf32> to vector<34x256xf32>
    %71 = arith.addf %68, %70 : vector<34x256xf32>
    %cst_64 = arith.constant 0.000000e+00 : f32
    %72 = vector.broadcast %cst_64 : f32 to vector<34x256xf32>
    %73 = arith.maximumf %71, %72 : vector<34x256xf32>
    %74 = vector.extract_strided_slice %73 {offsets = [0, 0], sizes = [16, 256], strides = [1, 1]} : vector<34x256xf32> to vector<16x256xf32>
    %c1_65 = arith.constant 1 : index
    %c0_66 = arith.constant 0 : index
    %75 = vector.load %arg13[%c1_65, %c0_66] : memref<36x256xf32, #tpu.memory_space<vmem>>, vector<16x256xf32>
    tpu.vector_store %arg13[%c1_65, %c0_66], %74 {strides = array<i32>} : memref<36x256xf32, #tpu.memory_space<vmem>>, vector<16x256xf32>,
    %76 = vector.extract_strided_slice %74 {offsets = [1, 0], sizes = [1, 256], strides = [1, 1]} : vector<16x256xf32> to vector<1x256xf32>
    %c0_67 = arith.constant 0 : index
    %c0_68 = arith.constant 0 : index
    %77 = vector.load %arg13[%c0_67, %c0_68] : memref<36x256xf32, #tpu.memory_space<vmem>>, vector<1x256xf32>
    tpu.vector_store %arg13[%c0_67, %c0_68], %76 {strides = array<i32>} : memref<36x256xf32, #tpu.memory_space<vmem>>, vector<1x256xf32>,
    %78 = vector.extract_strided_slice %74 {offsets = [14, 0], sizes = [1, 256], strides = [1, 1]} : vector<16x256xf32> to vector<1x256xf32>
    %c17_69 = arith.constant 17 : index
    %c0_70 = arith.constant 0 : index
    %79 = vector.load %arg13[%c17_69, %c0_70] : memref<36x256xf32, #tpu.memory_space<vmem>>, vector<1x256xf32>
    tpu.vector_store %arg13[%c17_69, %c0_70], %78 {strides = array<i32>} : memref<36x256xf32, #tpu.memory_space<vmem>>, vector<1x256xf32>,
    %80 = vector.extract_strided_slice %73 {offsets = [18, 0], sizes = [16, 256], strides = [1, 1]} : vector<34x256xf32> to vector<16x256xf32>
    %c19_71 = arith.constant 19 : index
    %c0_72 = arith.constant 0 : index
    %81 = vector.load %arg13[%c19_71, %c0_72] : memref<36x256xf32, #tpu.memory_space<vmem>>, vector<16x256xf32>
    tpu.vector_store %arg13[%c19_71, %c0_72], %80 {strides = array<i32>} : memref<36x256xf32, #tpu.memory_space<vmem>>, vector<16x256xf32>,
    %82 = vector.extract_strided_slice %80 {offsets = [1, 0], sizes = [1, 256], strides = [1, 1]} : vector<16x256xf32> to vector<1x256xf32>
    %c18_73 = arith.constant 18 : index
    %c0_74 = arith.constant 0 : index
    %83 = vector.load %arg13[%c18_73, %c0_74] : memref<36x256xf32, #tpu.memory_space<vmem>>, vector<1x256xf32>
    tpu.vector_store %arg13[%c18_73, %c0_74], %82 {strides = array<i32>} : memref<36x256xf32, #tpu.memory_space<vmem>>, vector<1x256xf32>,
    %84 = vector.extract_strided_slice %80 {offsets = [14, 0], sizes = [1, 256], strides = [1, 1]} : vector<16x256xf32> to vector<1x256xf32>
    %c35_75 = arith.constant 35 : index
    %c0_76 = arith.constant 0 : index
    %85 = vector.load %arg13[%c35_75, %c0_76] : memref<36x256xf32, #tpu.memory_space<vmem>>, vector<1x256xf32>
    tpu.vector_store %arg13[%c35_75, %c0_76], %84 {strides = array<i32>} : memref<36x256xf32, #tpu.memory_space<vmem>>, vector<1x256xf32>,
    %c0_77 = arith.constant 0 : index
    %c0_78 = arith.constant 0 : index
    %86 = vector.load %arg13[%c0_77, %c0_78] : memref<36x256xf32, #tpu.memory_space<vmem>>, vector<34x256xf32>
    %87 = arith.truncf %86 : vector<34x256xf32> to vector<34x256xbf16>
    %c0_79 = arith.constant 0 : index
    %c0_80 = arith.constant 0 : index
    %88 = vector.load %arg14[%c0_79, %c0_80] : memref<34x768xbf16, #tpu.memory_space<vmem>>, vector<34x256xbf16>
    tpu.vector_store %arg14[%c0_79, %c0_80], %87 {strides = array<i32>} : memref<34x768xbf16, #tpu.memory_space<vmem>>, vector<34x256xbf16>,
    %c1_81 = arith.constant 1 : index
    %c0_82 = arith.constant 0 : index
    %89 = vector.load %arg13[%c1_81, %c0_82] : memref<36x256xf32, #tpu.memory_space<vmem>>, vector<34x256xf32>
    %90 = arith.truncf %89 : vector<34x256xf32> to vector<34x256xbf16>
    %c0_83 = arith.constant 0 : index
    %c256_84 = arith.constant 256 : index
    %91 = vector.load %arg14[%c0_83, %c256_84] : memref<34x768xbf16, #tpu.memory_space<vmem>>, vector<34x256xbf16>
    tpu.vector_store %arg14[%c0_83, %c256_84], %90 {strides = array<i32>} : memref<34x768xbf16, #tpu.memory_space<vmem>>, vector<34x256xbf16>,
    %c2_85 = arith.constant 2 : index
    %c0_86 = arith.constant 0 : index
    %92 = vector.load %arg13[%c2_85, %c0_86] : memref<36x256xf32, #tpu.memory_space<vmem>>, vector<34x256xf32>
    %93 = arith.truncf %92 : vector<34x256xf32> to vector<34x256xbf16>
    %c0_87 = arith.constant 0 : index
    %c512_88 = arith.constant 512 : index
    %94 = vector.load %arg14[%c0_87, %c512_88] : memref<34x768xbf16, #tpu.memory_space<vmem>>, vector<34x256xbf16>
    tpu.vector_store %arg14[%c0_87, %c512_88], %93 {strides = array<i32>} : memref<34x768xbf16, #tpu.memory_space<vmem>>, vector<34x256xbf16>,
    %c0_89 = arith.constant 0 : index
    %c0_90 = arith.constant 0 : index
    %95 = vector.load %arg14[%c0_89, %c0_90] : memref<34x768xbf16, #tpu.memory_space<vmem>>, vector<34x768xbf16>
    %c0_91 = arith.constant 0 : index
    %c0_92 = arith.constant 0 : index
    %96 = vector.load %arg6[%c0_91, %c0_92] : memref<768x256xbf16, #tpu.memory_space<vmem>>, vector<768x256xbf16>
    %cst_93 = arith.constant dense<0.000000e+00> : vector<34x256xf32>
    %97 = tpu.matmul %95, %96, %cst_93 {dimension_numbers = #tpu.dot_dimension_numbers<[1], [0], [0], [1], [0, 0, 1, 1], [], []>} : vector<34x768xbf16>, vector<768x256xbf16>, vector<34x256xf32> -> vector<34x256xf32>
    %c0_94 = arith.constant 0 : index
    %c0_95 = arith.constant 0 : index
    %98 = vector.load %arg7[%c0_94, %c0_95] : memref<1x256xf32, #tpu.memory_space<vmem>>, vector<1x256xf32>
    %99 = vector.broadcast %98 : vector<1x256xf32> to vector<34x256xf32>
    %100 = arith.addf %97, %99 : vector<34x256xf32>
    %cst_96 = arith.constant 0.000000e+00 : f32
    %101 = vector.broadcast %cst_96 : f32 to vector<34x256xf32>
    %102 = arith.maximumf %100, %101 : vector<34x256xf32>
    %103 = vector.extract_strided_slice %102 {offsets = [0, 0], sizes = [16, 256], strides = [1, 1]} : vector<34x256xf32> to vector<16x256xf32>
    %c1_97 = arith.constant 1 : index
    %c0_98 = arith.constant 0 : index
    %104 = vector.load %arg13[%c1_97, %c0_98] : memref<36x256xf32, #tpu.memory_space<vmem>>, vector<16x256xf32>
    tpu.vector_store %arg13[%c1_97, %c0_98], %103 {strides = array<i32>} : memref<36x256xf32, #tpu.memory_space<vmem>>, vector<16x256xf32>,
    %105 = vector.extract_strided_slice %103 {offsets = [1, 0], sizes = [1, 256], strides = [1, 1]} : vector<16x256xf32> to vector<1x256xf32>
    %c0_99 = arith.constant 0 : index
    %c0_100 = arith.constant 0 : index
    %106 = vector.load %arg13[%c0_99, %c0_100] : memref<36x256xf32, #tpu.memory_space<vmem>>, vector<1x256xf32>
    tpu.vector_store %arg13[%c0_99, %c0_100], %105 {strides = array<i32>} : memref<36x256xf32, #tpu.memory_space<vmem>>, vector<1x256xf32>,
    %107 = vector.extract_strided_slice %103 {offsets = [14, 0], sizes = [1, 256], strides = [1, 1]} : vector<16x256xf32> to vector<1x256xf32>
    %c17_101 = arith.constant 17 : index
    %c0_102 = arith.constant 0 : index
    %108 = vector.load %arg13[%c17_101, %c0_102] : memref<36x256xf32, #tpu.memory_space<vmem>>, vector<1x256xf32>
    tpu.vector_store %arg13[%c17_101, %c0_102], %107 {strides = array<i32>} : memref<36x256xf32, #tpu.memory_space<vmem>>, vector<1x256xf32>,
    %109 = vector.extract_strided_slice %102 {offsets = [18, 0], sizes = [16, 256], strides = [1, 1]} : vector<34x256xf32> to vector<16x256xf32>
    %c19_103 = arith.constant 19 : index
    %c0_104 = arith.constant 0 : index
    %110 = vector.load %arg13[%c19_103, %c0_104] : memref<36x256xf32, #tpu.memory_space<vmem>>, vector<16x256xf32>
    tpu.vector_store %arg13[%c19_103, %c0_104], %109 {strides = array<i32>} : memref<36x256xf32, #tpu.memory_space<vmem>>, vector<16x256xf32>,
    %111 = vector.extract_strided_slice %109 {offsets = [1, 0], sizes = [1, 256], strides = [1, 1]} : vector<16x256xf32> to vector<1x256xf32>
    %c18_105 = arith.constant 18 : index
    %c0_106 = arith.constant 0 : index
    %112 = vector.load %arg13[%c18_105, %c0_106] : memref<36x256xf32, #tpu.memory_space<vmem>>, vector<1x256xf32>
    tpu.vector_store %arg13[%c18_105, %c0_106], %111 {strides = array<i32>} : memref<36x256xf32, #tpu.memory_space<vmem>>, vector<1x256xf32>,
    %113 = vector.extract_strided_slice %109 {offsets = [14, 0], sizes = [1, 256], strides = [1, 1]} : vector<16x256xf32> to vector<1x256xf32>
    %c35_107 = arith.constant 35 : index
    %c0_108 = arith.constant 0 : index
    %114 = vector.load %arg13[%c35_107, %c0_108] : memref<36x256xf32, #tpu.memory_space<vmem>>, vector<1x256xf32>
    tpu.vector_store %arg13[%c35_107, %c0_108], %113 {strides = array<i32>} : memref<36x256xf32, #tpu.memory_space<vmem>>, vector<1x256xf32>,
    %c0_109 = arith.constant 0 : index
    %c0_110 = arith.constant 0 : index
    %115 = vector.load %arg13[%c0_109, %c0_110] : memref<36x256xf32, #tpu.memory_space<vmem>>, vector<34x256xf32>
    %116 = arith.truncf %115 : vector<34x256xf32> to vector<34x256xbf16>
    %c0_111 = arith.constant 0 : index
    %c0_112 = arith.constant 0 : index
    %117 = vector.load %arg14[%c0_111, %c0_112] : memref<34x768xbf16, #tpu.memory_space<vmem>>, vector<34x256xbf16>
    tpu.vector_store %arg14[%c0_111, %c0_112], %116 {strides = array<i32>} : memref<34x768xbf16, #tpu.memory_space<vmem>>, vector<34x256xbf16>,
    %c1_113 = arith.constant 1 : index
    %c0_114 = arith.constant 0 : index
    %118 = vector.load %arg13[%c1_113, %c0_114] : memref<36x256xf32, #tpu.memory_space<vmem>>, vector<34x256xf32>
    %119 = arith.truncf %118 : vector<34x256xf32> to vector<34x256xbf16>
    %c0_115 = arith.constant 0 : index
    %c256_116 = arith.constant 256 : index
    %120 = vector.load %arg14[%c0_115, %c256_116] : memref<34x768xbf16, #tpu.memory_space<vmem>>, vector<34x256xbf16>
    tpu.vector_store %arg14[%c0_115, %c256_116], %119 {strides = array<i32>} : memref<34x768xbf16, #tpu.memory_space<vmem>>, vector<34x256xbf16>,
    %c2_117 = arith.constant 2 : index
    %c0_118 = arith.constant 0 : index
    %121 = vector.load %arg13[%c2_117, %c0_118] : memref<36x256xf32, #tpu.memory_space<vmem>>, vector<34x256xf32>
    %122 = arith.truncf %121 : vector<34x256xf32> to vector<34x256xbf16>
    %c0_119 = arith.constant 0 : index
    %c512_120 = arith.constant 512 : index
    %123 = vector.load %arg14[%c0_119, %c512_120] : memref<34x768xbf16, #tpu.memory_space<vmem>>, vector<34x256xbf16>
    tpu.vector_store %arg14[%c0_119, %c512_120], %122 {strides = array<i32>} : memref<34x768xbf16, #tpu.memory_space<vmem>>, vector<34x256xbf16>,
    %c0_121 = arith.constant 0 : index
    %c0_122 = arith.constant 0 : index
    %124 = vector.load %arg14[%c0_121, %c0_122] : memref<34x768xbf16, #tpu.memory_space<vmem>>, vector<34x768xbf16>
    %c0_123 = arith.constant 0 : index
    %c0_124 = arith.constant 0 : index
    %125 = vector.load %arg8[%c0_123, %c0_124] : memref<768x256xbf16, #tpu.memory_space<vmem>>, vector<768x256xbf16>
    %cst_125 = arith.constant dense<0.000000e+00> : vector<34x256xf32>
    %126 = tpu.matmul %124, %125, %cst_125 {dimension_numbers = #tpu.dot_dimension_numbers<[1], [0], [0], [1], [0, 0, 1, 1], [], []>} : vector<34x768xbf16>, vector<768x256xbf16>, vector<34x256xf32> -> vector<34x256xf32>
    %c0_126 = arith.constant 0 : index
    %c0_127 = arith.constant 0 : index
    %127 = vector.load %arg9[%c0_126, %c0_127] : memref<1x256xf32, #tpu.memory_space<vmem>>, vector<1x256xf32>
    %128 = vector.broadcast %127 : vector<1x256xf32> to vector<34x256xf32>
    %129 = arith.addf %126, %128 : vector<34x256xf32>
    %cst_128 = arith.constant 0.000000e+00 : f32
    %130 = vector.broadcast %cst_128 : f32 to vector<34x256xf32>
    %131 = arith.maximumf %129, %130 : vector<34x256xf32>
    %132 = vector.extract_strided_slice %131 {offsets = [0, 0], sizes = [16, 256], strides = [1, 1]} : vector<34x256xf32> to vector<16x256xf32>
    %c0_129 = arith.constant 0 : index
    %c0_130 = arith.constant 0 : index
    %c0_131 = arith.constant 0 : index
    %133 = vector.load %arg10[%c0_129, %c0_130, %c0_131] : memref<2x16x256xf32, #tpu.memory_space<vmem>>, vector<1x16x256xf32>
    %134 = vector.shape_cast %133 : vector<1x16x256xf32> to vector<16x256xf32>
    %135 = vector.shape_cast %132 : vector<16x256xf32> to vector<1x16x256xf32>
    tpu.vector_store %arg10[%c0_129, %c0_130, %c0_131], %135 {strides = array<i32>} : memref<2x16x256xf32, #tpu.memory_space<vmem>>, vector<1x16x256xf32>,
    %136 = vector.extract_strided_slice %131 {offsets = [18, 0], sizes = [16, 256], strides = [1, 1]} : vector<34x256xf32> to vector<16x256xf32>
    %c1_132 = arith.constant 1 : index
    %c0_133 = arith.constant 0 : index
    %c0_134 = arith.constant 0 : index
    %137 = vector.load %arg10[%c1_132, %c0_133, %c0_134] : memref<2x16x256xf32, #tpu.memory_space<vmem>>, vector<1x16x256xf32>
    %138 = vector.shape_cast %137 : vector<1x16x256xf32> to vector<16x256xf32>
    %139 = vector.shape_cast %136 : vector<16x256xf32> to vector<1x16x256xf32>
    tpu.vector_store %arg10[%c1_132, %c0_133, %c0_134], %139 {strides = array<i32>} : memref<2x16x256xf32, #tpu.memory_space<vmem>>, vector<1x16x256xf32>,
    return
  }
  func.func @transform_0(%arg0: i32) -> (i32, i32, i32) {
    %c0_i32 = arith.constant 0 : i32
    %c0_i32_0 = arith.constant 0 : i32
    %c0_i32_1 = arith.constant 0 : i32
    return %arg0, %c0_i32, %c0_i32_0 : i32, i32, i32
  }
  func.func @transform_1(%arg0: i32) -> (i32, i32) {
    %c0_i32 = arith.constant 0 : i32
    %c0_i32_0 = arith.constant 0 : i32
    %c0_i32_1 = arith.constant 0 : i32
    return %c0_i32, %c0_i32_0 : i32, i32
  }
  func.func @transform_2(%arg0: i32) -> (i32, i32) {
    %c0_i32 = arith.constant 0 : i32
    %c0_i32_0 = arith.constant 0 : i32
    %c0_i32_1 = arith.constant 0 : i32
    return %c0_i32, %c0_i32_0 : i32, i32
  }
  func.func @transform_3(%arg0: i32) -> (i32, i32) {
    %c0_i32 = arith.constant 0 : i32
    %c0_i32_0 = arith.constant 0 : i32
    %c0_i32_1 = arith.constant 0 : i32
    return %c0_i32, %c0_i32_0 : i32, i32
  }
  func.func @transform_4(%arg0: i32) -> (i32, i32) {
    %c0_i32 = arith.constant 0 : i32
    %c0_i32_0 = arith.constant 0 : i32
    %c0_i32_1 = arith.constant 0 : i32
    return %c0_i32, %c0_i32_0 : i32, i32
  }
  func.func @transform_5(%arg0: i32) -> (i32, i32) {
    %c0_i32 = arith.constant 0 : i32
    %c0_i32_0 = arith.constant 0 : i32
    %c0_i32_1 = arith.constant 0 : i32
    return %c0_i32, %c0_i32_0 : i32, i32
  }
  func.func @transform_6(%arg0: i32) -> (i32, i32) {
    %c0_i32 = arith.constant 0 : i32
    %c0_i32_0 = arith.constant 0 : i32
    %c0_i32_1 = arith.constant 0 : i32
    return %c0_i32, %c0_i32_0 : i32, i32
  }
  func.func @transform_7(%arg0: i32) -> (i32, i32) {
    %c0_i32 = arith.constant 0 : i32
    %c0_i32_0 = arith.constant 0 : i32
    %c0_i32_1 = arith.constant 0 : i32
    return %c0_i32, %c0_i32_0 : i32, i32
  }
  func.func @transform_8(%arg0: i32) -> (i32, i32) {
    %c0_i32 = arith.constant 0 : i32
    %c0_i32_0 = arith.constant 0 : i32
    %c0_i32_1 = arith.constant 0 : i32
    return %c0_i32, %c0_i32_0 : i32, i32
  }
  func.func @transform_9(%arg0: i32) -> (i32, i32, i32) {
    %c0_i32 = arith.constant 0 : i32
    %c0_i32_0 = arith.constant 0 : i32
    %c0_i32_1 = arith.constant 0 : i32
    return %arg0, %c0_i32, %c0_i32_0 : i32, i32, i32
  }
}

</mosaic_0001>

<llo_original>
// kernel: features4layer_forward.1
$region0: #{features4layer_forward.1}
  #allocation0 [shape = 'u32[]', space=smem, size = 0x4, offset = 0x4, fixed_abs, tag = 'smem constant byte address 0x4 - core index']
  #allocation1 [shape = 'u32[144,128]{1,0:T(1,128)}', space=vmem, size = 0x12000, scoped, tag = 'internal scratch']
  #allocation2 [shape = 'f32[40,16]{1,0:T(8,128)}', space=vmem, size = 0x5000, scoped, tag = 'scratch operand']
  #allocation3 [shape = 'bf16[36,80]{1,0:T(8,128)(2,1)}', space=vmem, size = 0x2800, scoped, tag = 'scratch operand']
  #allocation4 [shape = 'f32[36,256]{1,0:T(8,128)}', space=vmem, size = 0xa000, scoped, tag = 'scratch operand']
  #allocation5 [shape = 'bf16[34,768]{1,0:T(8,128)(2,1)}', space=vmem, size = 0xf000, scoped, tag = 'scratch operand']
  %s0 = inlined_call_operand.hbm [shape: f32[4,16,16], index: 0, kind: input, shape index: {}]
  %s1 = inlined_call_operand.hbm [shape: bf16[80,256], index: 1, kind: input, shape index: {}]
  %s2 = inlined_call_operand.vmem [shape: f32[1,256], index: 2, kind: input, shape index: {}]
  %s3 = inlined_call_operand.hbm [shape: bf16[768,256], index: 3, kind: input, shape index: {}]
  %s4 = inlined_call_operand.vmem [shape: f32[1,256], index: 4, kind: input, shape index: {}]
  %s5 = inlined_call_operand.hbm [shape: bf16[768,256], index: 5, kind: input, shape index: {}]
  %s6 = inlined_call_operand.vmem [shape: f32[1,256], index: 6, kind: input, shape index: {}]
  %s7 = inlined_call_operand.hbm [shape: bf16[768,256], index: 7, kind: input, shape index: {}]
  %s8 = inlined_call_operand.vmem [shape: f32[1,256], index: 8, kind: input, shape index: {}]
  %s9 = inlined_call_operand.vmem [shape: f32[4,16,256], index: 9, kind: output, shape index: {}]
  %s10 = sld [smem:[#allocation0]]
  $region89: #{features4layer_forward.1} parent=0
    _
  %s12 = ssub.s32 1, %s10
  %s13 = scalar_select 0, %s12, %s10
  $region1: #{features4layer_forward.1} parent=0
    #allocation6 [shape = 'u8[32768]{0}', space=vmem, size = 0x8000, scoped, tag = 'input window, operand 0']
    #allocation7 [shape = 's32[2]{0}', space=sflag, size = 0x8, scoped, tag = 'scoped memory for features4layer_forward.1']
    #allocation8 [shape = 'u8[40960]{0}', space=vmem, size = 0xa000, scoped, tag = 'input window, operand 1, single buffered']
    #allocation9 [shape = 's32[1]{0}', space=sflag, size = 0x4, scoped, tag = 'scoped memory for features4layer_forward.1']
    #allocation10 [shape = 'u8[393216]{0}', space=vmem, size = 0x60000, scoped, tag = 'input window, operand 3, single buffered']
    #allocation11 [shape = 'u8[393216]{0}', space=vmem, size = 0x60000, scoped, tag = 'input window, operand 5, single buffered']
    #allocation12 [shape = 's32[1]{0}', space=sflag, size = 0x4, scoped, tag = 'scoped memory for features4layer_forward.1']
    #allocation13 [shape = 'u8[393216]{0}', space=vmem, size = 0x60000, scoped, tag = 'input window, operand 7, single buffered']
    %14 = vsyncpa [#allocation7], 0
    %s15 = scalar_lea.sflag [#allocation7], 1
    %16 = vsyncpa %s15, 0
    %17 = vsyncpa [#allocation9], 0
    %18 = vsyncpa [#allocation12], 0
    loop: start=0, step=1, limit=4
    $region2: #{features4layer_forward.1} parent=1 // loop_pre_header
      _
    $region3: #{features4layer_forward.1} parent=1 // loop_header
      %s20 = sphi 0, %s24
      %p21 = scmp.ge.s32.totalorder %s20, 4
      %s30 = sphi 0, %s32
      %s33 = sphi 0, %s30
      %s34 = sphi 0, %s33
      %s50 = sphi 0, %s34
      %s54 = sphi 0, %s54
      %s56 = sphi 0, %s54
      %s57 = sphi 0, %s56
      %s71 = sphi 0, %s57
      %s75 = sphi 0, %s75
      %s77 = sphi 0, %s75
      %s78 = sphi 0, %s77
      %s92 = sphi 0, %s78
      %s96 = sphi 0, %s96
      %s98 = sphi 0, %s96
      %s99 = sphi 0, %s98
      %s113 = sphi 0, %s99
      %s117 = sphi 0, %s117
      %s119 = sphi 0, %s117
      %s120 = sphi 0, %s119
      %s134 = sphi 0, %s120
      %s138 = sphi 0, %s138
      %s140 = sphi 0, %s138
      %s141 = sphi 0, %s140
      %s155 = sphi 0, %s141
      %s159 = sphi 0, %s159
      %s161 = sphi 0, %s159
      %s162 = sphi 0, %s161
      %s176 = sphi 0, %s162
      %s180 = sphi 0, %s180
      %s182 = sphi 0, %s180
      %s183 = sphi 0, %s182
      %s197 = sphi 0, %s183
      %s201 = sphi 0, %s201
      %s203 = sphi 0, %s201
      %s204 = sphi 0, %s203
      %s218 = sphi 0, %s204
      %s224 = sphi 0, %s226
      %s227 = sphi 0, %s224
      %s228 = sphi 0, %s227
      %s244 = sphi 0, %s228
    $region4: #{features4layer_forward.1} parent=1 // loop_header_branch
      %23 = sbr.rel (%p21) target = $region8
    $region5: #{features4layer_forward.1} parent=1 // loop_body
      %s25 = ssub.s32 %s20, 1
      %s26 = ssub.s32 %s20, 2
      %s27 = sadd.s32 %s20, 1
      %s28 = ssub.s32 %s20, %s27
      %p29 = scmp.eq.s32.totalorder %s28, 0
      %s31 = sadd.s32 %s30, 1
      %s32 = scalar_select %p29, %s30, %s31
      %p35 = pneg %p29
      %p36 = scmp.eq.s32.totalorder %s20, 1
      %p37 = por %p35, %p36
      %p38 = scmp.ne.s32.totalorder %s30, %s33
      %p39 = scmp.eq.s32.totalorder %s20, 0
      %p40 = por %p38, %p39
      %p41 = scmp.ne.s32.totalorder %s30, %s33
      %p42 = scmp.eq.s32.totalorder %s25, 1
      %p43 = por %p41, %p42
      %p44 = scmp.ne.s32.totalorder %s33, %s34
      %p45 = scmp.eq.s32.totalorder %s25, 0
      %p46 = por %p44, %p45
      %p47 = scmp.ne.s32.totalorder %s33, %s34
      %p48 = scmp.eq.s32.totalorder %s26, 1
      %p49 = por %p47, %p48
      %p51 = scmp.ne.s32.totalorder %s34, %s50
      %p52 = scmp.eq.s32.totalorder %s26, 0
      %p53 = por %p51, %p52
      %s55 = sadd.s32 %s54, 1
      %p58 = scmp.eq.s32.totalorder %s20, 1
      %p59 = scmp.ne.s32.totalorder %s54, %s56
      %p60 = scmp.eq.s32.totalorder %s20, 0
      %p61 = por %p59, %p60
      %p62 = scmp.ne.s32.totalorder %s54, %s56
      %p63 = scmp.eq.s32.totalorder %s25, 1
      %p64 = por %p62, %p63
      %p65 = scmp.ne.s32.totalorder %s56, %s57
      %p66 = scmp.eq.s32.totalorder %s25, 0
      %p67 = por %p65, %p66
      %p68 = scmp.ne.s32.totalorder %s56, %s57
      %p69 = scmp.eq.s32.totalorder %s26, 1
      %p70 = por %p68, %p69
      %p72 = scmp.ne.s32.totalorder %s57, %s71
      %p73 = scmp.eq.s32.totalorder %s26, 0
      %p74 = por %p72, %p73
      %s76 = sadd.s32 %s75, 1
      %p79 = scmp.eq.s32.totalorder %s20, 1
      %p80 = scmp.ne.s32.totalorder %s75, %s77
      %p81 = scmp.eq.s32.totalorder %s20, 0
      %p82 = por %p80, %p81
      %p83 = scmp.ne.s32.totalorder %s75, %s77
      %p84 = scmp.eq.s32.totalorder %s25, 1
      %p85 = por %p83, %p84
      %p86 = scmp.ne.s32.totalorder %s77, %s78
      %p87 = scmp.eq.s32.totalorder %s25, 0
      %p88 = por %p86, %p87
      %p89 = scmp.ne.s32.totalorder %s77, %s78
      %p90 = scmp.eq.s32.totalorder %s26, 1
      %p91 = por %p89, %p90
      %p93 = scmp.ne.s32.totalorder %s78, %s92
      %p94 = scmp.eq.s32.totalorder %s26, 0
      %p95 = por %p93, %p94
      %s97 = sadd.s32 %s96, 1
      %p100 = scmp.eq.s32.totalorder %s20, 1
      %p101 = scmp.ne.s32.totalorder %s96, %s98
      %p102 = scmp.eq.s32.totalorder %s20, 0
      %p103 = por %p101, %p102
      %p104 = scmp.ne.s32.totalorder %s96, %s98
      %p105 = scmp.eq.s32.totalorder %s25, 1
      %p106 = por %p104, %p105
      %p107 = scmp.ne.s32.totalorder %s98, %s99
      %p108 = scmp.eq.s32.totalorder %s25, 0
      %p109 = por %p107, %p108
      %p110 = scmp.ne.s32.totalorder %s98, %s99
      %p111 = scmp.eq.s32.totalorder %s26, 1
      %p112 = por %p110, %p111
      %p114 = scmp.ne.s32.totalorder %s99, %s113
      %p115 = scmp.eq.s32.totalorder %s26, 0
      %p116 = por %p114, %p115
      %s118 = sadd.s32 %s117, 1
      %p121 = scmp.eq.s32.totalorder %s20, 1
      %p122 = scmp.ne.s32.totalorder %s117, %s119
      %p123 = scmp.eq.s32.totalorder %s20, 0
      %p124 = por %p122, %p123
      %p125 = scmp.ne.s32.totalorder %s117, %s119
      %p126 = scmp.eq.s32.totalorder %s25, 1
      %p127 = por %p125, %p126
      %p128 = scmp.ne.s32.totalorder %s119, %s120
      %p129 = scmp.eq.s32.totalorder %s25, 0
      %p130 = por %p128, %p129
      %p131 = scmp.ne.s32.totalorder %s119, %s120
      %p132 = scmp.eq.s32.totalorder %s26, 1
      %p133 = por %p131, %p132
      %p135 = scmp.ne.s32.totalorder %s120, %s134
      %p136 = scmp.eq.s32.totalorder %s26, 0
      %p137 = por %p135, %p136
      %s139 = sadd.s32 %s138, 1
      %p142 = scmp.eq.s32.totalorder %s20, 1
      %p143 = scmp.ne.s32.totalorder %s138, %s140
      %p144 = scmp.eq.s32.totalorder %s20, 0
      %p145 = por %p143, %p144
      %p146 = scmp.ne.s32.totalorder %s138, %s140
      %p147 = scmp.eq.s32.totalorder %s25, 1
      %p148 = por %p146, %p147
      %p149 = scmp.ne.s32.totalorder %s140, %s141
      %p150 = scmp.eq.s32.totalorder %s25, 0
      %p151 = por %p149, %p150
      %p152 = scmp.ne.s32.totalorder %s140, %s141
      %p153 = scmp.eq.s32.totalorder %s26, 1
      %p154 = por %p152, %p153
      %p156 = scmp.ne.s32.totalorder %s141, %s155
      %p157 = scmp.eq.s32.totalorder %s26, 0
      %p158 = por %p156, %p157
      %s160 = sadd.s32 %s159, 1
      %p163 = scmp.eq.s32.totalorder %s20, 1
      %p164 = scmp.ne.s32.totalorder %s159, %s161
      %p165 = scmp.eq.s32.totalorder %s20, 0
      %p166 = por %p164, %p165
      %p167 = scmp.ne.s32.totalorder %s159, %s161
      %p168 = scmp.eq.s32.totalorder %s25, 1
      %p169 = por %p167, %p168
      %p170 = scmp.ne.s32.totalorder %s161, %s162
      %p171 = scmp.eq.s32.totalorder %s25, 0
      %p172 = por %p170, %p171
      %p173 = scmp.ne.s32.totalorder %s161, %s162
      %p174 = scmp.eq.s32.totalorder %s26, 1
      %p175 = por %p173, %p174
      %p177 = scmp.ne.s32.totalorder %s162, %s176
      %p178 = scmp.eq.s32.totalorder %s26, 0
      %p179 = por %p177, %p178
      %s181 = sadd.s32 %s180, 1
      %p184 = scmp.eq.s32.totalorder %s20, 1
      %p185 = scmp.ne.s32.totalorder %s180, %s182
      %p186 = scmp.eq.s32.totalorder %s20, 0
      %p187 = por %p185, %p186
      %p188 = scmp.ne.s32.totalorder %s180, %s182
      %p189 = scmp.eq.s32.totalorder %s25, 1
      %p190 = por %p188, %p189
      %p191 = scmp.ne.s32.totalorder %s182, %s183
      %p192 = scmp.eq.s32.totalorder %s25, 0
      %p193 = por %p191, %p192
      %p194 = scmp.ne.s32.totalorder %s182, %s183
      %p195 = scmp.eq.s32.totalorder %s26, 1
      %p196 = por %p194, %p195
      %p198 = scmp.ne.s32.totalorder %s183, %s197
      %p199 = scmp.eq.s32.totalorder %s26, 0
      %p200 = por %p198, %p199
      %s202 = sadd.s32 %s201, 1
      %p205 = scmp.eq.s32.totalorder %s20, 1
      %p206 = scmp.ne.s32.totalorder %s201, %s203
      %p207 = scmp.eq.s32.totalorder %s20, 0
      %p208 = por %p206, %p207
      %p209 = scmp.ne.s32.totalorder %s201, %s203
      %p210 = scmp.eq.s32.totalorder %s25, 1
      %p211 = por %p209, %p210
      %p212 = scmp.ne.s32.totalorder %s203, %s204
      %p213 = scmp.eq.s32.totalorder %s25, 0
      %p214 = por %p212, %p213
      %p215 = scmp.ne.s32.totalorder %s203, %s204
      %p216 = scmp.eq.s32.totalorder %s26, 1
      %p217 = por %p215, %p216
      %p219 = scmp.ne.s32.totalorder %s204, %s218
      %p220 = scmp.eq.s32.totalorder %s26, 0
      %p221 = por %p219, %p220
      %s222 = ssub.s32 %s20, %s27
      %p223 = scmp.eq.s32.totalorder %s222, 0
      %s225 = sadd.s32 %s224, 1
      %s226 = scalar_select %p223, %s224, %s225
      %p229 = pneg %p223
      %p230 = scmp.eq.s32.totalorder %s20, 1
      %p231 = por %p229, %p230
      %p232 = scmp.ne.s32.totalorder %s224, %s227
      %p233 = scmp.eq.s32.totalorder %s20, 0
      %p234 = por %p232, %p233
      %p235 = scmp.ne.s32.totalorder %s224, %s227
      %p236 = scmp.eq.s32.totalorder %s25, 1
      %p237 = por %p235, %p236
      %p238 = scmp.ne.s32.totalorder %s227, %s228
      %p239 = scmp.eq.s32.totalorder %s25, 0
      %p240 = por %p238, %p239
      %p241 = scmp.ne.s32.totalorder %s227, %s228
      %p242 = scmp.eq.s32.totalorder %s26, 1
      %p243 = por %p241, %p242
      %p245 = scmp.ne.s32.totalorder %s228, %s244
      %p246 = scmp.eq.s32.totalorder %s26, 0
      %p247 = por %p245, %p246
      %p248 = scmp.le.s32.totalorder 1, %s20
      %p249 = scmp.lt.s32.totalorder %s20, 3
      %p250 = pnand %p248, %p249
      %p251 = pneg %p250
      // Predicated region
      $region9: #{features4layer_forward.1} parent=5 // pred_check
        _
      $region10: #{features4layer_forward.1} parent=5 // pred_check_branch
        %253 = sbr.rel (%p250) target = $region12
      $region11: #{features4layer_forward.1} parent=5 // pred_region
        %s254 = ssub.s32 %s20, 1
        // Predicated region
        $region13: #{features4layer_forward.1} parent=11 // pred_check
          %p255 = pneg %p67
        $region14: #{features4layer_forward.1} parent=11 // pred_check_branch
          %257 = sbr.rel (%p255) target = $region16
        $region15: #{features4layer_forward.1} parent=11 // pred_region
          %s259 = ssub.s32 1280, 1280
          %260 = vsyncadd [#allocation9], %s259
          %s261 = sshll.u32 [#allocation8], 4
          %s262 = int_to_ptr.vmem [resolvable:$true] %s261
          %267 = dma.hbm_to_vmem [thread:$0]  %s1, 1280, %s262, [#allocation9], 128, 128, 8
        $region16: #{features4layer_forward.1} parent=11 // pred_fallthru
          _
        // Predicated region
        $region17: #{features4layer_forward.1} parent=11 // pred_check
          %p268 = pneg %p88
        $region18: #{features4layer_forward.1} parent=11 // pred_check_branch
          %270 = sbr.rel (%p268) target = $region20
        $region19: #{features4layer_forward.1} parent=11 // pred_region
          _
        $region20: #{features4layer_forward.1} parent=11 // pred_fallthru
          _
        // Predicated region
        $region21: #{features4layer_forward.1} parent=11 // pred_check
          %p271 = pneg %p109
        $region22: #{features4layer_forward.1} parent=11 // pred_check_branch
          %273 = sbr.rel (%p271) target = $region24
        $region23: #{features4layer_forward.1} parent=11 // pred_region
          %s275 = ssub.s32 12288, 12288
          %276 = vsyncadd [#allocation9], %s275
          %s277 = sshll.u32 [#allocation10], 4
          %s278 = int_to_ptr.vmem [resolvable:$true] %s277
          %283 = dma.hbm_to_vmem [thread:$0]  %s3, 12288, %s278, [#allocation9], 128, 128, 8
        $region24: #{features4layer_forward.1} parent=11 // pred_fallthru
          _
        // Predicated region
        $region25: #{features4layer_forward.1} parent=11 // pred_check
          %p284 = pneg %p130
        $region26: #{features4layer_forward.1} parent=11 // pred_check_branch
          %286 = sbr.rel (%p284) target = $region28
        $region27: #{features4layer_forward.1} parent=11 // pred_region
          _
        $region28: #{features4layer_forward.1} parent=11 // pred_fallthru
          _
        // Predicated region
        $region29: #{features4layer_forward.1} parent=11 // pred_check
          %p287 = pneg %p151
        $region30: #{features4layer_forward.1} parent=11 // pred_check_branch
          %289 = sbr.rel (%p287) target = $region32
        $region31: #{features4layer_forward.1} parent=11 // pred_region
          %s291 = ssub.s32 12288, 12288
          %292 = vsyncadd [#allocation12], %s291
          %s293 = sshll.u32 [#allocation11], 4
          %s294 = int_to_ptr.vmem [resolvable:$true] %s293
          %299 = dma.hbm_to_vmem [thread:$0]  %s5, 12288, %s294, [#allocation12], 128, 128, 8
        $region32: #{features4layer_forward.1} parent=11 // pred_fallthru
          _
        // Predicated region
        $region33: #{features4layer_forward.1} parent=11 // pred_check
          %p300 = pneg %p172
        $region34: #{features4layer_forward.1} parent=11 // pred_check_branch
          %302 = sbr.rel (%p300) target = $region36
        $region35: #{features4layer_forward.1} parent=11 // pred_region
          _
        $region36: #{features4layer_forward.1} parent=11 // pred_fallthru
          _
        // Predicated region
        $region37: #{features4layer_forward.1} parent=11 // pred_check
          %p303 = pneg %p193
        $region38: #{features4layer_forward.1} parent=11 // pred_check_branch
          %305 = sbr.rel (%p303) target = $region40
        $region39: #{features4layer_forward.1} parent=11 // pred_region
          %s307 = ssub.s32 12288, 12288
          %308 = vsyncadd [#allocation12], %s307
          %s309 = sshll.u32 [#allocation13], 4
          %s310 = int_to_ptr.vmem [resolvable:$true] %s309
          %315 = dma.hbm_to_vmem [thread:$0]  %s7, 12288, %s310, [#allocation12], 128, 128, 8
        $region40: #{features4layer_forward.1} parent=11 // pred_fallthru
          _
        // Predicated region
        $region41: #{features4layer_forward.1} parent=11 // pred_check
          %p316 = pneg %p214
        $region42: #{features4layer_forward.1} parent=11 // pred_check_branch
          %318 = sbr.rel (%p316) target = $region44
        $region43: #{features4layer_forward.1} parent=11 // pred_region
          _
        $region44: #{features4layer_forward.1} parent=11 // pred_fallthru
          _
      $region12: #{features4layer_forward.1} parent=5 // pred_fallthru
        _
      %p319 = scmp.lt.s32.totalorder %s20, 2
      // Predicated region
      $region45: #{features4layer_forward.1} parent=5 // pred_check
        %p320 = pneg %p319
      $region46: #{features4layer_forward.1} parent=5 // pred_check_branch
        %322 = sbr.rel (%p320) target = $region48
      $region47: #{features4layer_forward.1} parent=5 // pred_region
        // Predicated region
        $region49: #{features4layer_forward.1} parent=47 // pred_check
          %p323 = pneg %p40
        $region50: #{features4layer_forward.1} parent=47 // pred_check_branch
          %325 = sbr.rel (%p323) target = $region52
        $region51: #{features4layer_forward.1} parent=47 // pred_region
          %s326 = sand.u32 %s30, 1
          %s327 = scalar_lea.sflag [#allocation7], %s326
          %s328 = sand.u32 %s30, 1
          %s329 = smul.addr %s328, 32
          %s330 = scalar_lea.vmem [#allocation6], %s329
          %s331 = smul.u32 2, %s20
          %s333 = ssub.s32 512, 512
          %334 = vsyncadd %s327, %s333
          %s335 = smul.addr %s331, 2
          %s336 = smul.addr %s335, 128
          %s337 = scalar_lea.hbm %s0, %s336
          %s338 = sshll.u32 %s330, 4
          %s339 = int_to_ptr.vmem [resolvable:$true] %s338
          %344 = dma.hbm_to_vmem [thread:$0]  %s337, 512, %s339, %s327, 128, 128, 8
        $region52: #{features4layer_forward.1} parent=47 // pred_fallthru
          _
      $region48: #{features4layer_forward.1} parent=5 // pred_fallthru
        _
      %p345 = scmp.le.s32.totalorder 1, %s20
      %p346 = scmp.lt.s32.totalorder %s20, 3
      %p347 = pnand %p345, %p346
      %p348 = pneg %p347
      // Predicated region
      $region53: #{features4layer_forward.1} parent=5 // pred_check
        _
      $region54: #{features4layer_forward.1} parent=5 // pred_check_branch
        %350 = sbr.rel (%p347) target = $region56
      $region55: #{features4layer_forward.1} parent=5 // pred_region
        %s351 = ssub.s32 %s20, 1
        %s352 = sand.u32 %s33, 1
        %s353 = scalar_lea.sflag [#allocation7], %s352
        %s354 = sand.u32 %s33, 1
        %s355 = smul.addr %s354, 32
        %s356 = scalar_lea.vmem [#allocation6], %s355
        // Predicated region
        $region57: #{features4layer_forward.1} parent=55 // pred_check
          %p357 = pneg %p46
        $region58: #{features4layer_forward.1} parent=55 // pred_check_branch
          %359 = sbr.rel (%p357) target = $region60
        $region59: #{features4layer_forward.1} parent=55 // pred_region
          %360 = dma.done %s353, 512
        $region60: #{features4layer_forward.1} parent=55 // pred_fallthru
          _
        // Predicated region
        $region61: #{features4layer_forward.1} parent=55 // pred_check
          %p361 = pneg %p67
        $region62: #{features4layer_forward.1} parent=55 // pred_check_branch
          %363 = sbr.rel (%p361) target = $region64
        $region63: #{features4layer_forward.1} parent=55 // pred_region
          %364 = dma.done [#allocation9], 1280
        $region64: #{features4layer_forward.1} parent=55 // pred_fallthru
          _
        // Predicated region
        $region65: #{features4layer_forward.1} parent=55 // pred_check
          %p365 = pneg %p109
        $region66: #{features4layer_forward.1} parent=55 // pred_check_branch
          %367 = sbr.rel (%p365) target = $region68
        $region67: #{features4layer_forward.1} parent=55 // pred_region
          %368 = dma.done [#allocation9], 12288
        $region68: #{features4layer_forward.1} parent=55 // pred_fallthru
          _
        // Predicated region
        $region69: #{features4layer_forward.1} parent=55 // pred_check
          %p369 = pneg %p151
        $region70: #{features4layer_forward.1} parent=55 // pred_check_branch
          %371 = sbr.rel (%p369) target = $region72
        $region71: #{features4layer_forward.1} parent=55 // pred_region
          %372 = dma.done [#allocation12], 12288
        $region72: #{features4layer_forward.1} parent=55 // pred_fallthru
          _
        // Predicated region
        $region73: #{features4layer_forward.1} parent=55 // pred_check
          %p373 = pneg %p193
        $region74: #{features4layer_forward.1} parent=55 // pred_check_branch
          %375 = sbr.rel (%p373) target = $region76
        $region75: #{features4layer_forward.1} parent=55 // pred_region
          %376 = dma.done [#allocation12], 12288
        $region76: #{features4layer_forward.1} parent=55 // pred_fallthru
          _
        %s377 = sand.u32 %s33, 1
        %s378 = scalar_lea.sflag [#allocation7], %s377
        %s379 = sand.u32 %s33, 1
        %s380 = smul.addr %s379, 32
        %s381 = scalar_lea.vmem [#allocation6], %s380
        %p382 = pneg %p46
        %p383 = pneg %p43
        %p384 = pneg %p67
        %p385 = pneg %p64
        %p386 = pneg %p88
        %p387 = pneg %p85
        %p388 = pneg %p109
        %p389 = pneg %p106
        %p390 = pneg %p130
        %p391 = pneg %p127
        %p392 = pneg %p151
        %p393 = pneg %p148
        %p394 = pneg %p172
        %p395 = pneg %p169
        %p396 = pneg %p193
        %p397 = pneg %p190
        %p398 = pneg %p214
        %p399 = pneg %p211
        %p400 = pneg %p240
        %p401 = pneg %p237
        %s402 = smul.u32 2, %s25
        %p403 = scmp.lt.s32.totalorder %s402, 3
        %s404 = scalar_select %p403, %s402, 3
        %s405 = smul.addr %s404, 4
        %s406 = smul.addr %s405, 8
        %s407 = scalar_lea.vmem %s9, %s406
        %s408 = smul.u32 2, %s25
        %s409 = smul.u32 2, %s25
        %p410 = scmp.lt.s32.totalorder %s409, 3
        %s411 = scalar_select %p410, %s409, 3
        %s412 = smul.addr %s411, 4
        %s413 = smul.addr %s412, 8
        %s414 = scalar_lea.vmem %s9, %s413
        %s415 = smul.u32 2, %s25
        %v417 = vld [vmem:[%s356] sm:$0xff]
        %v418 = vld [vmem:[%s356 + $0x8] sm:$0xff]
        %vm419 = vcmask 130048
        %420 = vst.msk [vmem:[#allocation2 + $0x2] sm:$0xff] %vm419, %v417
        %421 = vst.msk [vmem:[#allocation2 + $0xa] sm:$0xff] %vm419, %v418
        %vm422 = vcmask 124930
        %423 = vst.msk [vmem:[#allocation2 - $0x2] sm:$0x4] %vm422, %v417
        %vm424 = vcmask 123905
        %425 = vst.msk [vmem:[#allocation2] sm:$0x2] %vm424, %v417
        %vm426 = vcmask 129030
        %427 = vst.msk [vmem:[#allocation2 + $0xc] sm:$0x40] %vm426, %v418
        %vm428 = vcmask 128005
        %429 = vst.msk [vmem:[#allocation2 + $0xe] sm:$0x20] %vm428, %v418
        %s430 = scalar_lea.vmem %s356, 16 [#allocation6]
        %v431 = vld [vmem:[%s430] sm:$0xff]
        %v432 = vld [vmem:[%s430 + $0x8] sm:$0xff]
        %433 = vst.msk [vmem:[#allocation2 + $0x16] sm:$0xff] %vm419, %v431
        %434 = vst.msk [vmem:[#allocation2 + $0x1e] sm:$0xff] %vm419, %v432
        %435 = vst.msk [vmem:[#allocation2 + $0x12] sm:$0x4] %vm422, %v431
        %436 = vst.msk [vmem:[#allocation2 + $0x14] sm:$0x2] %vm424, %v431
        %437 = vst.msk [vmem:[#allocation2 + $0x20] sm:$0x40] %vm426, %v432
        %438 = vst.msk [vmem:[#allocation2 + $0x22] sm:$0x20] %vm428, %v432
        %v439 = vld [vmem:[#allocation2] sm:$0xff]
        %v440 = vld [vmem:[#allocation2 + $0x8] sm:$0xff]
        %v441 = vld [vmem:[#allocation2 + $0x10] sm:$0xff]
        %v442 = vld [vmem:[#allocation2 + $0x18] sm:$0xff]
        %v443 = vld [vmem:[#allocation2 + $0x20] sm:$0xf]
        %v444 = vpack.c.bf16 %v440, %v439
        %v445 = vpack.c.bf16 %v442, %v441
        %v446 = vpack.c.bf16 %v443, %v443
        %v450 = vunpack.c.l.b16 %v444
        %v451 = vunpack.c.h.b16 %v444
        %v452 = vunpack.c.l.b16 %v445
        %v453 = vunpack.c.h.b16 %v445
        %v454 = vunpack.c.l.b16 %v446
        %v455 = vpack.c.b16 %v450, %v450
        %v456 = vpack.c.b16 %v451, %v451
        %v457 = vpack.c.b16 %v452, %v452
        %v458 = vpack.c.b16 %v453, %v453
        %v459 = vpack.c.b16 %v454, %v454
        %vm465 = vcmask 125952
        %466 = vst.msk [vmem:[#allocation3] sm:$0xf] %vm465, %v455
        %467 = vst.msk [vmem:[#allocation3 + $0x4] sm:$0xf] %vm465, %v456
        %468 = vst.msk [vmem:[#allocation3 + $0x8] sm:$0xf] %vm465, %v457
        %469 = vst.msk [vmem:[#allocation3 + $0xc] sm:$0xf] %vm465, %v458
        %vm470 = vcmask 123904
        %471 = vst.msk [vmem:[#allocation3 + $0x10] sm:$0x3] %vm470, %v459
        %v472 = vld [vmem:[#allocation2 + $0x1] sm:$0xff]
        %v473 = vld [vmem:[#allocation2 + $0x9] sm:$0xff]
        %v474 = vld [vmem:[#allocation2 + $0x11] sm:$0xff]
        %v475 = vld [vmem:[#allocation2 + $0x19] sm:$0xff]
        %v476 = vld [vmem:[#allocation2 + $0x21] sm:$0xf]
        %v477 = vpack.c.bf16 %v473, %v472
        %v478 = vpack.c.bf16 %v475, %v474
        %v479 = vpack.c.bf16 %v476, %v476
        %v483 = vunpack.c.l.b16 %v477
        %v484 = vunpack.c.h.b16 %v477
        %v485 = vunpack.c.l.b16 %v478
        %v486 = vunpack.c.h.b16 %v478
        %v487 = vunpack.c.l.b16 %v479
        %v488 = vpack.c.b16 %v483, %v483
        %v489 = vpack.c.b16 %v484, %v484
        %v490 = vpack.c.b16 %v485, %v485
        %v491 = vpack.c.b16 %v486, %v486
        %v492 = vpack.c.b16 %v487, %v487
        %493 = vrot.lane.b32.xlu0 %v488, 16
        %v494 = vpop.permute.xlu0 %493
        %495 = vrot.lane.b32.xlu0 %v489, 16
        %v496 = vpop.permute.xlu0 %495
        %497 = vrot.lane.b32.xlu0 %v490, 16
        %v498 = vpop.permute.xlu0 %497
        %499 = vrot.lane.b32.xlu0 %v491, 16
        %v500 = vpop.permute.xlu0 %499
        %501 = vrot.lane.b32.xlu0 %v492, 16
        %v502 = vpop.permute.xlu0 %501
        %vm508 = vcmask 257152
        %509 = vst.msk [vmem:[#allocation3] sm:$0xf] %vm508, %v494
        %510 = vst.msk [vmem:[#allocation3 + $0x4] sm:$0xf] %vm508, %v496
        %511 = vst.msk [vmem:[#allocation3 + $0x8] sm:$0xf] %vm508, %v498
        %512 = vst.msk [vmem:[#allocation3 + $0xc] sm:$0xf] %vm508, %v500
        %vm513 = vcmask 255104
        %514 = vst.msk [vmem:[#allocation3 + $0x10] sm:$0x3] %vm513, %v502
        %v515 = vld [vmem:[#allocation2 + $0x2] sm:$0xff]
        %v516 = vld [vmem:[#allocation2 + $0xa] sm:$0xff]
        %v517 = vld [vmem:[#allocation2 + $0x12] sm:$0xff]
        %v518 = vld [vmem:[#allocation2 + $0x1a] sm:$0xff]
        %v519 = vld [vmem:[#allocation2 + $0x22] sm:$0xf]
        %v520 = vpack.c.bf16 %v516, %v515
        %v521 = vpack.c.bf16 %v518, %v517
        %v522 = vpack.c.bf16 %v519, %v519
        %v526 = vunpack.c.l.b16 %v520
        %v527 = vunpack.c.h.b16 %v520
        %v528 = vunpack.c.l.b16 %v521
        %v529 = vunpack.c.h.b16 %v521
        %v530 = vunpack.c.l.b16 %v522
        %v531 = vpack.c.b16 %v526, %v526
        %v532 = vpack.c.b16 %v527, %v527
        %v533 = vpack.c.b16 %v528, %v528
        %v534 = vpack.c.b16 %v529, %v529
        %v535 = vpack.c.b16 %v530, %v530
        %536 = vrot.lane.b32.xlu0 %v531, 32
        %v537 = vpop.permute.xlu0 %536
        %538 = vrot.lane.b32.xlu0 %v532, 32
        %v539 = vpop.permute.xlu0 %538
        %540 = vrot.lane.b32.xlu0 %v533, 32
        %v541 = vpop.permute.xlu0 %540
        %542 = vrot.lane.b32.xlu0 %v534, 32
        %v543 = vpop.permute.xlu0 %542
        %544 = vrot.lane.b32.xlu0 %v535, 32
        %v545 = vpop.permute.xlu0 %544
        %vm551 = vcmask 388352
        %552 = vst.msk [vmem:[#allocation3] sm:$0xf] %vm551, %v537
        %553 = vst.msk [vmem:[#allocation3 + $0x4] sm:$0xf] %vm551, %v539
        %554 = vst.msk [vmem:[#allocation3 + $0x8] sm:$0xf] %vm551, %v541
        %555 = vst.msk [vmem:[#allocation3 + $0xc] sm:$0xf] %vm551, %v543
        %vm556 = vcmask 386304
        %557 = vst.msk [vmem:[#allocation3 + $0x10] sm:$0x3] %vm556, %v545
        %v558 = vld [vmem:[#allocation2 + $0x3] sm:$0xff]
        %v559 = vld [vmem:[#allocation2 + $0xb] sm:$0xff]
        %v560 = vld [vmem:[#allocation2 + $0x13] sm:$0xff]
        %v561 = vld [vmem:[#allocation2 + $0x1b] sm:$0xff]
        %v562 = vld [vmem:[#allocation2 + $0x23] sm:$0xf]
        %v563 = vpack.c.bf16 %v559, %v558
        %v564 = vpack.c.bf16 %v561, %v560
        %v565 = vpack.c.bf16 %v562, %v562
        %v569 = vunpack.c.l.b16 %v563
        %v570 = vunpack.c.h.b16 %v563
        %v571 = vunpack.c.l.b16 %v564
        %v572 = vunpack.c.h.b16 %v564
        %v573 = vunpack.c.l.b16 %v565
        %v574 = vpack.c.b16 %v569, %v569
        %v575 = vpack.c.b16 %v570, %v570
        %v576 = vpack.c.b16 %v571, %v571
        %v577 = vpack.c.b16 %v572, %v572
        %v578 = vpack.c.b16 %v573, %v573
        %579 = vrot.lane.b32.xlu0 %v574, 48
        %v580 = vpop.permute.xlu0 %579
        %581 = vrot.lane.b32.xlu0 %v575, 48
        %v582 = vpop.permute.xlu0 %581
        %583 = vrot.lane.b32.xlu0 %v576, 48
        %v584 = vpop.permute.xlu0 %583
        %585 = vrot.lane.b32.xlu0 %v577, 48
        %v586 = vpop.permute.xlu0 %585
        %587 = vrot.lane.b32.xlu0 %v578, 48
        %v588 = vpop.permute.xlu0 %587
        %vm594 = vcmask 519552
        %595 = vst.msk [vmem:[#allocation3] sm:$0xf] %vm594, %v580
        %596 = vst.msk [vmem:[#allocation3 + $0x4] sm:$0xf] %vm594, %v582
        %597 = vst.msk [vmem:[#allocation3 + $0x8] sm:$0xf] %vm594, %v584
        %598 = vst.msk [vmem:[#allocation3 + $0xc] sm:$0xf] %vm594, %v586
        %vm599 = vcmask 517504
        %600 = vst.msk [vmem:[#allocation3 + $0x10] sm:$0x3] %vm599, %v588
        %v601 = vld [vmem:[#allocation2 + $0x4] sm:$0xff]
        %v602 = vld [vmem:[#allocation2 + $0xc] sm:$0xff]
        %v603 = vld [vmem:[#allocation2 + $0x14] sm:$0xff]
        %v604 = vld [vmem:[#allocation2 + $0x1c] sm:$0xff]
        %v605 = vld [vmem:[#allocation2 + $0x24] sm:$0xf]
        %v606 = vpack.c.bf16 %v602, %v601
        %v607 = vpack.c.bf16 %v604, %v603
        %v608 = vpack.c.bf16 %v605, %v605
        %v612 = vunpack.c.l.b16 %v606
        %v613 = vunpack.c.h.b16 %v606
        %v614 = vunpack.c.l.b16 %v607
        %v615 = vunpack.c.h.b16 %v607
        %v616 = vunpack.c.l.b16 %v608
        %v617 = vpack.c.b16 %v612, %v612
        %v618 = vpack.c.b16 %v613, %v613
        %v619 = vpack.c.b16 %v614, %v614
        %v620 = vpack.c.b16 %v615, %v615
        %v621 = vpack.c.b16 %v616, %v616
        %622 = vrot.lane.b32.xlu0 %v617, 64
        %v623 = vpop.permute.xlu0 %622
        %624 = vrot.lane.b32.xlu0 %v618, 64
        %v625 = vpop.permute.xlu0 %624
        %626 = vrot.lane.b32.xlu0 %v619, 64
        %v627 = vpop.permute.xlu0 %626
        %628 = vrot.lane.b32.xlu0 %v620, 64
        %v629 = vpop.permute.xlu0 %628
        %630 = vrot.lane.b32.xlu0 %v621, 64
        %v631 = vpop.permute.xlu0 %630
        %vm637 = vcmask 650752
        %638 = vst.msk [vmem:[#allocation3] sm:$0xf] %vm637, %v623
        %639 = vst.msk [vmem:[#allocation3 + $0x4] sm:$0xf] %vm637, %v625
        %640 = vst.msk [vmem:[#allocation3 + $0x8] sm:$0xf] %vm637, %v627
        %641 = vst.msk [vmem:[#allocation3 + $0xc] sm:$0xf] %vm637, %v629
        %vm642 = vcmask 648704
        %643 = vst.msk [vmem:[#allocation3 + $0x10] sm:$0x3] %vm642, %v631
        %v644 = vld [vmem:[#allocation3] sm:$0xf]
        %v645 = vld [vmem:[#allocation3 + $0x4] sm:$0xf]
        %v646 = vld [vmem:[#allocation3 + $0x8] sm:$0xf]
        %v647 = vld [vmem:[#allocation3 + $0xc] sm:$0xf]
        %v648 = vld [vmem:[#allocation3 + $0x10] sm:$0x3]
        %v649 = vld [vmem:[#allocation8] sm:$0xff]
        %v650 = vld [vmem:[#allocation8 + $0x8] sm:$0xff]
        %v651 = vld [vmem:[#allocation8 + $0x10] sm:$0xff]
        %v652 = vld [vmem:[#allocation8 + $0x18] sm:$0xff]
        %v653 = vld [vmem:[#allocation8 + $0x20] sm:$0xff]
        %v654 = vld [vmem:[#allocation8 + $0x28] sm:$0xff]
        %v655 = vld [vmem:[#allocation8 + $0x30] sm:$0xff]
        %v656 = vld [vmem:[#allocation8 + $0x38] sm:$0xff]
        %v657 = vld [vmem:[#allocation8 + $0x40] sm:$0xff]
        %v658 = vld [vmem:[#allocation8 + $0x48] sm:$0xff]
        %v659 = vld [vmem:[%s2] sm:$0x3]
        %v661 = vlaneseq
        %v662 = vshrl.u32 %v661, 7
        %v663 = vsub.s32 0, %v662
        %v664 = vrot.slane %v659, %v663
        %v665 = vlaneseq
        %v666 = vshrl.u32 %v665, 7
        %v667 = vsub.s32 1, %v666
        %v668 = vrot.slane %v659, %v667
        %v676 = vunpack.c.l.b16 %v644
        %v677 = vunpack.c.l.b16 %v645
        %v678 = vunpack.c.l.b16 %v646
        %v679 = vunpack.c.l.b16 %v647
        %v680 = vunpack.c.l.b16 %v648
        %v681 = vpack.c.b16 %v677, %v676
        %v682 = vpack.c.b16 %v679, %v678
        %v683 = vpack.c.b16 %v680, %v680
        %v694 = vunpack.c.l.b16 %v649
        %v695 = vunpack.c.h.b16 %v649
        %v696 = vunpack.c.l.b16 %v650
        %v697 = vunpack.c.h.b16 %v650
        %v698 = vunpack.c.l.b16 %v651
        %v699 = vunpack.c.h.b16 %v651
        %v700 = vunpack.c.l.b16 %v652
        %v701 = vunpack.c.h.b16 %v652
        %v702 = vunpack.c.l.b16 %v653
        %v703 = vunpack.c.h.b16 %v653
        %v704 = vunpack.c.l.b16 %v654
        %v705 = vunpack.c.h.b16 %v654
        %v706 = vunpack.c.l.b16 %v655
        %v707 = vunpack.c.h.b16 %v655
        %v708 = vunpack.c.l.b16 %v656
        %v709 = vunpack.c.h.b16 %v656
        %v710 = vunpack.c.l.b16 %v657
        %v711 = vunpack.c.h.b16 %v657
        %v712 = vunpack.c.l.b16 %v658
        %v713 = vunpack.c.h.b16 %v658
        %v714 = vpack.c.b16 %v696, %v694
        %v715 = vpack.c.b16 %v697, %v695
        %v716 = vpack.c.b16 %v700, %v698
        %v717 = vpack.c.b16 %v701, %v699
        %v718 = vpack.c.b16 %v704, %v702
        %v719 = vpack.c.b16 %v705, %v703
        %v720 = vpack.c.b16 %v708, %v706
        %v721 = vpack.c.b16 %v709, %v707
        %v722 = vpack.c.b16 %v712, %v710
        %v723 = vpack.c.b16 %v713, %v711
        %vm734 = vcmask 654336
        %v736 = vsel %vm734, %v681, 0
        %v739 = vsel %vm734, %v682, 0
        %v742 = vsel %vm734, %v683, 0
        %744 = vmatprep.subr.bf16.mxu0 %v715
        %745 = vmatpush1.bf16.msra.mxu0 %v714
        %746 = vmatprep.subr.bf16.mxu0 %v717
        %747 = vmatpush1.bf16.msra.mxu0 %v716
        %748 = vmatprep.subr.bf16.mxu0 %v719
        %749 = vmatpush1.bf16.msra.mxu0 %v718
        %750 = vmatprep.subr.bf16.mxu0 %v721
        %751 = vmatpush1.bf16.msra.mxu0 %v720
        %752 = vmatprep.subr.bf16.mxu0 %v723
        %753 = vmatpush1.bf16.msra.mxu0 %v722
        %754 = vmatprep.subr.bf16.mxu0 0
        %755 = vmatpush1.bf16.msra.mxu0 0
        %756 = vmatprep.subr.bf16.mxu0 0
        %757 = vmatpush1.bf16.msra.mxu0 0
        %758 = vmatprep.subr.bf16.mxu0 0
        %759 = vmatpush1.bf16.msra.mxu0 0
        %760 = vmatprep.subr.bf16.mxu0 0
        %761 = vmatpush1.bf16.msra.mxu0 0
        %762 = vmatprep.subr.bf16.mxu0 0
        %763 = vmatpush1.bf16.msra.mxu0 0
        %764 = vmatprep.subr.bf16.mxu0 0
        %765 = vmatpush1.bf16.msra.mxu0 0
        %766 = vmatprep.subr.bf16.mxu0 0
        %767 = vmatpush1.bf16.msra.mxu0 0
        %768 = vmatprep.subr.bf16.mxu0 0
        %769 = vmatpush1.bf16.msra.mxu0 0
        %770 = vmatprep.subr.bf16.mxu0 0
        %771 = vmatpush1.bf16.msra.mxu0 0
        %772 = vmatprep.subr.bf16.mxu0 0
        %773 = vmatpush1.bf16.msra.mxu0 0
        %774 = vmatprep.subr.bf16.mxu0 0
        %775 = vmatpush1.bf16.msra.mxu0 0
        %776 = vmatprep.mubr.bf16.mxu0 0
        %777 = vmatmul.mubr.bf16.gmra.mrb[0].mxu0 %v736
        %v778 = vpop.f32.mrb[0].mxu0
        %v779 = vadd.f32 %v664, %v778
        %v780 = vpop.f32.mrb[0].mxu0
        %v781 = vadd.f32 %v668, %v780
        %v782 = vpop.f32.mrb[0].mxu0
        %v783 = vadd.f32 %v664, %v782
        %v784 = vpop.f32.mrb[0].mxu0
        %v785 = vadd.f32 %v668, %v784
        %786 = vmatprep.mubr.bf16.mxu0 0
        %787 = vmatmul.mubr.bf16.gmra.mrb[0].mxu0 %v739
        %v788 = vpop.f32.mrb[0].mxu0
        %v789 = vadd.f32 %v664, %v788
        %v790 = vpop.f32.mrb[0].mxu0
        %v791 = vadd.f32 %v668, %v790
        %v792 = vpop.f32.mrb[0].mxu0
        %v793 = vadd.f32 %v664, %v792
        %v794 = vpop.f32.mrb[0].mxu0
        %v795 = vadd.f32 %v668, %v794
        %796 = vmatprep.mubr.bf16.mxu0 0
        %797 = vmatmul.mubr.bf16.gmra.mrb[0].mxu0 %v742
        %v798 = vpop.f32.mrb[0].mxu0
        %v799 = vadd.f32 %v664, %v798
        %v800 = vpop.f32.mrb[0].mxu0
        %v801 = vadd.f32 %v668, %v800
        %v802 = vpop.f32.mrb[0].mxu0
        %v803 = vpop.f32.mrb[0].mxu0
        %804 = vdwg.mxu0
        %v805 = vmax.f32 %v779, 0.0
        %v806 = vmax.f32 %v781, 0.0
        %v807 = vmax.f32 %v783, 0.0
        %v808 = vmax.f32 %v785, 0.0
        %v809 = vmax.f32 %v789, 0.0
        %v810 = vmax.f32 %v791, 0.0
        %v811 = vmax.f32 %v793, 0.0
        %v812 = vmax.f32 %v795, 0.0
        %v813 = vmax.f32 %v799, 0.0
        %v814 = vmax.f32 %v801, 0.0
        %vm819 = vcmask 1040384
        %v820 = vrot.slane %v805, 7
        %v821 = vrot.slane %v806, 7
        %v822 = vrot.slane %v807, 7
        %v823 = vsel %vm819, %v820, %v822
        %v824 = vrot.slane %v808, 7
        %v825 = vsel %vm819, %v821, %v824
        %832 = vst [vmem:[#allocation4] sm:$0xfe] %v820
        %833 = vst [vmem:[#allocation4 + $0x8] sm:$0xfe] %v821
        %834 = vst [vmem:[#allocation4 + $0x10] sm:$0xff] %v823
        %835 = vst [vmem:[#allocation4 + $0x18] sm:$0xff] %v825
        %836 = vst [vmem:[#allocation4 + $0x20] sm:$0x1] %v822
        %837 = vst [vmem:[#allocation4 + $0x28] sm:$0x1] %v824
        %v838 = vcombine.low %v805, %v806
        %v840 = vunpack.c.l.s4 1966171168
        %v841 = vunpack.c.0.s8 %v840
        %v842 = vlaneseq
        %v843 = vshrl.u32 %v842, 7
        %v844 = vsub.s32 %v841, %v843
        %v845 = vrot.slane %v838, %v844
        %v846 = vcombine.high %v845, %v845
        %v848 = vunpack.c.l.s4 1966171168
        %v849 = vunpack.c.0.s8 %v848
        %v850 = vlaneseq
        %v851 = vshrl.u32 %v850, 7
        %v852 = vsub.s32 %v849, %v851
        %v853 = vrot.slane %v846, %v852
        %v855 = vlaneseq
        %vm856 = vcmp.ge.s32.totalorder %v855, 0
        %vm857 = vcmp.lt.s32.totalorder %v855, 256
        %vm858 = vmand %vm856, %vm857
        %859 = vst.msk [vmem:[#allocation4] ss:$8 sm:$0x3] %vm858, %v853
        %860 = vst.msk [vmem:[#allocation4] ss:$8 sm:$0x0] %vm858, %v853
        %v861 = vcombine.high %v807, %v808
        %v863 = vunpack.c.l.s4 1966171168
        %v864 = vunpack.c.0.s8 %v863
        %v865 = vlaneseq
        %v866 = vshrl.u32 %v865, 7
        %v867 = vsub.s32 %v864, %v866
        %v868 = vrot.slane %v861, %v867
        %v870 = vunpack.c.l.s4 1966171168
        %v871 = vunpack.c.0.s8 %v870
        %v872 = vlaneseq
        %v873 = vshrl.u32 %v872, 7
        %v874 = vsub.s32 %v871, %v873
        %v875 = vrot.slane %v868, %v874
        %v876 = vcombine.high %v875, %v875
        %s878 = scalar_lea.vmem [#allocation4], 33
        %879 = vst.msk [vmem:[%s878] ss:$8 sm:$0x3] %vm858, %v876
        %880 = vst.msk [vmem:[%s878] ss:$8 sm:$0x0] %vm858, %v876
        %vm887 = vcmask 1046528
        %v888 = vrot.slane %v809, 1
        %v889 = vrot.slane %v811, 1
        %v890 = vsel %vm887, %v888, %v889
        %v891 = vrot.slane %v810, 1
        %v892 = vrot.slane %v812, 1
        %v893 = vsel %vm887, %v891, %v892
        %v894 = vrot.slane %v813, 1
        %v895 = vsel %vm887, %v889, %v894
        %v896 = vrot.slane %v814, 1
        %v897 = vsel %vm887, %v892, %v896
        %904 = vst [vmem:[#allocation4 + $0x20] sm:$0xf8] %v890
        %905 = vst [vmem:[#allocation4 + $0x28] sm:$0xf8] %v893
        %906 = vst [vmem:[#allocation4 + $0x30] sm:$0xff] %v895
        %907 = vst [vmem:[#allocation4 + $0x38] sm:$0xff] %v897
        %908 = vst [vmem:[#allocation4 + $0x40] sm:$0x7] %v894
        %909 = vst [vmem:[#allocation4 + $0x48] sm:$0x7] %v896
        %v910 = vcombine.high %v809, %v810
        %v912 = vunpack.c.l.s4 1966171168
        %v913 = vunpack.c.0.s8 %v912
        %v914 = vlaneseq
        %v915 = vshrl.u32 %v914, 7
        %v916 = vsub.s32 %v913, %v915
        %v917 = vrot.slane %v910, %v916
        %v918 = vcombine.high %v917, %v917
        %v920 = vunpack.c.l.s4 1966171168
        %v921 = vunpack.c.0.s8 %v920
        %v922 = vlaneseq
        %v923 = vshrl.u32 %v922, 7
        %v924 = vsub.s32 %v921, %v923
        %v925 = vrot.slane %v918, %v924
        %s927 = scalar_lea.vmem [#allocation4], 34
        %928 = vst.msk [vmem:[%s927] ss:$8 sm:$0x3] %vm858, %v925
        %929 = vst.msk [vmem:[%s927] ss:$8 sm:$0x0] %vm858, %v925
        %v930 = vcombine.low %v813, %v814
        %v932 = vunpack.c.l.s4 1966171168
        %v933 = vunpack.c.0.s8 %v932
        %v934 = vlaneseq
        %v935 = vshrl.u32 %v934, 7
        %v936 = vsub.s32 %v933, %v935
        %v937 = vrot.slane %v930, %v936
        %v939 = vunpack.c.l.s4 1966171168
        %v940 = vunpack.c.0.s8 %v939
        %v941 = vlaneseq
        %v942 = vshrl.u32 %v941, 7
        %v943 = vsub.s32 %v940, %v942
        %v944 = vrot.slane %v937, %v943
        %v945 = vcombine.high %v944, %v944
        %s947 = scalar_lea.vmem [#allocation4], 67
        %948 = vst.msk [vmem:[%s947] ss:$8 sm:$0x3] %vm858, %v945
        %949 = vst.msk [vmem:[%s947] ss:$8 sm:$0x0] %vm858, %v945
        %v950 = vld [vmem:[#allocation4] sm:$0xff]
        %v951 = vld [vmem:[#allocation4 + $0x8] sm:$0xff]
        %v952 = vld [vmem:[#allocation4 + $0x10] sm:$0xff]
        %v953 = vld [vmem:[#allocation4 + $0x18] sm:$0xff]
        %v954 = vld [vmem:[#allocation4 + $0x20] sm:$0xff]
        %v955 = vld [vmem:[#allocation4 + $0x28] sm:$0xff]
        %v956 = vld [vmem:[#allocation4 + $0x30] sm:$0xff]
        %v957 = vld [vmem:[#allocation4 + $0x38] sm:$0xff]
        %v958 = vld [vmem:[#allocation4 + $0x40] sm:$0x3]
        %v959 = vld [vmem:[#allocation4 + $0x48] sm:$0x3]
        %v960 = vpack.c.bf16 %v952, %v950
        %v961 = vpack.c.bf16 %v953, %v951
        %v962 = vpack.c.bf16 %v956, %v954
        %v963 = vpack.c.bf16 %v957, %v955
        %v964 = vpack.c.bf16 %v958, %v958
        %v965 = vpack.c.bf16 %v959, %v959
        %v972 = vunpack.c.l.b16 %v960
        %v973 = vunpack.c.l.b16 %v961
        %v974 = vunpack.c.h.b16 %v960
        %v975 = vunpack.c.h.b16 %v961
        %v976 = vunpack.c.l.b16 %v962
        %v977 = vunpack.c.l.b16 %v963
        %v978 = vunpack.c.h.b16 %v962
        %v979 = vunpack.c.h.b16 %v963
        %v980 = vunpack.c.l.b16 %v964
        %v981 = vunpack.c.l.b16 %v965
        %v982 = vpack.c.b16 %v973, %v972
        %v983 = vpack.c.b16 %v975, %v974
        %v984 = vpack.c.b16 %v977, %v976
        %v985 = vpack.c.b16 %v979, %v978
        %v986 = vpack.c.b16 %v981, %v980
        %992 = vst [vmem:[#allocation5] sm:$0xff] %v982
        %993 = vst [vmem:[#allocation5 + $0x18] sm:$0xff] %v983
        %994 = vst [vmem:[#allocation5 + $0x30] sm:$0xff] %v984
        %995 = vst [vmem:[#allocation5 + $0x48] sm:$0xff] %v985
        %996 = vst [vmem:[#allocation5 + $0x60] sm:$0x11] %v986
        %v997 = vld [vmem:[#allocation4] sm:$0xfe]
        %v998 = vld [vmem:[#allocation4 + $0x8] sm:$0xfe]
        %v999 = vld [vmem:[#allocation4 + $0x10] sm:$0xff]
        %v1000 = vld [vmem:[#allocation4 + $0x18] sm:$0xff]
        %v1001 = vld [vmem:[#allocation4 + $0x20] sm:$0xff]
        %v1002 = vld [vmem:[#allocation4 + $0x28] sm:$0xff]
        %v1003 = vld [vmem:[#allocation4 + $0x30] sm:$0xff]
        %v1004 = vld [vmem:[#allocation4 + $0x38] sm:$0xff]
        %v1005 = vld [vmem:[#allocation4 + $0x40] sm:$0x7]
        %v1006 = vld [vmem:[#allocation4 + $0x48] sm:$0x7]
        %v1007 = vpack.c.bf16 %v999, %v997
        %v1008 = vpack.c.bf16 %v1000, %v998
        %v1009 = vpack.c.bf16 %v1003, %v1001
        %v1010 = vpack.c.bf16 %v1004, %v1002
        %v1011 = vpack.c.bf16 %v1005, %v1005
        %v1012 = vpack.c.bf16 %v1006, %v1006
        %v1019 = vunpack.c.l.b16 %v1007
        %v1020 = vunpack.c.l.b16 %v1008
        %v1021 = vunpack.c.h.b16 %v1007
        %v1022 = vunpack.c.h.b16 %v1008
        %v1023 = vunpack.c.l.b16 %v1009
        %v1024 = vunpack.c.l.b16 %v1010
        %v1025 = vunpack.c.h.b16 %v1009
        %v1026 = vunpack.c.h.b16 %v1010
        %v1027 = vunpack.c.l.b16 %v1011
        %v1028 = vunpack.c.l.b16 %v1012
        %v1029 = vpack.c.b16 %v1020, %v1019
        %v1030 = vpack.c.b16 %v1022, %v1021
        %v1031 = vpack.c.b16 %v1024, %v1023
        %v1032 = vpack.c.b16 %v1026, %v1025
        %v1033 = vpack.c.b16 %v1028, %v1027
        %vm1034 = vsmask.f32 3328
        %vm1035 = vsmask.f32 7440
        %vm1036 = vmor %vm1034, %vm1035
        %v1038 = vshrl.u32 %v1029, 16
        %v1040 = vrot.slane %v1038, 4
        %v1041 = vshll.u32 %v1029, 16
        %v1043 = vrot.slane %v1041, 5
        %v1044 = vor.u32 %v1040, %v1043
        %v1045 = vrot.slane %v1044, 4
        %v1047 = vshll.u32 %v1030, 16
        %v1049 = vrot.slane %v1047, 5
        %v1050 = vsel %vm1036, %v1045, %v1049
        %v1051 = vshrl.u32 %v1030, 16
        %v1053 = vrot.slane %v1051, 4
        %v1054 = vor.u32 %v1053, %v1049
        %v1055 = vrot.slane %v1054, 4
        %v1057 = vshll.u32 %v1031, 16
        %v1059 = vrot.slane %v1057, 5
        %v1060 = vsel %vm1036, %v1055, %v1059
        %v1061 = vshrl.u32 %v1031, 16
        %v1063 = vrot.slane %v1061, 4
        %v1064 = vor.u32 %v1063, %v1059
        %v1065 = vrot.slane %v1064, 4
        %v1067 = vshll.u32 %v1032, 16
        %v1069 = vrot.slane %v1067, 5
        %v1070 = vsel %vm1036, %v1065, %v1069
        %v1071 = vshrl.u32 %v1032, 16
        %v1073 = vrot.slane %v1071, 4
        %v1074 = vor.u32 %v1073, %v1069
        %v1075 = vrot.slane %v1074, 4
        %v1077 = vshll.u32 %v1033, 16
        %v1079 = vrot.slane %v1077, 5
        %v1080 = vsel %vm1036, %v1075, %v1079
        %v1081 = vshrl.u32 %v1033, 16
        %v1083 = vrot.slane %v1081, 4
        %v1084 = vor.u32 %v1083, %v1079
        %v1085 = vrot.slane %v1084, 4
        %1091 = vst [vmem:[#allocation5 + $0x8] sm:$0xff] %v1050
        %1092 = vst [vmem:[#allocation5 + $0x20] sm:$0xff] %v1060
        %1093 = vst [vmem:[#allocation5 + $0x38] sm:$0xff] %v1070
        %1094 = vst [vmem:[#allocation5 + $0x50] sm:$0xff] %v1080
        %1095 = vst [vmem:[#allocation5 + $0x68] sm:$0x11] %v1085
        %v1096 = vld [vmem:[#allocation4] sm:$0xfc]
        %v1097 = vld [vmem:[#allocation4 + $0x8] sm:$0xfc]
        %v1098 = vld [vmem:[#allocation4 + $0x10] sm:$0xff]
        %v1099 = vld [vmem:[#allocation4 + $0x18] sm:$0xff]
        %v1100 = vld [vmem:[#allocation4 + $0x20] sm:$0xff]
        %v1101 = vld [vmem:[#allocation4 + $0x28] sm:$0xff]
        %v1102 = vld [vmem:[#allocation4 + $0x30] sm:$0xff]
        %v1103 = vld [vmem:[#allocation4 + $0x38] sm:$0xff]
        %v1104 = vld [vmem:[#allocation4 + $0x40] sm:$0xf]
        %v1105 = vld [vmem:[#allocation4 + $0x48] sm:$0xf]
        %v1106 = vpack.c.bf16 %v1098, %v1096
        %v1107 = vpack.c.bf16 %v1099, %v1097
        %v1108 = vpack.c.bf16 %v1102, %v1100
        %v1109 = vpack.c.bf16 %v1103, %v1101
        %v1110 = vpack.c.bf16 %v1104, %v1104
        %v1111 = vpack.c.bf16 %v1105, %v1105
        %v1118 = vunpack.c.l.b16 %v1106
        %v1119 = vunpack.c.l.b16 %v1107
        %v1120 = vunpack.c.h.b16 %v1106
        %v1121 = vunpack.c.h.b16 %v1107
        %v1122 = vunpack.c.l.b16 %v1108
        %v1123 = vunpack.c.l.b16 %v1109
        %v1124 = vunpack.c.h.b16 %v1108
        %v1125 = vunpack.c.h.b16 %v1109
        %v1126 = vunpack.c.l.b16 %v1110
        %v1127 = vunpack.c.l.b16 %v1111
        %v1128 = vpack.c.b16 %v1119, %v1118
        %v1129 = vpack.c.b16 %v1121, %v1120
        %v1130 = vpack.c.b16 %v1123, %v1122
        %v1131 = vpack.c.b16 %v1125, %v1124
        %v1132 = vpack.c.b16 %v1127, %v1126
        %vm1133 = vcmask 1042432
        %vm1134 = vcmask 1046532
        %vm1135 = vmor %vm1133, %vm1134
        %v1136 = vrot.slane %v1128, 5
        %v1137 = vrot.slane %v1136, 4
        %v1138 = vrot.slane %v1129, 5
        %v1139 = vsel %vm1135, %v1137, %v1138
        %v1140 = vrot.slane %v1138, 4
        %v1141 = vrot.slane %v1130, 5
        %v1142 = vsel %vm1135, %v1140, %v1141
        %v1143 = vrot.slane %v1141, 4
        %v1144 = vrot.slane %v1131, 5
        %v1145 = vsel %vm1135, %v1143, %v1144
        %v1146 = vrot.slane %v1144, 4
        %v1147 = vrot.slane %v1132, 5
        %v1148 = vsel %vm1135, %v1146, %v1147
        %v1149 = vrot.slane %v1147, 4
        %1155 = vst [vmem:[#allocation5 + $0x10] sm:$0xff] %v1139
        %1156 = vst [vmem:[#allocation5 + $0x28] sm:$0xff] %v1142
        %1157 = vst [vmem:[#allocation5 + $0x40] sm:$0xff] %v1145
        %1158 = vst [vmem:[#allocation5 + $0x58] sm:$0xff] %v1148
        %1159 = vst [vmem:[#allocation5 + $0x70] sm:$0x11] %v1149
        %v1160 = vld [vmem:[#allocation5] sm:$0xff]
        %v1161 = vld [vmem:[#allocation5 + $0x8] sm:$0xff]
        %v1162 = vld [vmem:[#allocation5 + $0x10] sm:$0xff]
        %v1163 = vld [vmem:[#allocation5 + $0x18] sm:$0xff]
        %v1164 = vld [vmem:[#allocation5 + $0x20] sm:$0xff]
        %v1165 = vld [vmem:[#allocation5 + $0x28] sm:$0xff]
        %v1166 = vld [vmem:[#allocation5 + $0x30] sm:$0xff]
        %v1167 = vld [vmem:[#allocation5 + $0x38] sm:$0xff]
        %v1168 = vld [vmem:[#allocation5 + $0x40] sm:$0xff]
        %v1169 = vld [vmem:[#allocation5 + $0x48] sm:$0xff]
        %v1170 = vld [vmem:[#allocation5 + $0x50] sm:$0xff]
        %v1171 = vld [vmem:[#allocation5 + $0x58] sm:$0xff]
        %v1172 = vld [vmem:[#allocation5 + $0x60] sm:$0x11]
        %v1173 = vld [vmem:[#allocation5 + $0x68] sm:$0x11]
        %v1174 = vld [vmem:[#allocation5 + $0x70] sm:$0x11]
        %v1175 = vld [vmem:[#allocation10] sm:$0xff]
        %v1176 = vld [vmem:[#allocation10 + $0x8] sm:$0xff]
        %v1177 = vld [vmem:[#allocation10 + $0x10] sm:$0xff]
        %v1178 = vld [vmem:[#allocation10 + $0x18] sm:$0xff]
        %v1179 = vld [vmem:[#allocation10 + $0x20] sm:$0xff]
        %v1180 = vld [vmem:[#allocation10 + $0x28] sm:$0xff]
        %v1181 = vld [vmem:[#allocation10 + $0x30] sm:$0xff]
        %v1182 = vld [vmem:[#allocation10 + $0x38] sm:$0xff]
        %v1183 = vld [vmem:[#allocation10 + $0x40] sm:$0xff]
        %v1184 = vld [vmem:[#allocation10 + $0x48] sm:$0xff]
        %v1185 = vld [vmem:[#allocation10 + $0x50] sm:$0xff]
        %v1186 = vld [vmem:[#allocation10 + $0x58] sm:$0xff]
        %v1187 = vld [vmem:[#allocation10 + $0x60] sm:$0xff]
        %v1188 = vld [vmem:[#allocation10 + $0x68] sm:$0xff]
        %v1189 = vld [vmem:[#allocation10 + $0x70] sm:$0xff]
        %v1190 = vld [vmem:[#allocation10 + $0x78] sm:$0xff]
        %v1191 = vld [vmem:[#allocation10 + $0x80] sm:$0xff]
        %v1192 = vld [vmem:[#allocation10 + $0x88] sm:$0xff]
        %v1193 = vld [vmem:[#allocation10 + $0x90] sm:$0xff]
        %v1194 = vld [vmem:[#allocation10 + $0x98] sm:$0xff]
        %v1195 = vld [vmem:[#allocation10 + $0xa0] sm:$0xff]
        %v1196 = vld [vmem:[#allocation10 + $0xa8] sm:$0xff]
        %v1197 = vld [vmem:[#allocation10 + $0xb0] sm:$0xff]
        %v1198 = vld [vmem:[#allocation10 + $0xb8] sm:$0xff]
        %v1199 = vld [vmem:[#allocation10 + $0xc0] sm:$0xff]
        %v1200 = vld [vmem:[#allocation10 + $0xc8] sm:$0xff]
        %v1201 = vld [vmem:[#allocation10 + $0xd0] sm:$0xff]
        %v1202 = vld [vmem:[#allocation10 + $0xd8] sm:$0xff]
        %v1203 = vld [vmem:[#allocation10 + $0xe0] sm:$0xff]
        %v1204 = vld [vmem:[#allocation10 + $0xe8] sm:$0xff]
        %v1205 = vld [vmem:[#allocation10 + $0xf0] sm:$0xff]
        %v1206 = vld [vmem:[#allocation10 + $0xf8] sm:$0xff]
        %v1207 = vld [vmem:[#allocation10 + $0x100] sm:$0xff]
        %v1208 = vld [vmem:[#allocation10 + $0x108] sm:$0xff]
        %v1209 = vld [vmem:[#allocation10 + $0x110] sm:$0xff]
        %v1210 = vld [vmem:[#allocation10 + $0x118] sm:$0xff]
        %v1211 = vld [vmem:[#allocation10 + $0x120] sm:$0xff]
        %v1212 = vld [vmem:[#allocation10 + $0x128] sm:$0xff]
        %v1213 = vld [vmem:[#allocation10 + $0x130] sm:$0xff]
        %v1214 = vld [vmem:[#allocation10 + $0x138] sm:$0xff]
        %v1215 = vld [vmem:[#allocation10 + $0x140] sm:$0xff]
        %v1216 = vld [vmem:[#allocation10 + $0x148] sm:$0xff]
        %v1217 = vld [vmem:[#allocation10 + $0x150] sm:$0xff]
        %v1218 = vld [vmem:[#allocation10 + $0x158] sm:$0xff]
        %v1219 = vld [vmem:[#allocation10 + $0x160] sm:$0xff]
        %v1220 = vld [vmem:[#allocation10 + $0x168] sm:$0xff]
        %v1221 = vld [vmem:[#allocation10 + $0x170] sm:$0xff]
        %v1222 = vld [vmem:[#allocation10 + $0x178] sm:$0xff]
        %v1223 = vld [vmem:[#allocation10 + $0x180] sm:$0xff]
        %v1224 = vld [vmem:[#allocation10 + $0x188] sm:$0xff]
        %v1225 = vld [vmem:[#allocation10 + $0x190] sm:$0xff]
        %v1226 = vld [vmem:[#allocation10 + $0x198] sm:$0xff]
        %v1227 = vld [vmem:[#allocation10 + $0x1a0] sm:$0xff]
        %v1228 = vld [vmem:[#allocation10 + $0x1a8] sm:$0xff]
        %v1229 = vld [vmem:[#allocation10 + $0x1b0] sm:$0xff]
        %v1230 = vld [vmem:[#allocation10 + $0x1b8] sm:$0xff]
        %v1231 = vld [vmem:[#allocation10 + $0x1c0] sm:$0xff]
        %v1232 = vld [vmem:[#allocation10 + $0x1c8] sm:$0xff]
        %v1233 = vld [vmem:[#allocation10 + $0x1d0] sm:$0xff]
        %v1234 = vld [vmem:[#allocation10 + $0x1d8] sm:$0xff]
        %v1235 = vld [vmem:[#allocation10 + $0x1e0] sm:$0xff]
        %v1236 = vld [vmem:[#allocation10 + $0x1e8] sm:$0xff]
        %v1237 = vld [vmem:[#allocation10 + $0x1f0] sm:$0xff]
        %v1238 = vld [vmem:[#allocation10 + $0x1f8] sm:$0xff]
        %v1239 = vld [vmem:[#allocation10 + $0x200] sm:$0xff]
        %v1240 = vld [vmem:[#allocation10 + $0x208] sm:$0xff]
        %v1241 = vld [vmem:[#allocation10 + $0x210] sm:$0xff]
        %v1242 = vld [vmem:[#allocation10 + $0x218] sm:$0xff]
        %v1243 = vld [vmem:[#allocation10 + $0x220] sm:$0xff]
        %v1244 = vld [vmem:[#allocation10 + $0x228] sm:$0xff]
        %v1245 = vld [vmem:[#allocation10 + $0x230] sm:$0xff]
        %v1246 = vld [vmem:[#allocation10 + $0x238] sm:$0xff]
        %v1247 = vld [vmem:[#allocation10 + $0x240] sm:$0xff]
        %v1248 = vld [vmem:[#allocation10 + $0x248] sm:$0xff]
        %v1249 = vld [vmem:[#allocation10 + $0x250] sm:$0xff]
        %v1250 = vld [vmem:[#allocation10 + $0x258] sm:$0xff]
        %v1251 = vld [vmem:[#allocation10 + $0x260] sm:$0xff]
        %v1252 = vld [vmem:[#allocation10 + $0x268] sm:$0xff]
        %v1253 = vld [vmem:[#allocation10 + $0x270] sm:$0xff]
        %v1254 = vld [vmem:[#allocation10 + $0x278] sm:$0xff]
        %v1255 = vld [vmem:[#allocation10 + $0x280] sm:$0xff]
        %v1256 = vld [vmem:[#allocation10 + $0x288] sm:$0xff]
        %v1257 = vld [vmem:[#allocation10 + $0x290] sm:$0xff]
        %v1258 = vld [vmem:[#allocation10 + $0x298] sm:$0xff]
        %v1259 = vld [vmem:[#allocation10 + $0x2a0] sm:$0xff]
        %v1260 = vld [vmem:[#allocation10 + $0x2a8] sm:$0xff]
        %v1261 = vld [vmem:[#allocation10 + $0x2b0] sm:$0xff]
        %v1262 = vld [vmem:[#allocation10 + $0x2b8] sm:$0xff]
        %v1263 = vld [vmem:[#allocation10 + $0x2c0] sm:$0xff]
        %v1264 = vld [vmem:[#allocation10 + $0x2c8] sm:$0xff]
        %v1265 = vld [vmem:[#allocation10 + $0x2d0] sm:$0xff]
        %v1266 = vld [vmem:[#allocation10 + $0x2d8] sm:$0xff]
        %v1267 = vld [vmem:[#allocation10 + $0x2e0] sm:$0xff]
        %v1268 = vld [vmem:[#allocation10 + $0x2e8] sm:$0xff]
        %v1269 = vld [vmem:[#allocation10 + $0x2f0] sm:$0xff]
        %v1270 = vld [vmem:[#allocation10 + $0x2f8] sm:$0xff]
        %v1271 = vld [vmem:[%s4] sm:$0x3]
        %v1273 = vlaneseq
        %v1274 = vshrl.u32 %v1273, 7
        %v1275 = vsub.s32 0, %v1274
        %v1276 = vrot.slane %v1271, %v1275
        %v1277 = vlaneseq
        %v1278 = vshrl.u32 %v1277, 7
        %v1279 = vsub.s32 1, %v1278
        %v1280 = vrot.slane %v1271, %v1279
        %v1298 = vunpack.c.l.b16 %v1160
        %v1299 = vunpack.c.h.b16 %v1160
        %v1300 = vunpack.c.l.b16 %v1161
        %v1301 = vunpack.c.h.b16 %v1161
        %v1302 = vunpack.c.l.b16 %v1162
        %v1303 = vunpack.c.h.b16 %v1162
        %v1304 = vunpack.c.l.b16 %v1163
        %v1305 = vunpack.c.h.b16 %v1163
        %v1306 = vunpack.c.l.b16 %v1164
        %v1307 = vunpack.c.h.b16 %v1164
        %v1308 = vunpack.c.l.b16 %v1165
        %v1309 = vunpack.c.h.b16 %v1165
        %v1310 = vunpack.c.l.b16 %v1166
        %v1311 = vunpack.c.h.b16 %v1166
        %v1312 = vunpack.c.l.b16 %v1167
        %v1313 = vunpack.c.h.b16 %v1167
        %v1314 = vunpack.c.l.b16 %v1168
        %v1315 = vunpack.c.h.b16 %v1168
        %v1316 = vunpack.c.l.b16 %v1169
        %v1317 = vunpack.c.h.b16 %v1169
        %v1318 = vunpack.c.l.b16 %v1170
        %v1319 = vunpack.c.h.b16 %v1170
        %v1320 = vunpack.c.l.b16 %v1171
        %v1321 = vunpack.c.h.b16 %v1171
        %v1322 = vunpack.c.l.b16 %v1172
        %v1323 = vunpack.c.h.b16 %v1172
        %v1324 = vunpack.c.l.b16 %v1173
        %v1325 = vunpack.c.h.b16 %v1173
        %v1326 = vunpack.c.l.b16 %v1174
        %v1327 = vunpack.c.h.b16 %v1174
        %v1328 = vpack.c.b16 %v1304, %v1298
        %v1329 = vpack.c.b16 %v1305, %v1299
        %v1330 = vpack.c.b16 %v1306, %v1300
        %v1331 = vpack.c.b16 %v1307, %v1301
        %v1332 = vpack.c.b16 %v1308, %v1302
        %v1333 = vpack.c.b16 %v1309, %v1303
        %v1334 = vpack.c.b16 %v1316, %v1310
        %v1335 = vpack.c.b16 %v1317, %v1311
        %v1336 = vpack.c.b16 %v1318, %v1312
        %v1337 = vpack.c.b16 %v1319, %v1313
        %v1338 = vpack.c.b16 %v1320, %v1314
        %v1339 = vpack.c.b16 %v1321, %v1315
        %v1340 = vpack.c.b16 %v1322, %v1322
        %v1341 = vpack.c.b16 %v1323, %v1323
        %v1342 = vpack.c.b16 %v1324, %v1324
        %v1343 = vpack.c.b16 %v1325, %v1325
        %v1344 = vpack.c.b16 %v1326, %v1326
        %v1345 = vpack.c.b16 %v1327, %v1327
        %v1460 = vunpack.c.l.b16 %v1175
        %v1461 = vunpack.c.h.b16 %v1175
        %v1462 = vunpack.c.l.b16 %v1176
        %v1463 = vunpack.c.h.b16 %v1176
        %v1464 = vunpack.c.l.b16 %v1177
        %v1465 = vunpack.c.h.b16 %v1177
        %v1466 = vunpack.c.l.b16 %v1178
        %v1467 = vunpack.c.h.b16 %v1178
        %v1468 = vunpack.c.l.b16 %v1179
        %v1469 = vunpack.c.h.b16 %v1179
        %v1470 = vunpack.c.l.b16 %v1180
        %v1471 = vunpack.c.h.b16 %v1180
        %v1472 = vunpack.c.l.b16 %v1181
        %v1473 = vunpack.c.h.b16 %v1181
        %v1474 = vunpack.c.l.b16 %v1182
        %v1475 = vunpack.c.h.b16 %v1182
        %v1476 = vunpack.c.l.b16 %v1183
        %v1477 = vunpack.c.h.b16 %v1183
        %v1478 = vunpack.c.l.b16 %v1184
        %v1479 = vunpack.c.h.b16 %v1184
        %v1480 = vunpack.c.l.b16 %v1185
        %v1481 = vunpack.c.h.b16 %v1185
        %v1482 = vunpack.c.l.b16 %v1186
        %v1483 = vunpack.c.h.b16 %v1186
        %v1484 = vunpack.c.l.b16 %v1187
        %v1485 = vunpack.c.h.b16 %v1187
        %v1486 = vunpack.c.l.b16 %v1188
        %v1487 = vunpack.c.h.b16 %v1188
        %v1488 = vunpack.c.l.b16 %v1189
        %v1489 = vunpack.c.h.b16 %v1189
        %v1490 = vunpack.c.l.b16 %v1190
        %v1491 = vunpack.c.h.b16 %v1190
        %v1492 = vunpack.c.l.b16 %v1191
        %v1493 = vunpack.c.h.b16 %v1191
        %v1494 = vunpack.c.l.b16 %v1192
        %v1495 = vunpack.c.h.b16 %v1192
        %v1496 = vunpack.c.l.b16 %v1193
        %v1497 = vunpack.c.h.b16 %v1193
        %v1498 = vunpack.c.l.b16 %v1194
        %v1499 = vunpack.c.h.b16 %v1194
        %v1500 = vunpack.c.l.b16 %v1195
        %v1501 = vunpack.c.h.b16 %v1195
        %v1502 = vunpack.c.l.b16 %v1196
        %v1503 = vunpack.c.h.b16 %v1196
        %v1504 = vunpack.c.l.b16 %v1197
        %v1505 = vunpack.c.h.b16 %v1197
        %v1506 = vunpack.c.l.b16 %v1198
        %v1507 = vunpack.c.h.b16 %v1198
        %v1508 = vunpack.c.l.b16 %v1199
        %v1509 = vunpack.c.h.b16 %v1199
        %v1510 = vunpack.c.l.b16 %v1200
        %v1511 = vunpack.c.h.b16 %v1200
        %v1512 = vunpack.c.l.b16 %v1201
        %v1513 = vunpack.c.h.b16 %v1201
        %v1514 = vunpack.c.l.b16 %v1202
        %v1515 = vunpack.c.h.b16 %v1202
        %v1516 = vunpack.c.l.b16 %v1203
        %v1517 = vunpack.c.h.b16 %v1203
        %v1518 = vunpack.c.l.b16 %v1204
        %v1519 = vunpack.c.h.b16 %v1204
        %v1520 = vunpack.c.l.b16 %v1205
        %v1521 = vunpack.c.h.b16 %v1205
        %v1522 = vunpack.c.l.b16 %v1206
        %v1523 = vunpack.c.h.b16 %v1206
        %v1524 = vunpack.c.l.b16 %v1207
        %v1525 = vunpack.c.h.b16 %v1207
        %v1526 = vunpack.c.l.b16 %v1208
        %v1527 = vunpack.c.h.b16 %v1208
        %v1528 = vunpack.c.l.b16 %v1209
        %v1529 = vunpack.c.h.b16 %v1209
        %v1530 = vunpack.c.l.b16 %v1210
        %v1531 = vunpack.c.h.b16 %v1210
        %v1532 = vunpack.c.l.b16 %v1211
        %v1533 = vunpack.c.h.b16 %v1211
        %v1534 = vunpack.c.l.b16 %v1212
        %v1535 = vunpack.c.h.b16 %v1212
        %v1536 = vunpack.c.l.b16 %v1213
        %v1537 = vunpack.c.h.b16 %v1213
        %v1538 = vunpack.c.l.b16 %v1214
        %v1539 = vunpack.c.h.b16 %v1214
        %v1540 = vunpack.c.l.b16 %v1215
        %v1541 = vunpack.c.h.b16 %v1215
        %v1542 = vunpack.c.l.b16 %v1216
        %v1543 = vunpack.c.h.b16 %v1216
        %v1544 = vunpack.c.l.b16 %v1217
        %v1545 = vunpack.c.h.b16 %v1217
        %v1546 = vunpack.c.l.b16 %v1218
        %v1547 = vunpack.c.h.b16 %v1218
        %v1548 = vunpack.c.l.b16 %v1219
        %v1549 = vunpack.c.h.b16 %v1219
        %v1550 = vunpack.c.l.b16 %v1220
        %v1551 = vunpack.c.h.b16 %v1220
        %v1552 = vunpack.c.l.b16 %v1221
        %v1553 = vunpack.c.h.b16 %v1221
        %v1554 = vunpack.c.l.b16 %v1222
        %v1555 = vunpack.c.h.b16 %v1222
        %v1556 = vunpack.c.l.b16 %v1223
        %v1557 = vunpack.c.h.b16 %v1223
        %v1558 = vunpack.c.l.b16 %v1224
        %v1559 = vunpack.c.h.b16 %v1224
        %v1560 = vunpack.c.l.b16 %v1225
        %v1561 = vunpack.c.h.b16 %v1225
        %v1562 = vunpack.c.l.b16 %v1226
        %v1563 = vunpack.c.h.b16 %v1226
        %v1564 = vunpack.c.l.b16 %v1227
        %v1565 = vunpack.c.h.b16 %v1227
        %v1566 = vunpack.c.l.b16 %v1228
        %v1567 = vunpack.c.h.b16 %v1228
        %v1568 = vunpack.c.l.b16 %v1229
        %v1569 = vunpack.c.h.b16 %v1229
        %v1570 = vunpack.c.l.b16 %v1230
        %v1571 = vunpack.c.h.b16 %v1230
        %v1572 = vunpack.c.l.b16 %v1231
        %v1573 = vunpack.c.h.b16 %v1231
        %v1574 = vunpack.c.l.b16 %v1232
        %v1575 = vunpack.c.h.b16 %v1232
        %v1576 = vunpack.c.l.b16 %v1233
        %v1577 = vunpack.c.h.b16 %v1233
        %v1578 = vunpack.c.l.b16 %v1234
        %v1579 = vunpack.c.h.b16 %v1234
        %v1580 = vunpack.c.l.b16 %v1235
        %v1581 = vunpack.c.h.b16 %v1235
        %v1582 = vunpack.c.l.b16 %v1236
        %v1583 = vunpack.c.h.b16 %v1236
        %v1584 = vunpack.c.l.b16 %v1237
        %v1585 = vunpack.c.h.b16 %v1237
        %v1586 = vunpack.c.l.b16 %v1238
        %v1587 = vunpack.c.h.b16 %v1238
        %v1588 = vunpack.c.l.b16 %v1239
        %v1589 = vunpack.c.h.b16 %v1239
        %v1590 = vunpack.c.l.b16 %v1240
        %v1591 = vunpack.c.h.b16 %v1240
        %v1592 = vunpack.c.l.b16 %v1241
        %v1593 = vunpack.c.h.b16 %v1241
        %v1594 = vunpack.c.l.b16 %v1242
        %v1595 = vunpack.c.h.b16 %v1242
        %v1596 = vunpack.c.l.b16 %v1243
        %v1597 = vunpack.c.h.b16 %v1243
        %v1598 = vunpack.c.l.b16 %v1244
        %v1599 = vunpack.c.h.b16 %v1244
        %v1600 = vunpack.c.l.b16 %v1245
        %v1601 = vunpack.c.h.b16 %v1245
        %v1602 = vunpack.c.l.b16 %v1246
        %v1603 = vunpack.c.h.b16 %v1246
        %v1604 = vunpack.c.l.b16 %v1247
        %v1605 = vunpack.c.h.b16 %v1247
        %v1606 = vunpack.c.l.b16 %v1248
        %v1607 = vunpack.c.h.b16 %v1248
        %v1608 = vunpack.c.l.b16 %v1249
        %v1609 = vunpack.c.h.b16 %v1249
        %v1610 = vunpack.c.l.b16 %v1250
        %v1611 = vunpack.c.h.b16 %v1250
        %v1612 = vunpack.c.l.b16 %v1251
        %v1613 = vunpack.c.h.b16 %v1251
        %v1614 = vunpack.c.l.b16 %v1252
        %v1615 = vunpack.c.h.b16 %v1252
        %v1616 = vunpack.c.l.b16 %v1253
        %v1617 = vunpack.c.h.b16 %v1253
        %v1618 = vunpack.c.l.b16 %v1254
        %v1619 = vunpack.c.h.b16 %v1254
        %v1620 = vunpack.c.l.b16 %v1255
        %v1621 = vunpack.c.h.b16 %v1255
        %v1622 = vunpack.c.l.b16 %v1256
        %v1623 = vunpack.c.h.b16 %v1256
        %v1624 = vunpack.c.l.b16 %v1257
        %v1625 = vunpack.c.h.b16 %v1257
        %v1626 = vunpack.c.l.b16 %v1258
        %v1627 = vunpack.c.h.b16 %v1258
        %v1628 = vunpack.c.l.b16 %v1259
        %v1629 = vunpack.c.h.b16 %v1259
        %v1630 = vunpack.c.l.b16 %v1260
        %v1631 = vunpack.c.h.b16 %v1260
        %v1632 = vunpack.c.l.b16 %v1261
        %v1633 = vunpack.c.h.b16 %v1261
        %v1634 = vunpack.c.l.b16 %v1262
        %v1635 = vunpack.c.h.b16 %v1262
        %v1636 = vunpack.c.l.b16 %v1263
        %v1637 = vunpack.c.h.b16 %v1263
        %v1638 = vunpack.c.l.b16 %v1264
        %v1639 = vunpack.c.h.b16 %v1264
        %v1640 = vunpack.c.l.b16 %v1265
        %v1641 = vunpack.c.h.b16 %v1265
        %v1642 = vunpack.c.l.b16 %v1266
        %v1643 = vunpack.c.h.b16 %v1266
        %v1644 = vunpack.c.l.b16 %v1267
        %v1645 = vunpack.c.h.b16 %v1267
        %v1646 = vunpack.c.l.b16 %v1268
        %v1647 = vunpack.c.h.b16 %v1268
        %v1648 = vunpack.c.l.b16 %v1269
        %v1649 = vunpack.c.h.b16 %v1269
        %v1650 = vunpack.c.l.b16 %v1270
        %v1651 = vunpack.c.h.b16 %v1270
        %v1652 = vpack.c.b16 %v1462, %v1460
        %v1653 = vpack.c.b16 %v1463, %v1461
        %v1654 = vpack.c.b16 %v1466, %v1464
        %v1655 = vpack.c.b16 %v1467, %v1465
        %v1656 = vpack.c.b16 %v1470, %v1468
        %v1657 = vpack.c.b16 %v1471, %v1469
        %v1658 = vpack.c.b16 %v1474, %v1472
        %v1659 = vpack.c.b16 %v1475, %v1473
        %v1660 = vpack.c.b16 %v1478, %v1476
        %v1661 = vpack.c.b16 %v1479, %v1477
        %v1662 = vpack.c.b16 %v1482, %v1480
        %v1663 = vpack.c.b16 %v1483, %v1481
        %v1664 = vpack.c.b16 %v1486, %v1484
        %v1665 = vpack.c.b16 %v1487, %v1485
        %v1666 = vpack.c.b16 %v1490, %v1488
        %v1667 = vpack.c.b16 %v1491, %v1489
        %v1668 = vpack.c.b16 %v1494, %v1492
        %v1669 = vpack.c.b16 %v1495, %v1493
        %v1670 = vpack.c.b16 %v1498, %v1496
        %v1671 = vpack.c.b16 %v1499, %v1497
        %v1672 = vpack.c.b16 %v1502, %v1500
        %v1673 = vpack.c.b16 %v1503, %v1501
        %v1674 = vpack.c.b16 %v1506, %v1504
        %v1675 = vpack.c.b16 %v1507, %v1505
        %v1676 = vpack.c.b16 %v1510, %v1508
        %v1677 = vpack.c.b16 %v1511, %v1509
        %v1678 = vpack.c.b16 %v1514, %v1512
        %v1679 = vpack.c.b16 %v1515, %v1513
        %v1680 = vpack.c.b16 %v1518, %v1516
        %v1681 = vpack.c.b16 %v1519, %v1517
        %v1682 = vpack.c.b16 %v1522, %v1520
        %v1683 = vpack.c.b16 %v1523, %v1521
        %v1684 = vpack.c.b16 %v1526, %v1524
        %v1685 = vpack.c.b16 %v1527, %v1525
        %v1686 = vpack.c.b16 %v1530, %v1528
        %v1687 = vpack.c.b16 %v1531, %v1529
        %v1688 = vpack.c.b16 %v1534, %v1532
        %v1689 = vpack.c.b16 %v1535, %v1533
        %v1690 = vpack.c.b16 %v1538, %v1536
        %v1691 = vpack.c.b16 %v1539, %v1537
        %v1692 = vpack.c.b16 %v1542, %v1540
        %v1693 = vpack.c.b16 %v1543, %v1541
        %v1694 = vpack.c.b16 %v1546, %v1544
        %v1695 = vpack.c.b16 %v1547, %v1545
        %v1696 = vpack.c.b16 %v1550, %v1548
        %v1697 = vpack.c.b16 %v1551, %v1549
        %v1698 = vpack.c.b16 %v1554, %v1552
        %v1699 = vpack.c.b16 %v1555, %v1553
        %v1700 = vpack.c.b16 %v1558, %v1556
        %v1701 = vpack.c.b16 %v1559, %v1557
        %v1702 = vpack.c.b16 %v1562, %v1560
        %v1703 = vpack.c.b16 %v1563, %v1561
        %v1704 = vpack.c.b16 %v1566, %v1564
        %v1705 = vpack.c.b16 %v1567, %v1565
        %v1706 = vpack.c.b16 %v1570, %v1568
        %v1707 = vpack.c.b16 %v1571, %v1569
        %v1708 = vpack.c.b16 %v1574, %v1572
        %v1709 = vpack.c.b16 %v1575, %v1573
        %v1710 = vpack.c.b16 %v1578, %v1576
        %v1711 = vpack.c.b16 %v1579, %v1577
        %v1712 = vpack.c.b16 %v1582, %v1580
        %v1713 = vpack.c.b16 %v1583, %v1581
        %v1714 = vpack.c.b16 %v1586, %v1584
        %v1715 = vpack.c.b16 %v1587, %v1585
        %v1716 = vpack.c.b16 %v1590, %v1588
        %v1717 = vpack.c.b16 %v1591, %v1589
        %v1718 = vpack.c.b16 %v1594, %v1592
        %v1719 = vpack.c.b16 %v1595, %v1593
        %v1720 = vpack.c.b16 %v1598, %v1596
        %v1721 = vpack.c.b16 %v1599, %v1597
        %v1722 = vpack.c.b16 %v1602, %v1600
        %v1723 = vpack.c.b16 %v1603, %v1601
        %v1724 = vpack.c.b16 %v1606, %v1604
        %v1725 = vpack.c.b16 %v1607, %v1605
        %v1726 = vpack.c.b16 %v1610, %v1608
        %v1727 = vpack.c.b16 %v1611, %v1609
        %v1728 = vpack.c.b16 %v1614, %v1612
        %v1729 = vpack.c.b16 %v1615, %v1613
        %v1730 = vpack.c.b16 %v1618, %v1616
        %v1731 = vpack.c.b16 %v1619, %v1617
        %v1732 = vpack.c.b16 %v1622, %v1620
        %v1733 = vpack.c.b16 %v1623, %v1621
        %v1734 = vpack.c.b16 %v1626, %v1624
        %v1735 = vpack.c.b16 %v1627, %v1625
        %v1736 = vpack.c.b16 %v1630, %v1628
        %v1737 = vpack.c.b16 %v1631, %v1629
        %v1738 = vpack.c.b16 %v1634, %v1632
        %v1739 = vpack.c.b16 %v1635, %v1633
        %v1740 = vpack.c.b16 %v1638, %v1636
        %v1741 = vpack.c.b16 %v1639, %v1637
        %v1742 = vpack.c.b16 %v1642, %v1640
        %v1743 = vpack.c.b16 %v1643, %v1641
        %v1744 = vpack.c.b16 %v1646, %v1644
        %v1745 = vpack.c.b16 %v1647, %v1645
        %v1746 = vpack.c.b16 %v1650, %v1648
        %v1747 = vpack.c.b16 %v1651, %v1649
        %1844 = vmatprep.subr.bf16.mxu0 %v1653
        %1845 = vmatpush1.bf16.msra.mxu0 %v1652
        %1846 = vmatprep.subr.bf16.mxu0 %v1655
        %1847 = vmatpush1.bf16.msra.mxu0 %v1654
        %1848 = vmatprep.subr.bf16.mxu0 %v1657
        %1849 = vmatpush1.bf16.msra.mxu0 %v1656
        %1850 = vmatprep.subr.bf16.mxu0 %v1659
        %1851 = vmatpush1.bf16.msra.mxu0 %v1658
        %1852 = vmatprep.subr.bf16.mxu0 %v1661
        %1853 = vmatpush1.bf16.msra.mxu0 %v1660
        %1854 = vmatprep.subr.bf16.mxu0 %v1663
        %1855 = vmatpush1.bf16.msra.mxu0 %v1662
        %1856 = vmatprep.subr.bf16.mxu0 %v1665
        %1857 = vmatpush1.bf16.msra.mxu0 %v1664
        %1858 = vmatprep.subr.bf16.mxu0 %v1667
        %1859 = vmatpush1.bf16.msra.mxu0 %v1666
        %1860 = vmatprep.subr.bf16.mxu0 %v1669
        %1861 = vmatpush1.bf16.msra.mxu0 %v1668
        %1862 = vmatprep.subr.bf16.mxu0 %v1671
        %1863 = vmatpush1.bf16.msra.mxu0 %v1670
        %1864 = vmatprep.subr.bf16.mxu0 %v1673
        %1865 = vmatpush1.bf16.msra.mxu0 %v1672
        %1866 = vmatprep.subr.bf16.mxu0 %v1675
        %1867 = vmatpush1.bf16.msra.mxu0 %v1674
        %1868 = vmatprep.subr.bf16.mxu0 %v1677
        %1869 = vmatpush1.bf16.msra.mxu0 %v1676
        %1870 = vmatprep.subr.bf16.mxu0 %v1679
        %1871 = vmatpush1.bf16.msra.mxu0 %v1678
        %1872 = vmatprep.subr.bf16.mxu0 %v1681
        %1873 = vmatpush1.bf16.msra.mxu0 %v1680
        %1874 = vmatprep.subr.bf16.mxu0 %v1683
        %1875 = vmatpush1.bf16.msra.mxu0 %v1682
        %1876 = vmatprep.mubr.bf16.mxu0 %v1329
        %1877 = vmatmul.mubr.bf16.gmra.mrb[0].mxu0 %v1328
        %v1878 = vpop.f32.mrb[0].mxu0
        %v1879 = vadd.f32 %v1276, %v1878
        %v1880 = vpop.f32.mrb[0].mxu0
        %v1881 = vadd.f32 %v1280, %v1880
        %v1882 = vpop.f32.mrb[0].mxu0
        %v1883 = vadd.f32 %v1276, %v1882
        %v1884 = vpop.f32.mrb[0].mxu0
        %v1885 = vadd.f32 %v1280, %v1884
        %1886 = vmatprep.mubr.bf16.mxu0 %v1335
        %1887 = vmatmul.mubr.bf16.gmra.mrb[0].mxu0 %v1334
        %v1888 = vpop.f32.mrb[0].mxu0
        %v1889 = vadd.f32 %v1276, %v1888
        %v1890 = vpop.f32.mrb[0].mxu0
        %v1891 = vadd.f32 %v1280, %v1890
        %v1892 = vpop.f32.mrb[0].mxu0
        %v1893 = vadd.f32 %v1276, %v1892
        %v1894 = vpop.f32.mrb[0].mxu0
        %v1895 = vadd.f32 %v1280, %v1894
        %1896 = vmatprep.mubr.bf16.mxu0 %v1341
        %1897 = vmatmul.mubr.bf16.gmra.mrb[0].mxu0 %v1340
        %v1898 = vpop.f32.mrb[0].mxu0
        %v1899 = vadd.f32 %v1276, %v1898
        %v1900 = vpop.f32.mrb[0].mxu0
        %v1901 = vadd.f32 %v1280, %v1900
        %v1902 = vpop.f32.mrb[0].mxu0
        %v1903 = vpop.f32.mrb[0].mxu0
        %1904 = vdwg.mxu0
        %1905 = vmatprep.subr.bf16.mxu0 %v1685
        %1906 = vmatpush1.bf16.msra.mxu0 %v1684
        %1907 = vmatprep.subr.bf16.mxu0 %v1687
        %1908 = vmatpush1.bf16.msra.mxu0 %v1686
        %1909 = vmatprep.subr.bf16.mxu0 %v1689
        %1910 = vmatpush1.bf16.msra.mxu0 %v1688
        %1911 = vmatprep.subr.bf16.mxu0 %v1691
        %1912 = vmatpush1.bf16.msra.mxu0 %v1690
        %1913 = vmatprep.subr.bf16.mxu0 %v1693
        %1914 = vmatpush1.bf16.msra.mxu0 %v1692
        %1915 = vmatprep.subr.bf16.mxu0 %v1695
        %1916 = vmatpush1.bf16.msra.mxu0 %v1694
        %1917 = vmatprep.subr.bf16.mxu0 %v1697
        %1918 = vmatpush1.bf16.msra.mxu0 %v1696
        %1919 = vmatprep.subr.bf16.mxu0 %v1699
        %1920 = vmatpush1.bf16.msra.mxu0 %v1698
        %1921 = vmatprep.subr.bf16.mxu0 %v1701
        %1922 = vmatpush1.bf16.msra.mxu0 %v1700
        %1923 = vmatprep.subr.bf16.mxu0 %v1703
        %1924 = vmatpush1.bf16.msra.mxu0 %v1702
        %1925 = vmatprep.subr.bf16.mxu0 %v1705
        %1926 = vmatpush1.bf16.msra.mxu0 %v1704
        %1927 = vmatprep.subr.bf16.mxu0 %v1707
        %1928 = vmatpush1.bf16.msra.mxu0 %v1706
        %1929 = vmatprep.subr.bf16.mxu0 %v1709
        %1930 = vmatpush1.bf16.msra.mxu0 %v1708
        %1931 = vmatprep.subr.bf16.mxu0 %v1711
        %1932 = vmatpush1.bf16.msra.mxu0 %v1710
        %1933 = vmatprep.subr.bf16.mxu0 %v1713
        %1934 = vmatpush1.bf16.msra.mxu0 %v1712
        %1935 = vmatprep.subr.bf16.mxu0 %v1715
        %1936 = vmatpush1.bf16.msra.mxu0 %v1714
        %1937 = vmatprep.mubr.bf16.mxu0 %v1331
        %1938 = vmatmul.mubr.bf16.gmra.mrb[0].mxu0 %v1330
        %v1939 = vpop.f32.mrb[0].mxu0
        %v1940 = vadd.f32 %v1879, %v1939
        %v1941 = vpop.f32.mrb[0].mxu0
        %v1942 = vadd.f32 %v1881, %v1941
        %v1943 = vpop.f32.mrb[0].mxu0
        %v1944 = vadd.f32 %v1883, %v1943
        %v1945 = vpop.f32.mrb[0].mxu0
        %v1946 = vadd.f32 %v1885, %v1945
        %1947 = vmatprep.mubr.bf16.mxu0 %v1337
        %1948 = vmatmul.mubr.bf16.gmra.mrb[0].mxu0 %v1336
        %v1949 = vpop.f32.mrb[0].mxu0
        %v1950 = vadd.f32 %v1889, %v1949
        %v1951 = vpop.f32.mrb[0].mxu0
        %v1952 = vadd.f32 %v1891, %v1951
        %v1953 = vpop.f32.mrb[0].mxu0
        %v1954 = vadd.f32 %v1893, %v1953
        %v1955 = vpop.f32.mrb[0].mxu0
        %v1956 = vadd.f32 %v1895, %v1955
        %1957 = vmatprep.mubr.bf16.mxu0 %v1343
        %1958 = vmatmul.mubr.bf16.gmra.mrb[0].mxu0 %v1342
        %v1959 = vpop.f32.mrb[0].mxu0
        %v1960 = vadd.f32 %v1899, %v1959
        %v1961 = vpop.f32.mrb[0].mxu0
        %v1962 = vadd.f32 %v1901, %v1961
        %v1963 = vpop.f32.mrb[0].mxu0
        %v1964 = vpop.f32.mrb[0].mxu0
        %1965 = vdwg.mxu0
        %1966 = vmatprep.subr.bf16.mxu0 %v1717
        %1967 = vmatpush1.bf16.msra.mxu0 %v1716
        %1968 = vmatprep.subr.bf16.mxu0 %v1719
        %1969 = vmatpush1.bf16.msra.mxu0 %v1718
        %1970 = vmatprep.subr.bf16.mxu0 %v1721
        %1971 = vmatpush1.bf16.msra.mxu0 %v1720
        %1972 = vmatprep.subr.bf16.mxu0 %v1723
        %1973 = vmatpush1.bf16.msra.mxu0 %v1722
        %1974 = vmatprep.subr.bf16.mxu0 %v1725
        %1975 = vmatpush1.bf16.msra.mxu0 %v1724
        %1976 = vmatprep.subr.bf16.mxu0 %v1727
        %1977 = vmatpush1.bf16.msra.mxu0 %v1726
        %1978 = vmatprep.subr.bf16.mxu0 %v1729
        %1979 = vmatpush1.bf16.msra.mxu0 %v1728
        %1980 = vmatprep.subr.bf16.mxu0 %v1731
        %1981 = vmatpush1.bf16.msra.mxu0 %v1730
        %1982 = vmatprep.subr.bf16.mxu0 %v1733
        %1983 = vmatpush1.bf16.msra.mxu0 %v1732
        %1984 = vmatprep.subr.bf16.mxu0 %v1735
        %1985 = vmatpush1.bf16.msra.mxu0 %v1734
        %1986 = vmatprep.subr.bf16.mxu0 %v1737
        %1987 = vmatpush1.bf16.msra.mxu0 %v1736
        %1988 = vmatprep.subr.bf16.mxu0 %v1739
        %1989 = vmatpush1.bf16.msra.mxu0 %v1738
        %1990 = vmatprep.subr.bf16.mxu0 %v1741
        %1991 = vmatpush1.bf16.msra.mxu0 %v1740
        %1992 = vmatprep.subr.bf16.mxu0 %v1743
        %1993 = vmatpush1.bf16.msra.mxu0 %v1742
        %1994 = vmatprep.subr.bf16.mxu0 %v1745
        %1995 = vmatpush1.bf16.msra.mxu0 %v1744
        %1996 = vmatprep.subr.bf16.mxu0 %v1747
        %1997 = vmatpush1.bf16.msra.mxu0 %v1746
        %1998 = vmatprep.mubr.bf16.mxu0 %v1333
        %1999 = vmatmul.mubr.bf16.gmra.mrb[0].mxu0 %v1332
        %v2000 = vpop.f32.mrb[0].mxu0
        %v2001 = vadd.f32 %v1940, %v2000
        %v2002 = vpop.f32.mrb[0].mxu0
        %v2003 = vadd.f32 %v1942, %v2002
        %v2004 = vpop.f32.mrb[0].mxu0
        %v2005 = vadd.f32 %v1944, %v2004
        %v2006 = vpop.f32.mrb[0].mxu0
        %v2007 = vadd.f32 %v1946, %v2006
        %2008 = vmatprep.mubr.bf16.mxu0 %v1339
        %2009 = vmatmul.mubr.bf16.gmra.mrb[0].mxu0 %v1338
        %v2010 = vpop.f32.mrb[0].mxu0
        %v2011 = vadd.f32 %v1950, %v2010
        %v2012 = vpop.f32.mrb[0].mxu0
        %v2013 = vadd.f32 %v1952, %v2012
        %v2014 = vpop.f32.mrb[0].mxu0
        %v2015 = vadd.f32 %v1954, %v2014
        %v2016 = vpop.f32.mrb[0].mxu0
        %v2017 = vadd.f32 %v1956, %v2016
        %2018 = vmatprep.mubr.bf16.mxu0 %v1345
        %2019 = vmatmul.mubr.bf16.gmra.mrb[0].mxu0 %v1344
        %v2020 = vpop.f32.mrb[0].mxu0
        %v2021 = vadd.f32 %v1960, %v2020
        %v2022 = vpop.f32.mrb[0].mxu0
        %v2023 = vadd.f32 %v1962, %v2022
        %v2024 = vpop.f32.mrb[0].mxu0
        %v2025 = vpop.f32.mrb[0].mxu0
        %2026 = vdwg.mxu0
        %v2027 = vmax.f32 %v2001, 0.0
        %v2028 = vmax.f32 %v2003, 0.0
        %v2029 = vmax.f32 %v2005, 0.0
        %v2030 = vmax.f32 %v2007, 0.0
        %v2031 = vmax.f32 %v2011, 0.0
        %v2032 = vmax.f32 %v2013, 0.0
        %v2033 = vmax.f32 %v2015, 0.0
        %v2034 = vmax.f32 %v2017, 0.0
        %v2035 = vmax.f32 %v2021, 0.0
        %v2036 = vmax.f32 %v2023, 0.0
        %v2041 = vrot.slane %v2027, 7
        %v2042 = vrot.slane %v2028, 7
        %v2043 = vrot.slane %v2029, 7
        %v2044 = vsel %vm819, %v2041, %v2043
        %v2045 = vrot.slane %v2030, 7
        %v2046 = vsel %vm819, %v2042, %v2045
        %2053 = vst [vmem:[#allocation4] sm:$0xfe] %v2041
        %2054 = vst [vmem:[#allocation4 + $0x8] sm:$0xfe] %v2042
        %2055 = vst [vmem:[#allocation4 + $0x10] sm:$0xff] %v2044
        %2056 = vst [vmem:[#allocation4 + $0x18] sm:$0xff] %v2046
        %2057 = vst [vmem:[#allocation4 + $0x20] sm:$0x1] %v2043
        %2058 = vst [vmem:[#allocation4 + $0x28] sm:$0x1] %v2045
        %v2059 = vcombine.low %v2027, %v2028
        %v2061 = vunpack.c.l.s4 1966171168
        %v2062 = vunpack.c.0.s8 %v2061
        %v2063 = vlaneseq
        %v2064 = vshrl.u32 %v2063, 7
        %v2065 = vsub.s32 %v2062, %v2064
        %v2066 = vrot.slane %v2059, %v2065
        %v2067 = vcombine.high %v2066, %v2066
        %v2069 = vunpack.c.l.s4 1966171168
        %v2070 = vunpack.c.0.s8 %v2069
        %v2071 = vlaneseq
        %v2072 = vshrl.u32 %v2071, 7
        %v2073 = vsub.s32 %v2070, %v2072
        %v2074 = vrot.slane %v2067, %v2073
        %2076 = vst.msk [vmem:[#allocation4] ss:$8 sm:$0x3] %vm858, %v2074
        %2077 = vst.msk [vmem:[#allocation4] ss:$8 sm:$0x0] %vm858, %v2074
        %v2078 = vcombine.high %v2029, %v2030
        %v2080 = vunpack.c.l.s4 1966171168
        %v2081 = vunpack.c.0.s8 %v2080
        %v2082 = vlaneseq
        %v2083 = vshrl.u32 %v2082, 7
        %v2084 = vsub.s32 %v2081, %v2083
        %v2085 = vrot.slane %v2078, %v2084
        %v2087 = vunpack.c.l.s4 1966171168
        %v2088 = vunpack.c.0.s8 %v2087
        %v2089 = vlaneseq
        %v2090 = vshrl.u32 %v2089, 7
        %v2091 = vsub.s32 %v2088, %v2090
        %v2092 = vrot.slane %v2085, %v2091
        %v2093 = vcombine.high %v2092, %v2092
        %2095 = vst.msk [vmem:[%s878] ss:$8 sm:$0x3] %vm858, %v2093
        %2096 = vst.msk [vmem:[%s878] ss:$8 sm:$0x0] %vm858, %v2093
        %v2103 = vrot.slane %v2031, 7
        %v2104 = vrot.slane %v2032, 7
        %v2105 = vrot.slane %v2033, 7
        %v2106 = vsel %vm819, %v2103, %v2105
        %v2107 = vrot.slane %v2034, 7
        %v2108 = vsel %vm819, %v2104, %v2107
        %v2109 = vrot.slane %v2035, 7
        %v2110 = vsel %vm819, %v2105, %v2109
        %v2111 = vrot.slane %v2036, 7
        %v2112 = vsel %vm819, %v2107, %v2111
        %2119 = vst [vmem:[#allocation4 + $0x20] sm:$0xf8] %v2103
        %2120 = vst [vmem:[#allocation4 + $0x28] sm:$0xf8] %v2104
        %2121 = vst [vmem:[#allocation4 + $0x30] sm:$0xff] %v2106
        %2122 = vst [vmem:[#allocation4 + $0x38] sm:$0xff] %v2108
        %2123 = vst [vmem:[#allocation4 + $0x40] sm:$0x7] %v2110
        %2124 = vst [vmem:[#allocation4 + $0x48] sm:$0x7] %v2112
        %v2125 = vcombine.low %v2031, %v2032
        %v2127 = vunpack.c.l.s4 1966171168
        %v2128 = vunpack.c.0.s8 %v2127
        %v2129 = vlaneseq
        %v2130 = vshrl.u32 %v2129, 7
        %v2131 = vsub.s32 %v2128, %v2130
        %v2132 = vrot.slane %v2125, %v2131
        %v2133 = vcombine.high %v2132, %v2132
        %v2135 = vunpack.c.l.s4 1966171168
        %v2136 = vunpack.c.0.s8 %v2135
        %v2137 = vlaneseq
        %v2138 = vshrl.u32 %v2137, 7
        %v2139 = vsub.s32 %v2136, %v2138
        %v2140 = vrot.slane %v2133, %v2139
        %v2141 = vcombine.high %v2140, %v2140
        %2143 = vst.msk [vmem:[%s927] ss:$8 sm:$0x3] %vm858, %v2141
        %2144 = vst.msk [vmem:[%s927] ss:$8 sm:$0x0] %vm858, %v2141
        %v2145 = vcombine.low %v2035, %v2036
        %v2147 = vunpack.c.l.s4 1966171168
        %v2148 = vunpack.c.0.s8 %v2147
        %v2149 = vlaneseq
        %v2150 = vshrl.u32 %v2149, 7
        %v2151 = vsub.s32 %v2148, %v2150
        %v2152 = vrot.slane %v2145, %v2151
        %v2154 = vunpack.c.l.s4 1966171168
        %v2155 = vunpack.c.0.s8 %v2154
        %v2156 = vlaneseq
        %v2157 = vshrl.u32 %v2156, 7
        %v2158 = vsub.s32 %v2155, %v2157
        %v2159 = vrot.slane %v2152, %v2158
        %2161 = vst.msk [vmem:[%s947] ss:$8 sm:$0x3] %vm858, %v2159
        %2162 = vst.msk [vmem:[%s947] ss:$8 sm:$0x0] %vm858, %v2159
        %v2163 = vld [vmem:[#allocation4] sm:$0xff]
        %v2164 = vld [vmem:[#allocation4 + $0x8] sm:$0xff]
        %v2165 = vld [vmem:[#allocation4 + $0x10] sm:$0xff]
        %v2166 = vld [vmem:[#allocation4 + $0x18] sm:$0xff]
        %v2167 = vld [vmem:[#allocation4 + $0x20] sm:$0xff]
        %v2168 = vld [vmem:[#allocation4 + $0x28] sm:$0xff]
        %v2169 = vld [vmem:[#allocation4 + $0x30] sm:$0xff]
        %v2170 = vld [vmem:[#allocation4 + $0x38] sm:$0xff]
        %v2171 = vld [vmem:[#allocation4 + $0x40] sm:$0x3]
        %v2172 = vld [vmem:[#allocation4 + $0x48] sm:$0x3]
        %v2173 = vpack.c.bf16 %v2165, %v2163
        %v2174 = vpack.c.bf16 %v2166, %v2164
        %v2175 = vpack.c.bf16 %v2169, %v2167
        %v2176 = vpack.c.bf16 %v2170, %v2168
        %v2177 = vpack.c.bf16 %v2171, %v2171
        %v2178 = vpack.c.bf16 %v2172, %v2172
        %v2185 = vunpack.c.l.b16 %v2173
        %v2186 = vunpack.c.l.b16 %v2174
        %v2187 = vunpack.c.h.b16 %v2173
        %v2188 = vunpack.c.h.b16 %v2174
        %v2189 = vunpack.c.l.b16 %v2175
        %v2190 = vunpack.c.l.b16 %v2176
        %v2191 = vunpack.c.h.b16 %v2175
        %v2192 = vunpack.c.h.b16 %v2176
        %v2193 = vunpack.c.l.b16 %v2177
        %v2194 = vunpack.c.l.b16 %v2178
        %v2195 = vpack.c.b16 %v2186, %v2185
        %v2196 = vpack.c.b16 %v2188, %v2187
        %v2197 = vpack.c.b16 %v2190, %v2189
        %v2198 = vpack.c.b16 %v2192, %v2191
        %v2199 = vpack.c.b16 %v2194, %v2193
        %2205 = vst [vmem:[#allocation5] sm:$0xff] %v2195
        %2206 = vst [vmem:[#allocation5 + $0x18] sm:$0xff] %v2196
        %2207 = vst [vmem:[#allocation5 + $0x30] sm:$0xff] %v2197
        %2208 = vst [vmem:[#allocation5 + $0x48] sm:$0xff] %v2198
        %2209 = vst [vmem:[#allocation5 + $0x60] sm:$0x11] %v2199
        %v2210 = vld [vmem:[#allocation4] sm:$0xfe]
        %v2211 = vld [vmem:[#allocation4 + $0x8] sm:$0xfe]
        %v2212 = vld [vmem:[#allocation4 + $0x10] sm:$0xff]
        %v2213 = vld [vmem:[#allocation4 + $0x18] sm:$0xff]
        %v2214 = vld [vmem:[#allocation4 + $0x20] sm:$0xff]
        %v2215 = vld [vmem:[#allocation4 + $0x28] sm:$0xff]
        %v2216 = vld [vmem:[#allocation4 + $0x30] sm:$0xff]
        %v2217 = vld [vmem:[#allocation4 + $0x38] sm:$0xff]
        %v2218 = vld [vmem:[#allocation4 + $0x40] sm:$0x7]
        %v2219 = vld [vmem:[#allocation4 + $0x48] sm:$0x7]
        %v2220 = vpack.c.bf16 %v2212, %v2210
        %v2221 = vpack.c.bf16 %v2213, %v2211
        %v2222 = vpack.c.bf16 %v2216, %v2214
        %v2223 = vpack.c.bf16 %v2217, %v2215
        %v2224 = vpack.c.bf16 %v2218, %v2218
        %v2225 = vpack.c.bf16 %v2219, %v2219
        %v2232 = vunpack.c.l.b16 %v2220
        %v2233 = vunpack.c.l.b16 %v2221
        %v2234 = vunpack.c.h.b16 %v2220
        %v2235 = vunpack.c.h.b16 %v2221
        %v2236 = vunpack.c.l.b16 %v2222
        %v2237 = vunpack.c.l.b16 %v2223
        %v2238 = vunpack.c.h.b16 %v2222
        %v2239 = vunpack.c.h.b16 %v2223
        %v2240 = vunpack.c.l.b16 %v2224
        %v2241 = vunpack.c.l.b16 %v2225
        %v2242 = vpack.c.b16 %v2233, %v2232
        %v2243 = vpack.c.b16 %v2235, %v2234
        %v2244 = vpack.c.b16 %v2237, %v2236
        %v2245 = vpack.c.b16 %v2239, %v2238
        %v2246 = vpack.c.b16 %v2241, %v2240
        %v2248 = vshrl.u32 %v2242, 16
        %v2250 = vrot.slane %v2248, 4
        %v2251 = vshll.u32 %v2242, 16
        %v2253 = vrot.slane %v2251, 5
        %v2254 = vor.u32 %v2250, %v2253
        %v2255 = vrot.slane %v2254, 4
        %v2257 = vshll.u32 %v2243, 16
        %v2259 = vrot.slane %v2257, 5
        %v2260 = vsel %vm1036, %v2255, %v2259
        %v2261 = vshrl.u32 %v2243, 16
        %v2263 = vrot.slane %v2261, 4
        %v2264 = vor.u32 %v2263, %v2259
        %v2265 = vrot.slane %v2264, 4
        %v2267 = vshll.u32 %v2244, 16
        %v2269 = vrot.slane %v2267, 5
        %v2270 = vsel %vm1036, %v2265, %v2269
        %v2271 = vshrl.u32 %v2244, 16
        %v2273 = vrot.slane %v2271, 4
        %v2274 = vor.u32 %v2273, %v2269
        %v2275 = vrot.slane %v2274, 4
        %v2277 = vshll.u32 %v2245, 16
        %v2279 = vrot.slane %v2277, 5
        %v2280 = vsel %vm1036, %v2275, %v2279
        %v2281 = vshrl.u32 %v2245, 16
        %v2283 = vrot.slane %v2281, 4
        %v2284 = vor.u32 %v2283, %v2279
        %v2285 = vrot.slane %v2284, 4
        %v2287 = vshll.u32 %v2246, 16
        %v2289 = vrot.slane %v2287, 5
        %v2290 = vsel %vm1036, %v2285, %v2289
        %v2291 = vshrl.u32 %v2246, 16
        %v2293 = vrot.slane %v2291, 4
        %v2294 = vor.u32 %v2293, %v2289
        %v2295 = vrot.slane %v2294, 4
        %2301 = vst [vmem:[#allocation5 + $0x8] sm:$0xff] %v2260
        %2302 = vst [vmem:[#allocation5 + $0x20] sm:$0xff] %v2270
        %2303 = vst [vmem:[#allocation5 + $0x38] sm:$0xff] %v2280
        %2304 = vst [vmem:[#allocation5 + $0x50] sm:$0xff] %v2290
        %2305 = vst [vmem:[#allocation5 + $0x68] sm:$0x11] %v2295
        %v2306 = vld [vmem:[#allocation4] sm:$0xfc]
        %v2307 = vld [vmem:[#allocation4 + $0x8] sm:$0xfc]
        %v2308 = vld [vmem:[#allocation4 + $0x10] sm:$0xff]
        %v2309 = vld [vmem:[#allocation4 + $0x18] sm:$0xff]
        %v2310 = vld [vmem:[#allocation4 + $0x20] sm:$0xff]
        %v2311 = vld [vmem:[#allocation4 + $0x28] sm:$0xff]
        %v2312 = vld [vmem:[#allocation4 + $0x30] sm:$0xff]
        %v2313 = vld [vmem:[#allocation4 + $0x38] sm:$0xff]
        %v2314 = vld [vmem:[#allocation4 + $0x40] sm:$0xf]
        %v2315 = vld [vmem:[#allocation4 + $0x48] sm:$0xf]
        %v2316 = vpack.c.bf16 %v2308, %v2306
        %v2317 = vpack.c.bf16 %v2309, %v2307
        %v2318 = vpack.c.bf16 %v2312, %v2310
        %v2319 = vpack.c.bf16 %v2313, %v2311
        %v2320 = vpack.c.bf16 %v2314, %v2314
        %v2321 = vpack.c.bf16 %v2315, %v2315
        %v2328 = vunpack.c.l.b16 %v2316
        %v2329 = vunpack.c.l.b16 %v2317
        %v2330 = vunpack.c.h.b16 %v2316
        %v2331 = vunpack.c.h.b16 %v2317
        %v2332 = vunpack.c.l.b16 %v2318
        %v2333 = vunpack.c.l.b16 %v2319
        %v2334 = vunpack.c.h.b16 %v2318
        %v2335 = vunpack.c.h.b16 %v2319
        %v2336 = vunpack.c.l.b16 %v2320
        %v2337 = vunpack.c.l.b16 %v2321
        %v2338 = vpack.c.b16 %v2329, %v2328
        %v2339 = vpack.c.b16 %v2331, %v2330
        %v2340 = vpack.c.b16 %v2333, %v2332
        %v2341 = vpack.c.b16 %v2335, %v2334
        %v2342 = vpack.c.b16 %v2337, %v2336
        %v2343 = vrot.slane %v2338, 5
        %v2344 = vrot.slane %v2343, 4
        %v2345 = vrot.slane %v2339, 5
        %v2346 = vsel %vm1135, %v2344, %v2345
        %v2347 = vrot.slane %v2345, 4
        %v2348 = vrot.slane %v2340, 5
        %v2349 = vsel %vm1135, %v2347, %v2348
        %v2350 = vrot.slane %v2348, 4
        %v2351 = vrot.slane %v2341, 5
        %v2352 = vsel %vm1135, %v2350, %v2351
        %v2353 = vrot.slane %v2351, 4
        %v2354 = vrot.slane %v2342, 5
        %v2355 = vsel %vm1135, %v2353, %v2354
        %v2356 = vrot.slane %v2354, 4
        %2362 = vst [vmem:[#allocation5 + $0x10] sm:$0xff] %v2346
        %2363 = vst [vmem:[#allocation5 + $0x28] sm:$0xff] %v2349
        %2364 = vst [vmem:[#allocation5 + $0x40] sm:$0xff] %v2352
        %2365 = vst [vmem:[#allocation5 + $0x58] sm:$0xff] %v2355
        %2366 = vst [vmem:[#allocation5 + $0x70] sm:$0x11] %v2356
        %v2367 = vld [vmem:[#allocation5] sm:$0xff]
        %v2368 = vld [vmem:[#allocation5 + $0x8] sm:$0xff]
        %v2369 = vld [vmem:[#allocation5 + $0x10] sm:$0xff]
        %v2370 = vld [vmem:[#allocation5 + $0x18] sm:$0xff]
        %v2371 = vld [vmem:[#allocation5 + $0x20] sm:$0xff]
        %v2372 = vld [vmem:[#allocation5 + $0x28] sm:$0xff]
        %v2373 = vld [vmem:[#allocation5 + $0x30] sm:$0xff]
        %v2374 = vld [vmem:[#allocation5 + $0x38] sm:$0xff]
        %v2375 = vld [vmem:[#allocation5 + $0x40] sm:$0xff]
        %v2376 = vld [vmem:[#allocation5 + $0x48] sm:$0xff]
        %v2377 = vld [vmem:[#allocation5 + $0x50] sm:$0xff]
        %v2378 = vld [vmem:[#allocation5 + $0x58] sm:$0xff]
        %v2379 = vld [vmem:[#allocation5 + $0x60] sm:$0x11]
        %v2380 = vld [vmem:[#allocation5 + $0x68] sm:$0x11]
        %v2381 = vld [vmem:[#allocation5 + $0x70] sm:$0x11]
        %v2382 = vld [vmem:[#allocation11] sm:$0xff]
        %v2383 = vld [vmem:[#allocation11 + $0x8] sm:$0xff]
        %v2384 = vld [vmem:[#allocation11 + $0x10] sm:$0xff]
        %v2385 = vld [vmem:[#allocation11 + $0x18] sm:$0xff]
        %v2386 = vld [vmem:[#allocation11 + $0x20] sm:$0xff]
        %v2387 = vld [vmem:[#allocation11 + $0x28] sm:$0xff]
        %v2388 = vld [vmem:[#allocation11 + $0x30] sm:$0xff]
        %v2389 = vld [vmem:[#allocation11 + $0x38] sm:$0xff]
        %v2390 = vld [vmem:[#allocation11 + $0x40] sm:$0xff]
        %v2391 = vld [vmem:[#allocation11 + $0x48] sm:$0xff]
        %v2392 = vld [vmem:[#allocation11 + $0x50] sm:$0xff]
        %v2393 = vld [vmem:[#allocation11 + $0x58] sm:$0xff]
        %v2394 = vld [vmem:[#allocation11 + $0x60] sm:$0xff]
        %v2395 = vld [vmem:[#allocation11 + $0x68] sm:$0xff]
        %v2396 = vld [vmem:[#allocation11 + $0x70] sm:$0xff]
        %v2397 = vld [vmem:[#allocation11 + $0x78] sm:$0xff]
        %v2398 = vld [vmem:[#allocation11 + $0x80] sm:$0xff]
        %v2399 = vld [vmem:[#allocation11 + $0x88] sm:$0xff]
        %v2400 = vld [vmem:[#allocation11 + $0x90] sm:$0xff]
        %v2401 = vld [vmem:[#allocation11 + $0x98] sm:$0xff]
        %v2402 = vld [vmem:[#allocation11 + $0xa0] sm:$0xff]
        %v2403 = vld [vmem:[#allocation11 + $0xa8] sm:$0xff]
        %v2404 = vld [vmem:[#allocation11 + $0xb0] sm:$0xff]
        %v2405 = vld [vmem:[#allocation11 + $0xb8] sm:$0xff]
        %v2406 = vld [vmem:[#allocation11 + $0xc0] sm:$0xff]
        %v2407 = vld [vmem:[#allocation11 + $0xc8] sm:$0xff]
        %v2408 = vld [vmem:[#allocation11 + $0xd0] sm:$0xff]
        %v2409 = vld [vmem:[#allocation11 + $0xd8] sm:$0xff]
        %v2410 = vld [vmem:[#allocation11 + $0xe0] sm:$0xff]
        %v2411 = vld [vmem:[#allocation11 + $0xe8] sm:$0xff]
        %v2412 = vld [vmem:[#allocation11 + $0xf0] sm:$0xff]
        %v2413 = vld [vmem:[#allocation11 + $0xf8] sm:$0xff]
        %v2414 = vld [vmem:[#allocation11 + $0x100] sm:$0xff]
        %v2415 = vld [vmem:[#allocation11 + $0x108] sm:$0xff]
        %v2416 = vld [vmem:[#allocation11 + $0x110] sm:$0xff]
        %v2417 = vld [vmem:[#allocation11 + $0x118] sm:$0xff]
        %v2418 = vld [vmem:[#allocation11 + $0x120] sm:$0xff]
        %v2419 = vld [vmem:[#allocation11 + $0x128] sm:$0xff]
        %v2420 = vld [vmem:[#allocation11 + $0x130] sm:$0xff]
        %v2421 = vld [vmem:[#allocation11 + $0x138] sm:$0xff]
        %v2422 = vld [vmem:[#allocation11 + $0x140] sm:$0xff]
        %v2423 = vld [vmem:[#allocation11 + $0x148] sm:$0xff]
        %v2424 = vld [vmem:[#allocation11 + $0x150] sm:$0xff]
        %v2425 = vld [vmem:[#allocation11 + $0x158] sm:$0xff]
        %v2426 = vld [vmem:[#allocation11 + $0x160] sm:$0xff]
        %v2427 = vld [vmem:[#allocation11 + $0x168] sm:$0xff]
        %v2428 = vld [vmem:[#allocation11 + $0x170] sm:$0xff]
        %v2429 = vld [vmem:[#allocation11 + $0x178] sm:$0xff]
        %v2430 = vld [vmem:[#allocation11 + $0x180] sm:$0xff]
        %v2431 = vld [vmem:[#allocation11 + $0x188] sm:$0xff]
        %v2432 = vld [vmem:[#allocation11 + $0x190] sm:$0xff]
        %v2433 = vld [vmem:[#allocation11 + $0x198] sm:$0xff]
        %v2434 = vld [vmem:[#allocation11 + $0x1a0] sm:$0xff]
        %v2435 = vld [vmem:[#allocation11 + $0x1a8] sm:$0xff]
        %v2436 = vld [vmem:[#allocation11 + $0x1b0] sm:$0xff]
        %v2437 = vld [vmem:[#allocation11 + $0x1b8] sm:$0xff]
        %v2438 = vld [vmem:[#allocation11 + $0x1c0] sm:$0xff]
        %v2439 = vld [vmem:[#allocation11 + $0x1c8] sm:$0xff]
        %v2440 = vld [vmem:[#allocation11 + $0x1d0] sm:$0xff]
        %v2441 = vld [vmem:[#allocation11 + $0x1d8] sm:$0xff]
        %v2442 = vld [vmem:[#allocation11 + $0x1e0] sm:$0xff]
        %v2443 = vld [vmem:[#allocation11 + $0x1e8] sm:$0xff]
        %v2444 = vld [vmem:[#allocation11 + $0x1f0] sm:$0xff]
        %v2445 = vld [vmem:[#allocation11 + $0x1f8] sm:$0xff]
        %v2446 = vld [vmem:[#allocation11 + $0x200] sm:$0xff]
        %v2447 = vld [vmem:[#allocation11 + $0x208] sm:$0xff]
        %v2448 = vld [vmem:[#allocation11 + $0x210] sm:$0xff]
        %v2449 = vld [vmem:[#allocation11 + $0x218] sm:$0xff]
        %v2450 = vld [vmem:[#allocation11 + $0x220] sm:$0xff]
        %v2451 = vld [vmem:[#allocation11 + $0x228] sm:$0xff]
        %v2452 = vld [vmem:[#allocation11 + $0x230] sm:$0xff]
        %v2453 = vld [vmem:[#allocation11 + $0x238] sm:$0xff]
        %v2454 = vld [vmem:[#allocation11 + $0x240] sm:$0xff]
        %v2455 = vld [vmem:[#allocation11 + $0x248] sm:$0xff]
        %v2456 = vld [vmem:[#allocation11 + $0x250] sm:$0xff]
        %v2457 = vld [vmem:[#allocation11 + $0x258] sm:$0xff]
        %v2458 = vld [vmem:[#allocation11 + $0x260] sm:$0xff]
        %v2459 = vld [vmem:[#allocation11 + $0x268] sm:$0xff]
        %v2460 = vld [vmem:[#allocation11 + $0x270] sm:$0xff]
        %v2461 = vld [vmem:[#allocation11 + $0x278] sm:$0xff]
        %v2462 = vld [vmem:[#allocation11 + $0x280] sm:$0xff]
        %v2463 = vld [vmem:[#allocation11 + $0x288] sm:$0xff]
        %v2464 = vld [vmem:[#allocation11 + $0x290] sm:$0xff]
        %v2465 = vld [vmem:[#allocation11 + $0x298] sm:$0xff]
        %v2466 = vld [vmem:[#allocation11 + $0x2a0] sm:$0xff]
        %v2467 = vld [vmem:[#allocation11 + $0x2a8] sm:$0xff]
        %v2468 = vld [vmem:[#allocation11 + $0x2b0] sm:$0xff]
        %v2469 = vld [vmem:[#allocation11 + $0x2b8] sm:$0xff]
        %v2470 = vld [vmem:[#allocation11 + $0x2c0] sm:$0xff]
        %v2471 = vld [vmem:[#allocation11 + $0x2c8] sm:$0xff]
        %v2472 = vld [vmem:[#allocation11 + $0x2d0] sm:$0xff]
        %v2473 = vld [vmem:[#allocation11 + $0x2d8] sm:$0xff]
        %v2474 = vld [vmem:[#allocation11 + $0x2e0] sm:$0xff]
        %v2475 = vld [vmem:[#allocation11 + $0x2e8] sm:$0xff]
        %v2476 = vld [vmem:[#allocation11 + $0x2f0] sm:$0xff]
        %v2477 = vld [vmem:[#allocation11 + $0x2f8] sm:$0xff]
        %v2478 = vld [vmem:[%s6] sm:$0x3]
        %v2480 = vlaneseq
        %v2481 = vshrl.u32 %v2480, 7
        %v2482 = vsub.s32 0, %v2481
        %v2483 = vrot.slane %v2478, %v2482
        %v2484 = vlaneseq
        %v2485 = vshrl.u32 %v2484, 7
        %v2486 = vsub.s32 1, %v2485
        %v2487 = vrot.slane %v2478, %v2486
        %v2505 = vunpack.c.l.b16 %v2367
        %v2506 = vunpack.c.h.b16 %v2367
        %v2507 = vunpack.c.l.b16 %v2368
        %v2508 = vunpack.c.h.b16 %v2368
        %v2509 = vunpack.c.l.b16 %v2369
        %v2510 = vunpack.c.h.b16 %v2369
        %v2511 = vunpack.c.l.b16 %v2370
        %v2512 = vunpack.c.h.b16 %v2370
        %v2513 = vunpack.c.l.b16 %v2371
        %v2514 = vunpack.c.h.b16 %v2371
        %v2515 = vunpack.c.l.b16 %v2372
        %v2516 = vunpack.c.h.b16 %v2372
        %v2517 = vunpack.c.l.b16 %v2373
        %v2518 = vunpack.c.h.b16 %v2373
        %v2519 = vunpack.c.l.b16 %v2374
        %v2520 = vunpack.c.h.b16 %v2374
        %v2521 = vunpack.c.l.b16 %v2375
        %v2522 = vunpack.c.h.b16 %v2375
        %v2523 = vunpack.c.l.b16 %v2376
        %v2524 = vunpack.c.h.b16 %v2376
        %v2525 = vunpack.c.l.b16 %v2377
        %v2526 = vunpack.c.h.b16 %v2377
        %v2527 = vunpack.c.l.b16 %v2378
        %v2528 = vunpack.c.h.b16 %v2378
        %v2529 = vunpack.c.l.b16 %v2379
        %v2530 = vunpack.c.h.b16 %v2379
        %v2531 = vunpack.c.l.b16 %v2380
        %v2532 = vunpack.c.h.b16 %v2380
        %v2533 = vunpack.c.l.b16 %v2381
        %v2534 = vunpack.c.h.b16 %v2381
        %v2535 = vpack.c.b16 %v2511, %v2505
        %v2536 = vpack.c.b16 %v2512, %v2506
        %v2537 = vpack.c.b16 %v2513, %v2507
        %v2538 = vpack.c.b16 %v2514, %v2508
        %v2539 = vpack.c.b16 %v2515, %v2509
        %v2540 = vpack.c.b16 %v2516, %v2510
        %v2541 = vpack.c.b16 %v2523, %v2517
        %v2542 = vpack.c.b16 %v2524, %v2518
        %v2543 = vpack.c.b16 %v2525, %v2519
        %v2544 = vpack.c.b16 %v2526, %v2520
        %v2545 = vpack.c.b16 %v2527, %v2521
        %v2546 = vpack.c.b16 %v2528, %v2522
        %v2547 = vpack.c.b16 %v2529, %v2529
        %v2548 = vpack.c.b16 %v2530, %v2530
        %v2549 = vpack.c.b16 %v2531, %v2531
        %v2550 = vpack.c.b16 %v2532, %v2532
        %v2551 = vpack.c.b16 %v2533, %v2533
        %v2552 = vpack.c.b16 %v2534, %v2534
        %v2667 = vunpack.c.l.b16 %v2382
        %v2668 = vunpack.c.h.b16 %v2382
        %v2669 = vunpack.c.l.b16 %v2383
        %v2670 = vunpack.c.h.b16 %v2383
        %v2671 = vunpack.c.l.b16 %v2384
        %v2672 = vunpack.c.h.b16 %v2384
        %v2673 = vunpack.c.l.b16 %v2385
        %v2674 = vunpack.c.h.b16 %v2385
        %v2675 = vunpack.c.l.b16 %v2386
        %v2676 = vunpack.c.h.b16 %v2386
        %v2677 = vunpack.c.l.b16 %v2387
        %v2678 = vunpack.c.h.b16 %v2387
        %v2679 = vunpack.c.l.b16 %v2388
        %v2680 = vunpack.c.h.b16 %v2388
        %v2681 = vunpack.c.l.b16 %v2389
        %v2682 = vunpack.c.h.b16 %v2389
        %v2683 = vunpack.c.l.b16 %v2390
        %v2684 = vunpack.c.h.b16 %v2390
        %v2685 = vunpack.c.l.b16 %v2391
        %v2686 = vunpack.c.h.b16 %v2391
        %v2687 = vunpack.c.l.b16 %v2392
        %v2688 = vunpack.c.h.b16 %v2392
        %v2689 = vunpack.c.l.b16 %v2393
        %v2690 = vunpack.c.h.b16 %v2393
        %v2691 = vunpack.c.l.b16 %v2394
        %v2692 = vunpack.c.h.b16 %v2394
        %v2693 = vunpack.c.l.b16 %v2395
        %v2694 = vunpack.c.h.b16 %v2395
        %v2695 = vunpack.c.l.b16 %v2396
        %v2696 = vunpack.c.h.b16 %v2396
        %v2697 = vunpack.c.l.b16 %v2397
        %v2698 = vunpack.c.h.b16 %v2397
        %v2699 = vunpack.c.l.b16 %v2398
        %v2700 = vunpack.c.h.b16 %v2398
        %v2701 = vunpack.c.l.b16 %v2399
        %v2702 = vunpack.c.h.b16 %v2399
        %v2703 = vunpack.c.l.b16 %v2400
        %v2704 = vunpack.c.h.b16 %v2400
        %v2705 = vunpack.c.l.b16 %v2401
        %v2706 = vunpack.c.h.b16 %v2401
        %v2707 = vunpack.c.l.b16 %v2402
        %v2708 = vunpack.c.h.b16 %v2402
        %v2709 = vunpack.c.l.b16 %v2403
        %v2710 = vunpack.c.h.b16 %v2403
        %v2711 = vunpack.c.l.b16 %v2404
        %v2712 = vunpack.c.h.b16 %v2404
        %v2713 = vunpack.c.l.b16 %v2405
        %v2714 = vunpack.c.h.b16 %v2405
        %v2715 = vunpack.c.l.b16 %v2406
        %v2716 = vunpack.c.h.b16 %v2406
        %v2717 = vunpack.c.l.b16 %v2407
        %v2718 = vunpack.c.h.b16 %v2407
        %v2719 = vunpack.c.l.b16 %v2408
        %v2720 = vunpack.c.h.b16 %v2408
        %v2721 = vunpack.c.l.b16 %v2409
        %v2722 = vunpack.c.h.b16 %v2409
        %v2723 = vunpack.c.l.b16 %v2410
        %v2724 = vunpack.c.h.b16 %v2410
        %v2725 = vunpack.c.l.b16 %v2411
        %v2726 = vunpack.c.h.b16 %v2411
        %v2727 = vunpack.c.l.b16 %v2412
        %v2728 = vunpack.c.h.b16 %v2412
        %v2729 = vunpack.c.l.b16 %v2413
        %v2730 = vunpack.c.h.b16 %v2413
        %v2731 = vunpack.c.l.b16 %v2414
        %v2732 = vunpack.c.h.b16 %v2414
        %v2733 = vunpack.c.l.b16 %v2415
        %v2734 = vunpack.c.h.b16 %v2415
        %v2735 = vunpack.c.l.b16 %v2416
        %v2736 = vunpack.c.h.b16 %v2416
        %v2737 = vunpack.c.l.b16 %v2417
        %v2738 = vunpack.c.h.b16 %v2417
        %v2739 = vunpack.c.l.b16 %v2418
        %v2740 = vunpack.c.h.b16 %v2418
        %v2741 = vunpack.c.l.b16 %v2419
        %v2742 = vunpack.c.h.b16 %v2419
        %v2743 = vunpack.c.l.b16 %v2420
        %v2744 = vunpack.c.h.b16 %v2420
        %v2745 = vunpack.c.l.b16 %v2421
        %v2746 = vunpack.c.h.b16 %v2421
        %v2747 = vunpack.c.l.b16 %v2422
        %v2748 = vunpack.c.h.b16 %v2422
        %v2749 = vunpack.c.l.b16 %v2423
        %v2750 = vunpack.c.h.b16 %v2423
        %v2751 = vunpack.c.l.b16 %v2424
        %v2752 = vunpack.c.h.b16 %v2424
        %v2753 = vunpack.c.l.b16 %v2425
        %v2754 = vunpack.c.h.b16 %v2425
        %v2755 = vunpack.c.l.b16 %v2426
        %v2756 = vunpack.c.h.b16 %v2426
        %v2757 = vunpack.c.l.b16 %v2427
        %v2758 = vunpack.c.h.b16 %v2427
        %v2759 = vunpack.c.l.b16 %v2428
        %v2760 = vunpack.c.h.b16 %v2428
        %v2761 = vunpack.c.l.b16 %v2429
        %v2762 = vunpack.c.h.b16 %v2429
        %v2763 = vunpack.c.l.b16 %v2430
        %v2764 = vunpack.c.h.b16 %v2430
        %v2765 = vunpack.c.l.b16 %v2431
        %v2766 = vunpack.c.h.b16 %v2431
        %v2767 = vunpack.c.l.b16 %v2432
        %v2768 = vunpack.c.h.b16 %v2432
        %v2769 = vunpack.c.l.b16 %v2433
        %v2770 = vunpack.c.h.b16 %v2433
        %v2771 = vunpack.c.l.b16 %v2434
        %v2772 = vunpack.c.h.b16 %v2434
        %v2773 = vunpack.c.l.b16 %v2435
        %v2774 = vunpack.c.h.b16 %v2435
        %v2775 = vunpack.c.l.b16 %v2436
        %v2776 = vunpack.c.h.b16 %v2436
        %v2777 = vunpack.c.l.b16 %v2437
        %v2778 = vunpack.c.h.b16 %v2437
        %v2779 = vunpack.c.l.b16 %v2438
        %v2780 = vunpack.c.h.b16 %v2438
        %v2781 = vunpack.c.l.b16 %v2439
        %v2782 = vunpack.c.h.b16 %v2439
        %v2783 = vunpack.c.l.b16 %v2440
        %v2784 = vunpack.c.h.b16 %v2440
        %v2785 = vunpack.c.l.b16 %v2441
        %v2786 = vunpack.c.h.b16 %v2441
        %v2787 = vunpack.c.l.b16 %v2442
        %v2788 = vunpack.c.h.b16 %v2442
        %v2789 = vunpack.c.l.b16 %v2443
        %v2790 = vunpack.c.h.b16 %v2443
        %v2791 = vunpack.c.l.b16 %v2444
        %v2792 = vunpack.c.h.b16 %v2444
        %v2793 = vunpack.c.l.b16 %v2445
        %v2794 = vunpack.c.h.b16 %v2445
        %v2795 = vunpack.c.l.b16 %v2446
        %v2796 = vunpack.c.h.b16 %v2446
        %v2797 = vunpack.c.l.b16 %v2447
        %v2798 = vunpack.c.h.b16 %v2447
        %v2799 = vunpack.c.l.b16 %v2448
        %v2800 = vunpack.c.h.b16 %v2448
        %v2801 = vunpack.c.l.b16 %v2449
        %v2802 = vunpack.c.h.b16 %v2449
        %v2803 = vunpack.c.l.b16 %v2450
        %v2804 = vunpack.c.h.b16 %v2450
        %v2805 = vunpack.c.l.b16 %v2451
        %v2806 = vunpack.c.h.b16 %v2451
        %v2807 = vunpack.c.l.b16 %v2452
        %v2808 = vunpack.c.h.b16 %v2452
        %v2809 = vunpack.c.l.b16 %v2453
        %v2810 = vunpack.c.h.b16 %v2453
        %v2811 = vunpack.c.l.b16 %v2454
        %v2812 = vunpack.c.h.b16 %v2454
        %v2813 = vunpack.c.l.b16 %v2455
        %v2814 = vunpack.c.h.b16 %v2455
        %v2815 = vunpack.c.l.b16 %v2456
        %v2816 = vunpack.c.h.b16 %v2456
        %v2817 = vunpack.c.l.b16 %v2457
        %v2818 = vunpack.c.h.b16 %v2457
        %v2819 = vunpack.c.l.b16 %v2458
        %v2820 = vunpack.c.h.b16 %v2458
        %v2821 = vunpack.c.l.b16 %v2459
        %v2822 = vunpack.c.h.b16 %v2459
        %v2823 = vunpack.c.l.b16 %v2460
        %v2824 = vunpack.c.h.b16 %v2460
        %v2825 = vunpack.c.l.b16 %v2461
        %v2826 = vunpack.c.h.b16 %v2461
        %v2827 = vunpack.c.l.b16 %v2462
        %v2828 = vunpack.c.h.b16 %v2462
        %v2829 = vunpack.c.l.b16 %v2463
        %v2830 = vunpack.c.h.b16 %v2463
        %v2831 = vunpack.c.l.b16 %v2464
        %v2832 = vunpack.c.h.b16 %v2464
        %v2833 = vunpack.c.l.b16 %v2465
        %v2834 = vunpack.c.h.b16 %v2465
        %v2835 = vunpack.c.l.b16 %v2466
        %v2836 = vunpack.c.h.b16 %v2466
        %v2837 = vunpack.c.l.b16 %v2467
        %v2838 = vunpack.c.h.b16 %v2467
        %v2839 = vunpack.c.l.b16 %v2468
        %v2840 = vunpack.c.h.b16 %v2468
        %v2841 = vunpack.c.l.b16 %v2469
        %v2842 = vunpack.c.h.b16 %v2469
        %v2843 = vunpack.c.l.b16 %v2470
        %v2844 = vunpack.c.h.b16 %v2470
        %v2845 = vunpack.c.l.b16 %v2471
        %v2846 = vunpack.c.h.b16 %v2471
        %v2847 = vunpack.c.l.b16 %v2472
        %v2848 = vunpack.c.h.b16 %v2472
        %v2849 = vunpack.c.l.b16 %v2473
        %v2850 = vunpack.c.h.b16 %v2473
        %v2851 = vunpack.c.l.b16 %v2474
        %v2852 = vunpack.c.h.b16 %v2474
        %v2853 = vunpack.c.l.b16 %v2475
        %v2854 = vunpack.c.h.b16 %v2475
        %v2855 = vunpack.c.l.b16 %v2476
        %v2856 = vunpack.c.h.b16 %v2476
        %v2857 = vunpack.c.l.b16 %v2477
        %v2858 = vunpack.c.h.b16 %v2477
        %v2859 = vpack.c.b16 %v2669, %v2667
        %v2860 = vpack.c.b16 %v2670, %v2668
        %v2861 = vpack.c.b16 %v2673, %v2671
        %v2862 = vpack.c.b16 %v2674, %v2672
        %v2863 = vpack.c.b16 %v2677, %v2675
        %v2864 = vpack.c.b16 %v2678, %v2676
        %v2865 = vpack.c.b16 %v2681, %v2679
        %v2866 = vpack.c.b16 %v2682, %v2680
        %v2867 = vpack.c.b16 %v2685, %v2683
        %v2868 = vpack.c.b16 %v2686, %v2684
        %v2869 = vpack.c.b16 %v2689, %v2687
        %v2870 = vpack.c.b16 %v2690, %v2688
        %v2871 = vpack.c.b16 %v2693, %v2691
        %v2872 = vpack.c.b16 %v2694, %v2692
        %v2873 = vpack.c.b16 %v2697, %v2695
        %v2874 = vpack.c.b16 %v2698, %v2696
        %v2875 = vpack.c.b16 %v2701, %v2699
        %v2876 = vpack.c.b16 %v2702, %v2700
        %v2877 = vpack.c.b16 %v2705, %v2703
        %v2878 = vpack.c.b16 %v2706, %v2704
        %v2879 = vpack.c.b16 %v2709, %v2707
        %v2880 = vpack.c.b16 %v2710, %v2708
        %v2881 = vpack.c.b16 %v2713, %v2711
        %v2882 = vpack.c.b16 %v2714, %v2712
        %v2883 = vpack.c.b16 %v2717, %v2715
        %v2884 = vpack.c.b16 %v2718, %v2716
        %v2885 = vpack.c.b16 %v2721, %v2719
        %v2886 = vpack.c.b16 %v2722, %v2720
        %v2887 = vpack.c.b16 %v2725, %v2723
        %v2888 = vpack.c.b16 %v2726, %v2724
        %v2889 = vpack.c.b16 %v2729, %v2727
        %v2890 = vpack.c.b16 %v2730, %v2728
        %v2891 = vpack.c.b16 %v2733, %v2731
        %v2892 = vpack.c.b16 %v2734, %v2732
        %v2893 = vpack.c.b16 %v2737, %v2735
        %v2894 = vpack.c.b16 %v2738, %v2736
        %v2895 = vpack.c.b16 %v2741, %v2739
        %v2896 = vpack.c.b16 %v2742, %v2740
        %v2897 = vpack.c.b16 %v2745, %v2743
        %v2898 = vpack.c.b16 %v2746, %v2744
        %v2899 = vpack.c.b16 %v2749, %v2747
        %v2900 = vpack.c.b16 %v2750, %v2748
        %v2901 = vpack.c.b16 %v2753, %v2751
        %v2902 = vpack.c.b16 %v2754, %v2752
        %v2903 = vpack.c.b16 %v2757, %v2755
        %v2904 = vpack.c.b16 %v2758, %v2756
        %v2905 = vpack.c.b16 %v2761, %v2759
        %v2906 = vpack.c.b16 %v2762, %v2760
        %v2907 = vpack.c.b16 %v2765, %v2763
        %v2908 = vpack.c.b16 %v2766, %v2764
        %v2909 = vpack.c.b16 %v2769, %v2767
        %v2910 = vpack.c.b16 %v2770, %v2768
        %v2911 = vpack.c.b16 %v2773, %v2771
        %v2912 = vpack.c.b16 %v2774, %v2772
        %v2913 = vpack.c.b16 %v2777, %v2775
        %v2914 = vpack.c.b16 %v2778, %v2776
        %v2915 = vpack.c.b16 %v2781, %v2779
        %v2916 = vpack.c.b16 %v2782, %v2780
        %v2917 = vpack.c.b16 %v2785, %v2783
        %v2918 = vpack.c.b16 %v2786, %v2784
        %v2919 = vpack.c.b16 %v2789, %v2787
        %v2920 = vpack.c.b16 %v2790, %v2788
        %v2921 = vpack.c.b16 %v2793, %v2791
        %v2922 = vpack.c.b16 %v2794, %v2792
        %v2923 = vpack.c.b16 %v2797, %v2795
        %v2924 = vpack.c.b16 %v2798, %v2796
        %v2925 = vpack.c.b16 %v2801, %v2799
        %v2926 = vpack.c.b16 %v2802, %v2800
        %v2927 = vpack.c.b16 %v2805, %v2803
        %v2928 = vpack.c.b16 %v2806, %v2804
        %v2929 = vpack.c.b16 %v2809, %v2807
        %v2930 = vpack.c.b16 %v2810, %v2808
        %v2931 = vpack.c.b16 %v2813, %v2811
        %v2932 = vpack.c.b16 %v2814, %v2812
        %v2933 = vpack.c.b16 %v2817, %v2815
        %v2934 = vpack.c.b16 %v2818, %v2816
        %v2935 = vpack.c.b16 %v2821, %v2819
        %v2936 = vpack.c.b16 %v2822, %v2820
        %v2937 = vpack.c.b16 %v2825, %v2823
        %v2938 = vpack.c.b16 %v2826, %v2824
        %v2939 = vpack.c.b16 %v2829, %v2827
        %v2940 = vpack.c.b16 %v2830, %v2828
        %v2941 = vpack.c.b16 %v2833, %v2831
        %v2942 = vpack.c.b16 %v2834, %v2832
        %v2943 = vpack.c.b16 %v2837, %v2835
        %v2944 = vpack.c.b16 %v2838, %v2836
        %v2945 = vpack.c.b16 %v2841, %v2839
        %v2946 = vpack.c.b16 %v2842, %v2840
        %v2947 = vpack.c.b16 %v2845, %v2843
        %v2948 = vpack.c.b16 %v2846, %v2844
        %v2949 = vpack.c.b16 %v2849, %v2847
        %v2950 = vpack.c.b16 %v2850, %v2848
        %v2951 = vpack.c.b16 %v2853, %v2851
        %v2952 = vpack.c.b16 %v2854, %v2852
        %v2953 = vpack.c.b16 %v2857, %v2855
        %v2954 = vpack.c.b16 %v2858, %v2856
        %3051 = vmatprep.subr.bf16.mxu0 %v2860
        %3052 = vmatpush1.bf16.msra.mxu0 %v2859
        %3053 = vmatprep.subr.bf16.mxu0 %v2862
        %3054 = vmatpush1.bf16.msra.mxu0 %v2861
        %3055 = vmatprep.subr.bf16.mxu0 %v2864
        %3056 = vmatpush1.bf16.msra.mxu0 %v2863
        %3057 = vmatprep.subr.bf16.mxu0 %v2866
        %3058 = vmatpush1.bf16.msra.mxu0 %v2865
        %3059 = vmatprep.subr.bf16.mxu0 %v2868
        %3060 = vmatpush1.bf16.msra.mxu0 %v2867
        %3061 = vmatprep.subr.bf16.mxu0 %v2870
        %3062 = vmatpush1.bf16.msra.mxu0 %v2869
        %3063 = vmatprep.subr.bf16.mxu0 %v2872
        %3064 = vmatpush1.bf16.msra.mxu0 %v2871
        %3065 = vmatprep.subr.bf16.mxu0 %v2874
        %3066 = vmatpush1.bf16.msra.mxu0 %v2873
        %3067 = vmatprep.subr.bf16.mxu0 %v2876
        %3068 = vmatpush1.bf16.msra.mxu0 %v2875
        %3069 = vmatprep.subr.bf16.mxu0 %v2878
        %3070 = vmatpush1.bf16.msra.mxu0 %v2877
        %3071 = vmatprep.subr.bf16.mxu0 %v2880
        %3072 = vmatpush1.bf16.msra.mxu0 %v2879
        %3073 = vmatprep.subr.bf16.mxu0 %v2882
        %3074 = vmatpush1.bf16.msra.mxu0 %v2881
        %3075 = vmatprep.subr.bf16.mxu0 %v2884
        %3076 = vmatpush1.bf16.msra.mxu0 %v2883
        %3077 = vmatprep.subr.bf16.mxu0 %v2886
        %3078 = vmatpush1.bf16.msra.mxu0 %v2885
        %3079 = vmatprep.subr.bf16.mxu0 %v2888
        %3080 = vmatpush1.bf16.msra.mxu0 %v2887
        %3081 = vmatprep.subr.bf16.mxu0 %v2890
        %3082 = vmatpush1.bf16.msra.mxu0 %v2889
        %3083 = vmatprep.mubr.bf16.mxu0 %v2536
        %3084 = vmatmul.mubr.bf16.gmra.mrb[0].mxu0 %v2535
        %v3085 = vpop.f32.mrb[0].mxu0
        %v3086 = vadd.f32 %v2483, %v3085
        %v3087 = vpop.f32.mrb[0].mxu0
        %v3088 = vadd.f32 %v2487, %v3087
        %v3089 = vpop.f32.mrb[0].mxu0
        %v3090 = vadd.f32 %v2483, %v3089
        %v3091 = vpop.f32.mrb[0].mxu0
        %v3092 = vadd.f32 %v2487, %v3091
        %3093 = vmatprep.mubr.bf16.mxu0 %v2542
        %3094 = vmatmul.mubr.bf16.gmra.mrb[0].mxu0 %v2541
        %v3095 = vpop.f32.mrb[0].mxu0
        %v3096 = vadd.f32 %v2483, %v3095
        %v3097 = vpop.f32.mrb[0].mxu0
        %v3098 = vadd.f32 %v2487, %v3097
        %v3099 = vpop.f32.mrb[0].mxu0
        %v3100 = vadd.f32 %v2483, %v3099
        %v3101 = vpop.f32.mrb[0].mxu0
        %v3102 = vadd.f32 %v2487, %v3101
        %3103 = vmatprep.mubr.bf16.mxu0 %v2548
        %3104 = vmatmul.mubr.bf16.gmra.mrb[0].mxu0 %v2547
        %v3105 = vpop.f32.mrb[0].mxu0
        %v3106 = vadd.f32 %v2483, %v3105
        %v3107 = vpop.f32.mrb[0].mxu0
        %v3108 = vadd.f32 %v2487, %v3107
        %v3109 = vpop.f32.mrb[0].mxu0
        %v3110 = vpop.f32.mrb[0].mxu0
        %3111 = vdwg.mxu0
        %3112 = vmatprep.subr.bf16.mxu0 %v2892
        %3113 = vmatpush1.bf16.msra.mxu0 %v2891
        %3114 = vmatprep.subr.bf16.mxu0 %v2894
        %3115 = vmatpush1.bf16.msra.mxu0 %v2893
        %3116 = vmatprep.subr.bf16.mxu0 %v2896
        %3117 = vmatpush1.bf16.msra.mxu0 %v2895
        %3118 = vmatprep.subr.bf16.mxu0 %v2898
        %3119 = vmatpush1.bf16.msra.mxu0 %v2897
        %3120 = vmatprep.subr.bf16.mxu0 %v2900
        %3121 = vmatpush1.bf16.msra.mxu0 %v2899
        %3122 = vmatprep.subr.bf16.mxu0 %v2902
        %3123 = vmatpush1.bf16.msra.mxu0 %v2901
        %3124 = vmatprep.subr.bf16.mxu0 %v2904
        %3125 = vmatpush1.bf16.msra.mxu0 %v2903
        %3126 = vmatprep.subr.bf16.mxu0 %v2906
        %3127 = vmatpush1.bf16.msra.mxu0 %v2905
        %3128 = vmatprep.subr.bf16.mxu0 %v2908
        %3129 = vmatpush1.bf16.msra.mxu0 %v2907
        %3130 = vmatprep.subr.bf16.mxu0 %v2910
        %3131 = vmatpush1.bf16.msra.mxu0 %v2909
        %3132 = vmatprep.subr.bf16.mxu0 %v2912
        %3133 = vmatpush1.bf16.msra.mxu0 %v2911
        %3134 = vmatprep.subr.bf16.mxu0 %v2914
        %3135 = vmatpush1.bf16.msra.mxu0 %v2913
        %3136 = vmatprep.subr.bf16.mxu0 %v2916
        %3137 = vmatpush1.bf16.msra.mxu0 %v2915
        %3138 = vmatprep.subr.bf16.mxu0 %v2918
        %3139 = vmatpush1.bf16.msra.mxu0 %v2917
        %3140 = vmatprep.subr.bf16.mxu0 %v2920
        %3141 = vmatpush1.bf16.msra.mxu0 %v2919
        %3142 = vmatprep.subr.bf16.mxu0 %v2922
        %3143 = vmatpush1.bf16.msra.mxu0 %v2921
        %3144 = vmatprep.mubr.bf16.mxu0 %v2538
        %3145 = vmatmul.mubr.bf16.gmra.mrb[0].mxu0 %v2537
        %v3146 = vpop.f32.mrb[0].mxu0
        %v3147 = vadd.f32 %v3086, %v3146
        %v3148 = vpop.f32.mrb[0].mxu0
        %v3149 = vadd.f32 %v3088, %v3148
        %v3150 = vpop.f32.mrb[0].mxu0
        %v3151 = vadd.f32 %v3090, %v3150
        %v3152 = vpop.f32.mrb[0].mxu0
        %v3153 = vadd.f32 %v3092, %v3152
        %3154 = vmatprep.mubr.bf16.mxu0 %v2544
        %3155 = vmatmul.mubr.bf16.gmra.mrb[0].mxu0 %v2543
        %v3156 = vpop.f32.mrb[0].mxu0
        %v3157 = vadd.f32 %v3096, %v3156
        %v3158 = vpop.f32.mrb[0].mxu0
        %v3159 = vadd.f32 %v3098, %v3158
        %v3160 = vpop.f32.mrb[0].mxu0
        %v3161 = vadd.f32 %v3100, %v3160
        %v3162 = vpop.f32.mrb[0].mxu0
        %v3163 = vadd.f32 %v3102, %v3162
        %3164 = vmatprep.mubr.bf16.mxu0 %v2550
        %3165 = vmatmul.mubr.bf16.gmra.mrb[0].mxu0 %v2549
        %v3166 = vpop.f32.mrb[0].mxu0
        %v3167 = vadd.f32 %v3106, %v3166
        %v3168 = vpop.f32.mrb[0].mxu0
        %v3169 = vadd.f32 %v3108, %v3168
        %v3170 = vpop.f32.mrb[0].mxu0
        %v3171 = vpop.f32.mrb[0].mxu0
        %3172 = vdwg.mxu0
        %3173 = vmatprep.subr.bf16.mxu0 %v2924
        %3174 = vmatpush1.bf16.msra.mxu0 %v2923
        %3175 = vmatprep.subr.bf16.mxu0 %v2926
        %3176 = vmatpush1.bf16.msra.mxu0 %v2925
        %3177 = vmatprep.subr.bf16.mxu0 %v2928
        %3178 = vmatpush1.bf16.msra.mxu0 %v2927
        %3179 = vmatprep.subr.bf16.mxu0 %v2930
        %3180 = vmatpush1.bf16.msra.mxu0 %v2929
        %3181 = vmatprep.subr.bf16.mxu0 %v2932
        %3182 = vmatpush1.bf16.msra.mxu0 %v2931
        %3183 = vmatprep.subr.bf16.mxu0 %v2934
        %3184 = vmatpush1.bf16.msra.mxu0 %v2933
        %3185 = vmatprep.subr.bf16.mxu0 %v2936
        %3186 = vmatpush1.bf16.msra.mxu0 %v2935
        %3187 = vmatprep.subr.bf16.mxu0 %v2938
        %3188 = vmatpush1.bf16.msra.mxu0 %v2937
        %3189 = vmatprep.subr.bf16.mxu0 %v2940
        %3190 = vmatpush1.bf16.msra.mxu0 %v2939
        %3191 = vmatprep.subr.bf16.mxu0 %v2942
        %3192 = vmatpush1.bf16.msra.mxu0 %v2941
        %3193 = vmatprep.subr.bf16.mxu0 %v2944
        %3194 = vmatpush1.bf16.msra.mxu0 %v2943
        %3195 = vmatprep.subr.bf16.mxu0 %v2946
        %3196 = vmatpush1.bf16.msra.mxu0 %v2945
        %3197 = vmatprep.subr.bf16.mxu0 %v2948
        %3198 = vmatpush1.bf16.msra.mxu0 %v2947
        %3199 = vmatprep.subr.bf16.mxu0 %v2950
        %3200 = vmatpush1.bf16.msra.mxu0 %v2949
        %3201 = vmatprep.subr.bf16.mxu0 %v2952
        %3202 = vmatpush1.bf16.msra.mxu0 %v2951
        %3203 = vmatprep.subr.bf16.mxu0 %v2954
        %3204 = vmatpush1.bf16.msra.mxu0 %v2953
        %3205 = vmatprep.mubr.bf16.mxu0 %v2540
        %3206 = vmatmul.mubr.bf16.gmra.mrb[0].mxu0 %v2539
        %v3207 = vpop.f32.mrb[0].mxu0
        %v3208 = vadd.f32 %v3147, %v3207
        %v3209 = vpop.f32.mrb[0].mxu0
        %v3210 = vadd.f32 %v3149, %v3209
        %v3211 = vpop.f32.mrb[0].mxu0
        %v3212 = vadd.f32 %v3151, %v3211
        %v3213 = vpop.f32.mrb[0].mxu0
        %v3214 = vadd.f32 %v3153, %v3213
        %3215 = vmatprep.mubr.bf16.mxu0 %v2546
        %3216 = vmatmul.mubr.bf16.gmra.mrb[0].mxu0 %v2545
        %v3217 = vpop.f32.mrb[0].mxu0
        %v3218 = vadd.f32 %v3157, %v3217
        %v3219 = vpop.f32.mrb[0].mxu0
        %v3220 = vadd.f32 %v3159, %v3219
        %v3221 = vpop.f32.mrb[0].mxu0
        %v3222 = vadd.f32 %v3161, %v3221
        %v3223 = vpop.f32.mrb[0].mxu0
        %v3224 = vadd.f32 %v3163, %v3223
        %3225 = vmatprep.mubr.bf16.mxu0 %v2552
        %3226 = vmatmul.mubr.bf16.gmra.mrb[0].mxu0 %v2551
        %v3227 = vpop.f32.mrb[0].mxu0
        %v3228 = vadd.f32 %v3167, %v3227
        %v3229 = vpop.f32.mrb[0].mxu0
        %v3230 = vadd.f32 %v3169, %v3229
        %v3231 = vpop.f32.mrb[0].mxu0
        %v3232 = vpop.f32.mrb[0].mxu0
        %3233 = vdwg.mxu0
        %v3234 = vmax.f32 %v3208, 0.0
        %v3235 = vmax.f32 %v3210, 0.0
        %v3236 = vmax.f32 %v3212, 0.0
        %v3237 = vmax.f32 %v3214, 0.0
        %v3238 = vmax.f32 %v3218, 0.0
        %v3239 = vmax.f32 %v3220, 0.0
        %v3240 = vmax.f32 %v3222, 0.0
        %v3241 = vmax.f32 %v3224, 0.0
        %v3242 = vmax.f32 %v3228, 0.0
        %v3243 = vmax.f32 %v3230, 0.0
        %v3248 = vrot.slane %v3234, 7
        %v3249 = vrot.slane %v3235, 7
        %v3250 = vrot.slane %v3236, 7
        %v3251 = vsel %vm819, %v3248, %v3250
        %v3252 = vrot.slane %v3237, 7
        %v3253 = vsel %vm819, %v3249, %v3252
        %3260 = vst [vmem:[#allocation4] sm:$0xfe] %v3248
        %3261 = vst [vmem:[#allocation4 + $0x8] sm:$0xfe] %v3249
        %3262 = vst [vmem:[#allocation4 + $0x10] sm:$0xff] %v3251
        %3263 = vst [vmem:[#allocation4 + $0x18] sm:$0xff] %v3253
        %3264 = vst [vmem:[#allocation4 + $0x20] sm:$0x1] %v3250
        %3265 = vst [vmem:[#allocation4 + $0x28] sm:$0x1] %v3252
        %v3266 = vcombine.low %v3234, %v3235
        %v3268 = vunpack.c.l.s4 1966171168
        %v3269 = vunpack.c.0.s8 %v3268
        %v3270 = vlaneseq
        %v3271 = vshrl.u32 %v3270, 7
        %v3272 = vsub.s32 %v3269, %v3271
        %v3273 = vrot.slane %v3266, %v3272
        %v3274 = vcombine.high %v3273, %v3273
        %v3276 = vunpack.c.l.s4 1966171168
        %v3277 = vunpack.c.0.s8 %v3276
        %v3278 = vlaneseq
        %v3279 = vshrl.u32 %v3278, 7
        %v3280 = vsub.s32 %v3277, %v3279
        %v3281 = vrot.slane %v3274, %v3280
        %3283 = vst.msk [vmem:[#allocation4] ss:$8 sm:$0x3] %vm858, %v3281
        %3284 = vst.msk [vmem:[#allocation4] ss:$8 sm:$0x0] %vm858, %v3281
        %v3285 = vcombine.high %v3236, %v3237
        %v3287 = vunpack.c.l.s4 1966171168
        %v3288 = vunpack.c.0.s8 %v3287
        %v3289 = vlaneseq
        %v3290 = vshrl.u32 %v3289, 7
        %v3291 = vsub.s32 %v3288, %v3290
        %v3292 = vrot.slane %v3285, %v3291
        %v3294 = vunpack.c.l.s4 1966171168
        %v3295 = vunpack.c.0.s8 %v3294
        %v3296 = vlaneseq
        %v3297 = vshrl.u32 %v3296, 7
        %v3298 = vsub.s32 %v3295, %v3297
        %v3299 = vrot.slane %v3292, %v3298
        %v3300 = vcombine.high %v3299, %v3299
        %3302 = vst.msk [vmem:[%s878] ss:$8 sm:$0x3] %vm858, %v3300
        %3303 = vst.msk [vmem:[%s878] ss:$8 sm:$0x0] %vm858, %v3300
        %v3310 = vrot.slane %v3238, 7
        %v3311 = vrot.slane %v3239, 7
        %v3312 = vrot.slane %v3240, 7
        %v3313 = vsel %vm819, %v3310, %v3312
        %v3314 = vrot.slane %v3241, 7
        %v3315 = vsel %vm819, %v3311, %v3314
        %v3316 = vrot.slane %v3242, 7
        %v3317 = vsel %vm819, %v3312, %v3316
        %v3318 = vrot.slane %v3243, 7
        %v3319 = vsel %vm819, %v3314, %v3318
        %3326 = vst [vmem:[#allocation4 + $0x20] sm:$0xf8] %v3310
        %3327 = vst [vmem:[#allocation4 + $0x28] sm:$0xf8] %v3311
        %3328 = vst [vmem:[#allocation4 + $0x30] sm:$0xff] %v3313
        %3329 = vst [vmem:[#allocation4 + $0x38] sm:$0xff] %v3315
        %3330 = vst [vmem:[#allocation4 + $0x40] sm:$0x7] %v3317
        %3331 = vst [vmem:[#allocation4 + $0x48] sm:$0x7] %v3319
        %v3332 = vcombine.low %v3238, %v3239
        %v3334 = vunpack.c.l.s4 1966171168
        %v3335 = vunpack.c.0.s8 %v3334
        %v3336 = vlaneseq
        %v3337 = vshrl.u32 %v3336, 7
        %v3338 = vsub.s32 %v3335, %v3337
        %v3339 = vrot.slane %v3332, %v3338
        %v3340 = vcombine.high %v3339, %v3339
        %v3342 = vunpack.c.l.s4 1966171168
        %v3343 = vunpack.c.0.s8 %v3342
        %v3344 = vlaneseq
        %v3345 = vshrl.u32 %v3344, 7
        %v3346 = vsub.s32 %v3343, %v3345
        %v3347 = vrot.slane %v3340, %v3346
        %v3348 = vcombine.high %v3347, %v3347
        %3350 = vst.msk [vmem:[%s927] ss:$8 sm:$0x3] %vm858, %v3348
        %3351 = vst.msk [vmem:[%s927] ss:$8 sm:$0x0] %vm858, %v3348
        %v3352 = vcombine.low %v3242, %v3243
        %v3354 = vunpack.c.l.s4 1966171168
        %v3355 = vunpack.c.0.s8 %v3354
        %v3356 = vlaneseq
        %v3357 = vshrl.u32 %v3356, 7
        %v3358 = vsub.s32 %v3355, %v3357
        %v3359 = vrot.slane %v3352, %v3358
        %v3361 = vunpack.c.l.s4 1966171168
        %v3362 = vunpack.c.0.s8 %v3361
        %v3363 = vlaneseq
        %v3364 = vshrl.u32 %v3363, 7
        %v3365 = vsub.s32 %v3362, %v3364
        %v3366 = vrot.slane %v3359, %v3365
        %3368 = vst.msk [vmem:[%s947] ss:$8 sm:$0x3] %vm858, %v3366
        %3369 = vst.msk [vmem:[%s947] ss:$8 sm:$0x0] %vm858, %v3366
        %v3370 = vld [vmem:[#allocation4] sm:$0xff]
        %v3371 = vld [vmem:[#allocation4 + $0x8] sm:$0xff]
        %v3372 = vld [vmem:[#allocation4 + $0x10] sm:$0xff]
        %v3373 = vld [vmem:[#allocation4 + $0x18] sm:$0xff]
        %v3374 = vld [vmem:[#allocation4 + $0x20] sm:$0xff]
        %v3375 = vld [vmem:[#allocation4 + $0x28] sm:$0xff]
        %v3376 = vld [vmem:[#allocation4 + $0x30] sm:$0xff]
        %v3377 = vld [vmem:[#allocation4 + $0x38] sm:$0xff]
        %v3378 = vld [vmem:[#allocation4 + $0x40] sm:$0x3]
        %v3379 = vld [vmem:[#allocation4 + $0x48] sm:$0x3]
        %v3380 = vpack.c.bf16 %v3372, %v3370
        %v3381 = vpack.c.bf16 %v3373, %v3371
        %v3382 = vpack.c.bf16 %v3376, %v3374
        %v3383 = vpack.c.bf16 %v3377, %v3375
        %v3384 = vpack.c.bf16 %v3378, %v3378
        %v3385 = vpack.c.bf16 %v3379, %v3379
        %v3392 = vunpack.c.l.b16 %v3380
        %v3393 = vunpack.c.l.b16 %v3381
        %v3394 = vunpack.c.h.b16 %v3380
        %v3395 = vunpack.c.h.b16 %v3381
        %v3396 = vunpack.c.l.b16 %v3382
        %v3397 = vunpack.c.l.b16 %v3383
        %v3398 = vunpack.c.h.b16 %v3382
        %v3399 = vunpack.c.h.b16 %v3383
        %v3400 = vunpack.c.l.b16 %v3384
        %v3401 = vunpack.c.l.b16 %v3385
        %v3402 = vpack.c.b16 %v3393, %v3392
        %v3403 = vpack.c.b16 %v3395, %v3394
        %v3404 = vpack.c.b16 %v3397, %v3396
        %v3405 = vpack.c.b16 %v3399, %v3398
        %v3406 = vpack.c.b16 %v3401, %v3400
        %3412 = vst [vmem:[#allocation5] sm:$0xff] %v3402
        %3413 = vst [vmem:[#allocation5 + $0x18] sm:$0xff] %v3403
        %3414 = vst [vmem:[#allocation5 + $0x30] sm:$0xff] %v3404
        %3415 = vst [vmem:[#allocation5 + $0x48] sm:$0xff] %v3405
        %3416 = vst [vmem:[#allocation5 + $0x60] sm:$0x11] %v3406
        %v3417 = vld [vmem:[#allocation4] sm:$0xfe]
        %v3418 = vld [vmem:[#allocation4 + $0x8] sm:$0xfe]
        %v3419 = vld [vmem:[#allocation4 + $0x10] sm:$0xff]
        %v3420 = vld [vmem:[#allocation4 + $0x18] sm:$0xff]
        %v3421 = vld [vmem:[#allocation4 + $0x20] sm:$0xff]
        %v3422 = vld [vmem:[#allocation4 + $0x28] sm:$0xff]
        %v3423 = vld [vmem:[#allocation4 + $0x30] sm:$0xff]
        %v3424 = vld [vmem:[#allocation4 + $0x38] sm:$0xff]
        %v3425 = vld [vmem:[#allocation4 + $0x40] sm:$0x7]
        %v3426 = vld [vmem:[#allocation4 + $0x48] sm:$0x7]
        %v3427 = vpack.c.bf16 %v3419, %v3417
        %v3428 = vpack.c.bf16 %v3420, %v3418
        %v3429 = vpack.c.bf16 %v3423, %v3421
        %v3430 = vpack.c.bf16 %v3424, %v3422
        %v3431 = vpack.c.bf16 %v3425, %v3425
        %v3432 = vpack.c.bf16 %v3426, %v3426
        %v3439 = vunpack.c.l.b16 %v3427
        %v3440 = vunpack.c.l.b16 %v3428
        %v3441 = vunpack.c.h.b16 %v3427
        %v3442 = vunpack.c.h.b16 %v3428
        %v3443 = vunpack.c.l.b16 %v3429
        %v3444 = vunpack.c.l.b16 %v3430
        %v3445 = vunpack.c.h.b16 %v3429
        %v3446 = vunpack.c.h.b16 %v3430
        %v3447 = vunpack.c.l.b16 %v3431
        %v3448 = vunpack.c.l.b16 %v3432
        %v3449 = vpack.c.b16 %v3440, %v3439
        %v3450 = vpack.c.b16 %v3442, %v3441
        %v3451 = vpack.c.b16 %v3444, %v3443
        %v3452 = vpack.c.b16 %v3446, %v3445
        %v3453 = vpack.c.b16 %v3448, %v3447
        %v3455 = vshrl.u32 %v3449, 16
        %v3457 = vrot.slane %v3455, 4
        %v3458 = vshll.u32 %v3449, 16
        %v3460 = vrot.slane %v3458, 5
        %v3461 = vor.u32 %v3457, %v3460
        %v3462 = vrot.slane %v3461, 4
        %v3464 = vshll.u32 %v3450, 16
        %v3466 = vrot.slane %v3464, 5
        %v3467 = vsel %vm1036, %v3462, %v3466
        %v3468 = vshrl.u32 %v3450, 16
        %v3470 = vrot.slane %v3468, 4
        %v3471 = vor.u32 %v3470, %v3466
        %v3472 = vrot.slane %v3471, 4
        %v3474 = vshll.u32 %v3451, 16
        %v3476 = vrot.slane %v3474, 5
        %v3477 = vsel %vm1036, %v3472, %v3476
        %v3478 = vshrl.u32 %v3451, 16
        %v3480 = vrot.slane %v3478, 4
        %v3481 = vor.u32 %v3480, %v3476
        %v3482 = vrot.slane %v3481, 4
        %v3484 = vshll.u32 %v3452, 16
        %v3486 = vrot.slane %v3484, 5
        %v3487 = vsel %vm1036, %v3482, %v3486
        %v3488 = vshrl.u32 %v3452, 16
        %v3490 = vrot.slane %v3488, 4
        %v3491 = vor.u32 %v3490, %v3486
        %v3492 = vrot.slane %v3491, 4
        %v3494 = vshll.u32 %v3453, 16
        %v3496 = vrot.slane %v3494, 5
        %v3497 = vsel %vm1036, %v3492, %v3496
        %v3498 = vshrl.u32 %v3453, 16
        %v3500 = vrot.slane %v3498, 4
        %v3501 = vor.u32 %v3500, %v3496
        %v3502 = vrot.slane %v3501, 4
        %3508 = vst [vmem:[#allocation5 + $0x8] sm:$0xff] %v3467
        %3509 = vst [vmem:[#allocation5 + $0x20] sm:$0xff] %v3477
        %3510 = vst [vmem:[#allocation5 + $0x38] sm:$0xff] %v3487
        %3511 = vst [vmem:[#allocation5 + $0x50] sm:$0xff] %v3497
        %3512 = vst [vmem:[#allocation5 + $0x68] sm:$0x11] %v3502
        %v3513 = vld [vmem:[#allocation4] sm:$0xfc]
        %v3514 = vld [vmem:[#allocation4 + $0x8] sm:$0xfc]
        %v3515 = vld [vmem:[#allocation4 + $0x10] sm:$0xff]
        %v3516 = vld [vmem:[#allocation4 + $0x18] sm:$0xff]
        %v3517 = vld [vmem:[#allocation4 + $0x20] sm:$0xff]
        %v3518 = vld [vmem:[#allocation4 + $0x28] sm:$0xff]
        %v3519 = vld [vmem:[#allocation4 + $0x30] sm:$0xff]
        %v3520 = vld [vmem:[#allocation4 + $0x38] sm:$0xff]
        %v3521 = vld [vmem:[#allocation4 + $0x40] sm:$0xf]
        %v3522 = vld [vmem:[#allocation4 + $0x48] sm:$0xf]
        %v3523 = vpack.c.bf16 %v3515, %v3513
        %v3524 = vpack.c.bf16 %v3516, %v3514
        %v3525 = vpack.c.bf16 %v3519, %v3517
        %v3526 = vpack.c.bf16 %v3520, %v3518
        %v3527 = vpack.c.bf16 %v3521, %v3521
        %v3528 = vpack.c.bf16 %v3522, %v3522
        %v3535 = vunpack.c.l.b16 %v3523
        %v3536 = vunpack.c.l.b16 %v3524
        %v3537 = vunpack.c.h.b16 %v3523
        %v3538 = vunpack.c.h.b16 %v3524
        %v3539 = vunpack.c.l.b16 %v3525
        %v3540 = vunpack.c.l.b16 %v3526
        %v3541 = vunpack.c.h.b16 %v3525
        %v3542 = vunpack.c.h.b16 %v3526
        %v3543 = vunpack.c.l.b16 %v3527
        %v3544 = vunpack.c.l.b16 %v3528
        %v3545 = vpack.c.b16 %v3536, %v3535
        %v3546 = vpack.c.b16 %v3538, %v3537
        %v3547 = vpack.c.b16 %v3540, %v3539
        %v3548 = vpack.c.b16 %v3542, %v3541
        %v3549 = vpack.c.b16 %v3544, %v3543
        %v3550 = vrot.slane %v3545, 5
        %v3551 = vrot.slane %v3550, 4
        %v3552 = vrot.slane %v3546, 5
        %v3553 = vsel %vm1135, %v3551, %v3552
        %v3554 = vrot.slane %v3552, 4
        %v3555 = vrot.slane %v3547, 5
        %v3556 = vsel %vm1135, %v3554, %v3555
        %v3557 = vrot.slane %v3555, 4
        %v3558 = vrot.slane %v3548, 5
        %v3559 = vsel %vm1135, %v3557, %v3558
        %v3560 = vrot.slane %v3558, 4
        %v3561 = vrot.slane %v3549, 5
        %v3562 = vsel %vm1135, %v3560, %v3561
        %v3563 = vrot.slane %v3561, 4
        %3569 = vst [vmem:[#allocation5 + $0x10] sm:$0xff] %v3553
        %3570 = vst [vmem:[#allocation5 + $0x28] sm:$0xff] %v3556
        %3571 = vst [vmem:[#allocation5 + $0x40] sm:$0xff] %v3559
        %3572 = vst [vmem:[#allocation5 + $0x58] sm:$0xff] %v3562
        %3573 = vst [vmem:[#allocation5 + $0x70] sm:$0x11] %v3563
        %v3574 = vld [vmem:[#allocation5] sm:$0xff]
        %v3575 = vld [vmem:[#allocation5 + $0x8] sm:$0xff]
        %v3576 = vld [vmem:[#allocation5 + $0x10] sm:$0xff]
        %v3577 = vld [vmem:[#allocation5 + $0x18] sm:$0xff]
        %v3578 = vld [vmem:[#allocation5 + $0x20] sm:$0xff]
        %v3579 = vld [vmem:[#allocation5 + $0x28] sm:$0xff]
        %v3580 = vld [vmem:[#allocation5 + $0x30] sm:$0xff]
        %v3581 = vld [vmem:[#allocation5 + $0x38] sm:$0xff]
        %v3582 = vld [vmem:[#allocation5 + $0x40] sm:$0xff]
        %v3583 = vld [vmem:[#allocation5 + $0x48] sm:$0xff]
        %v3584 = vld [vmem:[#allocation5 + $0x50] sm:$0xff]
        %v3585 = vld [vmem:[#allocation5 + $0x58] sm:$0xff]
        %v3586 = vld [vmem:[#allocation5 + $0x60] sm:$0x11]
        %v3587 = vld [vmem:[#allocation5 + $0x68] sm:$0x11]
        %v3588 = vld [vmem:[#allocation5 + $0x70] sm:$0x11]
        %v3589 = vld [vmem:[#allocation13] sm:$0xff]
        %v3590 = vld [vmem:[#allocation13 + $0x8] sm:$0xff]
        %v3591 = vld [vmem:[#allocation13 + $0x10] sm:$0xff]
        %v3592 = vld [vmem:[#allocation13 + $0x18] sm:$0xff]
        %v3593 = vld [vmem:[#allocation13 + $0x20] sm:$0xff]
        %v3594 = vld [vmem:[#allocation13 + $0x28] sm:$0xff]
        %v3595 = vld [vmem:[#allocation13 + $0x30] sm:$0xff]
        %v3596 = vld [vmem:[#allocation13 + $0x38] sm:$0xff]
        %v3597 = vld [vmem:[#allocation13 + $0x40] sm:$0xff]
        %v3598 = vld [vmem:[#allocation13 + $0x48] sm:$0xff]
        %v3599 = vld [vmem:[#allocation13 + $0x50] sm:$0xff]
        %v3600 = vld [vmem:[#allocation13 + $0x58] sm:$0xff]
        %v3601 = vld [vmem:[#allocation13 + $0x60] sm:$0xff]
        %v3602 = vld [vmem:[#allocation13 + $0x68] sm:$0xff]
        %v3603 = vld [vmem:[#allocation13 + $0x70] sm:$0xff]
        %v3604 = vld [vmem:[#allocation13 + $0x78] sm:$0xff]
        %v3605 = vld [vmem:[#allocation13 + $0x80] sm:$0xff]
        %v3606 = vld [vmem:[#allocation13 + $0x88] sm:$0xff]
        %v3607 = vld [vmem:[#allocation13 + $0x90] sm:$0xff]
        %v3608 = vld [vmem:[#allocation13 + $0x98] sm:$0xff]
        %v3609 = vld [vmem:[#allocation13 + $0xa0] sm:$0xff]
        %v3610 = vld [vmem:[#allocation13 + $0xa8] sm:$0xff]
        %v3611 = vld [vmem:[#allocation13 + $0xb0] sm:$0xff]
        %v3612 = vld [vmem:[#allocation13 + $0xb8] sm:$0xff]
        %v3613 = vld [vmem:[#allocation13 + $0xc0] sm:$0xff]
        %v3614 = vld [vmem:[#allocation13 + $0xc8] sm:$0xff]
        %v3615 = vld [vmem:[#allocation13 + $0xd0] sm:$0xff]
        %v3616 = vld [vmem:[#allocation13 + $0xd8] sm:$0xff]
        %v3617 = vld [vmem:[#allocation13 + $0xe0] sm:$0xff]
        %v3618 = vld [vmem:[#allocation13 + $0xe8] sm:$0xff]
        %v3619 = vld [vmem:[#allocation13 + $0xf0] sm:$0xff]
        %v3620 = vld [vmem:[#allocation13 + $0xf8] sm:$0xff]
        %v3621 = vld [vmem:[#allocation13 + $0x100] sm:$0xff]
        %v3622 = vld [vmem:[#allocation13 + $0x108] sm:$0xff]
        %v3623 = vld [vmem:[#allocation13 + $0x110] sm:$0xff]
        %v3624 = vld [vmem:[#allocation13 + $0x118] sm:$0xff]
        %v3625 = vld [vmem:[#allocation13 + $0x120] sm:$0xff]
        %v3626 = vld [vmem:[#allocation13 + $0x128] sm:$0xff]
        %v3627 = vld [vmem:[#allocation13 + $0x130] sm:$0xff]
        %v3628 = vld [vmem:[#allocation13 + $0x138] sm:$0xff]
        %v3629 = vld [vmem:[#allocation13 + $0x140] sm:$0xff]
        %v3630 = vld [vmem:[#allocation13 + $0x148] sm:$0xff]
        %v3631 = vld [vmem:[#allocation13 + $0x150] sm:$0xff]
        %v3632 = vld [vmem:[#allocation13 + $0x158] sm:$0xff]
        %v3633 = vld [vmem:[#allocation13 + $0x160] sm:$0xff]
        %v3634 = vld [vmem:[#allocation13 + $0x168] sm:$0xff]
        %v3635 = vld [vmem:[#allocation13 + $0x170] sm:$0xff]
        %v3636 = vld [vmem:[#allocation13 + $0x178] sm:$0xff]
        %v3637 = vld [vmem:[#allocation13 + $0x180] sm:$0xff]
        %v3638 = vld [vmem:[#allocation13 + $0x188] sm:$0xff]
        %v3639 = vld [vmem:[#allocation13 + $0x190] sm:$0xff]
        %v3640 = vld [vmem:[#allocation13 + $0x198] sm:$0xff]
        %v3641 = vld [vmem:[#allocation13 + $0x1a0] sm:$0xff]
        %v3642 = vld [vmem:[#allocation13 + $0x1a8] sm:$0xff]
        %v3643 = vld [vmem:[#allocation13 + $0x1b0] sm:$0xff]
        %v3644 = vld [vmem:[#allocation13 + $0x1b8] sm:$0xff]
        %v3645 = vld [vmem:[#allocation13 + $0x1c0] sm:$0xff]
        %v3646 = vld [vmem:[#allocation13 + $0x1c8] sm:$0xff]
        %v3647 = vld [vmem:[#allocation13 + $0x1d0] sm:$0xff]
        %v3648 = vld [vmem:[#allocation13 + $0x1d8] sm:$0xff]
        %v3649 = vld [vmem:[#allocation13 + $0x1e0] sm:$0xff]
        %v3650 = vld [vmem:[#allocation13 + $0x1e8] sm:$0xff]
        %v3651 = vld [vmem:[#allocation13 + $0x1f0] sm:$0xff]
        %v3652 = vld [vmem:[#allocation13 + $0x1f8] sm:$0xff]
        %v3653 = vld [vmem:[#allocation13 + $0x200] sm:$0xff]
        %v3654 = vld [vmem:[#allocation13 + $0x208] sm:$0xff]
        %v3655 = vld [vmem:[#allocation13 + $0x210] sm:$0xff]
        %v3656 = vld [vmem:[#allocation13 + $0x218] sm:$0xff]
        %v3657 = vld [vmem:[#allocation13 + $0x220] sm:$0xff]
        %v3658 = vld [vmem:[#allocation13 + $0x228] sm:$0xff]
        %v3659 = vld [vmem:[#allocation13 + $0x230] sm:$0xff]
        %v3660 = vld [vmem:[#allocation13 + $0x238] sm:$0xff]
        %v3661 = vld [vmem:[#allocation13 + $0x240] sm:$0xff]
        %v3662 = vld [vmem:[#allocation13 + $0x248] sm:$0xff]
        %v3663 = vld [vmem:[#allocation13 + $0x250] sm:$0xff]
        %v3664 = vld [vmem:[#allocation13 + $0x258] sm:$0xff]
        %v3665 = vld [vmem:[#allocation13 + $0x260] sm:$0xff]
        %v3666 = vld [vmem:[#allocation13 + $0x268] sm:$0xff]
        %v3667 = vld [vmem:[#allocation13 + $0x270] sm:$0xff]
        %v3668 = vld [vmem:[#allocation13 + $0x278] sm:$0xff]
        %v3669 = vld [vmem:[#allocation13 + $0x280] sm:$0xff]
        %v3670 = vld [vmem:[#allocation13 + $0x288] sm:$0xff]
        %v3671 = vld [vmem:[#allocation13 + $0x290] sm:$0xff]
        %v3672 = vld [vmem:[#allocation13 + $0x298] sm:$0xff]
        %v3673 = vld [vmem:[#allocation13 + $0x2a0] sm:$0xff]
        %v3674 = vld [vmem:[#allocation13 + $0x2a8] sm:$0xff]
        %v3675 = vld [vmem:[#allocation13 + $0x2b0] sm:$0xff]
        %v3676 = vld [vmem:[#allocation13 + $0x2b8] sm:$0xff]
        %v3677 = vld [vmem:[#allocation13 + $0x2c0] sm:$0xff]
        %v3678 = vld [vmem:[#allocation13 + $0x2c8] sm:$0xff]
        %v3679 = vld [vmem:[#allocation13 + $0x2d0] sm:$0xff]
        %v3680 = vld [vmem:[#allocation13 + $0x2d8] sm:$0xff]
        %v3681 = vld [vmem:[#allocation13 + $0x2e0] sm:$0xff]
        %v3682 = vld [vmem:[#allocation13 + $0x2e8] sm:$0xff]
        %v3683 = vld [vmem:[#allocation13 + $0x2f0] sm:$0xff]
        %v3684 = vld [vmem:[#allocation13 + $0x2f8] sm:$0xff]
        %v3685 = vld [vmem:[%s8] sm:$0x3]
        %v3687 = vlaneseq
        %v3688 = vshrl.u32 %v3687, 7
        %v3689 = vsub.s32 0, %v3688
        %v3690 = vrot.slane %v3685, %v3689
        %v3691 = vlaneseq
        %v3692 = vshrl.u32 %v3691, 7
        %v3693 = vsub.s32 1, %v3692
        %v3694 = vrot.slane %v3685, %v3693
        %v3712 = vunpack.c.l.b16 %v3574
        %v3713 = vunpack.c.h.b16 %v3574
        %v3714 = vunpack.c.l.b16 %v3575
        %v3715 = vunpack.c.h.b16 %v3575
        %v3716 = vunpack.c.l.b16 %v3576
        %v3717 = vunpack.c.h.b16 %v3576
        %v3718 = vunpack.c.l.b16 %v3577
        %v3719 = vunpack.c.h.b16 %v3577
        %v3720 = vunpack.c.l.b16 %v3578
        %v3721 = vunpack.c.h.b16 %v3578
        %v3722 = vunpack.c.l.b16 %v3579
        %v3723 = vunpack.c.h.b16 %v3579
        %v3724 = vunpack.c.l.b16 %v3580
        %v3725 = vunpack.c.h.b16 %v3580
        %v3726 = vunpack.c.l.b16 %v3581
        %v3727 = vunpack.c.h.b16 %v3581
        %v3728 = vunpack.c.l.b16 %v3582
        %v3729 = vunpack.c.h.b16 %v3582
        %v3730 = vunpack.c.l.b16 %v3583
        %v3731 = vunpack.c.h.b16 %v3583
        %v3732 = vunpack.c.l.b16 %v3584
        %v3733 = vunpack.c.h.b16 %v3584
        %v3734 = vunpack.c.l.b16 %v3585
        %v3735 = vunpack.c.h.b16 %v3585
        %v3736 = vunpack.c.l.b16 %v3586
        %v3737 = vunpack.c.h.b16 %v3586
        %v3738 = vunpack.c.l.b16 %v3587
        %v3739 = vunpack.c.h.b16 %v3587
        %v3740 = vunpack.c.l.b16 %v3588
        %v3741 = vunpack.c.h.b16 %v3588
        %v3742 = vpack.c.b16 %v3718, %v3712
        %v3743 = vpack.c.b16 %v3719, %v3713
        %v3744 = vpack.c.b16 %v3720, %v3714
        %v3745 = vpack.c.b16 %v3721, %v3715
        %v3746 = vpack.c.b16 %v3722, %v3716
        %v3747 = vpack.c.b16 %v3723, %v3717
        %v3748 = vpack.c.b16 %v3730, %v3724
        %v3749 = vpack.c.b16 %v3731, %v3725
        %v3750 = vpack.c.b16 %v3732, %v3726
        %v3751 = vpack.c.b16 %v3733, %v3727
        %v3752 = vpack.c.b16 %v3734, %v3728
        %v3753 = vpack.c.b16 %v3735, %v3729
        %v3754 = vpack.c.b16 %v3736, %v3736
        %v3755 = vpack.c.b16 %v3737, %v3737
        %v3756 = vpack.c.b16 %v3738, %v3738
        %v3757 = vpack.c.b16 %v3739, %v3739
        %v3758 = vpack.c.b16 %v3740, %v3740
        %v3759 = vpack.c.b16 %v3741, %v3741
        %v3874 = vunpack.c.l.b16 %v3589
        %v3875 = vunpack.c.h.b16 %v3589
        %v3876 = vunpack.c.l.b16 %v3590
        %v3877 = vunpack.c.h.b16 %v3590
        %v3878 = vunpack.c.l.b16 %v3591
        %v3879 = vunpack.c.h.b16 %v3591
        %v3880 = vunpack.c.l.b16 %v3592
        %v3881 = vunpack.c.h.b16 %v3592
        %v3882 = vunpack.c.l.b16 %v3593
        %v3883 = vunpack.c.h.b16 %v3593
        %v3884 = vunpack.c.l.b16 %v3594
        %v3885 = vunpack.c.h.b16 %v3594
        %v3886 = vunpack.c.l.b16 %v3595
        %v3887 = vunpack.c.h.b16 %v3595
        %v3888 = vunpack.c.l.b16 %v3596
        %v3889 = vunpack.c.h.b16 %v3596
        %v3890 = vunpack.c.l.b16 %v3597
        %v3891 = vunpack.c.h.b16 %v3597
        %v3892 = vunpack.c.l.b16 %v3598
        %v3893 = vunpack.c.h.b16 %v3598
        %v3894 = vunpack.c.l.b16 %v3599
        %v3895 = vunpack.c.h.b16 %v3599
        %v3896 = vunpack.c.l.b16 %v3600
        %v3897 = vunpack.c.h.b16 %v3600
        %v3898 = vunpack.c.l.b16 %v3601
        %v3899 = vunpack.c.h.b16 %v3601
        %v3900 = vunpack.c.l.b16 %v3602
        %v3901 = vunpack.c.h.b16 %v3602
        %v3902 = vunpack.c.l.b16 %v3603
        %v3903 = vunpack.c.h.b16 %v3603
        %v3904 = vunpack.c.l.b16 %v3604
        %v3905 = vunpack.c.h.b16 %v3604
        %v3906 = vunpack.c.l.b16 %v3605
        %v3907 = vunpack.c.h.b16 %v3605
        %v3908 = vunpack.c.l.b16 %v3606
        %v3909 = vunpack.c.h.b16 %v3606
        %v3910 = vunpack.c.l.b16 %v3607
        %v3911 = vunpack.c.h.b16 %v3607
        %v3912 = vunpack.c.l.b16 %v3608
        %v3913 = vunpack.c.h.b16 %v3608
        %v3914 = vunpack.c.l.b16 %v3609
        %v3915 = vunpack.c.h.b16 %v3609
        %v3916 = vunpack.c.l.b16 %v3610
        %v3917 = vunpack.c.h.b16 %v3610
        %v3918 = vunpack.c.l.b16 %v3611
        %v3919 = vunpack.c.h.b16 %v3611
        %v3920 = vunpack.c.l.b16 %v3612
        %v3921 = vunpack.c.h.b16 %v3612
        %v3922 = vunpack.c.l.b16 %v3613
        %v3923 = vunpack.c.h.b16 %v3613
        %v3924 = vunpack.c.l.b16 %v3614
        %v3925 = vunpack.c.h.b16 %v3614
        %v3926 = vunpack.c.l.b16 %v3615
        %v3927 = vunpack.c.h.b16 %v3615
        %v3928 = vunpack.c.l.b16 %v3616
        %v3929 = vunpack.c.h.b16 %v3616
        %v3930 = vunpack.c.l.b16 %v3617
        %v3931 = vunpack.c.h.b16 %v3617
        %v3932 = vunpack.c.l.b16 %v3618
        %v3933 = vunpack.c.h.b16 %v3618
        %v3934 = vunpack.c.l.b16 %v3619
        %v3935 = vunpack.c.h.b16 %v3619
        %v3936 = vunpack.c.l.b16 %v3620
        %v3937 = vunpack.c.h.b16 %v3620
        %v3938 = vunpack.c.l.b16 %v3621
        %v3939 = vunpack.c.h.b16 %v3621
        %v3940 = vunpack.c.l.b16 %v3622
        %v3941 = vunpack.c.h.b16 %v3622
        %v3942 = vunpack.c.l.b16 %v3623
        %v3943 = vunpack.c.h.b16 %v3623
        %v3944 = vunpack.c.l.b16 %v3624
        %v3945 = vunpack.c.h.b16 %v3624
        %v3946 = vunpack.c.l.b16 %v3625
        %v3947 = vunpack.c.h.b16 %v3625
        %v3948 = vunpack.c.l.b16 %v3626
        %v3949 = vunpack.c.h.b16 %v3626
        %v3950 = vunpack.c.l.b16 %v3627
        %v3951 = vunpack.c.h.b16 %v3627
        %v3952 = vunpack.c.l.b16 %v3628
        %v3953 = vunpack.c.h.b16 %v3628
        %v3954 = vunpack.c.l.b16 %v3629
        %v3955 = vunpack.c.h.b16 %v3629
        %v3956 = vunpack.c.l.b16 %v3630
        %v3957 = vunpack.c.h.b16 %v3630
        %v3958 = vunpack.c.l.b16 %v3631
        %v3959 = vunpack.c.h.b16 %v3631
        %v3960 = vunpack.c.l.b16 %v3632
        %v3961 = vunpack.c.h.b16 %v3632
        %v3962 = vunpack.c.l.b16 %v3633
        %v3963 = vunpack.c.h.b16 %v3633
        %v3964 = vunpack.c.l.b16 %v3634
        %v3965 = vunpack.c.h.b16 %v3634
        %v3966 = vunpack.c.l.b16 %v3635
        %v3967 = vunpack.c.h.b16 %v3635
        %v3968 = vunpack.c.l.b16 %v3636
        %v3969 = vunpack.c.h.b16 %v3636
        %v3970 = vunpack.c.l.b16 %v3637
        %v3971 = vunpack.c.h.b16 %v3637
        %v3972 = vunpack.c.l.b16 %v3638
        %v3973 = vunpack.c.h.b16 %v3638
        %v3974 = vunpack.c.l.b16 %v3639
        %v3975 = vunpack.c.h.b16 %v3639
        %v3976 = vunpack.c.l.b16 %v3640
        %v3977 = vunpack.c.h.b16 %v3640
        %v3978 = vunpack.c.l.b16 %v3641
        %v3979 = vunpack.c.h.b16 %v3641
        %v3980 = vunpack.c.l.b16 %v3642
        %v3981 = vunpack.c.h.b16 %v3642
        %v3982 = vunpack.c.l.b16 %v3643
        %v3983 = vunpack.c.h.b16 %v3643
        %v3984 = vunpack.c.l.b16 %v3644
        %v3985 = vunpack.c.h.b16 %v3644
        %v3986 = vunpack.c.l.b16 %v3645
        %v3987 = vunpack.c.h.b16 %v3645
        %v3988 = vunpack.c.l.b16 %v3646
        %v3989 = vunpack.c.h.b16 %v3646
        %v3990 = vunpack.c.l.b16 %v3647
        %v3991 = vunpack.c.h.b16 %v3647
        %v3992 = vunpack.c.l.b16 %v3648
        %v3993 = vunpack.c.h.b16 %v3648
        %v3994 = vunpack.c.l.b16 %v3649
        %v3995 = vunpack.c.h.b16 %v3649
        %v3996 = vunpack.c.l.b16 %v3650
        %v3997 = vunpack.c.h.b16 %v3650
        %v3998 = vunpack.c.l.b16 %v3651
        %v3999 = vunpack.c.h.b16 %v3651
        %v4000 = vunpack.c.l.b16 %v3652
        %v4001 = vunpack.c.h.b16 %v3652
        %v4002 = vunpack.c.l.b16 %v3653
        %v4003 = vunpack.c.h.b16 %v3653
        %v4004 = vunpack.c.l.b16 %v3654
        %v4005 = vunpack.c.h.b16 %v3654
        %v4006 = vunpack.c.l.b16 %v3655
        %v4007 = vunpack.c.h.b16 %v3655
        %v4008 = vunpack.c.l.b16 %v3656
        %v4009 = vunpack.c.h.b16 %v3656
        %v4010 = vunpack.c.l.b16 %v3657
        %v4011 = vunpack.c.h.b16 %v3657
        %v4012 = vunpack.c.l.b16 %v3658
        %v4013 = vunpack.c.h.b16 %v3658
        %v4014 = vunpack.c.l.b16 %v3659
        %v4015 = vunpack.c.h.b16 %v3659
        %v4016 = vunpack.c.l.b16 %v3660
        %v4017 = vunpack.c.h.b16 %v3660
        %v4018 = vunpack.c.l.b16 %v3661
        %v4019 = vunpack.c.h.b16 %v3661
        %v4020 = vunpack.c.l.b16 %v3662
        %v4021 = vunpack.c.h.b16 %v3662
        %v4022 = vunpack.c.l.b16 %v3663
        %v4023 = vunpack.c.h.b16 %v3663
        %v4024 = vunpack.c.l.b16 %v3664
        %v4025 = vunpack.c.h.b16 %v3664
        %v4026 = vunpack.c.l.b16 %v3665
        %v4027 = vunpack.c.h.b16 %v3665
        %v4028 = vunpack.c.l.b16 %v3666
        %v4029 = vunpack.c.h.b16 %v3666
        %v4030 = vunpack.c.l.b16 %v3667
        %v4031 = vunpack.c.h.b16 %v3667
        %v4032 = vunpack.c.l.b16 %v3668
        %v4033 = vunpack.c.h.b16 %v3668
        %v4034 = vunpack.c.l.b16 %v3669
        %v4035 = vunpack.c.h.b16 %v3669
        %v4036 = vunpack.c.l.b16 %v3670
        %v4037 = vunpack.c.h.b16 %v3670
        %v4038 = vunpack.c.l.b16 %v3671
        %v4039 = vunpack.c.h.b16 %v3671
        %v4040 = vunpack.c.l.b16 %v3672
        %v4041 = vunpack.c.h.b16 %v3672
        %v4042 = vunpack.c.l.b16 %v3673
        %v4043 = vunpack.c.h.b16 %v3673
        %v4044 = vunpack.c.l.b16 %v3674
        %v4045 = vunpack.c.h.b16 %v3674
        %v4046 = vunpack.c.l.b16 %v3675
        %v4047 = vunpack.c.h.b16 %v3675
        %v4048 = vunpack.c.l.b16 %v3676
        %v4049 = vunpack.c.h.b16 %v3676
        %v4050 = vunpack.c.l.b16 %v3677
        %v4051 = vunpack.c.h.b16 %v3677
        %v4052 = vunpack.c.l.b16 %v3678
        %v4053 = vunpack.c.h.b16 %v3678
        %v4054 = vunpack.c.l.b16 %v3679
        %v4055 = vunpack.c.h.b16 %v3679
        %v4056 = vunpack.c.l.b16 %v3680
        %v4057 = vunpack.c.h.b16 %v3680
        %v4058 = vunpack.c.l.b16 %v3681
        %v4059 = vunpack.c.h.b16 %v3681
        %v4060 = vunpack.c.l.b16 %v3682
        %v4061 = vunpack.c.h.b16 %v3682
        %v4062 = vunpack.c.l.b16 %v3683
        %v4063 = vunpack.c.h.b16 %v3683
        %v4064 = vunpack.c.l.b16 %v3684
        %v4065 = vunpack.c.h.b16 %v3684
        %v4066 = vpack.c.b16 %v3876, %v3874
        %v4067 = vpack.c.b16 %v3877, %v3875
        %v4068 = vpack.c.b16 %v3880, %v3878
        %v4069 = vpack.c.b16 %v3881, %v3879
        %v4070 = vpack.c.b16 %v3884, %v3882
        %v4071 = vpack.c.b16 %v3885, %v3883
        %v4072 = vpack.c.b16 %v3888, %v3886
        %v4073 = vpack.c.b16 %v3889, %v3887
        %v4074 = vpack.c.b16 %v3892, %v3890
        %v4075 = vpack.c.b16 %v3893, %v3891
        %v4076 = vpack.c.b16 %v3896, %v3894
        %v4077 = vpack.c.b16 %v3897, %v3895
        %v4078 = vpack.c.b16 %v3900, %v3898
        %v4079 = vpack.c.b16 %v3901, %v3899
        %v4080 = vpack.c.b16 %v3904, %v3902
        %v4081 = vpack.c.b16 %v3905, %v3903
        %v4082 = vpack.c.b16 %v3908, %v3906
        %v4083 = vpack.c.b16 %v3909, %v3907
        %v4084 = vpack.c.b16 %v3912, %v3910
        %v4085 = vpack.c.b16 %v3913, %v3911
        %v4086 = vpack.c.b16 %v3916, %v3914
        %v4087 = vpack.c.b16 %v3917, %v3915
        %v4088 = vpack.c.b16 %v3920, %v3918
        %v4089 = vpack.c.b16 %v3921, %v3919
        %v4090 = vpack.c.b16 %v3924, %v3922
        %v4091 = vpack.c.b16 %v3925, %v3923
        %v4092 = vpack.c.b16 %v3928, %v3926
        %v4093 = vpack.c.b16 %v3929, %v3927
        %v4094 = vpack.c.b16 %v3932, %v3930
        %v4095 = vpack.c.b16 %v3933, %v3931
        %v4096 = vpack.c.b16 %v3936, %v3934
        %v4097 = vpack.c.b16 %v3937, %v3935
        %v4098 = vpack.c.b16 %v3940, %v3938
        %v4099 = vpack.c.b16 %v3941, %v3939
        %v4100 = vpack.c.b16 %v3944, %v3942
        %v4101 = vpack.c.b16 %v3945, %v3943
        %v4102 = vpack.c.b16 %v3948, %v3946
        %v4103 = vpack.c.b16 %v3949, %v3947
        %v4104 = vpack.c.b16 %v3952, %v3950
        %v4105 = vpack.c.b16 %v3953, %v3951
        %v4106 = vpack.c.b16 %v3956, %v3954
        %v4107 = vpack.c.b16 %v3957, %v3955
        %v4108 = vpack.c.b16 %v3960, %v3958
        %v4109 = vpack.c.b16 %v3961, %v3959
        %v4110 = vpack.c.b16 %v3964, %v3962
        %v4111 = vpack.c.b16 %v3965, %v3963
        %v4112 = vpack.c.b16 %v3968, %v3966
        %v4113 = vpack.c.b16 %v3969, %v3967
        %v4114 = vpack.c.b16 %v3972, %v3970
        %v4115 = vpack.c.b16 %v3973, %v3971
        %v4116 = vpack.c.b16 %v3976, %v3974
        %v4117 = vpack.c.b16 %v3977, %v3975
        %v4118 = vpack.c.b16 %v3980, %v3978
        %v4119 = vpack.c.b16 %v3981, %v3979
        %v4120 = vpack.c.b16 %v3984, %v3982
        %v4121 = vpack.c.b16 %v3985, %v3983
        %v4122 = vpack.c.b16 %v3988, %v3986
        %v4123 = vpack.c.b16 %v3989, %v3987
        %v4124 = vpack.c.b16 %v3992, %v3990
        %v4125 = vpack.c.b16 %v3993, %v3991
        %v4126 = vpack.c.b16 %v3996, %v3994
        %v4127 = vpack.c.b16 %v3997, %v3995
        %v4128 = vpack.c.b16 %v4000, %v3998
        %v4129 = vpack.c.b16 %v4001, %v3999
        %v4130 = vpack.c.b16 %v4004, %v4002
        %v4131 = vpack.c.b16 %v4005, %v4003
        %v4132 = vpack.c.b16 %v4008, %v4006
        %v4133 = vpack.c.b16 %v4009, %v4007
        %v4134 = vpack.c.b16 %v4012, %v4010
        %v4135 = vpack.c.b16 %v4013, %v4011
        %v4136 = vpack.c.b16 %v4016, %v4014
        %v4137 = vpack.c.b16 %v4017, %v4015
        %v4138 = vpack.c.b16 %v4020, %v4018
        %v4139 = vpack.c.b16 %v4021, %v4019
        %v4140 = vpack.c.b16 %v4024, %v4022
        %v4141 = vpack.c.b16 %v4025, %v4023
        %v4142 = vpack.c.b16 %v4028, %v4026
        %v4143 = vpack.c.b16 %v4029, %v4027
        %v4144 = vpack.c.b16 %v4032, %v4030
        %v4145 = vpack.c.b16 %v4033, %v4031
        %v4146 = vpack.c.b16 %v4036, %v4034
        %v4147 = vpack.c.b16 %v4037, %v4035
        %v4148 = vpack.c.b16 %v4040, %v4038
        %v4149 = vpack.c.b16 %v4041, %v4039
        %v4150 = vpack.c.b16 %v4044, %v4042
        %v4151 = vpack.c.b16 %v4045, %v4043
        %v4152 = vpack.c.b16 %v4048, %v4046
        %v4153 = vpack.c.b16 %v4049, %v4047
        %v4154 = vpack.c.b16 %v4052, %v4050
        %v4155 = vpack.c.b16 %v4053, %v4051
        %v4156 = vpack.c.b16 %v4056, %v4054
        %v4157 = vpack.c.b16 %v4057, %v4055
        %v4158 = vpack.c.b16 %v4060, %v4058
        %v4159 = vpack.c.b16 %v4061, %v4059
        %v4160 = vpack.c.b16 %v4064, %v4062
        %v4161 = vpack.c.b16 %v4065, %v4063
        %4258 = vmatprep.subr.bf16.mxu0 %v4067
        %4259 = vmatpush1.bf16.msra.mxu0 %v4066
        %4260 = vmatprep.subr.bf16.mxu0 %v4069
        %4261 = vmatpush1.bf16.msra.mxu0 %v4068
        %4262 = vmatprep.subr.bf16.mxu0 %v4071
        %4263 = vmatpush1.bf16.msra.mxu0 %v4070
        %4264 = vmatprep.subr.bf16.mxu0 %v4073
        %4265 = vmatpush1.bf16.msra.mxu0 %v4072
        %4266 = vmatprep.subr.bf16.mxu0 %v4075
        %4267 = vmatpush1.bf16.msra.mxu0 %v4074
        %4268 = vmatprep.subr.bf16.mxu0 %v4077
        %4269 = vmatpush1.bf16.msra.mxu0 %v4076
        %4270 = vmatprep.subr.bf16.mxu0 %v4079
        %4271 = vmatpush1.bf16.msra.mxu0 %v4078
        %4272 = vmatprep.subr.bf16.mxu0 %v4081
        %4273 = vmatpush1.bf16.msra.mxu0 %v4080
        %4274 = vmatprep.subr.bf16.mxu0 %v4083
        %4275 = vmatpush1.bf16.msra.mxu0 %v4082
        %4276 = vmatprep.subr.bf16.mxu0 %v4085
        %4277 = vmatpush1.bf16.msra.mxu0 %v4084
        %4278 = vmatprep.subr.bf16.mxu0 %v4087
        %4279 = vmatpush1.bf16.msra.mxu0 %v4086
        %4280 = vmatprep.subr.bf16.mxu0 %v4089
        %4281 = vmatpush1.bf16.msra.mxu0 %v4088
        %4282 = vmatprep.subr.bf16.mxu0 %v4091
        %4283 = vmatpush1.bf16.msra.mxu0 %v4090
        %4284 = vmatprep.subr.bf16.mxu0 %v4093
        %4285 = vmatpush1.bf16.msra.mxu0 %v4092
        %4286 = vmatprep.subr.bf16.mxu0 %v4095
        %4287 = vmatpush1.bf16.msra.mxu0 %v4094
        %4288 = vmatprep.subr.bf16.mxu0 %v4097
        %4289 = vmatpush1.bf16.msra.mxu0 %v4096
        %4290 = vmatprep.mubr.bf16.mxu0 %v3743
        %4291 = vmatmul.mubr.bf16.gmra.mrb[0].mxu0 %v3742
        %v4292 = vpop.f32.mrb[0].mxu0
        %v4293 = vadd.f32 %v3690, %v4292
        %v4294 = vpop.f32.mrb[0].mxu0
        %v4295 = vadd.f32 %v3694, %v4294
        %v4296 = vpop.f32.mrb[0].mxu0
        %v4297 = vadd.f32 %v3690, %v4296
        %v4298 = vpop.f32.mrb[0].mxu0
        %v4299 = vadd.f32 %v3694, %v4298
        %4300 = vmatprep.mubr.bf16.mxu0 %v3749
        %4301 = vmatmul.mubr.bf16.gmra.mrb[0].mxu0 %v3748
        %v4302 = vpop.f32.mrb[0].mxu0
        %v4303 = vadd.f32 %v3690, %v4302
        %v4304 = vpop.f32.mrb[0].mxu0
        %v4305 = vadd.f32 %v3694, %v4304
        %v4306 = vpop.f32.mrb[0].mxu0
        %v4307 = vadd.f32 %v3690, %v4306
        %v4308 = vpop.f32.mrb[0].mxu0
        %v4309 = vadd.f32 %v3694, %v4308
        %4310 = vmatprep.mubr.bf16.mxu0 %v3755
        %4311 = vmatmul.mubr.bf16.gmra.mrb[0].mxu0 %v3754
        %v4312 = vpop.f32.mrb[0].mxu0
        %v4313 = vadd.f32 %v3690, %v4312
        %v4314 = vpop.f32.mrb[0].mxu0
        %v4315 = vadd.f32 %v3694, %v4314
        %v4316 = vpop.f32.mrb[0].mxu0
        %v4317 = vpop.f32.mrb[0].mxu0
        %4318 = vdwg.mxu0
        %4319 = vmatprep.subr.bf16.mxu0 %v4099
        %4320 = vmatpush1.bf16.msra.mxu0 %v4098
        %4321 = vmatprep.subr.bf16.mxu0 %v4101
        %4322 = vmatpush1.bf16.msra.mxu0 %v4100
        %4323 = vmatprep.subr.bf16.mxu0 %v4103
        %4324 = vmatpush1.bf16.msra.mxu0 %v4102
        %4325 = vmatprep.subr.bf16.mxu0 %v4105
        %4326 = vmatpush1.bf16.msra.mxu0 %v4104
        %4327 = vmatprep.subr.bf16.mxu0 %v4107
        %4328 = vmatpush1.bf16.msra.mxu0 %v4106
        %4329 = vmatprep.subr.bf16.mxu0 %v4109
        %4330 = vmatpush1.bf16.msra.mxu0 %v4108
        %4331 = vmatprep.subr.bf16.mxu0 %v4111
        %4332 = vmatpush1.bf16.msra.mxu0 %v4110
        %4333 = vmatprep.subr.bf16.mxu0 %v4113
        %4334 = vmatpush1.bf16.msra.mxu0 %v4112
        %4335 = vmatprep.subr.bf16.mxu0 %v4115
        %4336 = vmatpush1.bf16.msra.mxu0 %v4114
        %4337 = vmatprep.subr.bf16.mxu0 %v4117
        %4338 = vmatpush1.bf16.msra.mxu0 %v4116
        %4339 = vmatprep.subr.bf16.mxu0 %v4119
        %4340 = vmatpush1.bf16.msra.mxu0 %v4118
        %4341 = vmatprep.subr.bf16.mxu0 %v4121
        %4342 = vmatpush1.bf16.msra.mxu0 %v4120
        %4343 = vmatprep.subr.bf16.mxu0 %v4123
        %4344 = vmatpush1.bf16.msra.mxu0 %v4122
        %4345 = vmatprep.subr.bf16.mxu0 %v4125
        %4346 = vmatpush1.bf16.msra.mxu0 %v4124
        %4347 = vmatprep.subr.bf16.mxu0 %v4127
        %4348 = vmatpush1.bf16.msra.mxu0 %v4126
        %4349 = vmatprep.subr.bf16.mxu0 %v4129
        %4350 = vmatpush1.bf16.msra.mxu0 %v4128
        %4351 = vmatprep.mubr.bf16.mxu0 %v3745
        %4352 = vmatmul.mubr.bf16.gmra.mrb[0].mxu0 %v3744
        %v4353 = vpop.f32.mrb[0].mxu0
        %v4354 = vadd.f32 %v4293, %v4353
        %v4355 = vpop.f32.mrb[0].mxu0
        %v4356 = vadd.f32 %v4295, %v4355
        %v4357 = vpop.f32.mrb[0].mxu0
        %v4358 = vadd.f32 %v4297, %v4357
        %v4359 = vpop.f32.mrb[0].mxu0
        %v4360 = vadd.f32 %v4299, %v4359
        %4361 = vmatprep.mubr.bf16.mxu0 %v3751
        %4362 = vmatmul.mubr.bf16.gmra.mrb[0].mxu0 %v3750
        %v4363 = vpop.f32.mrb[0].mxu0
        %v4364 = vadd.f32 %v4303, %v4363
        %v4365 = vpop.f32.mrb[0].mxu0
        %v4366 = vadd.f32 %v4305, %v4365
        %v4367 = vpop.f32.mrb[0].mxu0
        %v4368 = vadd.f32 %v4307, %v4367
        %v4369 = vpop.f32.mrb[0].mxu0
        %v4370 = vadd.f32 %v4309, %v4369
        %4371 = vmatprep.mubr.bf16.mxu0 %v3757
        %4372 = vmatmul.mubr.bf16.gmra.mrb[0].mxu0 %v3756
        %v4373 = vpop.f32.mrb[0].mxu0
        %v4374 = vadd.f32 %v4313, %v4373
        %v4375 = vpop.f32.mrb[0].mxu0
        %v4376 = vadd.f32 %v4315, %v4375
        %v4377 = vpop.f32.mrb[0].mxu0
        %v4378 = vpop.f32.mrb[0].mxu0
        %4379 = vdwg.mxu0
        %4380 = vmatprep.subr.bf16.mxu0 %v4131
        %4381 = vmatpush1.bf16.msra.mxu0 %v4130
        %4382 = vmatprep.subr.bf16.mxu0 %v4133
        %4383 = vmatpush1.bf16.msra.mxu0 %v4132
        %4384 = vmatprep.subr.bf16.mxu0 %v4135
        %4385 = vmatpush1.bf16.msra.mxu0 %v4134
        %4386 = vmatprep.subr.bf16.mxu0 %v4137
        %4387 = vmatpush1.bf16.msra.mxu0 %v4136
        %4388 = vmatprep.subr.bf16.mxu0 %v4139
        %4389 = vmatpush1.bf16.msra.mxu0 %v4138
        %4390 = vmatprep.subr.bf16.mxu0 %v4141
        %4391 = vmatpush1.bf16.msra.mxu0 %v4140
        %4392 = vmatprep.subr.bf16.mxu0 %v4143
        %4393 = vmatpush1.bf16.msra.mxu0 %v4142
        %4394 = vmatprep.subr.bf16.mxu0 %v4145
        %4395 = vmatpush1.bf16.msra.mxu0 %v4144
        %4396 = vmatprep.subr.bf16.mxu0 %v4147
        %4397 = vmatpush1.bf16.msra.mxu0 %v4146
        %4398 = vmatprep.subr.bf16.mxu0 %v4149
        %4399 = vmatpush1.bf16.msra.mxu0 %v4148
        %4400 = vmatprep.subr.bf16.mxu0 %v4151
        %4401 = vmatpush1.bf16.msra.mxu0 %v4150
        %4402 = vmatprep.subr.bf16.mxu0 %v4153
        %4403 = vmatpush1.bf16.msra.mxu0 %v4152
        %4404 = vmatprep.subr.bf16.mxu0 %v4155
        %4405 = vmatpush1.bf16.msra.mxu0 %v4154
        %4406 = vmatprep.subr.bf16.mxu0 %v4157
        %4407 = vmatpush1.bf16.msra.mxu0 %v4156
        %4408 = vmatprep.subr.bf16.mxu0 %v4159
        %4409 = vmatpush1.bf16.msra.mxu0 %v4158
        %4410 = vmatprep.subr.bf16.mxu0 %v4161
        %4411 = vmatpush1.bf16.msra.mxu0 %v4160
        %4412 = vmatprep.mubr.bf16.mxu0 %v3747
        %4413 = vmatmul.mubr.bf16.gmra.mrb[0].mxu0 %v3746
        %v4414 = vpop.f32.mrb[0].mxu0
        %v4415 = vadd.f32 %v4354, %v4414
        %v4416 = vpop.f32.mrb[0].mxu0
        %v4417 = vadd.f32 %v4356, %v4416
        %v4418 = vpop.f32.mrb[0].mxu0
        %v4419 = vadd.f32 %v4358, %v4418
        %v4420 = vpop.f32.mrb[0].mxu0
        %v4421 = vadd.f32 %v4360, %v4420
        %4422 = vmatprep.mubr.bf16.mxu0 %v3753
        %4423 = vmatmul.mubr.bf16.gmra.mrb[0].mxu0 %v3752
        %v4424 = vpop.f32.mrb[0].mxu0
        %v4425 = vadd.f32 %v4364, %v4424
        %v4426 = vpop.f32.mrb[0].mxu0
        %v4427 = vadd.f32 %v4366, %v4426
        %v4428 = vpop.f32.mrb[0].mxu0
        %v4429 = vadd.f32 %v4368, %v4428
        %v4430 = vpop.f32.mrb[0].mxu0
        %v4431 = vadd.f32 %v4370, %v4430
        %4432 = vmatprep.mubr.bf16.mxu0 %v3759
        %4433 = vmatmul.mubr.bf16.gmra.mrb[0].mxu0 %v3758
        %v4434 = vpop.f32.mrb[0].mxu0
        %v4435 = vadd.f32 %v4374, %v4434
        %v4436 = vpop.f32.mrb[0].mxu0
        %v4437 = vadd.f32 %v4376, %v4436
        %v4438 = vpop.f32.mrb[0].mxu0
        %v4439 = vpop.f32.mrb[0].mxu0
        %4440 = vdwg.mxu0
        %v4441 = vmax.f32 %v4415, 0.0
        %v4442 = vmax.f32 %v4417, 0.0
        %v4443 = vmax.f32 %v4419, 0.0
        %v4444 = vmax.f32 %v4421, 0.0
        %v4445 = vmax.f32 %v4425, 0.0
        %v4446 = vmax.f32 %v4427, 0.0
        %v4447 = vmax.f32 %v4429, 0.0
        %v4448 = vmax.f32 %v4431, 0.0
        %v4449 = vmax.f32 %v4435, 0.0
        %v4450 = vmax.f32 %v4437, 0.0
        %4451 = vst [vmem:[%s414] sm:$0xff] %v4441
        %4452 = vst [vmem:[%s414 + $0x8] sm:$0xff] %v4442
        %4453 = vst [vmem:[%s414 + $0x10] sm:$0xff] %v4443
        %4454 = vst [vmem:[%s414 + $0x18] sm:$0xff] %v4444
        %vm4461 = vcmask 1045504
        %v4462 = vrot.slane %v4445, 2
        %v4463 = vrot.slane %v4447, 2
        %v4464 = vsel %vm4461, %v4462, %v4463
        %v4465 = vrot.slane %v4446, 2
        %v4466 = vrot.slane %v4448, 2
        %v4467 = vsel %vm4461, %v4465, %v4466
        %v4468 = vrot.slane %v4449, 2
        %v4469 = vsel %vm4461, %v4463, %v4468
        %v4470 = vrot.slane %v4450, 2
        %v4471 = vsel %vm4461, %v4466, %v4470
        %s4476 = scalar_lea.vmem %s414, 32
        %4477 = vst [vmem:[%s4476] sm:$0xff] %v4464
        %4478 = vst [vmem:[%s4476 + $0x8] sm:$0xff] %v4467
        %4479 = vst [vmem:[%s4476 + $0x10] sm:$0xff] %v4469
        %4480 = vst [vmem:[%s4476 + $0x18] sm:$0xff] %v4471
        %s4481 = smul.u32 2, %s25
        %p4482 = scmp.lt.s32.totalorder %s4481, 3
        %s4483 = scalar_select %p4482, %s4481, 3
        %s4484 = smul.addr %s4483, 4
        %s4485 = smul.addr %s4484, 8
        %s4486 = scalar_lea.vmem %s9, %s4485
        // Predicated region
        $region77: #{features4layer_forward.1} parent=55 // pred_check
          %p4487 = pneg %p237
        $region78: #{features4layer_forward.1} parent=55 // pred_check_branch
          %4489 = sbr.rel (%p4487) target = $region80
        $region79: #{features4layer_forward.1} parent=55 // pred_region
          %s4490 = smul.u32 2, %s25
        $region80: #{features4layer_forward.1} parent=55 // pred_fallthru
          _
      $region56: #{features4layer_forward.1} parent=5 // pred_fallthru
        _
      %p4491 = scmp.le.s32.totalorder 2, %s20
      // Predicated region
      $region81: #{features4layer_forward.1} parent=5 // pred_check
        %p4492 = pneg %p4491
      $region82: #{features4layer_forward.1} parent=5 // pred_check_branch
        %4494 = sbr.rel (%p4492) target = $region84
      $region83: #{features4layer_forward.1} parent=5 // pred_region
        %s4495 = ssub.s32 %s20, 2
        // Predicated region
        $region85: #{features4layer_forward.1} parent=83 // pred_check
          %p4496 = pneg %p243
        $region86: #{features4layer_forward.1} parent=83 // pred_check_branch
          %4498 = sbr.rel (%p4496) target = $region88
        $region87: #{features4layer_forward.1} parent=83 // pred_region
          %s4499 = smul.u32 2, %s26
          %p4500 = scmp.lt.s32.totalorder %s4499, 3
          %s4501 = scalar_select %p4500, %s4499, 3
          %s4502 = smul.addr %s4501, 4
          %s4503 = smul.addr %s4502, 8
          %s4504 = scalar_lea.vmem %s9, %s4503
        $region88: #{features4layer_forward.1} parent=83 // pred_fallthru
          _
      $region84: #{features4layer_forward.1} parent=5 // pred_fallthru
        _
    $region6: #{features4layer_forward.1} parent=1 // loop_footer
      %s24 = sadd.s32 1, %s20
    $region7: #{features4layer_forward.1} parent=1 // loop_footer_branch
      %19 = sbr.rel target = $region3
    $region8: #{features4layer_forward.1} parent=1 // loop_exit
      _
    %4505 = vsyncpa [#allocation7], 1
    %s4506 = scalar_lea.sflag [#allocation7], 1
    %4507 = vsyncpa %s4506, 1
    %4508 = vsyncpa [#allocation9], 1
    %4509 = vsyncpa [#allocation12], 1

// kernel: features4layer_forward.1
$region0: #{features4layer_forward.1}
  #allocation0 [shape = 'u32[]', space=smem, size = 0x4, offset = 0x4, fixed_abs, tag = 'smem constant byte address 0x4 - core index']
  #allocation1 [shape = 'u32[144,128]{1,0:T(1,128)}', space=vmem, size = 0x12000, scoped, tag = 'internal scratch']
  #allocation2 [shape = 'f32[40,16]{1,0:T(8,128)}', space=vmem, size = 0x5000, scoped, tag = 'scratch operand']
  #allocation3 [shape = 'bf16[36,80]{1,0:T(8,128)(2,1)}', space=vmem, size = 0x2800, scoped, tag = 'scratch operand']
  #allocation4 [shape = 'f32[36,256]{1,0:T(8,128)}', space=vmem, size = 0xa000, scoped, tag = 'scratch operand']
  #allocation5 [shape = 'bf16[34,768]{1,0:T(8,128)(2,1)}', space=vmem, size = 0xf000, scoped, tag = 'scratch operand']
  %s0 = inlined_call_operand.hbm [shape: f32[4,16,16], index: 0, kind: input, shape index: {}]
  %s1 = inlined_call_operand.hbm [shape: bf16[80,256], index: 1, kind: input, shape index: {}]
  %s2 = inlined_call_operand.vmem [shape: f32[1,256], index: 2, kind: input, shape index: {}]
  %s3 = inlined_call_operand.hbm [shape: bf16[768,256], index: 3, kind: input, shape index: {}]
  %s4 = inlined_call_operand.vmem [shape: f32[1,256], index: 4, kind: input, shape index: {}]
  %s5 = inlined_call_operand.hbm [shape: bf16[768,256], index: 5, kind: input, shape index: {}]
  %s6 = inlined_call_operand.vmem [shape: f32[1,256], index: 6, kind: input, shape index: {}]
  %s7 = inlined_call_operand.hbm [shape: bf16[768,256], index: 7, kind: input, shape index: {}]
  %s8 = inlined_call_operand.vmem [shape: f32[1,256], index: 8, kind: input, shape index: {}]
  %s9 = inlined_call_operand.vmem [shape: f32[4,16,256], index: 9, kind: output, shape index: {}]
  %s10 = sld [smem:[#allocation0]]
  $region89: #{features4layer_forward.1} parent=0
    _
  %s12 = ssub.s32 1, %s10
  %s13 = scalar_select 0, %s12, %s10
  $region1: #{features4layer_forward.1} parent=0
    #allocation6 [shape = 'u8[32768]{0}', space=vmem, size = 0x8000, scoped, tag = 'input window, operand 0']
    #allocation7 [shape = 's32[2]{0}', space=sflag, size = 0x8, scoped, tag = 'scoped memory for features4layer_forward.1']
    #allocation8 [shape = 'u8[40960]{0}', space=vmem, size = 0xa000, scoped, tag = 'input window, operand 1, single buffered']
    #allocation9 [shape = 's32[1]{0}', space=sflag, size = 0x4, scoped, tag = 'scoped memory for features4layer_forward.1']
    #allocation10 [shape = 'u8[393216]{0}', space=vmem, size = 0x60000, scoped, tag = 'input window, operand 3, single buffered']
    #allocation11 [shape = 'u8[393216]{0}', space=vmem, size = 0x60000, scoped, tag = 'input window, operand 5, single buffered']
    #allocation12 [shape = 's32[1]{0}', space=sflag, size = 0x4, scoped, tag = 'scoped memory for features4layer_forward.1']
    #allocation13 [shape = 'u8[393216]{0}', space=vmem, size = 0x60000, scoped, tag = 'input window, operand 7, single buffered']
    %14 = vsyncpa [#allocation7], 0
    %s15 = scalar_lea.sflag [#allocation7], 1
    %16 = vsyncpa %s15, 0
    %17 = vsyncpa [#allocation9], 0
    %18 = vsyncpa [#allocation12], 0
    loop: start=0, step=1, limit=4
    $region2: #{features4layer_forward.1} parent=1 // loop_pre_header
      _
    $region3: #{features4layer_forward.1} parent=1 // loop_header
      %s20 = sphi 0, %s24
      %p21 = scmp.ge.s32.totalorder %s20, 4
      %s30 = sphi 0, %s32
      %s33 = sphi 0, %s30
      %s34 = sphi 0, %s33
      %s50 = sphi 0, %s34
      %s54 = sphi 0, %s54
      %s56 = sphi 0, %s54
      %s57 = sphi 0, %s56
      %s71 = sphi 0, %s57
      %s75 = sphi 0, %s75
      %s77 = sphi 0, %s75
      %s78 = sphi 0, %s77
      %s92 = sphi 0, %s78
      %s96 = sphi 0, %s96
      %s98 = sphi 0, %s96
      %s99 = sphi 0, %s98
      %s113 = sphi 0, %s99
      %s117 = sphi 0, %s117
      %s119 = sphi 0, %s117
      %s120 = sphi 0, %s119
      %s134 = sphi 0, %s120
      %s138 = sphi 0, %s138
      %s140 = sphi 0, %s138
      %s141 = sphi 0, %s140
      %s155 = sphi 0, %s141
      %s159 = sphi 0, %s159
      %s161 = sphi 0, %s159
      %s162 = sphi 0, %s161
      %s176 = sphi 0, %s162
      %s180 = sphi 0, %s180
      %s182 = sphi 0, %s180
      %s183 = sphi 0, %s182
      %s197 = sphi 0, %s183
      %s201 = sphi 0, %s201
      %s203 = sphi 0, %s201
      %s204 = sphi 0, %s203
      %s218 = sphi 0, %s204
      %s224 = sphi 0, %s226
      %s227 = sphi 0, %s224
      %s228 = sphi 0, %s227
      %s244 = sphi 0, %s228
    $region4: #{features4layer_forward.1} parent=1 // loop_header_branch
      %23 = sbr.rel (%p21) target = $region8
    $region5: #{features4layer_forward.1} parent=1 // loop_body
      %s25 = ssub.s32 %s20, 1
      %s26 = ssub.s32 %s20, 2
      %s27 = sadd.s32 %s20, 1
      %s28 = ssub.s32 %s20, %s27
      %p29 = scmp.eq.s32.totalorder %s28, 0
      %s31 = sadd.s32 %s30, 1
      %s32 = scalar_select %p29, %s30, %s31
      %p35 = pneg %p29
      %p36 = scmp.eq.s32.totalorder %s20, 1
      %p37 = por %p35, %p36
      %p38 = scmp.ne.s32.totalorder %s30, %s33
      %p39 = scmp.eq.s32.totalorder %s20, 0
      %p40 = por %p38, %p39
      %p41 = scmp.ne.s32.totalorder %s30, %s33
      %p42 = scmp.eq.s32.totalorder %s25, 1
      %p43 = por %p41, %p42
      %p44 = scmp.ne.s32.totalorder %s33, %s34
      %p45 = scmp.eq.s32.totalorder %s25, 0
      %p46 = por %p44, %p45
      %p47 = scmp.ne.s32.totalorder %s33, %s34
      %p48 = scmp.eq.s32.totalorder %s26, 1
      %p49 = por %p47, %p48
      %p51 = scmp.ne.s32.totalorder %s34, %s50
      %p52 = scmp.eq.s32.totalorder %s26, 0
      %p53 = por %p51, %p52
      %s55 = sadd.s32 %s54, 1
      %p58 = scmp.eq.s32.totalorder %s20, 1
      %p59 = scmp.ne.s32.totalorder %s54, %s56
      %p60 = scmp.eq.s32.totalorder %s20, 0
      %p61 = por %p59, %p60
      %p62 = scmp.ne.s32.totalorder %s54, %s56
      %p63 = scmp.eq.s32.totalorder %s25, 1
      %p64 = por %p62, %p63
      %p65 = scmp.ne.s32.totalorder %s56, %s57
      %p66 = scmp.eq.s32.totalorder %s25, 0
      %p67 = por %p65, %p66
      %p68 = scmp.ne.s32.totalorder %s56, %s57
      %p69 = scmp.eq.s32.totalorder %s26, 1
      %p70 = por %p68, %p69
      %p72 = scmp.ne.s32.totalorder %s57, %s71
      %p73 = scmp.eq.s32.totalorder %s26, 0
      %p74 = por %p72, %p73
      %s76 = sadd.s32 %s75, 1
      %p79 = scmp.eq.s32.totalorder %s20, 1
      %p80 = scmp.ne.s32.totalorder %s75, %s77
      %p81 = scmp.eq.s32.totalorder %s20, 0
      %p82 = por %p80, %p81
      %p83 = scmp.ne.s32.totalorder %s75, %s77
      %p84 = scmp.eq.s32.totalorder %s25, 1
      %p85 = por %p83, %p84
      %p86 = scmp.ne.s32.totalorder %s77, %s78
      %p87 = scmp.eq.s32.totalorder %s25, 0
      %p88 = por %p86, %p87
      %p89 = scmp.ne.s32.totalorder %s77, %s78
      %p90 = scmp.eq.s32.totalorder %s26, 1
      %p91 = por %p89, %p90
      %p93 = scmp.ne.s32.totalorder %s78, %s92
      %p94 = scmp.eq.s32.totalorder %s26, 0
      %p95 = por %p93, %p94
      %s97 = sadd.s32 %s96, 1
      %p100 = scmp.eq.s32.totalorder %s20, 1
      %p101 = scmp.ne.s32.totalorder %s96, %s98
      %p102 = scmp.eq.s32.totalorder %s20, 0
      %p103 = por %p101, %p102
      %p104 = scmp.ne.s32.totalorder %s96, %s98
      %p105 = scmp.eq.s32.totalorder %s25, 1
      %p106 = por %p104, %p105
      %p107 = scmp.ne.s32.totalorder %s98, %s99
      %p108 = scmp.eq.s32.totalorder %s25, 0
      %p109 = por %p107, %p108
      %p110 = scmp.ne.s32.totalorder %s98, %s99
      %p111 = scmp.eq.s32.totalorder %s26, 1
      %p112 = por %p110, %p111
      %p114 = scmp.ne.s32.totalorder %s99, %s113
      %p115 = scmp.eq.s32.totalorder %s26, 0
      %p116 = por %p114, %p115
      %s118 = sadd.s32 %s117, 1
      %p121 = scmp.eq.s32.totalorder %s20, 1
      %p122 = scmp.ne.s32.totalorder %s117, %s119
      %p123 = scmp.eq.s32.totalorder %s20, 0
      %p124 = por %p122, %p123
      %p125 = scmp.ne.s32.totalorder %s117, %s119
      %p126 = scmp.eq.s32.totalorder %s25, 1
      %p127 = por %p125, %p126
      %p128 = scmp.ne.s32.totalorder %s119, %s120
      %p129 = scmp.eq.s32.totalorder %s25, 0
      %p130 = por %p128, %p129
      %p131 = scmp.ne.s32.totalorder %s119, %s120
      %p132 = scmp.eq.s32.totalorder %s26, 1
      %p133 = por %p131, %p132
      %p135 = scmp.ne.s32.totalorder %s120, %s134
      %p136 = scmp.eq.s32.totalorder %s26, 0
      %p137 = por %p135, %p136
      %s139 = sadd.s32 %s138, 1
      %p142 = scmp.eq.s32.totalorder %s20, 1
      %p143 = scmp.ne.s32.totalorder %s138, %s140
      %p144 = scmp.eq.s32.totalorder %s20, 0
      %p145 = por %p143, %p144
      %p146 = scmp.ne.s32.totalorder %s138, %s140
      %p147 = scmp.eq.s32.totalorder %s25, 1
      %p148 = por %p146, %p147
      %p149 = scmp.ne.s32.totalorder %s140, %s141
      %p150 = scmp.eq.s32.totalorder %s25, 0
      %p151 = por %p149, %p150
      %p152 = scmp.ne.s32.totalorder %s140, %s141
      %p153 = scmp.eq.s32.totalorder %s26, 1
      %p154 = por %p152, %p153
      %p156 = scmp.ne.s32.totalorder %s141, %s155
      %p157 = scmp.eq.s32.totalorder %s26, 0
      %p158 = por %p156, %p157
      %s160 = sadd.s32 %s159, 1
      %p163 = scmp.eq.s32.totalorder %s20, 1
      %p164 = scmp.ne.s32.totalorder %s159, %s161
      %p165 = scmp.eq.s32.totalorder %s20, 0
      %p166 = por %p164, %p165
      %p167 = scmp.ne.s32.totalorder %s159, %s161
      %p168 = scmp.eq.s32.totalorder %s25, 1
      %p169 = por %p167, %p168
      %p170 = scmp.ne.s32.totalorder %s161, %s162
      %p171 = scmp.eq.s32.totalorder %s25, 0
      %p172 = por %p170, %p171
      %p173 = scmp.ne.s32.totalorder %s161, %s162
      %p174 = scmp.eq.s32.totalorder %s26, 1
      %p175 = por %p173, %p174
      %p177 = scmp.ne.s32.totalorder %s162, %s176
      %p178 = scmp.eq.s32.totalorder %s26, 0
      %p179 = por %p177, %p178
      %s181 = sadd.s32 %s180, 1
      %p184 = scmp.eq.s32.totalorder %s20, 1
      %p185 = scmp.ne.s32.totalorder %s180, %s182
      %p186 = scmp.eq.s32.totalorder %s20, 0
      %p187 = por %p185, %p186
      %p188 = scmp.ne.s32.totalorder %s180, %s182
      %p189 = scmp.eq.s32.totalorder %s25, 1
      %p190 = por %p188, %p189
      %p191 = scmp.ne.s32.totalorder %s182, %s183
      %p192 = scmp.eq.s32.totalorder %s25, 0
      %p193 = por %p191, %p192
      %p194 = scmp.ne.s32.totalorder %s182, %s183
      %p195 = scmp.eq.s32.totalorder %s26, 1
      %p196 = por %p194, %p195
      %p198 = scmp.ne.s32.totalorder %s183, %s197
      %p199 = scmp.eq.s32.totalorder %s26, 0
      %p200 = por %p198, %p199
      %s202 = sadd.s32 %s201, 1
      %p205 = scmp.eq.s32.totalorder %s20, 1
      %p206 = scmp.ne.s32.totalorder %s201, %s203
      %p207 = scmp.eq.s32.totalorder %s20, 0
      %p208 = por %p206, %p207
      %p209 = scmp.ne.s32.totalorder %s201, %s203
      %p210 = scmp.eq.s32.totalorder %s25, 1
      %p211 = por %p209, %p210
      %p212 = scmp.ne.s32.totalorder %s203, %s204
      %p213 = scmp.eq.s32.totalorder %s25, 0
      %p214 = por %p212, %p213
      %p215 = scmp.ne.s32.totalorder %s203, %s204
      %p216 = scmp.eq.s32.totalorder %s26, 1
      %p217 = por %p215, %p216
      %p219 = scmp.ne.s32.totalorder %s204, %s218
      %p220 = scmp.eq.s32.totalorder %s26, 0
      %p221 = por %p219, %p220
      %s222 = ssub.s32 %s20, %s27
      %p223 = scmp.eq.s32.totalorder %s222, 0
      %s225 = sadd.s32 %s224, 1
      %s226 = scalar_select %p223, %s224, %s225
      %p229 = pneg %p223
      %p230 = scmp.eq.s32.totalorder %s20, 1
      %p231 = por %p229, %p230
      %p232 = scmp.ne.s32.totalorder %s224, %s227
      %p233 = scmp.eq.s32.totalorder %s20, 0
      %p234 = por %p232, %p233
      %p235 = scmp.ne.s32.totalorder %s224, %s227
      %p236 = scmp.eq.s32.totalorder %s25, 1
      %p237 = por %p235, %p236
      %p238 = scmp.ne.s32.totalorder %s227, %s228
      %p239 = scmp.eq.s32.totalorder %s25, 0
      %p240 = por %p238, %p239
      %p241 = scmp.ne.s32.totalorder %s227, %s228
      %p242 = scmp.eq.s32.totalorder %s26, 1
      %p243 = por %p241, %p242
      %p245 = scmp.ne.s32.totalorder %s228, %s244
      %p246 = scmp.eq.s32.totalorder %s26, 0
      %p247 = por %p245, %p246
      %p248 = scmp.le.s32.totalorder 1, %s20
      %p249 = scmp.lt.s32.totalorder %s20, 3
      %p250 = pnand %p248, %p249
      %p251 = pneg %p250
      // Predicated region
      $region9: #{features4layer_forward.1} parent=5 // pred_check
        _
      $region10: #{features4layer_forward.1} parent=5 // pred_check_branch
        %253 = sbr.rel (%p250) target = $region12
      $region11: #{features4layer_forward.1} parent=5 // pred_region
        %s254 = ssub.s32 %s20, 1
        // Predicated region
        $region13: #{features4layer_forward.1} parent=11 // pred_check
          %p255 = pneg %p67
        $region14: #{features4layer_forward.1} parent=11 // pred_check_branch
          %257 = sbr.rel (%p255) target = $region16
        $region15: #{features4layer_forward.1} parent=11 // pred_region
          %s259 = ssub.s32 1280, 1280
          %260 = vsyncadd [#allocation9], %s259
          %s261 = sshll.u32 [#allocation8], 4
          %s262 = int_to_ptr.vmem [resolvable:$true] %s261
          %267 = dma.hbm_to_vmem [thread:$0]  %s1, 1280, %s262, [#allocation9], 128, 128, 8
        $region16: #{features4layer_forward.1} parent=11 // pred_fallthru
          _
        // Predicated region
        $region17: #{features4layer_forward.1} parent=11 // pred_check
          %p268 = pneg %p88
        $region18: #{features4layer_forward.1} parent=11 // pred_check_branch
          %270 = sbr.rel (%p268) target = $region20
        $region19: #{features4layer_forward.1} parent=11 // pred_region
          _
        $region20: #{features4layer_forward.1} parent=11 // pred_fallthru
          _
        // Predicated region
        $region21: #{features4layer_forward.1} parent=11 // pred_check
          %p271 = pneg %p109
        $region22: #{features4layer_forward.1} parent=11 // pred_check_branch
          %273 = sbr.rel (%p271) target = $region24
        $region23: #{features4layer_forward.1} parent=11 // pred_region
          %s275 = ssub.s32 12288, 12288
          %276 = vsyncadd [#allocation9], %s275
          %s277 = sshll.u32 [#allocation10], 4
          %s278 = int_to_ptr.vmem [resolvable:$true] %s277
          %283 = dma.hbm_to_vmem [thread:$0]  %s3, 12288, %s278, [#allocation9], 128, 128, 8
        $region24: #{features4layer_forward.1} parent=11 // pred_fallthru
          _
        // Predicated region
        $region25: #{features4layer_forward.1} parent=11 // pred_check
          %p284 = pneg %p130
        $region26: #{features4layer_forward.1} parent=11 // pred_check_branch
          %286 = sbr.rel (%p284) target = $region28
        $region27: #{features4layer_forward.1} parent=11 // pred_region
          _
        $region28: #{features4layer_forward.1} parent=11 // pred_fallthru
          _
        // Predicated region
        $region29: #{features4layer_forward.1} parent=11 // pred_check
          %p287 = pneg %p151
        $region30: #{features4layer_forward.1} parent=11 // pred_check_branch
          %289 = sbr.rel (%p287) target = $region32
        $region31: #{features4layer_forward.1} parent=11 // pred_region
          %s291 = ssub.s32 12288, 12288
          %292 = vsyncadd [#allocation12], %s291
          %s293 = sshll.u32 [#allocation11], 4
          %s294 = int_to_ptr.vmem [resolvable:$true] %s293
          %299 = dma.hbm_to_vmem [thread:$0]  %s5, 12288, %s294, [#allocation12], 128, 128, 8
        $region32: #{features4layer_forward.1} parent=11 // pred_fallthru
          _
        // Predicated region
        $region33: #{features4layer_forward.1} parent=11 // pred_check
          %p300 = pneg %p172
        $region34: #{features4layer_forward.1} parent=11 // pred_check_branch
          %302 = sbr.rel (%p300) target = $region36
        $region35: #{features4layer_forward.1} parent=11 // pred_region
          _
        $region36: #{features4layer_forward.1} parent=11 // pred_fallthru
          _
        // Predicated region
        $region37: #{features4layer_forward.1} parent=11 // pred_check
          %p303 = pneg %p193
        $region38: #{features4layer_forward.1} parent=11 // pred_check_branch
          %305 = sbr.rel (%p303) target = $region40
        $region39: #{features4layer_forward.1} parent=11 // pred_region
          %s307 = ssub.s32 12288, 12288
          %308 = vsyncadd [#allocation12], %s307
          %s309 = sshll.u32 [#allocation13], 4
          %s310 = int_to_ptr.vmem [resolvable:$true] %s309
          %315 = dma.hbm_to_vmem [thread:$0]  %s7, 12288, %s310, [#allocation12], 128, 128, 8
        $region40: #{features4layer_forward.1} parent=11 // pred_fallthru
          _
        // Predicated region
        $region41: #{features4layer_forward.1} parent=11 // pred_check
          %p316 = pneg %p214
        $region42: #{features4layer_forward.1} parent=11 // pred_check_branch
          %318 = sbr.rel (%p316) target = $region44
        $region43: #{features4layer_forward.1} parent=11 // pred_region
          _
        $region44: #{features4layer_forward.1} parent=11 // pred_fallthru
          _
      $region12: #{features4layer_forward.1} parent=5 // pred_fallthru
        _
      %p319 = scmp.lt.s32.totalorder %s20, 2
      // Predicated region
      $region45: #{features4layer_forward.1} parent=5 // pred_check
        %p320 = pneg %p319
      $region46: #{features4layer_forward.1} parent=5 // pred_check_branch
        %322 = sbr.rel (%p320) target = $region48
      $region47: #{features4layer_forward.1} parent=5 // pred_region
        // Predicated region
        $region49: #{features4layer_forward.1} parent=47 // pred_check
          %p323 = pneg %p40
        $region50: #{features4layer_forward.1} parent=47 // pred_check_branch
          %325 = sbr.rel (%p323) target = $region52
        $region51: #{features4layer_forward.1} parent=47 // pred_region
          %s326 = sand.u32 %s30, 1
          %s327 = scalar_lea.sflag [#allocation7], %s326
          %s328 = sand.u32 %s30, 1
          %s329 = smul.addr %s328, 32
          %s330 = scalar_lea.vmem [#allocation6], %s329
          %s331 = smul.u32 2, %s20
          %s333 = ssub.s32 512, 512
          %334 = vsyncadd %s327, %s333
          %s335 = smul.addr %s331, 2
          %s336 = smul.addr %s335, 128
          %s337 = scalar_lea.hbm %s0, %s336
          %s338 = sshll.u32 %s330, 4
          %s339 = int_to_ptr.vmem [resolvable:$true] %s338
          %344 = dma.hbm_to_vmem [thread:$0]  %s337, 512, %s339, %s327, 128, 128, 8
        $region52: #{features4layer_forward.1} parent=47 // pred_fallthru
          _
      $region48: #{features4layer_forward.1} parent=5 // pred_fallthru
        _
      %p345 = scmp.le.s32.totalorder 1, %s20
      %p346 = scmp.lt.s32.totalorder %s20, 3
      %p347 = pnand %p345, %p346
      %p348 = pneg %p347
      // Predicated region
      $region53: #{features4layer_forward.1} parent=5 // pred_check
        _
      $region54: #{features4layer_forward.1} parent=5 // pred_check_branch
        %350 = sbr.rel (%p347) target = $region56
      $region55: #{features4layer_forward.1} parent=5 // pred_region
        %s351 = ssub.s32 %s20, 1
        %s352 = sand.u32 %s33, 1
        %s353 = scalar_lea.sflag [#allocation7], %s352
        %s354 = sand.u32 %s33, 1
        %s355 = smul.addr %s354, 32
        %s356 = scalar_lea.vmem [#allocation6], %s355
        // Predicated region
        $region57: #{features4layer_forward.1} parent=55 // pred_check
          %p357 = pneg %p46
        $region58: #{features4layer_forward.1} parent=55 // pred_check_branch
          %359 = sbr.rel (%p357) target = $region60
        $region59: #{features4layer_forward.1} parent=55 // pred_region
          %360 = dma.done %s353, 512
        $region60: #{features4layer_forward.1} parent=55 // pred_fallthru
          _
        // Predicated region
        $region61: #{features4layer_forward.1} parent=55 // pred_check
          %p361 = pneg %p67
        $region62: #{features4layer_forward.1} parent=55 // pred_check_branch
          %363 = sbr.rel (%p361) target = $region64
        $region63: #{features4layer_forward.1} parent=55 // pred_region
          %364 = dma.done [#allocation9], 1280
        $region64: #{features4layer_forward.1} parent=55 // pred_fallthru
          _
        // Predicated region
        $region65: #{features4layer_forward.1} parent=55 // pred_check
          %p365 = pneg %p109
        $region66: #{features4layer_forward.1} parent=55 // pred_check_branch
          %367 = sbr.rel (%p365) target = $region68
        $region67: #{features4layer_forward.1} parent=55 // pred_region
          %368 = dma.done [#allocation9], 12288
        $region68: #{features4layer_forward.1} parent=55 // pred_fallthru
          _
        // Predicated region
        $region69: #{features4layer_forward.1} parent=55 // pred_check
          %p369 = pneg %p151
        $region70: #{features4layer_forward.1} parent=55 // pred_check_branch
          %371 = sbr.rel (%p369) target = $region72
        $region71: #{features4layer_forward.1} parent=55 // pred_region
          %372 = dma.done [#allocation12], 12288
        $region72: #{features4layer_forward.1} parent=55 // pred_fallthru
          _
        // Predicated region
        $region73: #{features4layer_forward.1} parent=55 // pred_check
          %p373 = pneg %p193
        $region74: #{features4layer_forward.1} parent=55 // pred_check_branch
          %375 = sbr.rel (%p373) target = $region76
        $region75: #{features4layer_forward.1} parent=55 // pred_region
          %376 = dma.done [#allocation12], 12288
        $region76: #{features4layer_forward.1} parent=55 // pred_fallthru
          _
        %s377 = sand.u32 %s33, 1
        %s378 = scalar_lea.sflag [#allocation7], %s377
        %s379 = sand.u32 %s33, 1
        %s380 = smul.addr %s379, 32
        %s381 = scalar_lea.vmem [#allocation6], %s380
        %p382 = pneg %p46
        %p383 = pneg %p43
        %p384 = pneg %p67
        %p385 = pneg %p64
        %p386 = pneg %p88
        %p387 = pneg %p85
        %p388 = pneg %p109
        %p389 = pneg %p106
        %p390 = pneg %p130
        %p391 = pneg %p127
        %p392 = pneg %p151
        %p393 = pneg %p148
        %p394 = pneg %p172
        %p395 = pneg %p169
        %p396 = pneg %p193
        %p397 = pneg %p190
        %p398 = pneg %p214
        %p399 = pneg %p211
        %p400 = pneg %p240
        %p401 = pneg %p237
        %s402 = smul.u32 2, %s25
        %p403 = scmp.lt.s32.totalorder %s402, 3
        %s404 = scalar_select %p403, %s402, 3
        %s405 = smul.addr %s404, 4
        %s406 = smul.addr %s405, 8
        %s407 = scalar_lea.vmem %s9, %s406
        %s408 = smul.u32 2, %s25
        %s409 = smul.u32 2, %s25
        %p410 = scmp.lt.s32.totalorder %s409, 3
        %s411 = scalar_select %p410, %s409, 3
        %s412 = smul.addr %s411, 4
        %s413 = smul.addr %s412, 8
        %s414 = scalar_lea.vmem %s9, %s413
        %s415 = smul.u32 2, %s25
        %v417 = vld [vmem:[%s356] sm:$0xff]
        %v418 = vld [vmem:[%s356 + $0x8] sm:$0xff]
        %vm419 = vcmask 130048
        %420 = vst.msk [vmem:[#allocation2 + $0x2] sm:$0xff] %vm419, %v417
        %421 = vst.msk [vmem:[#allocation2 + $0xa] sm:$0xff] %vm419, %v418
        %vm422 = vcmask 124930
        %423 = vst.msk [vmem:[#allocation2 - $0x2] sm:$0x4] %vm422, %v417
        %vm424 = vcmask 123905
        %425 = vst.msk [vmem:[#allocation2] sm:$0x2] %vm424, %v417
        %vm426 = vcmask 129030
        %427 = vst.msk [vmem:[#allocation2 + $0xc] sm:$0x40] %vm426, %v418
        %vm428 = vcmask 128005
        %429 = vst.msk [vmem:[#allocation2 + $0xe] sm:$0x20] %vm428, %v418
        %s430 = scalar_lea.vmem %s356, 16 [#allocation6]
        %v431 = vld [vmem:[%s430] sm:$0xff]
        %v432 = vld [vmem:[%s430 + $0x8] sm:$0xff]
        %433 = vst.msk [vmem:[#allocation2 + $0x16] sm:$0xff] %vm419, %v431
        %434 = vst.msk [vmem:[#allocation2 + $0x1e] sm:$0xff] %vm419, %v432
        %435 = vst.msk [vmem:[#allocation2 + $0x12] sm:$0x4] %vm422, %v431
        %436 = vst.msk [vmem:[#allocation2 + $0x14] sm:$0x2] %vm424, %v431
        %437 = vst.msk [vmem:[#allocation2 + $0x20] sm:$0x40] %vm426, %v432
        %438 = vst.msk [vmem:[#allocation2 + $0x22] sm:$0x20] %vm428, %v432
        %v439 = vld [vmem:[#allocation2] sm:$0xff]
        %v440 = vld [vmem:[#allocation2 + $0x8] sm:$0xff]
        %v441 = vld [vmem:[#allocation2 + $0x10] sm:$0xff]
        %v442 = vld [vmem:[#allocation2 + $0x18] sm:$0xff]
        %v443 = vld [vmem:[#allocation2 + $0x20] sm:$0xf]
        %v444 = vpack.c.bf16 %v440, %v439
        %v445 = vpack.c.bf16 %v442, %v441
        %v446 = vpack.c.bf16 %v443, %v443
        %v450 = vunpack.c.l.b16 %v444
        %v451 = vunpack.c.h.b16 %v444
        %v452 = vunpack.c.l.b16 %v445
        %v453 = vunpack.c.h.b16 %v445
        %v454 = vunpack.c.l.b16 %v446
        %v455 = vpack.c.b16 %v450, %v450
        %v456 = vpack.c.b16 %v451, %v451
        %v457 = vpack.c.b16 %v452, %v452
        %v458 = vpack.c.b16 %v453, %v453
        %v459 = vpack.c.b16 %v454, %v454
        %vm465 = vcmask 125952
        %466 = vst.msk [vmem:[#allocation3] sm:$0xf] %vm465, %v455
        %467 = vst.msk [vmem:[#allocation3 + $0x4] sm:$0xf] %vm465, %v456
        %468 = vst.msk [vmem:[#allocation3 + $0x8] sm:$0xf] %vm465, %v457
        %469 = vst.msk [vmem:[#allocation3 + $0xc] sm:$0xf] %vm465, %v458
        %vm470 = vcmask 123904
        %471 = vst.msk [vmem:[#allocation3 + $0x10] sm:$0x3] %vm470, %v459
        %v472 = vld [vmem:[#allocation2 + $0x1] sm:$0xff]
        %v473 = vld [vmem:[#allocation2 + $0x9] sm:$0xff]
        %v474 = vld [vmem:[#allocation2 + $0x11] sm:$0xff]
        %v475 = vld [vmem:[#allocation2 + $0x19] sm:$0xff]
        %v476 = vld [vmem:[#allocation2 + $0x21] sm:$0xf]
        %v477 = vpack.c.bf16 %v473, %v472
        %v478 = vpack.c.bf16 %v475, %v474
        %v479 = vpack.c.bf16 %v476, %v476
        %v483 = vunpack.c.l.b16 %v477
        %v484 = vunpack.c.h.b16 %v477
        %v485 = vunpack.c.l.b16 %v478
        %v486 = vunpack.c.h.b16 %v478
        %v487 = vunpack.c.l.b16 %v479
        %v488 = vpack.c.b16 %v483, %v483
        %v489 = vpack.c.b16 %v484, %v484
        %v490 = vpack.c.b16 %v485, %v485
        %v491 = vpack.c.b16 %v486, %v486
        %v492 = vpack.c.b16 %v487, %v487
        %493 = vrot.lane.b32.xlu0 %v488, 16
        %v494 = vpop.permute.xlu0 %493
        %495 = vrot.lane.b32.xlu0 %v489, 16
        %v496 = vpop.permute.xlu0 %495
        %497 = vrot.lane.b32.xlu0 %v490, 16
        %v498 = vpop.permute.xlu0 %497
        %499 = vrot.lane.b32.xlu0 %v491, 16
        %v500 = vpop.permute.xlu0 %499
        %501 = vrot.lane.b32.xlu0 %v492, 16
        %v502 = vpop.permute.xlu0 %501
        %vm508 = vcmask 257152
        %509 = vst.msk [vmem:[#allocation3] sm:$0xf] %vm508, %v494
        %510 = vst.msk [vmem:[#allocation3 + $0x4] sm:$0xf] %vm508, %v496
        %511 = vst.msk [vmem:[#allocation3 + $0x8] sm:$0xf] %vm508, %v498
        %512 = vst.msk [vmem:[#allocation3 + $0xc] sm:$0xf] %vm508, %v500
        %vm513 = vcmask 255104
        %514 = vst.msk [vmem:[#allocation3 + $0x10] sm:$0x3] %vm513, %v502
        %v515 = vld [vmem:[#allocation2 + $0x2] sm:$0xff]
        %v516 = vld [vmem:[#allocation2 + $0xa] sm:$0xff]
        %v517 = vld [vmem:[#allocation2 + $0x12] sm:$0xff]
        %v518 = vld [vmem:[#allocation2 + $0x1a] sm:$0xff]
        %v519 = vld [vmem:[#allocation2 + $0x22] sm:$0xf]
        %v520 = vpack.c.bf16 %v516, %v515
        %v521 = vpack.c.bf16 %v518, %v517
        %v522 = vpack.c.bf16 %v519, %v519
        %v526 = vunpack.c.l.b16 %v520
        %v527 = vunpack.c.h.b16 %v520
        %v528 = vunpack.c.l.b16 %v521
        %v529 = vunpack.c.h.b16 %v521
        %v530 = vunpack.c.l.b16 %v522
        %v531 = vpack.c.b16 %v526, %v526
        %v532 = vpack.c.b16 %v527, %v527
        %v533 = vpack.c.b16 %v528, %v528
        %v534 = vpack.c.b16 %v529, %v529
        %v535 = vpack.c.b16 %v530, %v530
        %536 = vrot.lane.b32.xlu0 %v531, 32
        %v537 = vpop.permute.xlu0 %536
        %538 = vrot.lane.b32.xlu0 %v532, 32
        %v539 = vpop.permute.xlu0 %538
        %540 = vrot.lane.b32.xlu0 %v533, 32
        %v541 = vpop.permute.xlu0 %540
        %542 = vrot.lane.b32.xlu0 %v534, 32
        %v543 = vpop.permute.xlu0 %542
        %544 = vrot.lane.b32.xlu0 %v535, 32
        %v545 = vpop.permute.xlu0 %544
        %vm551 = vcmask 388352
        %552 = vst.msk [vmem:[#allocation3] sm:$0xf] %vm551, %v537
        %553 = vst.msk [vmem:[#allocation3 + $0x4] sm:$0xf] %vm551, %v539
        %554 = vst.msk [vmem:[#allocation3 + $0x8] sm:$0xf] %vm551, %v541
        %555 = vst.msk [vmem:[#allocation3 + $0xc] sm:$0xf] %vm551, %v543
        %vm556 = vcmask 386304
        %557 = vst.msk [vmem:[#allocation3 + $0x10] sm:$0x3] %vm556, %v545
        %v558 = vld [vmem:[#allocation2 + $0x3] sm:$0xff]
        %v559 = vld [vmem:[#allocation2 + $0xb] sm:$0xff]
        %v560 = vld [vmem:[#allocation2 + $0x13] sm:$0xff]
        %v561 = vld [vmem:[#allocation2 + $0x1b] sm:$0xff]
        %v562 = vld [vmem:[#allocation2 + $0x23] sm:$0xf]
        %v563 = vpack.c.bf16 %v559, %v558
        %v564 = vpack.c.bf16 %v561, %v560
        %v565 = vpack.c.bf16 %v562, %v562
        %v569 = vunpack.c.l.b16 %v563
        %v570 = vunpack.c.h.b16 %v563
        %v571 = vunpack.c.l.b16 %v564
        %v572 = vunpack.c.h.b16 %v564
        %v573 = vunpack.c.l.b16 %v565
        %v574 = vpack.c.b16 %v569, %v569
        %v575 = vpack.c.b16 %v570, %v570
        %v576 = vpack.c.b16 %v571, %v571
        %v577 = vpack.c.b16 %v572, %v572
        %v578 = vpack.c.b16 %v573, %v573
        %579 = vrot.lane.b32.xlu0 %v574, 48
        %v580 = vpop.permute.xlu0 %579
        %581 = vrot.lane.b32.xlu0 %v575, 48
        %v582 = vpop.permute.xlu0 %581
        %583 = vrot.lane.b32.xlu0 %v576, 48
        %v584 = vpop.permute.xlu0 %583
        %585 = vrot.lane.b32.xlu0 %v577, 48
        %v586 = vpop.permute.xlu0 %585
        %587 = vrot.lane.b32.xlu0 %v578, 48
        %v588 = vpop.permute.xlu0 %587
        %vm594 = vcmask 519552
        %595 = vst.msk [vmem:[#allocation3] sm:$0xf] %vm594, %v580
        %596 = vst.msk [vmem:[#allocation3 + $0x4] sm:$0xf] %vm594, %v582
        %597 = vst.msk [vmem:[#allocation3 + $0x8] sm:$0xf] %vm594, %v584
        %598 = vst.msk [vmem:[#allocation3 + $0xc] sm:$0xf] %vm594, %v586
        %vm599 = vcmask 517504
        %600 = vst.msk [vmem:[#allocation3 + $0x10] sm:$0x3] %vm599, %v588
        %v601 = vld [vmem:[#allocation2 + $0x4] sm:$0xff]
        %v602 = vld [vmem:[#allocation2 + $0xc] sm:$0xff]
        %v603 = vld [vmem:[#allocation2 + $0x14] sm:$0xff]
        %v604 = vld [vmem:[#allocation2 + $0x1c] sm:$0xff]
        %v605 = vld [vmem:[#allocation2 + $0x24] sm:$0xf]
        %v606 = vpack.c.bf16 %v602, %v601
        %v607 = vpack.c.bf16 %v604, %v603
        %v608 = vpack.c.bf16 %v605, %v605
        %v612 = vunpack.c.l.b16 %v606
        %v613 = vunpack.c.h.b16 %v606
        %v614 = vunpack.c.l.b16 %v607
        %v615 = vunpack.c.h.b16 %v607
        %v616 = vunpack.c.l.b16 %v608
        %v617 = vpack.c.b16 %v612, %v612
        %v618 = vpack.c.b16 %v613, %v613
        %v619 = vpack.c.b16 %v614, %v614
        %v620 = vpack.c.b16 %v615, %v615
        %v621 = vpack.c.b16 %v616, %v616
        %622 = vrot.lane.b32.xlu0 %v617, 64
        %v623 = vpop.permute.xlu0 %622
        %624 = vrot.lane.b32.xlu0 %v618, 64
        %v625 = vpop.permute.xlu0 %624
        %626 = vrot.lane.b32.xlu0 %v619, 64
        %v627 = vpop.permute.xlu0 %626
        %628 = vrot.lane.b32.xlu0 %v620, 64
        %v629 = vpop.permute.xlu0 %628
        %630 = vrot.lane.b32.xlu0 %v621, 64
        %v631 = vpop.permute.xlu0 %630
        %vm637 = vcmask 650752
        %638 = vst.msk [vmem:[#allocation3] sm:$0xf] %vm637, %v623
        %639 = vst.msk [vmem:[#allocation3 + $0x4] sm:$0xf] %vm637, %v625
        %640 = vst.msk [vmem:[#allocation3 + $0x8] sm:$0xf] %vm637, %v627
        %641 = vst.msk [vmem:[#allocation3 + $0xc] sm:$0xf] %vm637, %v629
        %vm642 = vcmask 648704
        %643 = vst.msk [vmem:[#allocation3 + $0x10] sm:$0x3] %vm642, %v631
        %v644 = vld [vmem:[#allocation3] sm:$0xf]
        %v645 = vld [vmem:[#allocation3 + $0x4] sm:$0xf]
        %v646 = vld [vmem:[#allocation3 + $0x8] sm:$0xf]
        %v647 = vld [vmem:[#allocation3 + $0xc] sm:$0xf]
        %v648 = vld [vmem:[#allocation3 + $0x10] sm:$0x3]
        %v649 = vld [vmem:[#allocation8] sm:$0xff]
        %v650 = vld [vmem:[#allocation8 + $0x8] sm:$0xff]
        %v651 = vld [vmem:[#allocation8 + $0x10] sm:$0xff]
        %v652 = vld [vmem:[#allocation8 + $0x18] sm:$0xff]
        %v653 = vld [vmem:[#allocation8 + $0x20] sm:$0xff]
        %v654 = vld [vmem:[#allocation8 + $0x28] sm:$0xff]
        %v655 = vld [vmem:[#allocation8 + $0x30] sm:$0xff]
        %v656 = vld [vmem:[#allocation8 + $0x38] sm:$0xff]
        %v657 = vld [vmem:[#allocation8 + $0x40] sm:$0xff]
        %v658 = vld [vmem:[#allocation8 + $0x48] sm:$0xff]
        %v659 = vld [vmem:[%s2] sm:$0x3]
        %v661 = vlaneseq
        %v662 = vshrl.u32 %v661, 7
        %v663 = vsub.s32 0, %v662
        %v664 = vrot.slane %v659, %v663
        %v665 = vlaneseq
        %v666 = vshrl.u32 %v665, 7
        %v667 = vsub.s32 1, %v666
        %v668 = vrot.slane %v659, %v667
        %v676 = vunpack.c.l.b16 %v644
        %v677 = vunpack.c.l.b16 %v645
        %v678 = vunpack.c.l.b16 %v646
        %v679 = vunpack.c.l.b16 %v647
        %v680 = vunpack.c.l.b16 %v648
        %v681 = vpack.c.b16 %v677, %v676
        %v682 = vpack.c.b16 %v679, %v678
        %v683 = vpack.c.b16 %v680, %v680
        %v694 = vunpack.c.l.b16 %v649
        %v695 = vunpack.c.h.b16 %v649
        %v696 = vunpack.c.l.b16 %v650
        %v697 = vunpack.c.h.b16 %v650
        %v698 = vunpack.c.l.b16 %v651
        %v699 = vunpack.c.h.b16 %v651
        %v700 = vunpack.c.l.b16 %v652
        %v701 = vunpack.c.h.b16 %v652
        %v702 = vunpack.c.l.b16 %v653
        %v703 = vunpack.c.h.b16 %v653
        %v704 = vunpack.c.l.b16 %v654
        %v705 = vunpack.c.h.b16 %v654
        %v706 = vunpack.c.l.b16 %v655
        %v707 = vunpack.c.h.b16 %v655
        %v708 = vunpack.c.l.b16 %v656
        %v709 = vunpack.c.h.b16 %v656
        %v710 = vunpack.c.l.b16 %v657
        %v711 = vunpack.c.h.b16 %v657
        %v712 = vunpack.c.l.b16 %v658
        %v713 = vunpack.c.h.b16 %v658
        %v714 = vpack.c.b16 %v696, %v694
        %v715 = vpack.c.b16 %v697, %v695
        %v716 = vpack.c.b16 %v700, %v698
        %v717 = vpack.c.b16 %v701, %v699
        %v718 = vpack.c.b16 %v704, %v702
        %v719 = vpack.c.b16 %v705, %v703
        %v720 = vpack.c.b16 %v708, %v706
        %v721 = vpack.c.b16 %v709, %v707
        %v722 = vpack.c.b16 %v712, %v710
        %v723 = vpack.c.b16 %v713, %v711
        %vm734 = vcmask 654336
        %v736 = vsel %vm734, %v681, 0
        %v739 = vsel %vm734, %v682, 0
        %v742 = vsel %vm734, %v683, 0
        %744 = vmatprep.subr.bf16.mxu0 %v715
        %745 = vmatpush1.bf16.msra.mxu0 %v714
        %746 = vmatprep.subr.bf16.mxu0 %v717
        %747 = vmatpush1.bf16.msra.mxu0 %v716
        %748 = vmatprep.subr.bf16.mxu0 %v719
        %749 = vmatpush1.bf16.msra.mxu0 %v718
        %750 = vmatprep.subr.bf16.mxu0 %v721
        %751 = vmatpush1.bf16.msra.mxu0 %v720
        %752 = vmatprep.subr.bf16.mxu0 %v723
        %753 = vmatpush1.bf16.msra.mxu0 %v722
        %754 = vmatprep.subr.bf16.mxu0 0
        %755 = vmatpush1.bf16.msra.mxu0 0
        %756 = vmatprep.subr.bf16.mxu0 0
        %757 = vmatpush1.bf16.msra.mxu0 0
        %758 = vmatprep.subr.bf16.mxu0 0
        %759 = vmatpush1.bf16.msra.mxu0 0
        %760 = vmatprep.subr.bf16.mxu0 0
        %761 = vmatpush1.bf16.msra.mxu0 0
        %762 = vmatprep.subr.bf16.mxu0 0
        %763 = vmatpush1.bf16.msra.mxu0 0
        %764 = vmatprep.subr.bf16.mxu0 0
        %765 = vmatpush1.bf16.msra.mxu0 0
        %766 = vmatprep.subr.bf16.mxu0 0
        %767 = vmatpush1.bf16.msra.mxu0 0
        %768 = vmatprep.subr.bf16.mxu0 0
        %769 = vmatpush1.bf16.msra.mxu0 0
        %770 = vmatprep.subr.bf16.mxu0 0
        %771 = vmatpush1.bf16.msra.mxu0 0
        %772 = vmatprep.subr.bf16.mxu0 0
        %773 = vmatpush1.bf16.msra.mxu0 0
        %774 = vmatprep.subr.bf16.mxu0 0
        %775 = vmatpush1.bf16.msra.mxu0 0
        %776 = vmatprep.mubr.bf16.mxu0 0
        %777 = vmatmul.mubr.bf16.gmra.mrb[0].mxu0 %v736
        %v778 = vpop.f32.mrb[0].mxu0
        %v779 = vadd.f32 %v664, %v778
        %v780 = vpop.f32.mrb[0].mxu0
        %v781 = vadd.f32 %v668, %v780
        %v782 = vpop.f32.mrb[0].mxu0
        %v783 = vadd.f32 %v664, %v782
        %v784 = vpop.f32.mrb[0].mxu0
        %v785 = vadd.f32 %v668, %v784
        %786 = vmatprep.mubr.bf16.mxu0 0
        %787 = vmatmul.mubr.bf16.gmra.mrb[0].mxu0 %v739
        %v788 = vpop.f32.mrb[0].mxu0
        %v789 = vadd.f32 %v664, %v788
        %v790 = vpop.f32.mrb[0].mxu0
        %v791 = vadd.f32 %v668, %v790
        %v792 = vpop.f32.mrb[0].mxu0
        %v793 = vadd.f32 %v664, %v792
        %v794 = vpop.f32.mrb[0].mxu0
        %v795 = vadd.f32 %v668, %v794
        %796 = vmatprep.mubr.bf16.mxu0 0
        %797 = vmatmul.mubr.bf16.gmra.mrb[0].mxu0 %v742
        %v798 = vpop.f32.mrb[0].mxu0
        %v799 = vadd.f32 %v664, %v798
        %v800 = vpop.f32.mrb[0].mxu0
        %v801 = vadd.f32 %v668, %v800
        %v802 = vpop.f32.mrb[0].mxu0
        %v803 = vpop.f32.mrb[0].mxu0
        %804 = vdwg.mxu0
        %v805 = vmax.f32 %v779, 0.0
        %v806 = vmax.f32 %v781, 0.0
        %v807 = vmax.f32 %v783, 0.0
        %v808 = vmax.f32 %v785, 0.0
        %v809 = vmax.f32 %v789, 0.0
        %v810 = vmax.f32 %v791, 0.0
        %v811 = vmax.f32 %v793, 0.0
        %v812 = vmax.f32 %v795, 0.0
        %v813 = vmax.f32 %v799, 0.0
        %v814 = vmax.f32 %v801, 0.0
        %vm819 = vcmask 1040384
        %v820 = vrot.slane %v805, 7
        %v821 = vrot.slane %v806, 7
        %v822 = vrot.slane %v807, 7
        %v823 = vsel %vm819, %v820, %v822
        %v824 = vrot.slane %v808, 7
        %v825 = vsel %vm819, %v821, %v824
        %832 = vst [vmem:[#allocation4] sm:$0xfe] %v820
        %833 = vst [vmem:[#allocation4 + $0x8] sm:$0xfe] %v821
        %834 = vst [vmem:[#allocation4 + $0x10] sm:$0xff] %v823
        %835 = vst [vmem:[#allocation4 + $0x18] sm:$0xff] %v825
        %836 = vst [vmem:[#allocation4 + $0x20] sm:$0x1] %v822
        %837 = vst [vmem:[#allocation4 + $0x28] sm:$0x1] %v824
        %v838 = vcombine.low %v805, %v806
        %v840 = vunpack.c.l.s4 1966171168
        %v841 = vunpack.c.0.s8 %v840
        %v842 = vlaneseq
        %v843 = vshrl.u32 %v842, 7
        %v844 = vsub.s32 %v841, %v843
        %v845 = vrot.slane %v838, %v844
        %v846 = vcombine.high %v845, %v845
        %v848 = vunpack.c.l.s4 1966171168
        %v849 = vunpack.c.0.s8 %v848
        %v850 = vlaneseq
        %v851 = vshrl.u32 %v850, 7
        %v852 = vsub.s32 %v849, %v851
        %v853 = vrot.slane %v846, %v852
        %v855 = vlaneseq
        %vm856 = vcmp.ge.s32.totalorder %v855, 0
        %vm857 = vcmp.lt.s32.totalorder %v855, 256
        %vm858 = vmand %vm856, %vm857
        %859 = vst.msk [vmem:[#allocation4] ss:$8 sm:$0x3] %vm858, %v853
        %860 = vst.msk [vmem:[#allocation4] ss:$8 sm:$0x0] %vm858, %v853
        %v861 = vcombine.high %v807, %v808
        %v863 = vunpack.c.l.s4 1966171168
        %v864 = vunpack.c.0.s8 %v863
        %v865 = vlaneseq
        %v866 = vshrl.u32 %v865, 7
        %v867 = vsub.s32 %v864, %v866
        %v868 = vrot.slane %v861, %v867
        %v870 = vunpack.c.l.s4 1966171168
        %v871 = vunpack.c.0.s8 %v870
        %v872 = vlaneseq
        %v873 = vshrl.u32 %v872, 7
        %v874 = vsub.s32 %v871, %v873
        %v875 = vrot.slane %v868, %v874
        %v876 = vcombine.high %v875, %v875
        %s878 = scalar_lea.vmem [#allocation4], 33
        %879 = vst.msk [vmem:[%s878] ss:$8 sm:$0x3] %vm858, %v876
        %880 = vst.msk [vmem:[%s878] ss:$8 sm:$0x0] %vm858, %v876
        %vm887 = vcmask 1046528
        %v888 = vrot.slane %v809, 1
        %v889 = vrot.slane %v811, 1
        %v890 = vsel %vm887, %v888, %v889
        %v891 = vrot.slane %v810, 1
        %v892 = vrot.slane %v812, 1
        %v893 = vsel %vm887, %v891, %v892
        %v894 = vrot.slane %v813, 1
        %v895 = vsel %vm887, %v889, %v894
        %v896 = vrot.slane %v814, 1
        %v897 = vsel %vm887, %v892, %v896
        %904 = vst [vmem:[#allocation4 + $0x20] sm:$0xf8] %v890
        %905 = vst [vmem:[#allocation4 + $0x28] sm:$0xf8] %v893
        %906 = vst [vmem:[#allocation4 + $0x30] sm:$0xff] %v895
        %907 = vst [vmem:[#allocation4 + $0x38] sm:$0xff] %v897
        %908 = vst [vmem:[#allocation4 + $0x40] sm:$0x7] %v894
        %909 = vst [vmem:[#allocation4 + $0x48] sm:$0x7] %v896
        %v910 = vcombine.high %v809, %v810
        %v912 = vunpack.c.l.s4 1966171168
        %v913 = vunpack.c.0.s8 %v912
        %v914 = vlaneseq
        %v915 = vshrl.u32 %v914, 7
        %v916 = vsub.s32 %v913, %v915
        %v917 = vrot.slane %v910, %v916
        %v918 = vcombine.high %v917, %v917
        %v920 = vunpack.c.l.s4 1966171168
        %v921 = vunpack.c.0.s8 %v920
        %v922 = vlaneseq
        %v923 = vshrl.u32 %v922, 7
        %v924 = vsub.s32 %v921, %v923
        %v925 = vrot.slane %v918, %v924
        %s927 = scalar_lea.vmem [#allocation4], 34
        %928 = vst.msk [vmem:[%s927] ss:$8 sm:$0x3] %vm858, %v925
        %929 = vst.msk [vmem:[%s927] ss:$8 sm:$0x0] %vm858, %v925
        %v930 = vcombine.low %v813, %v814
        %v932 = vunpack.c.l.s4 1966171168
        %v933 = vunpack.c.0.s8 %v932
        %v934 = vlaneseq
        %v935 = vshrl.u32 %v934, 7
        %v936 = vsub.s32 %v933, %v935
        %v937 = vrot.slane %v930, %v936
        %v939 = vunpack.c.l.s4 1966171168
        %v940 = vunpack.c.0.s8 %v939
        %v941 = vlaneseq
        %v942 = vshrl.u32 %v941, 7
        %v943 = vsub.s32 %v940, %v942
        %v944 = vrot.slane %v937, %v943
        %v945 = vcombine.high %v944, %v944
        %s947 = scalar_lea.vmem [#allocation4], 67
        %948 = vst.msk [vmem:[%s947] ss:$8 sm:$0x3] %vm858, %v945
        %949 = vst.msk [vmem:[%s947] ss:$8 sm:$0x0] %vm858, %v945
        %v950 = vld [vmem:[#allocation4] sm:$0xff]
        %v951 = vld [vmem:[#allocation4 + $0x8] sm:$0xff]
        %v952 = vld [vmem:[#allocation4 + $0x10] sm:$0xff]
        %v953 = vld [vmem:[#allocation4 + $0x18] sm:$0xff]
        %v954 = vld [vmem:[#allocation4 + $0x20] sm:$0xff]
        %v955 = vld [vmem:[#allocation4 + $0x28] sm:$0xff]
        %v956 = vld [vmem:[#allocation4 + $0x30] sm:$0xff]
        %v957 = vld [vmem:[#allocation4 + $0x38] sm:$0xff]
        %v958 = vld [vmem:[#allocation4 + $0x40] sm:$0x3]
        %v959 = vld [vmem:[#allocation4 + $0x48] sm:$0x3]
        %v960 = vpack.c.bf16 %v952, %v950
        %v961 = vpack.c.bf16 %v953, %v951
        %v962 = vpack.c.bf16 %v956, %v954
        %v963 = vpack.c.bf16 %v957, %v955
        %v964 = vpack.c.bf16 %v958, %v958
        %v965 = vpack.c.bf16 %v959, %v959
        %v972 = vunpack.c.l.b16 %v960
        %v973 = vunpack.c.l.b16 %v961
        %v974 = vunpack.c.h.b16 %v960
        %v975 = vunpack.c.h.b16 %v961
        %v976 = vunpack.c.l.b16 %v962
        %v977 = vunpack.c.l.b16 %v963
        %v978 = vunpack.c.h.b16 %v962
        %v979 = vunpack.c.h.b16 %v963
        %v980 = vunpack.c.l.b16 %v964
        %v981 = vunpack.c.l.b16 %v965
        %v982 = vpack.c.b16 %v973, %v972
        %v983 = vpack.c.b16 %v975, %v974
        %v984 = vpack.c.b16 %v977, %v976
        %v985 = vpack.c.b16 %v979, %v978
        %v986 = vpack.c.b16 %v981, %v980
        %992 = vst [vmem:[#allocation5] sm:$0xff] %v982
        %993 = vst [vmem:[#allocation5 + $0x18] sm:$0xff] %v983
        %994 = vst [vmem:[#allocation5 + $0x30] sm:$0xff] %v984
        %995 = vst [vmem:[#allocation5 + $0x48] sm:$0xff] %v985
        %996 = vst [vmem:[#allocation5 + $0x60] sm:$0x11] %v986
        %v997 = vld [vmem:[#allocation4] sm:$0xfe]
        %v998 = vld [vmem:[#allocation4 + $0x8] sm:$0xfe]
        %v999 = vld [vmem:[#allocation4 + $0x10] sm:$0xff]
        %v1000 = vld [vmem:[#allocation4 + $0x18] sm:$0xff]
        %v1001 = vld [vmem:[#allocation4 + $0x20] sm:$0xff]
        %v1002 = vld [vmem:[#allocation4 + $0x28] sm:$0xff]
        %v1003 = vld [vmem:[#allocation4 + $0x30] sm:$0xff]
        %v1004 = vld [vmem:[#allocation4 + $0x38] sm:$0xff]
        %v1005 = vld [vmem:[#allocation4 + $0x40] sm:$0x7]
        %v1006 = vld [vmem:[#allocation4 + $0x48] sm:$0x7]
        %v1007 = vpack.c.bf16 %v999, %v997
        %v1008 = vpack.c.bf16 %v1000, %v998
        %v1009 = vpack.c.bf16 %v1003, %v1001
        %v1010 = vpack.c.bf16 %v1004, %v1002
        %v1011 = vpack.c.bf16 %v1005, %v1005
        %v1012 = vpack.c.bf16 %v1006, %v1006
        %v1019 = vunpack.c.l.b16 %v1007
        %v1020 = vunpack.c.l.b16 %v1008
        %v1021 = vunpack.c.h.b16 %v1007
        %v1022 = vunpack.c.h.b16 %v1008
        %v1023 = vunpack.c.l.b16 %v1009
        %v1024 = vunpack.c.l.b16 %v1010
        %v1025 = vunpack.c.h.b16 %v1009
        %v1026 = vunpack.c.h.b16 %v1010
        %v1027 = vunpack.c.l.b16 %v1011
        %v1028 = vunpack.c.l.b16 %v1012
        %v1029 = vpack.c.b16 %v1020, %v1019
        %v1030 = vpack.c.b16 %v1022, %v1021
        %v1031 = vpack.c.b16 %v1024, %v1023
        %v1032 = vpack.c.b16 %v1026, %v1025
        %v1033 = vpack.c.b16 %v1028, %v1027
        %vm1034 = vsmask.f32 3328
        %vm1035 = vsmask.f32 7440
        %vm1036 = vmor %vm1034, %vm1035
        %v1038 = vshrl.u32 %v1029, 16
        %v1040 = vrot.slane %v1038, 4
        %v1041 = vshll.u32 %v1029, 16
        %v1043 = vrot.slane %v1041, 5
        %v1044 = vor.u32 %v1040, %v1043
        %v1045 = vrot.slane %v1044, 4
        %v1047 = vshll.u32 %v1030, 16
        %v1049 = vrot.slane %v1047, 5
        %v1050 = vsel %vm1036, %v1045, %v1049
        %v1051 = vshrl.u32 %v1030, 16
        %v1053 = vrot.slane %v1051, 4
        %v1054 = vor.u32 %v1053, %v1049
        %v1055 = vrot.slane %v1054, 4
        %v1057 = vshll.u32 %v1031, 16
        %v1059 = vrot.slane %v1057, 5
        %v1060 = vsel %vm1036, %v1055, %v1059
        %v1061 = vshrl.u32 %v1031, 16
        %v1063 = vrot.slane %v1061, 4
        %v1064 = vor.u32 %v1063, %v1059
        %v1065 = vrot.slane %v1064, 4
        %v1067 = vshll.u32 %v1032, 16
        %v1069 = vrot.slane %v1067, 5
        %v1070 = vsel %vm1036, %v1065, %v1069
        %v1071 = vshrl.u32 %v1032, 16
        %v1073 = vrot.slane %v1071, 4
        %v1074 = vor.u32 %v1073, %v1069
        %v1075 = vrot.slane %v1074, 4
        %v1077 = vshll.u32 %v1033, 16
        %v1079 = vrot.slane %v1077, 5
        %v1080 = vsel %vm1036, %v1075, %v1079
        %v1081 = vshrl.u32 %v1033, 16
        %v1083 = vrot.slane %v1081, 4
        %v1084 = vor.u32 %v1083, %v1079
        %v1085 = vrot.slane %v1084, 4
        %1091 = vst [vmem:[#allocation5 + $0x8] sm:$0xff] %v1050
        %1092 = vst [vmem:[#allocation5 + $0x20] sm:$0xff] %v1060
        %1093 = vst [vmem:[#allocation5 + $0x38] sm:$0xff] %v1070
        %1094 = vst [vmem:[#allocation5 + $0x50] sm:$0xff] %v1080
        %1095 = vst [vmem:[#allocation5 + $0x68] sm:$0x11] %v1085
        %v1096 = vld [vmem:[#allocation4] sm:$0xfc]
        %v1097 = vld [vmem:[#allocation4 + $0x8] sm:$0xfc]
        %v1098 = vld [vmem:[#allocation4 + $0x10] sm:$0xff]
        %v1099 = vld [vmem:[#allocation4 + $0x18] sm:$0xff]
        %v1100 = vld [vmem:[#allocation4 + $0x20] sm:$0xff]
        %v1101 = vld [vmem:[#allocation4 + $0x28] sm:$0xff]
        %v1102 = vld [vmem:[#allocation4 + $0x30] sm:$0xff]
        %v1103 = vld [vmem:[#allocation4 + $0x38] sm:$0xff]
        %v1104 = vld [vmem:[#allocation4 + $0x40] sm:$0xf]
        %v1105 = vld [vmem:[#allocation4 + $0x48] sm:$0xf]
        %v1106 = vpack.c.bf16 %v1098, %v1096
        %v1107 = vpack.c.bf16 %v1099, %v1097
        %v1108 = vpack.c.bf16 %v1102, %v1100
        %v1109 = vpack.c.bf16 %v1103, %v1101
        %v1110 = vpack.c.bf16 %v1104, %v1104
        %v1111 = vpack.c.bf16 %v1105, %v1105
        %v1118 = vunpack.c.l.b16 %v1106
        %v1119 = vunpack.c.l.b16 %v1107
        %v1120 = vunpack.c.h.b16 %v1106
        %v1121 = vunpack.c.h.b16 %v1107
        %v1122 = vunpack.c.l.b16 %v1108
        %v1123 = vunpack.c.l.b16 %v1109
        %v1124 = vunpack.c.h.b16 %v1108
        %v1125 = vunpack.c.h.b16 %v1109
        %v1126 = vunpack.c.l.b16 %v1110
        %v1127 = vunpack.c.l.b16 %v1111
        %v1128 = vpack.c.b16 %v1119, %v1118
        %v1129 = vpack.c.b16 %v1121, %v1120
        %v1130 = vpack.c.b16 %v1123, %v1122
        %v1131 = vpack.c.b16 %v1125, %v1124
        %v1132 = vpack.c.b16 %v1127, %v1126
        %vm1133 = vcmask 1042432
        %vm1134 = vcmask 1046532
        %vm1135 = vmor %vm1133, %vm1134
        %v1136 = vrot.slane %v1128, 5
        %v1137 = vrot.slane %v1136, 4
        %v1138 = vrot.slane %v1129, 5
        %v1139 = vsel %vm1135, %v1137, %v1138
        %v1140 = vrot.slane %v1138, 4
        %v1141 = vrot.slane %v1130, 5
        %v1142 = vsel %vm1135, %v1140, %v1141
        %v1143 = vrot.slane %v1141, 4
        %v1144 = vrot.slane %v1131, 5
        %v1145 = vsel %vm1135, %v1143, %v1144
        %v1146 = vrot.slane %v1144, 4
        %v1147 = vrot.slane %v1132, 5
        %v1148 = vsel %vm1135, %v1146, %v1147
        %v1149 = vrot.slane %v1147, 4
        %1155 = vst [vmem:[#allocation5 + $0x10] sm:$0xff] %v1139
        %1156 = vst [vmem:[#allocation5 + $0x28] sm:$0xff] %v1142
        %1157 = vst [vmem:[#allocation5 + $0x40] sm:$0xff] %v1145
        %1158 = vst [vmem:[#allocation5 + $0x58] sm:$0xff] %v1148
        %1159 = vst [vmem:[#allocation5 + $0x70] sm:$0x11] %v1149
        %v1160 = vld [vmem:[#allocation5] sm:$0xff]
        %v1161 = vld [vmem:[#allocation5 + $0x8] sm:$0xff]
        %v1162 = vld [vmem:[#allocation5 + $0x10] sm:$0xff]
        %v1163 = vld [vmem:[#allocation5 + $0x18] sm:$0xff]
        %v1164 = vld [vmem:[#allocation5 + $0x20] sm:$0xff]
        %v1165 = vld [vmem:[#allocation5 + $0x28] sm:$0xff]
        %v1166 = vld [vmem:[#allocation5 + $0x30] sm:$0xff]
        %v1167 = vld [vmem:[#allocation5 + $0x38] sm:$0xff]
        %v1168 = vld [vmem:[#allocation5 + $0x40] sm:$0xff]
        %v1169 = vld [vmem:[#allocation5 + $0x48] sm:$0xff]
        %v1170 = vld [vmem:[#allocation5 + $0x50] sm:$0xff]
        %v1171 = vld [vmem:[#allocation5 + $0x58] sm:$0xff]
        %v1172 = vld [vmem:[#allocation5 + $0x60] sm:$0x11]
        %v1173 = vld [vmem:[#allocation5 + $0x68] sm:$0x11]
        %v1174 = vld [vmem:[#allocation5 + $0x70] sm:$0x11]
        %v1175 = vld [vmem:[#allocation10] sm:$0xff]
        %v1176 = vld [vmem:[#allocation10 + $0x8] sm:$0xff]
        %v1177 = vld [vmem:[#allocation10 + $0x10] sm:$0xff]
        %v1178 = vld [vmem:[#allocation10 + $0x18] sm:$0xff]
        %v1179 = vld [vmem:[#allocation10 + $0x20] sm:$0xff]
        %v1180 = vld [vmem:[#allocation10 + $0x28] sm:$0xff]
        %v1181 = vld [vmem:[#allocation10 + $0x30] sm:$0xff]
        %v1182 = vld [vmem:[#allocation10 + $0x38] sm:$0xff]
        %v1183 = vld [vmem:[#allocation10 + $0x40] sm:$0xff]
        %v1184 = vld [vmem:[#allocation10 + $0x48] sm:$0xff]
        %v1185 = vld [vmem:[#allocation10 + $0x50] sm:$0xff]
        %v1186 = vld [vmem:[#allocation10 + $0x58] sm:$0xff]
        %v1187 = vld [vmem:[#allocation10 + $0x60] sm:$0xff]
        %v1188 = vld [vmem:[#allocation10 + $0x68] sm:$0xff]
        %v1189 = vld [vmem:[#allocation10 + $0x70] sm:$0xff]
        %v1190 = vld [vmem:[#allocation10 + $0x78] sm:$0xff]
        %v1191 = vld [vmem:[#allocation10 + $0x80] sm:$0xff]
        %v1192 = vld [vmem:[#allocation10 + $0x88] sm:$0xff]
        %v1193 = vld [vmem:[#allocation10 + $0x90] sm:$0xff]
        %v1194 = vld [vmem:[#allocation10 + $0x98] sm:$0xff]
        %v1195 = vld [vmem:[#allocation10 + $0xa0] sm:$0xff]
        %v1196 = vld [vmem:[#allocation10 + $0xa8] sm:$0xff]
        %v1197 = vld [vmem:[#allocation10 + $0xb0] sm:$0xff]
        %v1198 = vld [vmem:[#allocation10 + $0xb8] sm:$0xff]
        %v1199 = vld [vmem:[#allocation10 + $0xc0] sm:$0xff]
        %v1200 = vld [vmem:[#allocation10 + $0xc8] sm:$0xff]
        %v1201 = vld [vmem:[#allocation10 + $0xd0] sm:$0xff]
        %v1202 = vld [vmem:[#allocation10 + $0xd8] sm:$0xff]
        %v1203 = vld [vmem:[#allocation10 + $0xe0] sm:$0xff]
        %v1204 = vld [vmem:[#allocation10 + $0xe8] sm:$0xff]
        %v1205 = vld [vmem:[#allocation10 + $0xf0] sm:$0xff]
        %v1206 = vld [vmem:[#allocation10 + $0xf8] sm:$0xff]
        %v1207 = vld [vmem:[#allocation10 + $0x100] sm:$0xff]
        %v1208 = vld [vmem:[#allocation10 + $0x108] sm:$0xff]
        %v1209 = vld [vmem:[#allocation10 + $0x110] sm:$0xff]
        %v1210 = vld [vmem:[#allocation10 + $0x118] sm:$0xff]
        %v1211 = vld [vmem:[#allocation10 + $0x120] sm:$0xff]
        %v1212 = vld [vmem:[#allocation10 + $0x128] sm:$0xff]
        %v1213 = vld [vmem:[#allocation10 + $0x130] sm:$0xff]
        %v1214 = vld [vmem:[#allocation10 + $0x138] sm:$0xff]
        %v1215 = vld [vmem:[#allocation10 + $0x140] sm:$0xff]
        %v1216 = vld [vmem:[#allocation10 + $0x148] sm:$0xff]
        %v1217 = vld [vmem:[#allocation10 + $0x150] sm:$0xff]
        %v1218 = vld [vmem:[#allocation10 + $0x158] sm:$0xff]
        %v1219 = vld [vmem:[#allocation10 + $0x160] sm:$0xff]
        %v1220 = vld [vmem:[#allocation10 + $0x168] sm:$0xff]
        %v1221 = vld [vmem:[#allocation10 + $0x170] sm:$0xff]
        %v1222 = vld [vmem:[#allocation10 + $0x178] sm:$0xff]
        %v1223 = vld [vmem:[#allocation10 + $0x180] sm:$0xff]
        %v1224 = vld [vmem:[#allocation10 + $0x188] sm:$0xff]
        %v1225 = vld [vmem:[#allocation10 + $0x190] sm:$0xff]
        %v1226 = vld [vmem:[#allocation10 + $0x198] sm:$0xff]
        %v1227 = vld [vmem:[#allocation10 + $0x1a0] sm:$0xff]
        %v1228 = vld [vmem:[#allocation10 + $0x1a8] sm:$0xff]
        %v1229 = vld [vmem:[#allocation10 + $0x1b0] sm:$0xff]
        %v1230 = vld [vmem:[#allocation10 + $0x1b8] sm:$0xff]
        %v1231 = vld [vmem:[#allocation10 + $0x1c0] sm:$0xff]
        %v1232 = vld [vmem:[#allocation10 + $0x1c8] sm:$0xff]
        %v1233 = vld [vmem:[#allocation10 + $0x1d0] sm:$0xff]
        %v1234 = vld [vmem:[#allocation10 + $0x1d8] sm:$0xff]
        %v1235 = vld [vmem:[#allocation10 + $0x1e0] sm:$0xff]
        %v1236 = vld [vmem:[#allocation10 + $0x1e8] sm:$0xff]
        %v1237 = vld [vmem:[#allocation10 + $0x1f0] sm:$0xff]
        %v1238 = vld [vmem:[#allocation10 + $0x1f8] sm:$0xff]
        %v1239 = vld [vmem:[#allocation10 + $0x200] sm:$0xff]
        %v1240 = vld [vmem:[#allocation10 + $0x208] sm:$0xff]
        %v1241 = vld [vmem:[#allocation10 + $0x210] sm:$0xff]
        %v1242 = vld [vmem:[#allocation10 + $0x218] sm:$0xff]
        %v1243 = vld [vmem:[#allocation10 + $0x220] sm:$0xff]
        %v1244 = vld [vmem:[#allocation10 + $0x228] sm:$0xff]
        %v1245 = vld [vmem:[#allocation10 + $0x230] sm:$0xff]
        %v1246 = vld [vmem:[#allocation10 + $0x238] sm:$0xff]
        %v1247 = vld [vmem:[#allocation10 + $0x240] sm:$0xff]
        %v1248 = vld [vmem:[#allocation10 + $0x248] sm:$0xff]
        %v1249 = vld [vmem:[#allocation10 + $0x250] sm:$0xff]
        %v1250 = vld [vmem:[#allocation10 + $0x258] sm:$0xff]
        %v1251 = vld [vmem:[#allocation10 + $0x260] sm:$0xff]
        %v1252 = vld [vmem:[#allocation10 + $0x268] sm:$0xff]
        %v1253 = vld [vmem:[#allocation10 + $0x270] sm:$0xff]
        %v1254 = vld [vmem:[#allocation10 + $0x278] sm:$0xff]
        %v1255 = vld [vmem:[#allocation10 + $0x280] sm:$0xff]
        %v1256 = vld [vmem:[#allocation10 + $0x288] sm:$0xff]
        %v1257 = vld [vmem:[#allocation10 + $0x290] sm:$0xff]
        %v1258 = vld [vmem:[#allocation10 + $0x298] sm:$0xff]
        %v1259 = vld [vmem:[#allocation10 + $0x2a0] sm:$0xff]
        %v1260 = vld [vmem:[#allocation10 + $0x2a8] sm:$0xff]
        %v1261 = vld [vmem:[#allocation10 + $0x2b0] sm:$0xff]
        %v1262 = vld [vmem:[#allocation10 + $0x2b8] sm:$0xff]
        %v1263 = vld [vmem:[#allocation10 + $0x2c0] sm:$0xff]
        %v1264 = vld [vmem:[#allocation10 + $0x2c8] sm:$0xff]
        %v1265 = vld [vmem:[#allocation10 + $0x2d0] sm:$0xff]
        %v1266 = vld [vmem:[#allocation10 + $0x2d8] sm:$0xff]
        %v1267 = vld [vmem:[#allocation10 + $0x2e0] sm:$0xff]
        %v1268 = vld [vmem:[#allocation10 + $0x2e8] sm:$0xff]
        %v1269 = vld [vmem:[#allocation10 + $0x2f0] sm:$0xff]
        %v1270 = vld [vmem:[#allocation10 + $0x2f8] sm:$0xff]
        %v1271 = vld [vmem:[%s4] sm:$0x3]
        %v1273 = vlaneseq
        %v1274 = vshrl.u32 %v1273, 7
        %v1275 = vsub.s32 0, %v1274
        %v1276 = vrot.slane %v1271, %v1275
        %v1277 = vlaneseq
        %v1278 = vshrl.u32 %v1277, 7
        %v1279 = vsub.s32 1, %v1278
        %v1280 = vrot.slane %v1271, %v1279
        %v1298 = vunpack.c.l.b16 %v1160
        %v1299 = vunpack.c.h.b16 %v1160
        %v1300 = vunpack.c.l.b16 %v1161
        %v1301 = vunpack.c.h.b16 %v1161
        %v1302 = vunpack.c.l.b16 %v1162
        %v1303 = vunpack.c.h.b16 %v1162
        %v1304 = vunpack.c.l.b16 %v1163
        %v1305 = vunpack.c.h.b16 %v1163
        %v1306 = vunpack.c.l.b16 %v1164
        %v1307 = vunpack.c.h.b16 %v1164
        %v1308 = vunpack.c.l.b16 %v1165
        %v1309 = vunpack.c.h.b16 %v1165
        %v1310 = vunpack.c.l.b16 %v1166
        %v1311 = vunpack.c.h.b16 %v1166
        %v1312 = vunpack.c.l.b16 %v1167
        %v1313 = vunpack.c.h.b16 %v1167
        %v1314 = vunpack.c.l.b16 %v1168
        %v1315 = vunpack.c.h.b16 %v1168
        %v1316 = vunpack.c.l.b16 %v1169
        %v1317 = vunpack.c.h.b16 %v1169
        %v1318 = vunpack.c.l.b16 %v1170
        %v1319 = vunpack.c.h.b16 %v1170
        %v1320 = vunpack.c.l.b16 %v1171
        %v1321 = vunpack.c.h.b16 %v1171
        %v1322 = vunpack.c.l.b16 %v1172
        %v1323 = vunpack.c.h.b16 %v1172
        %v1324 = vunpack.c.l.b16 %v1173
        %v1325 = vunpack.c.h.b16 %v1173
        %v1326 = vunpack.c.l.b16 %v1174
        %v1327 = vunpack.c.h.b16 %v1174
        %v1328 = vpack.c.b16 %v1304, %v1298
        %v1329 = vpack.c.b16 %v1305, %v1299
        %v1330 = vpack.c.b16 %v1306, %v1300
        %v1331 = vpack.c.b16 %v1307, %v1301
        %v1332 = vpack.c.b16 %v1308, %v1302
        %v1333 = vpack.c.b16 %v1309, %v1303
        %v1334 = vpack.c.b16 %v1316, %v1310
        %v1335 = vpack.c.b16 %v1317, %v1311
        %v1336 = vpack.c.b16 %v1318, %v1312
        %v1337 = vpack.c.b16 %v1319, %v1313
        %v1338 = vpack.c.b16 %v1320, %v1314
        %v1339 = vpack.c.b16 %v1321, %v1315
        %v1340 = vpack.c.b16 %v1322, %v1322
        %v1341 = vpack.c.b16 %v1323, %v1323
        %v1342 = vpack.c.b16 %v1324, %v1324
        %v1343 = vpack.c.b16 %v1325, %v1325
        %v1344 = vpack.c.b16 %v1326, %v1326
        %v1345 = vpack.c.b16 %v1327, %v1327
        %v1460 = vunpack.c.l.b16 %v1175
        %v1461 = vunpack.c.h.b16 %v1175
        %v1462 = vunpack.c.l.b16 %v1176
        %v1463 = vunpack.c.h.b16 %v1176
        %v1464 = vunpack.c.l.b16 %v1177
        %v1465 = vunpack.c.h.b16 %v1177
        %v1466 = vunpack.c.l.b16 %v1178
        %v1467 = vunpack.c.h.b16 %v1178
        %v1468 = vunpack.c.l.b16 %v1179
        %v1469 = vunpack.c.h.b16 %v1179
        %v1470 = vunpack.c.l.b16 %v1180
        %v1471 = vunpack.c.h.b16 %v1180
        %v1472 = vunpack.c.l.b16 %v1181
        %v1473 = vunpack.c.h.b16 %v1181
        %v1474 = vunpack.c.l.b16 %v1182
        %v1475 = vunpack.c.h.b16 %v1182
        %v1476 = vunpack.c.l.b16 %v1183
        %v1477 = vunpack.c.h.b16 %v1183
        %v1478 = vunpack.c.l.b16 %v1184
        %v1479 = vunpack.c.h.b16 %v1184
        %v1480 = vunpack.c.l.b16 %v1185
        %v1481 = vunpack.c.h.b16 %v1185
        %v1482 = vunpack.c.l.b16 %v1186
        %v1483 = vunpack.c.h.b16 %v1186
        %v1484 = vunpack.c.l.b16 %v1187
        %v1485 = vunpack.c.h.b16 %v1187
        %v1486 = vunpack.c.l.b16 %v1188
        %v1487 = vunpack.c.h.b16 %v1188
        %v1488 = vunpack.c.l.b16 %v1189
        %v1489 = vunpack.c.h.b16 %v1189
        %v1490 = vunpack.c.l.b16 %v1190
        %v1491 = vunpack.c.h.b16 %v1190
        %v1492 = vunpack.c.l.b16 %v1191
        %v1493 = vunpack.c.h.b16 %v1191
        %v1494 = vunpack.c.l.b16 %v1192
        %v1495 = vunpack.c.h.b16 %v1192
        %v1496 = vunpack.c.l.b16 %v1193
        %v1497 = vunpack.c.h.b16 %v1193
        %v1498 = vunpack.c.l.b16 %v1194
        %v1499 = vunpack.c.h.b16 %v1194
        %v1500 = vunpack.c.l.b16 %v1195
        %v1501 = vunpack.c.h.b16 %v1195
        %v1502 = vunpack.c.l.b16 %v1196
        %v1503 = vunpack.c.h.b16 %v1196
        %v1504 = vunpack.c.l.b16 %v1197
        %v1505 = vunpack.c.h.b16 %v1197
        %v1506 = vunpack.c.l.b16 %v1198
        %v1507 = vunpack.c.h.b16 %v1198
        %v1508 = vunpack.c.l.b16 %v1199
        %v1509 = vunpack.c.h.b16 %v1199
        %v1510 = vunpack.c.l.b16 %v1200
        %v1511 = vunpack.c.h.b16 %v1200
        %v1512 = vunpack.c.l.b16 %v1201
        %v1513 = vunpack.c.h.b16 %v1201
        %v1514 = vunpack.c.l.b16 %v1202
        %v1515 = vunpack.c.h.b16 %v1202
        %v1516 = vunpack.c.l.b16 %v1203
        %v1517 = vunpack.c.h.b16 %v1203
        %v1518 = vunpack.c.l.b16 %v1204
        %v1519 = vunpack.c.h.b16 %v1204
        %v1520 = vunpack.c.l.b16 %v1205
        %v1521 = vunpack.c.h.b16 %v1205
        %v1522 = vunpack.c.l.b16 %v1206
        %v1523 = vunpack.c.h.b16 %v1206
        %v1524 = vunpack.c.l.b16 %v1207
        %v1525 = vunpack.c.h.b16 %v1207
        %v1526 = vunpack.c.l.b16 %v1208
        %v1527 = vunpack.c.h.b16 %v1208
        %v1528 = vunpack.c.l.b16 %v1209
        %v1529 = vunpack.c.h.b16 %v1209
        %v1530 = vunpack.c.l.b16 %v1210
        %v1531 = vunpack.c.h.b16 %v1210
        %v1532 = vunpack.c.l.b16 %v1211
        %v1533 = vunpack.c.h.b16 %v1211
        %v1534 = vunpack.c.l.b16 %v1212
        %v1535 = vunpack.c.h.b16 %v1212
        %v1536 = vunpack.c.l.b16 %v1213
        %v1537 = vunpack.c.h.b16 %v1213
        %v1538 = vunpack.c.l.b16 %v1214
        %v1539 = vunpack.c.h.b16 %v1214
        %v1540 = vunpack.c.l.b16 %v1215
        %v1541 = vunpack.c.h.b16 %v1215
        %v1542 = vunpack.c.l.b16 %v1216
        %v1543 = vunpack.c.h.b16 %v1216
        %v1544 = vunpack.c.l.b16 %v1217
        %v1545 = vunpack.c.h.b16 %v1217
        %v1546 = vunpack.c.l.b16 %v1218
        %v1547 = vunpack.c.h.b16 %v1218
        %v1548 = vunpack.c.l.b16 %v1219
        %v1549 = vunpack.c.h.b16 %v1219
        %v1550 = vunpack.c.l.b16 %v1220
        %v1551 = vunpack.c.h.b16 %v1220
        %v1552 = vunpack.c.l.b16 %v1221
        %v1553 = vunpack.c.h.b16 %v1221
        %v1554 = vunpack.c.l.b16 %v1222
        %v1555 = vunpack.c.h.b16 %v1222
        %v1556 = vunpack.c.l.b16 %v1223
        %v1557 = vunpack.c.h.b16 %v1223
        %v1558 = vunpack.c.l.b16 %v1224
        %v1559 = vunpack.c.h.b16 %v1224
        %v1560 = vunpack.c.l.b16 %v1225
        %v1561 = vunpack.c.h.b16 %v1225
        %v1562 = vunpack.c.l.b16 %v1226
        %v1563 = vunpack.c.h.b16 %v1226
        %v1564 = vunpack.c.l.b16 %v1227
        %v1565 = vunpack.c.h.b16 %v1227
        %v1566 = vunpack.c.l.b16 %v1228
        %v1567 = vunpack.c.h.b16 %v1228
        %v1568 = vunpack.c.l.b16 %v1229
        %v1569 = vunpack.c.h.b16 %v1229
        %v1570 = vunpack.c.l.b16 %v1230
        %v1571 = vunpack.c.h.b16 %v1230
        %v1572 = vunpack.c.l.b16 %v1231
        %v1573 = vunpack.c.h.b16 %v1231
        %v1574 = vunpack.c.l.b16 %v1232
        %v1575 = vunpack.c.h.b16 %v1232
        %v1576 = vunpack.c.l.b16 %v1233
        %v1577 = vunpack.c.h.b16 %v1233
        %v1578 = vunpack.c.l.b16 %v1234
        %v1579 = vunpack.c.h.b16 %v1234
        %v1580 = vunpack.c.l.b16 %v1235
        %v1581 = vunpack.c.h.b16 %v1235
        %v1582 = vunpack.c.l.b16 %v1236
        %v1583 = vunpack.c.h.b16 %v1236
        %v1584 = vunpack.c.l.b16 %v1237
        %v1585 = vunpack.c.h.b16 %v1237
        %v1586 = vunpack.c.l.b16 %v1238
        %v1587 = vunpack.c.h.b16 %v1238
        %v1588 = vunpack.c.l.b16 %v1239
        %v1589 = vunpack.c.h.b16 %v1239
        %v1590 = vunpack.c.l.b16 %v1240
        %v1591 = vunpack.c.h.b16 %v1240
        %v1592 = vunpack.c.l.b16 %v1241
        %v1593 = vunpack.c.h.b16 %v1241
        %v1594 = vunpack.c.l.b16 %v1242
        %v1595 = vunpack.c.h.b16 %v1242
        %v1596 = vunpack.c.l.b16 %v1243
        %v1597 = vunpack.c.h.b16 %v1243
        %v1598 = vunpack.c.l.b16 %v1244
        %v1599 = vunpack.c.h.b16 %v1244
        %v1600 = vunpack.c.l.b16 %v1245
        %v1601 = vunpack.c.h.b16 %v1245
        %v1602 = vunpack.c.l.b16 %v1246
        %v1603 = vunpack.c.h.b16 %v1246
        %v1604 = vunpack.c.l.b16 %v1247
        %v1605 = vunpack.c.h.b16 %v1247
        %v1606 = vunpack.c.l.b16 %v1248
        %v1607 = vunpack.c.h.b16 %v1248
        %v1608 = vunpack.c.l.b16 %v1249
        %v1609 = vunpack.c.h.b16 %v1249
        %v1610 = vunpack.c.l.b16 %v1250
        %v1611 = vunpack.c.h.b16 %v1250
        %v1612 = vunpack.c.l.b16 %v1251
        %v1613 = vunpack.c.h.b16 %v1251
        %v1614 = vunpack.c.l.b16 %v1252
        %v1615 = vunpack.c.h.b16 %v1252
        %v1616 = vunpack.c.l.b16 %v1253
        %v1617 = vunpack.c.h.b16 %v1253
        %v1618 = vunpack.c.l.b16 %v1254
        %v1619 = vunpack.c.h.b16 %v1254
        %v1620 = vunpack.c.l.b16 %v1255
        %v1621 = vunpack.c.h.b16 %v1255
        %v1622 = vunpack.c.l.b16 %v1256
        %v1623 = vunpack.c.h.b16 %v1256
        %v1624 = vunpack.c.l.b16 %v1257
        %v1625 = vunpack.c.h.b16 %v1257
        %v1626 = vunpack.c.l.b16 %v1258
        %v1627 = vunpack.c.h.b16 %v1258
        %v1628 = vunpack.c.l.b16 %v1259
        %v1629 = vunpack.c.h.b16 %v1259
        %v1630 = vunpack.c.l.b16 %v1260
        %v1631 = vunpack.c.h.b16 %v1260
        %v1632 = vunpack.c.l.b16 %v1261
        %v1633 = vunpack.c.h.b16 %v1261
        %v1634 = vunpack.c.l.b16 %v1262
        %v1635 = vunpack.c.h.b16 %v1262
        %v1636 = vunpack.c.l.b16 %v1263
        %v1637 = vunpack.c.h.b16 %v1263
        %v1638 = vunpack.c.l.b16 %v1264
        %v1639 = vunpack.c.h.b16 %v1264
        %v1640 = vunpack.c.l.b16 %v1265
        %v1641 = vunpack.c.h.b16 %v1265
        %v1642 = vunpack.c.l.b16 %v1266
        %v1643 = vunpack.c.h.b16 %v1266
        %v1644 = vunpack.c.l.b16 %v1267
        %v1645 = vunpack.c.h.b16 %v1267
        %v1646 = vunpack.c.l.b16 %v1268
        %v1647 = vunpack.c.h.b16 %v1268
        %v1648 = vunpack.c.l.b16 %v1269
        %v1649 = vunpack.c.h.b16 %v1269
        %v1650 = vunpack.c.l.b16 %v1270
        %v1651 = vunpack.c.h.b16 %v1270
        %v1652 = vpack.c.b16 %v1462, %v1460
        %v1653 = vpack.c.b16 %v1463, %v1461
        %v1654 = vpack.c.b16 %v1466, %v1464
        %v1655 = vpack.c.b16 %v1467, %v1465
        %v1656 = vpack.c.b16 %v1470, %v1468
        %v1657 = vpack.c.b16 %v1471, %v1469
        %v1658 = vpack.c.b16 %v1474, %v1472
        %v1659 = vpack.c.b16 %v1475, %v1473
        %v1660 = vpack.c.b16 %v1478, %v1476
        %v1661 = vpack.c.b16 %v1479, %v1477
        %v1662 = vpack.c.b16 %v1482, %v1480
        %v1663 = vpack.c.b16 %v1483, %v1481
        %v1664 = vpack.c.b16 %v1486, %v1484
        %v1665 = vpack.c.b16 %v1487, %v1485
        %v1666 = vpack.c.b16 %v1490, %v1488
        %v1667 = vpack.c.b16 %v1491, %v1489
        %v1668 = vpack.c.b16 %v1494, %v1492
        %v1669 = vpack.c.b16 %v1495, %v1493
        %v1670 = vpack.c.b16 %v1498, %v1496
        %v1671 = vpack.c.b16 %v1499, %v1497
        %v1672 = vpack.c.b16 %v1502, %v1500
        %v1673 = vpack.c.b16 %v1503, %v1501
        %v1674 = vpack.c.b16 %v1506, %v1504
        %v1675 = vpack.c.b16 %v1507, %v1505
        %v1676 = vpack.c.b16 %v1510, %v1508
        %v1677 = vpack.c.b16 %v1511, %v1509
        %v1678 = vpack.c.b16 %v1514, %v1512
        %v1679 = vpack.c.b16 %v1515, %v1513
        %v1680 = vpack.c.b16 %v1518, %v1516
        %v1681 = vpack.c.b16 %v1519, %v1517
        %v1682 = vpack.c.b16 %v1522, %v1520
        %v1683 = vpack.c.b16 %v1523, %v1521
        %v1684 = vpack.c.b16 %v1526, %v1524
        %v1685 = vpack.c.b16 %v1527, %v1525
        %v1686 = vpack.c.b16 %v1530, %v1528
        %v1687 = vpack.c.b16 %v1531, %v1529
        %v1688 = vpack.c.b16 %v1534, %v1532
        %v1689 = vpack.c.b16 %v1535, %v1533
        %v1690 = vpack.c.b16 %v1538, %v1536
        %v1691 = vpack.c.b16 %v1539, %v1537
        %v1692 = vpack.c.b16 %v1542, %v1540
        %v1693 = vpack.c.b16 %v1543, %v1541
        %v1694 = vpack.c.b16 %v1546, %v1544
        %v1695 = vpack.c.b16 %v1547, %v1545
        %v1696 = vpack.c.b16 %v1550, %v1548
        %v1697 = vpack.c.b16 %v1551, %v1549
        %v1698 = vpack.c.b16 %v1554, %v1552
        %v1699 = vpack.c.b16 %v1555, %v1553
        %v1700 = vpack.c.b16 %v1558, %v1556
        %v1701 = vpack.c.b16 %v1559, %v1557
        %v1702 = vpack.c.b16 %v1562, %v1560
        %v1703 = vpack.c.b16 %v1563, %v1561
        %v1704 = vpack.c.b16 %v1566, %v1564
        %v1705 = vpack.c.b16 %v1567, %v1565
        %v1706 = vpack.c.b16 %v1570, %v1568
        %v1707 = vpack.c.b16 %v1571, %v1569
        %v1708 = vpack.c.b16 %v1574, %v1572
        %v1709 = vpack.c.b16 %v1575, %v1573
        %v1710 = vpack.c.b16 %v1578, %v1576
        %v1711 = vpack.c.b16 %v1579, %v1577
        %v1712 = vpack.c.b16 %v1582, %v1580
        %v1713 = vpack.c.b16 %v1583, %v1581
        %v1714 = vpack.c.b16 %v1586, %v1584
        %v1715 = vpack.c.b16 %v1587, %v1585
        %v1716 = vpack.c.b16 %v1590, %v1588
        %v1717 = vpack.c.b16 %v1591, %v1589
        %v1718 = vpack.c.b16 %v1594, %v1592
        %v1719 = vpack.c.b16 %v1595, %v1593
        %v1720 = vpack.c.b16 %v1598, %v1596
        %v1721 = vpack.c.b16 %v1599, %v1597
        %v1722 = vpack.c.b16 %v1602, %v1600
        %v1723 = vpack.c.b16 %v1603, %v1601
        %v1724 = vpack.c.b16 %v1606, %v1604
        %v1725 = vpack.c.b16 %v1607, %v1605
        %v1726 = vpack.c.b16 %v1610, %v1608
        %v1727 = vpack.c.b16 %v1611, %v1609
        %v1728 = vpack.c.b16 %v1614, %v1612
        %v1729 = vpack.c.b16 %v1615, %v1613
        %v1730 = vpack.c.b16 %v1618, %v1616
        %v1731 = vpack.c.b16 %v1619, %v1617
        %v1732 = vpack.c.b16 %v1622, %v1620
        %v1733 = vpack.c.b16 %v1623, %v1621
        %v1734 = vpack.c.b16 %v1626, %v1624
        %v1735 = vpack.c.b16 %v1627, %v1625
        %v1736 = vpack.c.b16 %v1630, %v1628
        %v1737 = vpack.c.b16 %v1631, %v1629
        %v1738 = vpack.c.b16 %v1634, %v1632
        %v1739 = vpack.c.b16 %v1635, %v1633
        %v1740 = vpack.c.b16 %v1638, %v1636
        %v1741 = vpack.c.b16 %v1639, %v1637
        %v1742 = vpack.c.b16 %v1642, %v1640
        %v1743 = vpack.c.b16 %v1643, %v1641
        %v1744 = vpack.c.b16 %v1646, %v1644
        %v1745 = vpack.c.b16 %v1647, %v1645
        %v1746 = vpack.c.b16 %v1650, %v1648
        %v1747 = vpack.c.b16 %v1651, %v1649
        %1844 = vmatprep.subr.bf16.mxu0 %v1653
        %1845 = vmatpush1.bf16.msra.mxu0 %v1652
        %1846 = vmatprep.subr.bf16.mxu0 %v1655
        %1847 = vmatpush1.bf16.msra.mxu0 %v1654
        %1848 = vmatprep.subr.bf16.mxu0 %v1657
        %1849 = vmatpush1.bf16.msra.mxu0 %v1656
        %1850 = vmatprep.subr.bf16.mxu0 %v1659
        %1851 = vmatpush1.bf16.msra.mxu0 %v1658
        %1852 = vmatprep.subr.bf16.mxu0 %v1661
        %1853 = vmatpush1.bf16.msra.mxu0 %v1660
        %1854 = vmatprep.subr.bf16.mxu0 %v1663
        %1855 = vmatpush1.bf16.msra.mxu0 %v1662
        %1856 = vmatprep.subr.bf16.mxu0 %v1665
        %1857 = vmatpush1.bf16.msra.mxu0 %v1664
        %1858 = vmatprep.subr.bf16.mxu0 %v1667
        %1859 = vmatpush1.bf16.msra.mxu0 %v1666
        %1860 = vmatprep.subr.bf16.mxu0 %v1669
        %1861 = vmatpush1.bf16.msra.mxu0 %v1668
        %1862 = vmatprep.subr.bf16.mxu0 %v1671
        %1863 = vmatpush1.bf16.msra.mxu0 %v1670
        %1864 = vmatprep.subr.bf16.mxu0 %v1673
        %1865 = vmatpush1.bf16.msra.mxu0 %v1672
        %1866 = vmatprep.subr.bf16.mxu0 %v1675
        %1867 = vmatpush1.bf16.msra.mxu0 %v1674
        %1868 = vmatprep.subr.bf16.mxu0 %v1677
        %1869 = vmatpush1.bf16.msra.mxu0 %v1676
        %1870 = vmatprep.subr.bf16.mxu0 %v1679
        %1871 = vmatpush1.bf16.msra.mxu0 %v1678
        %1872 = vmatprep.subr.bf16.mxu0 %v1681
        %1873 = vmatpush1.bf16.msra.mxu0 %v1680
        %1874 = vmatprep.subr.bf16.mxu0 %v1683
        %1875 = vmatpush1.bf16.msra.mxu0 %v1682
        %1876 = vmatprep.mubr.bf16.mxu0 %v1329
        %1877 = vmatmul.mubr.bf16.gmra.mrb[0].mxu0 %v1328
        %v1878 = vpop.f32.mrb[0].mxu0
        %v1879 = vadd.f32 %v1276, %v1878
        %v1880 = vpop.f32.mrb[0].mxu0
        %v1881 = vadd.f32 %v1280, %v1880
        %v1882 = vpop.f32.mrb[0].mxu0
        %v1883 = vadd.f32 %v1276, %v1882
        %v1884 = vpop.f32.mrb[0].mxu0
        %v1885 = vadd.f32 %v1280, %v1884
        %1886 = vmatprep.mubr.bf16.mxu0 %v1335
        %1887 = vmatmul.mubr.bf16.gmra.mrb[0].mxu0 %v1334
        %v1888 = vpop.f32.mrb[0].mxu0
        %v1889 = vadd.f32 %v1276, %v1888
        %v1890 = vpop.f32.mrb[0].mxu0
        %v1891 = vadd.f32 %v1280, %v1890
        %v1892 = vpop.f32.mrb[0].mxu0
        %v1893 = vadd.f32 %v1276, %v1892
        %v1894 = vpop.f32.mrb[0].mxu0
        %v1895 = vadd.f32 %v1280, %v1894
        %1896 = vmatprep.mubr.bf16.mxu0 %v1341
        %1897 = vmatmul.mubr.bf16.gmra.mrb[0].mxu0 %v1340
        %v1898 = vpop.f32.mrb[0].mxu0
        %v1899 = vadd.f32 %v1276, %v1898
        %v1900 = vpop.f32.mrb[0].mxu0
        %v1901 = vadd.f32 %v1280, %v1900
        %v1902 = vpop.f32.mrb[0].mxu0
        %v1903 = vpop.f32.mrb[0].mxu0
        %1904 = vdwg.mxu0
        %1905 = vmatprep.subr.bf16.mxu0 %v1685
        %1906 = vmatpush1.bf16.msra.mxu0 %v1684
        %1907 = vmatprep.subr.bf16.mxu0 %v1687
        %1908 = vmatpush1.bf16.msra.mxu0 %v1686
        %1909 = vmatprep.subr.bf16.mxu0 %v1689
        %1910 = vmatpush1.bf16.msra.mxu0 %v1688
        %1911 = vmatprep.subr.bf16.mxu0 %v1691
        %1912 = vmatpush1.bf16.msra.mxu0 %v1690
        %1913 = vmatprep.subr.bf16.mxu0 %v1693
        %1914 = vmatpush1.bf16.msra.mxu0 %v1692
        %1915 = vmatprep.subr.bf16.mxu0 %v1695
        %1916 = vmatpush1.bf16.msra.mxu0 %v1694
        %1917 = vmatprep.subr.bf16.mxu0 %v1697
        %1918 = vmatpush1.bf16.msra.mxu0 %v1696
        %1919 = vmatprep.subr.bf16.mxu0 %v1699
        %1920 = vmatpush1.bf16.msra.mxu0 %v1698
        %1921 = vmatprep.subr.bf16.mxu0 %v1701
        %1922 = vmatpush1.bf16.msra.mxu0 %v1700
        %1923 = vmatprep.subr.bf16.mxu0 %v1703
        %1924 = vmatpush1.bf16.msra.mxu0 %v1702
        %1925 = vmatprep.subr.bf16.mxu0 %v1705
        %1926 = vmatpush1.bf16.msra.mxu0 %v1704
        %1927 = vmatprep.subr.bf16.mxu0 %v1707
        %1928 = vmatpush1.bf16.msra.mxu0 %v1706
        %1929 = vmatprep.subr.bf16.mxu0 %v1709
        %1930 = vmatpush1.bf16.msra.mxu0 %v1708
        %1931 = vmatprep.subr.bf16.mxu0 %v1711
        %1932 = vmatpush1.bf16.msra.mxu0 %v1710
        %1933 = vmatprep.subr.bf16.mxu0 %v1713
        %1934 = vmatpush1.bf16.msra.mxu0 %v1712
        %1935 = vmatprep.subr.bf16.mxu0 %v1715
        %1936 = vmatpush1.bf16.msra.mxu0 %v1714
        %1937 = vmatprep.mubr.bf16.mxu0 %v1331
        %1938 = vmatmul.mubr.bf16.gmra.mrb[0].mxu0 %v1330
        %v1939 = vpop.f32.mrb[0].mxu0
        %v1940 = vadd.f32 %v1879, %v1939
        %v1941 = vpop.f32.mrb[0].mxu0
        %v1942 = vadd.f32 %v1881, %v1941
        %v1943 = vpop.f32.mrb[0].mxu0
        %v1944 = vadd.f32 %v1883, %v1943
        %v1945 = vpop.f32.mrb[0].mxu0
        %v1946 = vadd.f32 %v1885, %v1945
        %1947 = vmatprep.mubr.bf16.mxu0 %v1337
        %1948 = vmatmul.mubr.bf16.gmra.mrb[0].mxu0 %v1336
        %v1949 = vpop.f32.mrb[0].mxu0
        %v1950 = vadd.f32 %v1889, %v1949
        %v1951 = vpop.f32.mrb[0].mxu0
        %v1952 = vadd.f32 %v1891, %v1951
        %v1953 = vpop.f32.mrb[0].mxu0
        %v1954 = vadd.f32 %v1893, %v1953
        %v1955 = vpop.f32.mrb[0].mxu0
        %v1956 = vadd.f32 %v1895, %v1955
        %1957 = vmatprep.mubr.bf16.mxu0 %v1343
        %1958 = vmatmul.mubr.bf16.gmra.mrb[0].mxu0 %v1342
        %v1959 = vpop.f32.mrb[0].mxu0
        %v1960 = vadd.f32 %v1899, %v1959
        %v1961 = vpop.f32.mrb[0].mxu0
        %v1962 = vadd.f32 %v1901, %v1961
        %v1963 = vpop.f32.mrb[0].mxu0
        %v1964 = vpop.f32.mrb[0].mxu0
        %1965 = vdwg.mxu0
        %1966 = vmatprep.subr.bf16.mxu0 %v1717
        %1967 = vmatpush1.bf16.msra.mxu0 %v1716
        %1968 = vmatprep.subr.bf16.mxu0 %v1719
        %1969 = vmatpush1.bf16.msra.mxu0 %v1718
        %1970 = vmatprep.subr.bf16.mxu0 %v1721
        %1971 = vmatpush1.bf16.msra.mxu0 %v1720
        %1972 = vmatprep.subr.bf16.mxu0 %v1723
        %1973 = vmatpush1.bf16.msra.mxu0 %v1722
        %1974 = vmatprep.subr.bf16.mxu0 %v1725
        %1975 = vmatpush1.bf16.msra.mxu0 %v1724
        %1976 = vmatprep.subr.bf16.mxu0 %v1727
        %1977 = vmatpush1.bf16.msra.mxu0 %v1726
        %1978 = vmatprep.subr.bf16.mxu0 %v1729
        %1979 = vmatpush1.bf16.msra.mxu0 %v1728
        %1980 = vmatprep.subr.bf16.mxu0 %v1731
        %1981 = vmatpush1.bf16.msra.mxu0 %v1730
        %1982 = vmatprep.subr.bf16.mxu0 %v1733
        %1983 = vmatpush1.bf16.msra.mxu0 %v1732
        %1984 = vmatprep.subr.bf16.mxu0 %v1735
        %1985 = vmatpush1.bf16.msra.mxu0 %v1734
        %1986 = vmatprep.subr.bf16.mxu0 %v1737
        %1987 = vmatpush1.bf16.msra.mxu0 %v1736
        %1988 = vmatprep.subr.bf16.mxu0 %v1739
        %1989 = vmatpush1.bf16.msra.mxu0 %v1738
        %1990 = vmatprep.subr.bf16.mxu0 %v1741
        %1991 = vmatpush1.bf16.msra.mxu0 %v1740
        %1992 = vmatprep.subr.bf16.mxu0 %v1743
        %1993 = vmatpush1.bf16.msra.mxu0 %v1742
        %1994 = vmatprep.subr.bf16.mxu0 %v1745
        %1995 = vmatpush1.bf16.msra.mxu0 %v1744
        %1996 = vmatprep.subr.bf16.mxu0 %v1747
        %1997 = vmatpush1.bf16.msra.mxu0 %v1746
        %1998 = vmatprep.mubr.bf16.mxu0 %v1333
        %1999 = vmatmul.mubr.bf16.gmra.mrb[0].mxu0 %v1332
        %v2000 = vpop.f32.mrb[0].mxu0
        %v2001 = vadd.f32 %v1940, %v2000
        %v2002 = vpop.f32.mrb[0].mxu0
        %v2003 = vadd.f32 %v1942, %v2002
        %v2004 = vpop.f32.mrb[0].mxu0
        %v2005 = vadd.f32 %v1944, %v2004
        %v2006 = vpop.f32.mrb[0].mxu0
        %v2007 = vadd.f32 %v1946, %v2006
        %2008 = vmatprep.mubr.bf16.mxu0 %v1339
        %2009 = vmatmul.mubr.bf16.gmra.mrb[0].mxu0 %v1338
        %v2010 = vpop.f32.mrb[0].mxu0
        %v2011 = vadd.f32 %v1950, %v2010
        %v2012 = vpop.f32.mrb[0].mxu0
        %v2013 = vadd.f32 %v1952, %v2012
        %v2014 = vpop.f32.mrb[0].mxu0
        %v2015 = vadd.f32 %v1954, %v2014
        %v2016 = vpop.f32.mrb[0].mxu0
        %v2017 = vadd.f32 %v1956, %v2016
        %2018 = vmatprep.mubr.bf16.mxu0 %v1345
        %2019 = vmatmul.mubr.bf16.gmra.mrb[0].mxu0 %v1344
        %v2020 = vpop.f32.mrb[0].mxu0
        %v2021 = vadd.f32 %v1960, %v2020
        %v2022 = vpop.f32.mrb[0].mxu0
        %v2023 = vadd.f32 %v1962, %v2022
        %v2024 = vpop.f32.mrb[0].mxu0
        %v2025 = vpop.f32.mrb[0].mxu0
        %2026 = vdwg.mxu0
        %v2027 = vmax.f32 %v2001, 0.0
        %v2028 = vmax.f32 %v2003, 0.0
        %v2029 = vmax.f32 %v2005, 0.0
        %v2030 = vmax.f32 %v2007, 0.0
        %v2031 = vmax.f32 %v2011, 0.0
        %v2032 = vmax.f32 %v2013, 0.0
        %v2033 = vmax.f32 %v2015, 0.0
        %v2034 = vmax.f32 %v2017, 0.0
        %v2035 = vmax.f32 %v2021, 0.0
        %v2036 = vmax.f32 %v2023, 0.0
        %v2041 = vrot.slane %v2027, 7
        %v2042 = vrot.slane %v2028, 7
        %v2043 = vrot.slane %v2029, 7
        %v2044 = vsel %vm819, %v2041, %v2043
        %v2045 = vrot.slane %v2030, 7
        %v2046 = vsel %vm819, %v2042, %v2045
        %2053 = vst [vmem:[#allocation4] sm:$0xfe] %v2041
        %2054 = vst [vmem:[#allocation4 + $0x8] sm:$0xfe] %v2042
        %2055 = vst [vmem:[#allocation4 + $0x10] sm:$0xff] %v2044
        %2056 = vst [vmem:[#allocation4 + $0x18] sm:$0xff] %v2046
        %2057 = vst [vmem:[#allocation4 + $0x20] sm:$0x1] %v2043
        %2058 = vst [vmem:[#allocation4 + $0x28] sm:$0x1] %v2045
        %v2059 = vcombine.low %v2027, %v2028
        %v2061 = vunpack.c.l.s4 1966171168
        %v2062 = vunpack.c.0.s8 %v2061
        %v2063 = vlaneseq
        %v2064 = vshrl.u32 %v2063, 7
        %v2065 = vsub.s32 %v2062, %v2064
        %v2066 = vrot.slane %v2059, %v2065
        %v2067 = vcombine.high %v2066, %v2066
        %v2069 = vunpack.c.l.s4 1966171168
        %v2070 = vunpack.c.0.s8 %v2069
        %v2071 = vlaneseq
        %v2072 = vshrl.u32 %v2071, 7
        %v2073 = vsub.s32 %v2070, %v2072
        %v2074 = vrot.slane %v2067, %v2073
        %2076 = vst.msk [vmem:[#allocation4] ss:$8 sm:$0x3] %vm858, %v2074
        %2077 = vst.msk [vmem:[#allocation4] ss:$8 sm:$0x0] %vm858, %v2074
        %v2078 = vcombine.high %v2029, %v2030
        %v2080 = vunpack.c.l.s4 1966171168
        %v2081 = vunpack.c.0.s8 %v2080
        %v2082 = vlaneseq
        %v2083 = vshrl.u32 %v2082, 7
        %v2084 = vsub.s32 %v2081, %v2083
        %v2085 = vrot.slane %v2078, %v2084
        %v2087 = vunpack.c.l.s4 1966171168
        %v2088 = vunpack.c.0.s8 %v2087
        %v2089 = vlaneseq
        %v2090 = vshrl.u32 %v2089, 7
        %v2091 = vsub.s32 %v2088, %v2090
        %v2092 = vrot.slane %v2085, %v2091
        %v2093 = vcombine.high %v2092, %v2092
        %2095 = vst.msk [vmem:[%s878] ss:$8 sm:$0x3] %vm858, %v2093
        %2096 = vst.msk [vmem:[%s878] ss:$8 sm:$0x0] %vm858, %v2093
        %v2103 = vrot.slane %v2031, 7
        %v2104 = vrot.slane %v2032, 7
        %v2105 = vrot.slane %v2033, 7
        %v2106 = vsel %vm819, %v2103, %v2105
        %v2107 = vrot.slane %v2034, 7
        %v2108 = vsel %vm819, %v2104, %v2107
        %v2109 = vrot.slane %v2035, 7
        %v2110 = vsel %vm819, %v2105, %v2109
        %v2111 = vrot.slane %v2036, 7
        %v2112 = vsel %vm819, %v2107, %v2111
        %2119 = vst [vmem:[#allocation4 + $0x20] sm:$0xf8] %v2103
        %2120 = vst [vmem:[#allocation4 + $0x28] sm:$0xf8] %v2104
        %2121 = vst [vmem:[#allocation4 + $0x30] sm:$0xff] %v2106
        %2122 = vst [vmem:[#allocation4 + $0x38] sm:$0xff] %v2108
        %2123 = vst [vmem:[#allocation4 + $0x40] sm:$0x7] %v2110
        %2124 = vst [vmem:[#allocation4 + $0x48] sm:$0x7] %v2112
        %v2125 = vcombine.low %v2031, %v2032
        %v2127 = vunpack.c.l.s4 1966171168
        %v2128 = vunpack.c.0.s8 %v2127
        %v2129 = vlaneseq
        %v2130 = vshrl.u32 %v2129, 7
        %v2131 = vsub.s32 %v2128, %v2130
        %v2132 = vrot.slane %v2125, %v2131
        %v2133 = vcombine.high %v2132, %v2132
        %v2135 = vunpack.c.l.s4 1966171168
        %v2136 = vunpack.c.0.s8 %v2135
        %v2137 = vlaneseq
        %v2138 = vshrl.u32 %v2137, 7
        %v2139 = vsub.s32 %v2136, %v2138
        %v2140 = vrot.slane %v2133, %v2139
        %v2141 = vcombine.high %v2140, %v2140
        %2143 = vst.msk [vmem:[%s927] ss:$8 sm:$0x3] %vm858, %v2141
        %2144 = vst.msk [vmem:[%s927] ss:$8 sm:$0x0] %vm858, %v2141
        %v2145 = vcombine.low %v2035, %v2036
        %v2147 = vunpack.c.l.s4 1966171168
        %v2148 = vunpack.c.0.s8 %v2147
        %v2149 = vlaneseq
        %v2150 = vshrl.u32 %v2149, 7
        %v2151 = vsub.s32 %v2148, %v2150
        %v2152 = vrot.slane %v2145, %v2151
        %v2154 = vunpack.c.l.s4 1966171168
        %v2155 = vunpack.c.0.s8 %v2154
        %v2156 = vlaneseq
        %v2157 = vshrl.u32 %v2156, 7
        %v2158 = vsub.s32 %v2155, %v2157
        %v2159 = vrot.slane %v2152, %v2158
        %2161 = vst.msk [vmem:[%s947] ss:$8 sm:$0x3] %vm858, %v2159
        %2162 = vst.msk [vmem:[%s947] ss:$8 sm:$0x0] %vm858, %v2159
        %v2163 = vld [vmem:[#allocation4] sm:$0xff]
        %v2164 = vld [vmem:[#allocation4 + $0x8] sm:$0xff]
        %v2165 = vld [vmem:[#allocation4 + $0x10] sm:$0xff]
        %v2166 = vld [vmem:[#allocation4 + $0x18] sm:$0xff]
        %v2167 = vld [vmem:[#allocation4 + $0x20] sm:$0xff]
        %v2168 = vld [vmem:[#allocation4 + $0x28] sm:$0xff]
        %v2169 = vld [vmem:[#allocation4 + $0x30] sm:$0xff]
        %v2170 = vld [vmem:[#allocation4 + $0x38] sm:$0xff]
        %v2171 = vld [vmem:[#allocation4 + $0x40] sm:$0x3]
        %v2172 = vld [vmem:[#allocation4 + $0x48] sm:$0x3]
        %v2173 = vpack.c.bf16 %v2165, %v2163
        %v2174 = vpack.c.bf16 %v2166, %v2164
        %v2175 = vpack.c.bf16 %v2169, %v2167
        %v2176 = vpack.c.bf16 %v2170, %v2168
        %v2177 = vpack.c.bf16 %v2171, %v2171
        %v2178 = vpack.c.bf16 %v2172, %v2172
        %v2185 = vunpack.c.l.b16 %v2173
        %v2186 = vunpack.c.l.b16 %v2174
        %v2187 = vunpack.c.h.b16 %v2173
        %v2188 = vunpack.c.h.b16 %v2174
        %v2189 = vunpack.c.l.b16 %v2175
        %v2190 = vunpack.c.l.b16 %v2176
        %v2191 = vunpack.c.h.b16 %v2175
        %v2192 = vunpack.c.h.b16 %v2176
        %v2193 = vunpack.c.l.b16 %v2177
        %v2194 = vunpack.c.l.b16 %v2178
        %v2195 = vpack.c.b16 %v2186, %v2185
        %v2196 = vpack.c.b16 %v2188, %v2187
        %v2197 = vpack.c.b16 %v2190, %v2189
        %v2198 = vpack.c.b16 %v2192, %v2191
        %v2199 = vpack.c.b16 %v2194, %v2193
        %2205 = vst [vmem:[#allocation5] sm:$0xff] %v2195
        %2206 = vst [vmem:[#allocation5 + $0x18] sm:$0xff] %v2196
        %2207 = vst [vmem:[#allocation5 + $0x30] sm:$0xff] %v2197
        %2208 = vst [vmem:[#allocation5 + $0x48] sm:$0xff] %v2198
        %2209 = vst [vmem:[#allocation5 + $0x60] sm:$0x11] %v2199
        %v2210 = vld [vmem:[#allocation4] sm:$0xfe]
        %v2211 = vld [vmem:[#allocation4 + $0x8] sm:$0xfe]
        %v2212 = vld [vmem:[#allocation4 + $0x10] sm:$0xff]
        %v2213 = vld [vmem:[#allocation4 + $0x18] sm:$0xff]
        %v2214 = vld [vmem:[#allocation4 + $0x20] sm:$0xff]
        %v2215 = vld [vmem:[#allocation4 + $0x28] sm:$0xff]
        %v2216 = vld [vmem:[#allocation4 + $0x30] sm:$0xff]
        %v2217 = vld [vmem:[#allocation4 + $0x38] sm:$0xff]
        %v2218 = vld [vmem:[#allocation4 + $0x40] sm:$0x7]
        %v2219 = vld [vmem:[#allocation4 + $0x48] sm:$0x7]
        %v2220 = vpack.c.bf16 %v2212, %v2210
        %v2221 = vpack.c.bf16 %v2213, %v2211
        %v2222 = vpack.c.bf16 %v2216, %v2214
        %v2223 = vpack.c.bf16 %v2217, %v2215
        %v2224 = vpack.c.bf16 %v2218, %v2218
        %v2225 = vpack.c.bf16 %v2219, %v2219
        %v2232 = vunpack.c.l.b16 %v2220
        %v2233 = vunpack.c.l.b16 %v2221
        %v2234 = vunpack.c.h.b16 %v2220
        %v2235 = vunpack.c.h.b16 %v2221
        %v2236 = vunpack.c.l.b16 %v2222
        %v2237 = vunpack.c.l.b16 %v2223
        %v2238 = vunpack.c.h.b16 %v2222
        %v2239 = vunpack.c.h.b16 %v2223
        %v2240 = vunpack.c.l.b16 %v2224
        %v2241 = vunpack.c.l.b16 %v2225
        %v2242 = vpack.c.b16 %v2233, %v2232
        %v2243 = vpack.c.b16 %v2235, %v2234
        %v2244 = vpack.c.b16 %v2237, %v2236
        %v2245 = vpack.c.b16 %v2239, %v2238
        %v2246 = vpack.c.b16 %v2241, %v2240
        %v2248 = vshrl.u32 %v2242, 16
        %v2250 = vrot.slane %v2248, 4
        %v2251 = vshll.u32 %v2242, 16
        %v2253 = vrot.slane %v2251, 5
        %v2254 = vor.u32 %v2250, %v2253
        %v2255 = vrot.slane %v2254, 4
        %v2257 = vshll.u32 %v2243, 16
        %v2259 = vrot.slane %v2257, 5
        %v2260 = vsel %vm1036, %v2255, %v2259
        %v2261 = vshrl.u32 %v2243, 16
        %v2263 = vrot.slane %v2261, 4
        %v2264 = vor.u32 %v2263, %v2259
        %v2265 = vrot.slane %v2264, 4
        %v2267 = vshll.u32 %v2244, 16
        %v2269 = vrot.slane %v2267, 5
        %v2270 = vsel %vm1036, %v2265, %v2269
        %v2271 = vshrl.u32 %v2244, 16
        %v2273 = vrot.slane %v2271, 4
        %v2274 = vor.u32 %v2273, %v2269
        %v2275 = vrot.slane %v2274, 4
        %v2277 = vshll.u32 %v2245, 16
        %v2279 = vrot.slane %v2277, 5
        %v2280 = vsel %vm1036, %v2275, %v2279
        %v2281 = vshrl.u32 %v2245, 16
        %v2283 = vrot.slane %v2281, 4
        %v2284 = vor.u32 %v2283, %v2279
        %v2285 = vrot.slane %v2284, 4
        %v2287 = vshll.u32 %v2246, 16
        %v2289 = vrot.slane %v2287, 5
        %v2290 = vsel %vm1036, %v2285, %v2289
        %v2291 = vshrl.u32 %v2246, 16
        %v2293 = vrot.slane %v2291, 4
        %v2294 = vor.u32 %v2293, %v2289
        %v2295 = vrot.slane %v2294, 4
        %2301 = vst [vmem:[#allocation5 + $0x8] sm:$0xff] %v2260
        %2302 = vst [vmem:[#allocation5 + $0x20] sm:$0xff] %v2270
        %2303 = vst [vmem:[#allocation5 + $0x38] sm:$0xff] %v2280
        %2304 = vst [vmem:[#allocation5 + $0x50] sm:$0xff] %v2290
        %2305 = vst [vmem:[#allocation5 + $0x68] sm:$0x11] %v2295
        %v2306 = vld [vmem:[#allocation4] sm:$0xfc]
        %v2307 = vld [vmem:[#allocation4 + $0x8] sm:$0xfc]
        %v2308 = vld [vmem:[#allocation4 + $0x10] sm:$0xff]
        %v2309 = vld [vmem:[#allocation4 + $0x18] sm:$0xff]
        %v2310 = vld [vmem:[#allocation4 + $0x20] sm:$0xff]
        %v2311 = vld [vmem:[#allocation4 + $0x28] sm:$0xff]
        %v2312 = vld [vmem:[#allocation4 + $0x30] sm:$0xff]
        %v2313 = vld [vmem:[#allocation4 + $0x38] sm:$0xff]
        %v2314 = vld [vmem:[#allocation4 + $0x40] sm:$0xf]
        %v2315 = vld [vmem:[#allocation4 + $0x48] sm:$0xf]
        %v2316 = vpack.c.bf16 %v2308, %v2306
        %v2317 = vpack.c.bf16 %v2309, %v2307
        %v2318 = vpack.c.bf16 %v2312, %v2310
        %v2319 = vpack.c.bf16 %v2313, %v2311
        %v2320 = vpack.c.bf16 %v2314, %v2314
        %v2321 = vpack.c.bf16 %v2315, %v2315
        %v2328 = vunpack.c.l.b16 %v2316
        %v2329 = vunpack.c.l.b16 %v2317
        %v2330 = vunpack.c.h.b16 %v2316
        %v2331 = vunpack.c.h.b16 %v2317
        %v2332 = vunpack.c.l.b16 %v2318
        %v2333 = vunpack.c.l.b16 %v2319
        %v2334 = vunpack.c.h.b16 %v2318
        %v2335 = vunpack.c.h.b16 %v2319
        %v2336 = vunpack.c.l.b16 %v2320
        %v2337 = vunpack.c.l.b16 %v2321
        %v2338 = vpack.c.b16 %v2329, %v2328
        %v2339 = vpack.c.b16 %v2331, %v2330
        %v2340 = vpack.c.b16 %v2333, %v2332
        %v2341 = vpack.c.b16 %v2335, %v2334
        %v2342 = vpack.c.b16 %v2337, %v2336
        %v2343 = vrot.slane %v2338, 5
        %v2344 = vrot.slane %v2343, 4
        %v2345 = vrot.slane %v2339, 5
        %v2346 = vsel %vm1135, %v2344, %v2345
        %v2347 = vrot.slane %v2345, 4
        %v2348 = vrot.slane %v2340, 5
        %v2349 = vsel %vm1135, %v2347, %v2348
        %v2350 = vrot.slane %v2348, 4
        %v2351 = vrot.slane %v2341, 5
        %v2352 = vsel %vm1135, %v2350, %v2351
        %v2353 = vrot.slane %v2351, 4
        %v2354 = vrot.slane %v2342, 5
        %v2355 = vsel %vm1135, %v2353, %v2354
        %v2356 = vrot.slane %v2354, 4
        %2362 = vst [vmem:[#allocation5 + $0x10] sm:$0xff] %v2346
        %2363 = vst [vmem:[#allocation5 + $0x28] sm:$0xff] %v2349
        %2364 = vst [vmem:[#allocation5 + $0x40] sm:$0xff] %v2352
        %2365 = vst [vmem:[#allocation5 + $0x58] sm:$0xff] %v2355
        %2366 = vst [vmem:[#allocation5 + $0x70] sm:$0x11] %v2356
        %v2367 = vld [vmem:[#allocation5] sm:$0xff]
        %v2368 = vld [vmem:[#allocation5 + $0x8] sm:$0xff]
        %v2369 = vld [vmem:[#allocation5 + $0x10] sm:$0xff]
        %v2370 = vld [vmem:[#allocation5 + $0x18] sm:$0xff]
        %v2371 = vld [vmem:[#allocation5 + $0x20] sm:$0xff]
        %v2372 = vld [vmem:[#allocation5 + $0x28] sm:$0xff]
        %v2373 = vld [vmem:[#allocation5 + $0x30] sm:$0xff]
        %v2374 = vld [vmem:[#allocation5 + $0x38] sm:$0xff]
        %v2375 = vld [vmem:[#allocation5 + $0x40] sm:$0xff]
        %v2376 = vld [vmem:[#allocation5 + $0x48] sm:$0xff]
        %v2377 = vld [vmem:[#allocation5 + $0x50] sm:$0xff]
        %v2378 = vld [vmem:[#allocation5 + $0x58] sm:$0xff]
        %v2379 = vld [vmem:[#allocation5 + $0x60] sm:$0x11]
        %v2380 = vld [vmem:[#allocation5 + $0x68] sm:$0x11]
        %v2381 = vld [vmem:[#allocation5 + $0x70] sm:$0x11]
        %v2382 = vld [vmem:[#allocation11] sm:$0xff]
        %v2383 = vld [vmem:[#allocation11 + $0x8] sm:$0xff]
        %v2384 = vld [vmem:[#allocation11 + $0x10] sm:$0xff]
        %v2385 = vld [vmem:[#allocation11 + $0x18] sm:$0xff]
        %v2386 = vld [vmem:[#allocation11 + $0x20] sm:$0xff]
        %v2387 = vld [vmem:[#allocation11 + $0x28] sm:$0xff]
        %v2388 = vld [vmem:[#allocation11 + $0x30] sm:$0xff]
        %v2389 = vld [vmem:[#allocation11 + $0x38] sm:$0xff]
        %v2390 = vld [vmem:[#allocation11 + $0x40] sm:$0xff]
        %v2391 = vld [vmem:[#allocation11 + $0x48] sm:$0xff]
        %v2392 = vld [vmem:[#allocation11 + $0x50] sm:$0xff]
        %v2393 = vld [vmem:[#allocation11 + $0x58] sm:$0xff]
        %v2394 = vld [vmem:[#allocation11 + $0x60] sm:$0xff]
        %v2395 = vld [vmem:[#allocation11 + $0x68] sm:$0xff]
        %v2396 = vld [vmem:[#allocation11 + $0x70] sm:$0xff]
        %v2397 = vld [vmem:[#allocation11 + $0x78] sm:$0xff]
        %v2398 = vld [vmem:[#allocation11 + $0x80] sm:$0xff]
        %v2399 = vld [vmem:[#allocation11 + $0x88] sm:$0xff]
        %v2400 = vld [vmem:[#allocation11 + $0x90] sm:$0xff]
        %v2401 = vld [vmem:[#allocation11 + $0x98] sm:$0xff]
        %v2402 = vld [vmem:[#allocation11 + $0xa0] sm:$0xff]
        %v2403 = vld [vmem:[#allocation11 + $0xa8] sm:$0xff]
        %v2404 = vld [vmem:[#allocation11 + $0xb0] sm:$0xff]
        %v2405 = vld [vmem:[#allocation11 + $0xb8] sm:$0xff]
        %v2406 = vld [vmem:[#allocation11 + $0xc0] sm:$0xff]
        %v2407 = vld [vmem:[#allocation11 + $0xc8] sm:$0xff]
        %v2408 = vld [vmem:[#allocation11 + $0xd0] sm:$0xff]
        %v2409 = vld [vmem:[#allocation11 + $0xd8] sm:$0xff]
        %v2410 = vld [vmem:[#allocation11 + $0xe0] sm:$0xff]
        %v2411 = vld [vmem:[#allocation11 + $0xe8] sm:$0xff]
        %v2412 = vld [vmem:[#allocation11 + $0xf0] sm:$0xff]
        %v2413 = vld [vmem:[#allocation11 + $0xf8] sm:$0xff]
        %v2414 = vld [vmem:[#allocation11 + $0x100] sm:$0xff]
        %v2415 = vld [vmem:[#allocation11 + $0x108] sm:$0xff]
        %v2416 = vld [vmem:[#allocation11 + $0x110] sm:$0xff]
        %v2417 = vld [vmem:[#allocation11 + $0x118] sm:$0xff]
        %v2418 = vld [vmem:[#allocation11 + $0x120] sm:$0xff]
        %v2419 = vld [vmem:[#allocation11 + $0x128] sm:$0xff]
        %v2420 = vld [vmem:[#allocation11 + $0x130] sm:$0xff]
        %v2421 = vld [vmem:[#allocation11 + $0x138] sm:$0xff]
        %v2422 = vld [vmem:[#allocation11 + $0x140] sm:$0xff]
        %v2423 = vld [vmem:[#allocation11 + $0x148] sm:$0xff]
        %v2424 = vld [vmem:[#allocation11 + $0x150] sm:$0xff]
        %v2425 = vld [vmem:[#allocation11 + $0x158] sm:$0xff]
        %v2426 = vld [vmem:[#allocation11 + $0x160] sm:$0xff]
        %v2427 = vld [vmem:[#allocation11 + $0x168] sm:$0xff]
        %v2428 = vld [vmem:[#allocation11 + $0x170] sm:$0xff]
        %v2429 = vld [vmem:[#allocation11 + $0x178] sm:$0xff]
        %v2430 = vld [vmem:[#allocation11 + $0x180] sm:$0xff]
        %v2431 = vld [vmem:[#allocation11 + $0x188] sm:$0xff]
        %v2432 = vld [vmem:[#allocation11 + $0x190] sm:$0xff]
        %v2433 = vld [vmem:[#allocation11 + $0x198] sm:$0xff]
        %v2434 = vld [vmem:[#allocation11 + $0x1a0] sm:$0xff]
        %v2435 = vld [vmem:[#allocation11 + $0x1a8] sm:$0xff]
        %v2436 = vld [vmem:[#allocation11 + $0x1b0] sm:$0xff]
        %v2437 = vld [vmem:[#allocation11 + $0x1b8] sm:$0xff]
        %v2438 = vld [vmem:[#allocation11 + $0x1c0] sm:$0xff]
        %v2439 = vld [vmem:[#allocation11 + $0x1c8] sm:$0xff]
        %v2440 = vld [vmem:[#allocation11 + $0x1d0] sm:$0xff]
        %v2441 = vld [vmem:[#allocation11 + $0x1d8] sm:$0xff]
        %v2442 = vld [vmem:[#allocation11 + $0x1e0] sm:$0xff]
        %v2443 = vld [vmem:[#allocation11 + $0x1e8] sm:$0xff]
        %v2444 = vld [vmem:[#allocation11 + $0x1f0] sm:$0xff]
        %v2445 = vld [vmem:[#allocation11 + $0x1f8] sm:$0xff]
        %v2446 = vld [vmem:[#allocation11 + $0x200] sm:$0xff]
        %v2447 = vld [vmem:[#allocation11 + $0x208] sm:$0xff]
        %v2448 = vld [vmem:[#allocation11 + $0x210] sm:$0xff]
        %v2449 = vld [vmem:[#allocation11 + $0x218] sm:$0xff]
        %v2450 = vld [vmem:[#allocation11 + $0x220] sm:$0xff]
        %v2451 = vld [vmem:[#allocation11 + $0x228] sm:$0xff]
        %v2452 = vld [vmem:[#allocation11 + $0x230] sm:$0xff]
        %v2453 = vld [vmem:[#allocation11 + $0x238] sm:$0xff]
        %v2454 = vld [vmem:[#allocation11 + $0x240] sm:$0xff]
        %v2455 = vld [vmem:[#allocation11 + $0x248] sm:$0xff]
        %v2456 = vld [vmem:[#allocation11 + $0x250] sm:$0xff]
        %v2457 = vld [vmem:[#allocation11 + $0x258] sm:$0xff]
        %v2458 = vld [vmem:[#allocation11 + $0x260] sm:$0xff]
        %v2459 = vld [vmem:[#allocation11 + $0x268] sm:$0xff]
        %v2460 = vld [vmem:[#allocation11 + $0x270] sm:$0xff]
        %v2461 = vld [vmem:[#allocation11 + $0x278] sm:$0xff]
        %v2462 = vld [vmem:[#allocation11 + $0x280] sm:$0xff]
        %v2463 = vld [vmem:[#allocation11 + $0x288] sm:$0xff]
        %v2464 = vld [vmem:[#allocation11 + $0x290] sm:$0xff]
        %v2465 = vld [vmem:[#allocation11 + $0x298] sm:$0xff]
        %v2466 = vld [vmem:[#allocation11 + $0x2a0] sm:$0xff]
        %v2467 = vld [vmem:[#allocation11 + $0x2a8] sm:$0xff]
        %v2468 = vld [vmem:[#allocation11 + $0x2b0] sm:$0xff]
        %v2469 = vld [vmem:[#allocation11 + $0x2b8] sm:$0xff]
        %v2470 = vld [vmem:[#allocation11 + $0x2c0] sm:$0xff]
        %v2471 = vld [vmem:[#allocation11 + $0x2c8] sm:$0xff]
        %v2472 = vld [vmem:[#allocation11 + $0x2d0] sm:$0xff]
        %v2473 = vld [vmem:[#allocation11 + $0x2d8] sm:$0xff]
        %v2474 = vld [vmem:[#allocation11 + $0x2e0] sm:$0xff]
        %v2475 = vld [vmem:[#allocation11 + $0x2e8] sm:$0xff]
        %v2476 = vld [vmem:[#allocation11 + $0x2f0] sm:$0xff]
        %v2477 = vld [vmem:[#allocation11 + $0x2f8] sm:$0xff]
        %v2478 = vld [vmem:[%s6] sm:$0x3]
        %v2480 = vlaneseq
        %v2481 = vshrl.u32 %v2480, 7
        %v2482 = vsub.s32 0, %v2481
        %v2483 = vrot.slane %v2478, %v2482
        %v2484 = vlaneseq
        %v2485 = vshrl.u32 %v2484, 7
        %v2486 = vsub.s32 1, %v2485
        %v2487 = vrot.slane %v2478, %v2486
        %v2505 = vunpack.c.l.b16 %v2367
        %v2506 = vunpack.c.h.b16 %v2367
        %v2507 = vunpack.c.l.b16 %v2368
        %v2508 = vunpack.c.h.b16 %v2368
        %v2509 = vunpack.c.l.b16 %v2369
        %v2510 = vunpack.c.h.b16 %v2369
        %v2511 = vunpack.c.l.b16 %v2370
        %v2512 = vunpack.c.h.b16 %v2370
        %v2513 = vunpack.c.l.b16 %v2371
        %v2514 = vunpack.c.h.b16 %v2371
        %v2515 = vunpack.c.l.b16 %v2372
        %v2516 = vunpack.c.h.b16 %v2372
        %v2517 = vunpack.c.l.b16 %v2373
        %v2518 = vunpack.c.h.b16 %v2373
        %v2519 = vunpack.c.l.b16 %v2374
        %v2520 = vunpack.c.h.b16 %v2374
        %v2521 = vunpack.c.l.b16 %v2375
        %v2522 = vunpack.c.h.b16 %v2375
        %v2523 = vunpack.c.l.b16 %v2376
        %v2524 = vunpack.c.h.b16 %v2376
        %v2525 = vunpack.c.l.b16 %v2377
        %v2526 = vunpack.c.h.b16 %v2377
        %v2527 = vunpack.c.l.b16 %v2378
        %v2528 = vunpack.c.h.b16 %v2378
        %v2529 = vunpack.c.l.b16 %v2379
        %v2530 = vunpack.c.h.b16 %v2379
        %v2531 = vunpack.c.l.b16 %v2380
        %v2532 = vunpack.c.h.b16 %v2380
        %v2533 = vunpack.c.l.b16 %v2381
        %v2534 = vunpack.c.h.b16 %v2381
        %v2535 = vpack.c.b16 %v2511, %v2505
        %v2536 = vpack.c.b16 %v2512, %v2506
        %v2537 = vpack.c.b16 %v2513, %v2507
        %v2538 = vpack.c.b16 %v2514, %v2508
        %v2539 = vpack.c.b16 %v2515, %v2509
        %v2540 = vpack.c.b16 %v2516, %v2510
        %v2541 = vpack.c.b16 %v2523, %v2517
        %v2542 = vpack.c.b16 %v2524, %v2518
        %v2543 = vpack.c.b16 %v2525, %v2519
        %v2544 = vpack.c.b16 %v2526, %v2520
        %v2545 = vpack.c.b16 %v2527, %v2521
        %v2546 = vpack.c.b16 %v2528, %v2522
        %v2547 = vpack.c.b16 %v2529, %v2529
        %v2548 = vpack.c.b16 %v2530, %v2530
        %v2549 = vpack.c.b16 %v2531, %v2531
        %v2550 = vpack.c.b16 %v2532, %v2532
        %v2551 = vpack.c.b16 %v2533, %v2533
        %v2552 = vpack.c.b16 %v2534, %v2534
        %v2667 = vunpack.c.l.b16 %v2382
        %v2668 = vunpack.c.h.b16 %v2382
        %v2669 = vunpack.c.l.b16 %v2383
        %v2670 = vunpack.c.h.b16 %v2383
        %v2671 = vunpack.c.l.b16 %v2384
        %v2672 = vunpack.c.h.b16 %v2384
        %v2673 = vunpack.c.l.b16 %v2385
        %v2674 = vunpack.c.h.b16 %v2385
        %v2675 = vunpack.c.l.b16 %v2386
        %v2676 = vunpack.c.h.b16 %v2386
        %v2677 = vunpack.c.l.b16 %v2387
        %v2678 = vunpack.c.h.b16 %v2387
        %v2679 = vunpack.c.l.b16 %v2388
        %v2680 = vunpack.c.h.b16 %v2388
        %v2681 = vunpack.c.l.b16 %v2389
        %v2682 = vunpack.c.h.b16 %v2389
        %v2683 = vunpack.c.l.b16 %v2390
        %v2684 = vunpack.c.h.b16 %v2390
        %v2685 = vunpack.c.l.b16 %v2391
        %v2686 = vunpack.c.h.b16 %v2391
        %v2687 = vunpack.c.l.b16 %v2392
        %v2688 = vunpack.c.h.b16 %v2392
        %v2689 = vunpack.c.l.b16 %v2393
        %v2690 = vunpack.c.h.b16 %v2393
        %v2691 = vunpack.c.l.b16 %v2394
        %v2692 = vunpack.c.h.b16 %v2394
        %v2693 = vunpack.c.l.b16 %v2395
        %v2694 = vunpack.c.h.b16 %v2395
        %v2695 = vunpack.c.l.b16 %v2396
        %v2696 = vunpack.c.h.b16 %v2396
        %v2697 = vunpack.c.l.b16 %v2397
        %v2698 = vunpack.c.h.b16 %v2397
        %v2699 = vunpack.c.l.b16 %v2398
        %v2700 = vunpack.c.h.b16 %v2398
        %v2701 = vunpack.c.l.b16 %v2399
        %v2702 = vunpack.c.h.b16 %v2399
        %v2703 = vunpack.c.l.b16 %v2400
        %v2704 = vunpack.c.h.b16 %v2400
        %v2705 = vunpack.c.l.b16 %v2401
        %v2706 = vunpack.c.h.b16 %v2401
        %v2707 = vunpack.c.l.b16 %v2402
        %v2708 = vunpack.c.h.b16 %v2402
        %v2709 = vunpack.c.l.b16 %v2403
        %v2710 = vunpack.c.h.b16 %v2403
        %v2711 = vunpack.c.l.b16 %v2404
        %v2712 = vunpack.c.h.b16 %v2404
        %v2713 = vunpack.c.l.b16 %v2405
        %v2714 = vunpack.c.h.b16 %v2405
        %v2715 = vunpack.c.l.b16 %v2406
        %v2716 = vunpack.c.h.b16 %v2406
        %v2717 = vunpack.c.l.b16 %v2407
        %v2718 = vunpack.c.h.b16 %v2407
        %v2719 = vunpack.c.l.b16 %v2408
        %v2720 = vunpack.c.h.b16 %v2408
        %v2721 = vunpack.c.l.b16 %v2409
        %v2722 = vunpack.c.h.b16 %v2409
        %v2723 = vunpack.c.l.b16 %v2410
        %v2724 = vunpack.c.h.b16 %v2410
        %v2725 = vunpack.c.l.b16 %v2411
        %v2726 = vunpack.c.h.b16 %v2411
        %v2727 = vunpack.c.l.b16 %v2412
        %v2728 = vunpack.c.h.b16 %v2412
        %v2729 = vunpack.c.l.b16 %v2413
        %v2730 = vunpack.c.h.b16 %v2413
        %v2731 = vunpack.c.l.b16 %v2414
        %v2732 = vunpack.c.h.b16 %v2414
        %v2733 = vunpack.c.l.b16 %v2415
        %v2734 = vunpack.c.h.b16 %v2415
        %v2735 = vunpack.c.l.b16 %v2416
        %v2736 = vunpack.c.h.b16 %v2416
        %v2737 = vunpack.c.l.b16 %v2417
        %v2738 = vunpack.c.h.b16 %v2417
        %v2739 = vunpack.c.l.b16 %v2418
        %v2740 = vunpack.c.h.b16 %v2418
        %v2741 = vunpack.c.l.b16 %v2419
        %v2742 = vunpack.c.h.b16 %v2419
        %v2743 = vunpack.c.l.b16 %v2420
        %v2744 = vunpack.c.h.b16 %v2420
        %v2745 = vunpack.c.l.b16 %v2421
        %v2746 = vunpack.c.h.b16 %v2421
        %v2747 = vunpack.c.l.b16 %v2422
        %v2748 = vunpack.c.h.b16 %v2422
        %v2749 = vunpack.c.l.b16 %v2423
        %v2750 = vunpack.c.h.b16 %v2423
        %v2751 = vunpack.c.l.b16 %v2424
        %v2752 = vunpack.c.h.b16 %v2424
        %v2753 = vunpack.c.l.b16 %v2425
        %v2754 = vunpack.c.h.b16 %v2425
        %v2755 = vunpack.c.l.b16 %v2426
        %v2756 = vunpack.c.h.b16 %v2426
        %v2757 = vunpack.c.l.b16 %v2427
        %v2758 = vunpack.c.h.b16 %v2427
        %v2759 = vunpack.c.l.b16 %v2428
        %v2760 = vunpack.c.h.b16 %v2428
        %v2761 = vunpack.c.l.b16 %v2429
        %v2762 = vunpack.c.h.b16 %v2429
        %v2763 = vunpack.c.l.b16 %v2430
        %v2764 = vunpack.c.h.b16 %v2430
        %v2765 = vunpack.c.l.b16 %v2431
        %v2766 = vunpack.c.h.b16 %v2431
        %v2767 = vunpack.c.l.b16 %v2432
        %v2768 = vunpack.c.h.b16 %v2432
        %v2769 = vunpack.c.l.b16 %v2433
        %v2770 = vunpack.c.h.b16 %v2433
        %v2771 = vunpack.c.l.b16 %v2434
        %v2772 = vunpack.c.h.b16 %v2434
        %v2773 = vunpack.c.l.b16 %v2435
        %v2774 = vunpack.c.h.b16 %v2435
        %v2775 = vunpack.c.l.b16 %v2436
        %v2776 = vunpack.c.h.b16 %v2436
        %v2777 = vunpack.c.l.b16 %v2437
        %v2778 = vunpack.c.h.b16 %v2437
        %v2779 = vunpack.c.l.b16 %v2438
        %v2780 = vunpack.c.h.b16 %v2438
        %v2781 = vunpack.c.l.b16 %v2439
        %v2782 = vunpack.c.h.b16 %v2439
        %v2783 = vunpack.c.l.b16 %v2440
        %v2784 = vunpack.c.h.b16 %v2440
        %v2785 = vunpack.c.l.b16 %v2441
        %v2786 = vunpack.c.h.b16 %v2441
        %v2787 = vunpack.c.l.b16 %v2442
        %v2788 = vunpack.c.h.b16 %v2442
        %v2789 = vunpack.c.l.b16 %v2443
        %v2790 = vunpack.c.h.b16 %v2443
        %v2791 = vunpack.c.l.b16 %v2444
        %v2792 = vunpack.c.h.b16 %v2444
        %v2793 = vunpack.c.l.b16 %v2445
        %v2794 = vunpack.c.h.b16 %v2445
        %v2795 = vunpack.c.l.b16 %v2446
        %v2796 = vunpack.c.h.b16 %v2446
        %v2797 = vunpack.c.l.b16 %v2447
        %v2798 = vunpack.c.h.b16 %v2447
        %v2799 = vunpack.c.l.b16 %v2448
        %v2800 = vunpack.c.h.b16 %v2448
        %v2801 = vunpack.c.l.b16 %v2449
        %v2802 = vunpack.c.h.b16 %v2449
        %v2803 = vunpack.c.l.b16 %v2450
        %v2804 = vunpack.c.h.b16 %v2450
        %v2805 = vunpack.c.l.b16 %v2451
        %v2806 = vunpack.c.h.b16 %v2451
        %v2807 = vunpack.c.l.b16 %v2452
        %v2808 = vunpack.c.h.b16 %v2452
        %v2809 = vunpack.c.l.b16 %v2453
        %v2810 = vunpack.c.h.b16 %v2453
        %v2811 = vunpack.c.l.b16 %v2454
        %v2812 = vunpack.c.h.b16 %v2454
        %v2813 = vunpack.c.l.b16 %v2455
        %v2814 = vunpack.c.h.b16 %v2455
        %v2815 = vunpack.c.l.b16 %v2456
        %v2816 = vunpack.c.h.b16 %v2456
        %v2817 = vunpack.c.l.b16 %v2457
        %v2818 = vunpack.c.h.b16 %v2457
        %v2819 = vunpack.c.l.b16 %v2458
        %v2820 = vunpack.c.h.b16 %v2458
        %v2821 = vunpack.c.l.b16 %v2459
        %v2822 = vunpack.c.h.b16 %v2459
        %v2823 = vunpack.c.l.b16 %v2460
        %v2824 = vunpack.c.h.b16 %v2460
        %v2825 = vunpack.c.l.b16 %v2461
        %v2826 = vunpack.c.h.b16 %v2461
        %v2827 = vunpack.c.l.b16 %v2462
        %v2828 = vunpack.c.h.b16 %v2462
        %v2829 = vunpack.c.l.b16 %v2463
        %v2830 = vunpack.c.h.b16 %v2463
        %v2831 = vunpack.c.l.b16 %v2464
        %v2832 = vunpack.c.h.b16 %v2464
        %v2833 = vunpack.c.l.b16 %v2465
        %v2834 = vunpack.c.h.b16 %v2465
        %v2835 = vunpack.c.l.b16 %v2466
        %v2836 = vunpack.c.h.b16 %v2466
        %v2837 = vunpack.c.l.b16 %v2467
        %v2838 = vunpack.c.h.b16 %v2467
        %v2839 = vunpack.c.l.b16 %v2468
        %v2840 = vunpack.c.h.b16 %v2468
        %v2841 = vunpack.c.l.b16 %v2469
        %v2842 = vunpack.c.h.b16 %v2469
        %v2843 = vunpack.c.l.b16 %v2470
        %v2844 = vunpack.c.h.b16 %v2470
        %v2845 = vunpack.c.l.b16 %v2471
        %v2846 = vunpack.c.h.b16 %v2471
        %v2847 = vunpack.c.l.b16 %v2472
        %v2848 = vunpack.c.h.b16 %v2472
        %v2849 = vunpack.c.l.b16 %v2473
        %v2850 = vunpack.c.h.b16 %v2473
        %v2851 = vunpack.c.l.b16 %v2474
        %v2852 = vunpack.c.h.b16 %v2474
        %v2853 = vunpack.c.l.b16 %v2475
        %v2854 = vunpack.c.h.b16 %v2475
        %v2855 = vunpack.c.l.b16 %v2476
        %v2856 = vunpack.c.h.b16 %v2476
        %v2857 = vunpack.c.l.b16 %v2477
        %v2858 = vunpack.c.h.b16 %v2477
        %v2859 = vpack.c.b16 %v2669, %v2667
        %v2860 = vpack.c.b16 %v2670, %v2668
        %v2861 = vpack.c.b16 %v2673, %v2671
        %v2862 = vpack.c.b16 %v2674, %v2672
        %v2863 = vpack.c.b16 %v2677, %v2675
        %v2864 = vpack.c.b16 %v2678, %v2676
        %v2865 = vpack.c.b16 %v2681, %v2679
        %v2866 = vpack.c.b16 %v2682, %v2680
        %v2867 = vpack.c.b16 %v2685, %v2683
        %v2868 = vpack.c.b16 %v2686, %v2684
        %v2869 = vpack.c.b16 %v2689, %v2687
        %v2870 = vpack.c.b16 %v2690, %v2688
        %v2871 = vpack.c.b16 %v2693, %v2691
        %v2872 = vpack.c.b16 %v2694, %v2692
        %v2873 = vpack.c.b16 %v2697, %v2695
        %v2874 = vpack.c.b16 %v2698, %v2696
        %v2875 = vpack.c.b16 %v2701, %v2699
        %v2876 = vpack.c.b16 %v2702, %v2700
        %v2877 = vpack.c.b16 %v2705, %v2703
        %v2878 = vpack.c.b16 %v2706, %v2704
        %v2879 = vpack.c.b16 %v2709, %v2707
        %v2880 = vpack.c.b16 %v2710, %v2708
        %v2881 = vpack.c.b16 %v2713, %v2711
        %v2882 = vpack.c.b16 %v2714, %v2712
        %v2883 = vpack.c.b16 %v2717, %v2715
        %v2884 = vpack.c.b16 %v2718, %v2716
        %v2885 = vpack.c.b16 %v2721, %v2719
        %v2886 = vpack.c.b16 %v2722, %v2720
        %v2887 = vpack.c.b16 %v2725, %v2723
        %v2888 = vpack.c.b16 %v2726, %v2724
        %v2889 = vpack.c.b16 %v2729, %v2727
        %v2890 = vpack.c.b16 %v2730, %v2728
        %v2891 = vpack.c.b16 %v2733, %v2731
        %v2892 = vpack.c.b16 %v2734, %v2732
        %v2893 = vpack.c.b16 %v2737, %v2735
        %v2894 = vpack.c.b16 %v2738, %v2736
        %v2895 = vpack.c.b16 %v2741, %v2739
        %v2896 = vpack.c.b16 %v2742, %v2740
        %v2897 = vpack.c.b16 %v2745, %v2743
        %v2898 = vpack.c.b16 %v2746, %v2744
        %v2899 = vpack.c.b16 %v2749, %v2747
        %v2900 = vpack.c.b16 %v2750, %v2748
        %v2901 = vpack.c.b16 %v2753, %v2751
        %v2902 = vpack.c.b16 %v2754, %v2752
        %v2903 = vpack.c.b16 %v2757, %v2755
        %v2904 = vpack.c.b16 %v2758, %v2756
        %v2905 = vpack.c.b16 %v2761, %v2759
        %v2906 = vpack.c.b16 %v2762, %v2760
        %v2907 = vpack.c.b16 %v2765, %v2763
        %v2908 = vpack.c.b16 %v2766, %v2764
        %v2909 = vpack.c.b16 %v2769, %v2767
        %v2910 = vpack.c.b16 %v2770, %v2768
        %v2911 = vpack.c.b16 %v2773, %v2771
        %v2912 = vpack.c.b16 %v2774, %v2772
        %v2913 = vpack.c.b16 %v2777, %v2775
        %v2914 = vpack.c.b16 %v2778, %v2776
        %v2915 = vpack.c.b16 %v2781, %v2779
        %v2916 = vpack.c.b16 %v2782, %v2780
        %v2917 = vpack.c.b16 %v2785, %v2783
        %v2918 = vpack.c.b16 %v2786, %v2784
        %v2919 = vpack.c.b16 %v2789, %v2787
        %v2920 = vpack.c.b16 %v2790, %v2788
        %v2921 = vpack.c.b16 %v2793, %v2791
        %v2922 = vpack.c.b16 %v2794, %v2792
        %v2923 = vpack.c.b16 %v2797, %v2795
        %v2924 = vpack.c.b16 %v2798, %v2796
        %v2925 = vpack.c.b16 %v2801, %v2799
        %v2926 = vpack.c.b16 %v2802, %v2800
        %v2927 = vpack.c.b16 %v2805, %v2803
        %v2928 = vpack.c.b16 %v2806, %v2804
        %v2929 = vpack.c.b16 %v2809, %v2807
        %v2930 = vpack.c.b16 %v2810, %v2808
        %v2931 = vpack.c.b16 %v2813, %v2811
        %v2932 = vpack.c.b16 %v2814, %v2812
        %v2933 = vpack.c.b16 %v2817, %v2815
        %v2934 = vpack.c.b16 %v2818, %v2816
        %v2935 = vpack.c.b16 %v2821, %v2819
        %v2936 = vpack.c.b16 %v2822, %v2820
        %v2937 = vpack.c.b16 %v2825, %v2823
        %v2938 = vpack.c.b16 %v2826, %v2824
        %v2939 = vpack.c.b16 %v2829, %v2827
        %v2940 = vpack.c.b16 %v2830, %v2828
        %v2941 = vpack.c.b16 %v2833, %v2831
        %v2942 = vpack.c.b16 %v2834, %v2832
        %v2943 = vpack.c.b16 %v2837, %v2835
        %v2944 = vpack.c.b16 %v2838, %v2836
        %v2945 = vpack.c.b16 %v2841, %v2839
        %v2946 = vpack.c.b16 %v2842, %v2840
        %v2947 = vpack.c.b16 %v2845, %v2843
        %v2948 = vpack.c.b16 %v2846, %v2844
        %v2949 = vpack.c.b16 %v2849, %v2847
        %v2950 = vpack.c.b16 %v2850, %v2848
        %v2951 = vpack.c.b16 %v2853, %v2851
        %v2952 = vpack.c.b16 %v2854, %v2852
        %v2953 = vpack.c.b16 %v2857, %v2855
        %v2954 = vpack.c.b16 %v2858, %v2856
        %3051 = vmatprep.subr.bf16.mxu0 %v2860
        %3052 = vmatpush1.bf16.msra.mxu0 %v2859
        %3053 = vmatprep.subr.bf16.mxu0 %v2862
        %3054 = vmatpush1.bf16.msra.mxu0 %v2861
        %3055 = vmatprep.subr.bf16.mxu0 %v2864
        %3056 = vmatpush1.bf16.msra.mxu0 %v2863
        %3057 = vmatprep.subr.bf16.mxu0 %v2866
        %3058 = vmatpush1.bf16.msra.mxu0 %v2865
        %3059 = vmatprep.subr.bf16.mxu0 %v2868
        %3060 = vmatpush1.bf16.msra.mxu0 %v2867
        %3061 = vmatprep.subr.bf16.mxu0 %v2870
        %3062 = vmatpush1.bf16.msra.mxu0 %v2869
        %3063 = vmatprep.subr.bf16.mxu0 %v2872
        %3064 = vmatpush1.bf16.msra.mxu0 %v2871
        %3065 = vmatprep.subr.bf16.mxu0 %v2874
        %3066 = vmatpush1.bf16.msra.mxu0 %v2873
        %3067 = vmatprep.subr.bf16.mxu0 %v2876
        %3068 = vmatpush1.bf16.msra.mxu0 %v2875
        %3069 = vmatprep.subr.bf16.mxu0 %v2878
        %3070 = vmatpush1.bf16.msra.mxu0 %v2877
        %3071 = vmatprep.subr.bf16.mxu0 %v2880
        %3072 = vmatpush1.bf16.msra.mxu0 %v2879
        %3073 = vmatprep.subr.bf16.mxu0 %v2882
        %3074 = vmatpush1.bf16.msra.mxu0 %v2881
        %3075 = vmatprep.subr.bf16.mxu0 %v2884
        %3076 = vmatpush1.bf16.msra.mxu0 %v2883
        %3077 = vmatprep.subr.bf16.mxu0 %v2886
        %3078 = vmatpush1.bf16.msra.mxu0 %v2885
        %3079 = vmatprep.subr.bf16.mxu0 %v2888
        %3080 = vmatpush1.bf16.msra.mxu0 %v2887
        %3081 = vmatprep.subr.bf16.mxu0 %v2890
        %3082 = vmatpush1.bf16.msra.mxu0 %v2889
        %3083 = vmatprep.mubr.bf16.mxu0 %v2536
        %3084 = vmatmul.mubr.bf16.gmra.mrb[0].mxu0 %v2535
        %v3085 = vpop.f32.mrb[0].mxu0
        %v3086 = vadd.f32 %v2483, %v3085
        %v3087 = vpop.f32.mrb[0].mxu0
        %v3088 = vadd.f32 %v2487, %v3087
        %v3089 = vpop.f32.mrb[0].mxu0
        %v3090 = vadd.f32 %v2483, %v3089
        %v3091 = vpop.f32.mrb[0].mxu0
        %v3092 = vadd.f32 %v2487, %v3091
        %3093 = vmatprep.mubr.bf16.mxu0 %v2542
        %3094 = vmatmul.mubr.bf16.gmra.mrb[0].mxu0 %v2541
        %v3095 = vpop.f32.mrb[0].mxu0
        %v3096 = vadd.f32 %v2483, %v3095
        %v3097 = vpop.f32.mrb[0].mxu0
        %v3098 = vadd.f32 %v2487, %v3097
        %v3099 = vpop.f32.mrb[0].mxu0
        %v3100 = vadd.f32 %v2483, %v3099
        %v3101 = vpop.f32.mrb[0].mxu0
        %v3102 = vadd.f32 %v2487, %v3101
        %3103 = vmatprep.mubr.bf16.mxu0 %v2548
        %3104 = vmatmul.mubr.bf16.gmra.mrb[0].mxu0 %v2547
        %v3105 = vpop.f32.mrb[0].mxu0
        %v3106 = vadd.f32 %v2483, %v3105
        %v3107 = vpop.f32.mrb[0].mxu0
        %v3108 = vadd.f32 %v2487, %v3107
        %v3109 = vpop.f32.mrb[0].mxu0
        %v3110 = vpop.f32.mrb[0].mxu0
        %3111 = vdwg.mxu0
        %3112 = vmatprep.subr.bf16.mxu0 %v2892
        %3113 = vmatpush1.bf16.msra.mxu0 %v2891
        %3114 = vmatprep.subr.bf16.mxu0 %v2894
        %3115 = vmatpush1.bf16.msra.mxu0 %v2893
        %3116 = vmatprep.subr.bf16.mxu0 %v2896
        %3117 = vmatpush1.bf16.msra.mxu0 %v2895
        %3118 = vmatprep.subr.bf16.mxu0 %v2898
        %3119 = vmatpush1.bf16.msra.mxu0 %v2897
        %3120 = vmatprep.subr.bf16.mxu0 %v2900
        %3121 = vmatpush1.bf16.msra.mxu0 %v2899
        %3122 = vmatprep.subr.bf16.mxu0 %v2902
        %3123 = vmatpush1.bf16.msra.mxu0 %v2901
        %3124 = vmatprep.subr.bf16.mxu0 %v2904
        %3125 = vmatpush1.bf16.msra.mxu0 %v2903
        %3126 = vmatprep.subr.bf16.mxu0 %v2906
        %3127 = vmatpush1.bf16.msra.mxu0 %v2905
        %3128 = vmatprep.subr.bf16.mxu0 %v2908
        %3129 = vmatpush1.bf16.msra.mxu0 %v2907
        %3130 = vmatprep.subr.bf16.mxu0 %v2910
        %3131 = vmatpush1.bf16.msra.mxu0 %v2909
        %3132 = vmatprep.subr.bf16.mxu0 %v2912
        %3133 = vmatpush1.bf16.msra.mxu0 %v2911
        %3134 = vmatprep.subr.bf16.mxu0 %v2914
        %3135 = vmatpush1.bf16.msra.mxu0 %v2913
        %3136 = vmatprep.subr.bf16.mxu0 %v2916
        %3137 = vmatpush1.bf16.msra.mxu0 %v2915
        %3138 = vmatprep.subr.bf16.mxu0 %v2918
        %3139 = vmatpush1.bf16.msra.mxu0 %v2917
        %3140 = vmatprep.subr.bf16.mxu0 %v2920
        %3141 = vmatpush1.bf16.msra.mxu0 %v2919
        %3142 = vmatprep.subr.bf16.mxu0 %v2922
        %3143 = vmatpush1.bf16.msra.mxu0 %v2921
        %3144 = vmatprep.mubr.bf16.mxu0 %v2538
        %3145 = vmatmul.mubr.bf16.gmra.mrb[0].mxu0 %v2537
        %v3146 = vpop.f32.mrb[0].mxu0
        %v3147 = vadd.f32 %v3086, %v3146
        %v3148 = vpop.f32.mrb[0].mxu0
        %v3149 = vadd.f32 %v3088, %v3148
        %v3150 = vpop.f32.mrb[0].mxu0
        %v3151 = vadd.f32 %v3090, %v3150
        %v3152 = vpop.f32.mrb[0].mxu0
        %v3153 = vadd.f32 %v3092, %v3152
        %3154 = vmatprep.mubr.bf16.mxu0 %v2544
        %3155 = vmatmul.mubr.bf16.gmra.mrb[0].mxu0 %v2543
        %v3156 = vpop.f32.mrb[0].mxu0
        %v3157 = vadd.f32 %v3096, %v3156
        %v3158 = vpop.f32.mrb[0].mxu0
        %v3159 = vadd.f32 %v3098, %v3158
        %v3160 = vpop.f32.mrb[0].mxu0
        %v3161 = vadd.f32 %v3100, %v3160
        %v3162 = vpop.f32.mrb[0].mxu0
        %v3163 = vadd.f32 %v3102, %v3162
        %3164 = vmatprep.mubr.bf16.mxu0 %v2550
        %3165 = vmatmul.mubr.bf16.gmra.mrb[0].mxu0 %v2549
        %v3166 = vpop.f32.mrb[0].mxu0
        %v3167 = vadd.f32 %v3106, %v3166
        %v3168 = vpop.f32.mrb[0].mxu0
        %v3169 = vadd.f32 %v3108, %v3168
        %v3170 = vpop.f32.mrb[0].mxu0
        %v3171 = vpop.f32.mrb[0].mxu0
        %3172 = vdwg.mxu0
        %3173 = vmatprep.subr.bf16.mxu0 %v2924
        %3174 = vmatpush1.bf16.msra.mxu0 %v2923
        %3175 = vmatprep.subr.bf16.mxu0 %v2926
        %3176 = vmatpush1.bf16.msra.mxu0 %v2925
        %3177 = vmatprep.subr.bf16.mxu0 %v2928
        %3178 = vmatpush1.bf16.msra.mxu0 %v2927
        %3179 = vmatprep.subr.bf16.mxu0 %v2930
        %3180 = vmatpush1.bf16.msra.mxu0 %v2929
        %3181 = vmatprep.subr.bf16.mxu0 %v2932
        %3182 = vmatpush1.bf16.msra.mxu0 %v2931
        %3183 = vmatprep.subr.bf16.mxu0 %v2934
        %3184 = vmatpush1.bf16.msra.mxu0 %v2933
        %3185 = vmatprep.subr.bf16.mxu0 %v2936
        %3186 = vmatpush1.bf16.msra.mxu0 %v2935
        %3187 = vmatprep.subr.bf16.mxu0 %v2938
        %3188 = vmatpush1.bf16.msra.mxu0 %v2937
        %3189 = vmatprep.subr.bf16.mxu0 %v2940
        %3190 = vmatpush1.bf16.msra.mxu0 %v2939
        %3191 = vmatprep.subr.bf16.mxu0 %v2942
        %3192 = vmatpush1.bf16.msra.mxu0 %v2941
        %3193 = vmatprep.subr.bf16.mxu0 %v2944
        %3194 = vmatpush1.bf16.msra.mxu0 %v2943
        %3195 = vmatprep.subr.bf16.mxu0 %v2946
        %3196 = vmatpush1.bf16.msra.mxu0 %v2945
        %3197 = vmatprep.subr.bf16.mxu0 %v2948
        %3198 = vmatpush1.bf16.msra.mxu0 %v2947
        %3199 = vmatprep.subr.bf16.mxu0 %v2950
        %3200 = vmatpush1.bf16.msra.mxu0 %v2949
        %3201 = vmatprep.subr.bf16.mxu0 %v2952
        %3202 = vmatpush1.bf16.msra.mxu0 %v2951
        %3203 = vmatprep.subr.bf16.mxu0 %v2954
        %3204 = vmatpush1.bf16.msra.mxu0 %v2953
        %3205 = vmatprep.mubr.bf16.mxu0 %v2540
        %3206 = vmatmul.mubr.bf16.gmra.mrb[0].mxu0 %v2539
        %v3207 = vpop.f32.mrb[0].mxu0
        %v3208 = vadd.f32 %v3147, %v3207
        %v3209 = vpop.f32.mrb[0].mxu0
        %v3210 = vadd.f32 %v3149, %v3209
        %v3211 = vpop.f32.mrb[0].mxu0
        %v3212 = vadd.f32 %v3151, %v3211
        %v3213 = vpop.f32.mrb[0].mxu0
        %v3214 = vadd.f32 %v3153, %v3213
        %3215 = vmatprep.mubr.bf16.mxu0 %v2546
        %3216 = vmatmul.mubr.bf16.gmra.mrb[0].mxu0 %v2545
        %v3217 = vpop.f32.mrb[0].mxu0
        %v3218 = vadd.f32 %v3157, %v3217
        %v3219 = vpop.f32.mrb[0].mxu0
        %v3220 = vadd.f32 %v3159, %v3219
        %v3221 = vpop.f32.mrb[0].mxu0
        %v3222 = vadd.f32 %v3161, %v3221
        %v3223 = vpop.f32.mrb[0].mxu0
        %v3224 = vadd.f32 %v3163, %v3223
        %3225 = vmatprep.mubr.bf16.mxu0 %v2552
        %3226 = vmatmul.mubr.bf16.gmra.mrb[0].mxu0 %v2551
        %v3227 = vpop.f32.mrb[0].mxu0
        %v3228 = vadd.f32 %v3167, %v3227
        %v3229 = vpop.f32.mrb[0].mxu0
        %v3230 = vadd.f32 %v3169, %v3229
        %v3231 = vpop.f32.mrb[0].mxu0
        %v3232 = vpop.f32.mrb[0].mxu0
        %3233 = vdwg.mxu0
        %v3234 = vmax.f32 %v3208, 0.0
        %v3235 = vmax.f32 %v3210, 0.0
        %v3236 = vmax.f32 %v3212, 0.0
        %v3237 = vmax.f32 %v3214, 0.0
        %v3238 = vmax.f32 %v3218, 0.0
        %v3239 = vmax.f32 %v3220, 0.0
        %v3240 = vmax.f32 %v3222, 0.0
        %v3241 = vmax.f32 %v3224, 0.0
        %v3242 = vmax.f32 %v3228, 0.0
        %v3243 = vmax.f32 %v3230, 0.0
        %v3248 = vrot.slane %v3234, 7
        %v3249 = vrot.slane %v3235, 7
        %v3250 = vrot.slane %v3236, 7
        %v3251 = vsel %vm819, %v3248, %v3250
        %v3252 = vrot.slane %v3237, 7
        %v3253 = vsel %vm819, %v3249, %v3252
        %3260 = vst [vmem:[#allocation4] sm:$0xfe] %v3248
        %3261 = vst [vmem:[#allocation4 + $0x8] sm:$0xfe] %v3249
        %3262 = vst [vmem:[#allocation4 + $0x10] sm:$0xff] %v3251
        %3263 = vst [vmem:[#allocation4 + $0x18] sm:$0xff] %v3253
        %3264 = vst [vmem:[#allocation4 + $0x20] sm:$0x1] %v3250
        %3265 = vst [vmem:[#allocation4 + $0x28] sm:$0x1] %v3252
        %v3266 = vcombine.low %v3234, %v3235
        %v3268 = vunpack.c.l.s4 1966171168
        %v3269 = vunpack.c.0.s8 %v3268
        %v3270 = vlaneseq
        %v3271 = vshrl.u32 %v3270, 7
        %v3272 = vsub.s32 %v3269, %v3271
        %v3273 = vrot.slane %v3266, %v3272
        %v3274 = vcombine.high %v3273, %v3273
        %v3276 = vunpack.c.l.s4 1966171168
        %v3277 = vunpack.c.0.s8 %v3276
        %v3278 = vlaneseq
        %v3279 = vshrl.u32 %v3278, 7
        %v3280 = vsub.s32 %v3277, %v3279
        %v3281 = vrot.slane %v3274, %v3280
        %3283 = vst.msk [vmem:[#allocation4] ss:$8 sm:$0x3] %vm858, %v3281
        %3284 = vst.msk [vmem:[#allocation4] ss:$8 sm:$0x0] %vm858, %v3281
        %v3285 = vcombine.high %v3236, %v3237
        %v3287 = vunpack.c.l.s4 1966171168
        %v3288 = vunpack.c.0.s8 %v3287
        %v3289 = vlaneseq
        %v3290 = vshrl.u32 %v3289, 7
        %v3291 = vsub.s32 %v3288, %v3290
        %v3292 = vrot.slane %v3285, %v3291
        %v3294 = vunpack.c.l.s4 1966171168
        %v3295 = vunpack.c.0.s8 %v3294
        %v3296 = vlaneseq
        %v3297 = vshrl.u32 %v3296, 7
        %v3298 = vsub.s32 %v3295, %v3297
        %v3299 = vrot.slane %v3292, %v3298
        %v3300 = vcombine.high %v3299, %v3299
        %3302 = vst.msk [vmem:[%s878] ss:$8 sm:$0x3] %vm858, %v3300
        %3303 = vst.msk [vmem:[%s878] ss:$8 sm:$0x0] %vm858, %v3300
        %v3310 = vrot.slane %v3238, 7
        %v3311 = vrot.slane %v3239, 7
        %v3312 = vrot.slane %v3240, 7
        %v3313 = vsel %vm819, %v3310, %v3312
        %v3314 = vrot.slane %v3241, 7
        %v3315 = vsel %vm819, %v3311, %v3314
        %v3316 = vrot.slane %v3242, 7
        %v3317 = vsel %vm819, %v3312, %v3316
        %v3318 = vrot.slane %v3243, 7
        %v3319 = vsel %vm819, %v3314, %v3318
        %3326 = vst [vmem:[#allocation4 + $0x20] sm:$0xf8] %v3310
        %3327 = vst [vmem:[#allocation4 + $0x28] sm:$0xf8] %v3311
        %3328 = vst [vmem:[#allocation4 + $0x30] sm:$0xff] %v3313
        %3329 = vst [vmem:[#allocation4 + $0x38] sm:$0xff] %v3315
        %3330 = vst [vmem:[#allocation4 + $0x40] sm:$0x7] %v3317
        %3331 = vst [vmem:[#allocation4 + $0x48] sm:$0x7] %v3319
        %v3332 = vcombine.low %v3238, %v3239
        %v3334 = vunpack.c.l.s4 1966171168
        %v3335 = vunpack.c.0.s8 %v3334
        %v3336 = vlaneseq
        %v3337 = vshrl.u32 %v3336, 7
        %v3338 = vsub.s32 %v3335, %v3337
        %v3339 = vrot.slane %v3332, %v3338
        %v3340 = vcombine.high %v3339, %v3339
        %v3342 = vunpack.c.l.s4 1966171168
        %v3343 = vunpack.c.0.s8 %v3342
        %v3344 = vlaneseq
        %v3345 = vshrl.u32 %v3344, 7
        %v3346 = vsub.s32 %v3343, %v3345
        %v3347 = vrot.slane %v3340, %v3346
        %v3348 = vcombine.high %v3347, %v3347
        %3350 = vst.msk [vmem:[%s927] ss:$8 sm:$0x3] %vm858, %v3348
        %3351 = vst.msk [vmem:[%s927] ss:$8 sm:$0x0] %vm858, %v3348
        %v3352 = vcombine.low %v3242, %v3243
        %v3354 = vunpack.c.l.s4 1966171168
        %v3355 = vunpack.c.0.s8 %v3354
        %v3356 = vlaneseq
        %v3357 = vshrl.u32 %v3356, 7
        %v3358 = vsub.s32 %v3355, %v3357
        %v3359 = vrot.slane %v3352, %v3358
        %v3361 = vunpack.c.l.s4 1966171168
        %v3362 = vunpack.c.0.s8 %v3361
        %v3363 = vlaneseq
        %v3364 = vshrl.u32 %v3363, 7
        %v3365 = vsub.s32 %v3362, %v3364
        %v3366 = vrot.slane %v3359, %v3365
        %3368 = vst.msk [vmem:[%s947] ss:$8 sm:$0x3] %vm858, %v3366
        %3369 = vst.msk [vmem:[%s947] ss:$8 sm:$0x0] %vm858, %v3366
        %v3370 = vld [vmem:[#allocation4] sm:$0xff]
        %v3371 = vld [vmem:[#allocation4 + $0x8] sm:$0xff]
        %v3372 = vld [vmem:[#allocation4 + $0x10] sm:$0xff]
        %v3373 = vld [vmem:[#allocation4 + $0x18] sm:$0xff]
        %v3374 = vld [vmem:[#allocation4 + $0x20] sm:$0xff]
        %v3375 = vld [vmem:[#allocation4 + $0x28] sm:$0xff]
        %v3376 = vld [vmem:[#allocation4 + $0x30] sm:$0xff]
        %v3377 = vld [vmem:[#allocation4 + $0x38] sm:$0xff]
        %v3378 = vld [vmem:[#allocation4 + $0x40] sm:$0x3]
        %v3379 = vld [vmem:[#allocation4 + $0x48] sm:$0x3]
        %v3380 = vpack.c.bf16 %v3372, %v3370
        %v3381 = vpack.c.bf16 %v3373, %v3371
        %v3382 = vpack.c.bf16 %v3376, %v3374
        %v3383 = vpack.c.bf16 %v3377, %v3375
        %v3384 = vpack.c.bf16 %v3378, %v3378
        %v3385 = vpack.c.bf16 %v3379, %v3379
        %v3392 = vunpack.c.l.b16 %v3380
        %v3393 = vunpack.c.l.b16 %v3381
        %v3394 = vunpack.c.h.b16 %v3380
        %v3395 = vunpack.c.h.b16 %v3381
        %v3396 = vunpack.c.l.b16 %v3382
        %v3397 = vunpack.c.l.b16 %v3383
        %v3398 = vunpack.c.h.b16 %v3382
        %v3399 = vunpack.c.h.b16 %v3383
        %v3400 = vunpack.c.l.b16 %v3384
        %v3401 = vunpack.c.l.b16 %v3385
        %v3402 = vpack.c.b16 %v3393, %v3392
        %v3403 = vpack.c.b16 %v3395, %v3394
        %v3404 = vpack.c.b16 %v3397, %v3396
        %v3405 = vpack.c.b16 %v3399, %v3398
        %v3406 = vpack.c.b16 %v3401, %v3400
        %3412 = vst [vmem:[#allocation5] sm:$0xff] %v3402
        %3413 = vst [vmem:[#allocation5 + $0x18] sm:$0xff] %v3403
        %3414 = vst [vmem:[#allocation5 + $0x30] sm:$0xff] %v3404
        %3415 = vst [vmem:[#allocation5 + $0x48] sm:$0xff] %v3405
        %3416 = vst [vmem:[#allocation5 + $0x60] sm:$0x11] %v3406
        %v3417 = vld [vmem:[#allocation4] sm:$0xfe]
        %v3418 = vld [vmem:[#allocation4 + $0x8] sm:$0xfe]
        %v3419 = vld [vmem:[#allocation4 + $0x10] sm:$0xff]
        %v3420 = vld [vmem:[#allocation4 + $0x18] sm:$0xff]
        %v3421 = vld [vmem:[#allocation4 + $0x20] sm:$0xff]
        %v3422 = vld [vmem:[#allocation4 + $0x28] sm:$0xff]
        %v3423 = vld [vmem:[#allocation4 + $0x30] sm:$0xff]
        %v3424 = vld [vmem:[#allocation4 + $0x38] sm:$0xff]
        %v3425 = vld [vmem:[#allocation4 + $0x40] sm:$0x7]
        %v3426 = vld [vmem:[#allocation4 + $0x48] sm:$0x7]
        %v3427 = vpack.c.bf16 %v3419, %v3417
        %v3428 = vpack.c.bf16 %v3420, %v3418
        %v3429 = vpack.c.bf16 %v3423, %v3421
        %v3430 = vpack.c.bf16 %v3424, %v3422
        %v3431 = vpack.c.bf16 %v3425, %v3425
        %v3432 = vpack.c.bf16 %v3426, %v3426
        %v3439 = vunpack.c.l.b16 %v3427
        %v3440 = vunpack.c.l.b16 %v3428
        %v3441 = vunpack.c.h.b16 %v3427
        %v3442 = vunpack.c.h.b16 %v3428
        %v3443 = vunpack.c.l.b16 %v3429
        %v3444 = vunpack.c.l.b16 %v3430
        %v3445 = vunpack.c.h.b16 %v3429
        %v3446 = vunpack.c.h.b16 %v3430
        %v3447 = vunpack.c.l.b16 %v3431
        %v3448 = vunpack.c.l.b16 %v3432
        %v3449 = vpack.c.b16 %v3440, %v3439
        %v3450 = vpack.c.b16 %v3442, %v3441
        %v3451 = vpack.c.b16 %v3444, %v3443
        %v3452 = vpack.c.b16 %v3446, %v3445
        %v3453 = vpack.c.b16 %v3448, %v3447
        %v3455 = vshrl.u32 %v3449, 16
        %v3457 = vrot.slane %v3455, 4
        %v3458 = vshll.u32 %v3449, 16
        %v3460 = vrot.slane %v3458, 5
        %v3461 = vor.u32 %v3457, %v3460
        %v3462 = vrot.slane %v3461, 4
        %v3464 = vshll.u32 %v3450, 16
        %v3466 = vrot.slane %v3464, 5
        %v3467 = vsel %vm1036, %v3462, %v3466
        %v3468 = vshrl.u32 %v3450, 16
        %v3470 = vrot.slane %v3468, 4
        %v3471 = vor.u32 %v3470, %v3466
        %v3472 = vrot.slane %v3471, 4
        %v3474 = vshll.u32 %v3451, 16
        %v3476 = vrot.slane %v3474, 5
        %v3477 = vsel %vm1036, %v3472, %v3476
        %v3478 = vshrl.u32 %v3451, 16
        %v3480 = vrot.slane %v3478, 4
        %v3481 = vor.u32 %v3480, %v3476
        %v3482 = vrot.slane %v3481, 4
        %v3484 = vshll.u32 %v3452, 16
        %v3486 = vrot.slane %v3484, 5
        %v3487 = vsel %vm1036, %v3482, %v3486
        %v3488 = vshrl.u32 %v3452, 16
        %v3490 = vrot.slane %v3488, 4
        %v3491 = vor.u32 %v3490, %v3486
        %v3492 = vrot.slane %v3491, 4
        %v3494 = vshll.u32 %v3453, 16
        %v3496 = vrot.slane %v3494, 5
        %v3497 = vsel %vm1036, %v3492, %v3496
        %v3498 = vshrl.u32 %v3453, 16
        %v3500 = vrot.slane %v3498, 4
        %v3501 = vor.u32 %v3500, %v3496
        %v3502 = vrot.slane %v3501, 4
        %3508 = vst [vmem:[#allocation5 + $0x8] sm:$0xff] %v3467
        %3509 = vst [vmem:[#allocation5 + $0x20] sm:$0xff] %v3477
        %3510 = vst [vmem:[#allocation5 + $0x38] sm:$0xff] %v3487
        %3511 = vst [vmem:[#allocation5 + $0x50] sm:$0xff] %v3497
        %3512 = vst [vmem:[#allocation5 + $0x68] sm:$0x11] %v3502
        %v3513 = vld [vmem:[#allocation4] sm:$0xfc]
        %v3514 = vld [vmem:[#allocation4 + $0x8] sm:$0xfc]
        %v3515 = vld [vmem:[#allocation4 + $0x10] sm:$0xff]
        %v3516 = vld [vmem:[#allocation4 + $0x18] sm:$0xff]
        %v3517 = vld [vmem:[#allocation4 + $0x20] sm:$0xff]
        %v3518 = vld [vmem:[#allocation4 + $0x28] sm:$0xff]
        %v3519 = vld [vmem:[#allocation4 + $0x30] sm:$0xff]
        %v3520 = vld [vmem:[#allocation4 + $0x38] sm:$0xff]
        %v3521 = vld [vmem:[#allocation4 + $0x40] sm:$0xf]
        %v3522 = vld [vmem:[#allocation4 + $0x48] sm:$0xf]
        %v3523 = vpack.c.bf16 %v3515, %v3513
        %v3524 = vpack.c.bf16 %v3516, %v3514
        %v3525 = vpack.c.bf16 %v3519, %v3517
        %v3526 = vpack.c.bf16 %v3520, %v3518
        %v3527 = vpack.c.bf16 %v3521, %v3521
        %v3528 = vpack.c.bf16 %v3522, %v3522
        %v3535 = vunpack.c.l.b16 %v3523
        %v3536 = vunpack.c.l.b16 %v3524
        %v3537 = vunpack.c.h.b16 %v3523
        %v3538 = vunpack.c.h.b16 %v3524
        %v3539 = vunpack.c.l.b16 %v3525
        %v3540 = vunpack.c.l.b16 %v3526
        %v3541 = vunpack.c.h.b16 %v3525
        %v3542 = vunpack.c.h.b16 %v3526
        %v3543 = vunpack.c.l.b16 %v3527
        %v3544 = vunpack.c.l.b16 %v3528
        %v3545 = vpack.c.b16 %v3536, %v3535
        %v3546 = vpack.c.b16 %v3538, %v3537
        %v3547 = vpack.c.b16 %v3540, %v3539
        %v3548 = vpack.c.b16 %v3542, %v3541
        %v3549 = vpack.c.b16 %v3544, %v3543
        %v3550 = vrot.slane %v3545, 5
        %v3551 = vrot.slane %v3550, 4
        %v3552 = vrot.slane %v3546, 5
        %v3553 = vsel %vm1135, %v3551, %v3552
        %v3554 = vrot.slane %v3552, 4
        %v3555 = vrot.slane %v3547, 5
        %v3556 = vsel %vm1135, %v3554, %v3555
        %v3557 = vrot.slane %v3555, 4
        %v3558 = vrot.slane %v3548, 5
        %v3559 = vsel %vm1135, %v3557, %v3558
        %v3560 = vrot.slane %v3558, 4
        %v3561 = vrot.slane %v3549, 5
        %v3562 = vsel %vm1135, %v3560, %v3561
        %v3563 = vrot.slane %v3561, 4
        %3569 = vst [vmem:[#allocation5 + $0x10] sm:$0xff] %v3553
        %3570 = vst [vmem:[#allocation5 + $0x28] sm:$0xff] %v3556
        %3571 = vst [vmem:[#allocation5 + $0x40] sm:$0xff] %v3559
        %3572 = vst [vmem:[#allocation5 + $0x58] sm:$0xff] %v3562
        %3573 = vst [vmem:[#allocation5 + $0x70] sm:$0x11] %v3563
        %v3574 = vld [vmem:[#allocation5] sm:$0xff]
        %v3575 = vld [vmem:[#allocation5 + $0x8] sm:$0xff]
        %v3576 = vld [vmem:[#allocation5 + $0x10] sm:$0xff]
        %v3577 = vld [vmem:[#allocation5 + $0x18] sm:$0xff]
        %v3578 = vld [vmem:[#allocation5 + $0x20] sm:$0xff]
        %v3579 = vld [vmem:[#allocation5 + $0x28] sm:$0xff]
        %v3580 = vld [vmem:[#allocation5 + $0x30] sm:$0xff]
        %v3581 = vld [vmem:[#allocation5 + $0x38] sm:$0xff]
        %v3582 = vld [vmem:[#allocation5 + $0x40] sm:$0xff]
        %v3583 = vld [vmem:[#allocation5 + $0x48] sm:$0xff]
        %v3584 = vld [vmem:[#allocation5 + $0x50] sm:$0xff]
        %v3585 = vld [vmem:[#allocation5 + $0x58] sm:$0xff]
        %v3586 = vld [vmem:[#allocation5 + $0x60] sm:$0x11]
        %v3587 = vld [vmem:[#allocation5 + $0x68] sm:$0x11]
        %v3588 = vld [vmem:[#allocation5 + $0x70] sm:$0x11]
        %v3589 = vld [vmem:[#allocation13] sm:$0xff]
        %v3590 = vld [vmem:[#allocation13 + $0x8] sm:$0xff]
        %v3591 = vld [vmem:[#allocation13 + $0x10] sm:$0xff]
        %v3592 = vld [vmem:[#allocation13 + $0x18] sm:$0xff]
        %v3593 = vld [vmem:[#allocation13 + $0x20] sm:$0xff]
        %v3594 = vld [vmem:[#allocation13 + $0x28] sm:$0xff]
        %v3595 = vld [vmem:[#allocation13 + $0x30] sm:$0xff]
        %v3596 = vld [vmem:[#allocation13 + $0x38] sm:$0xff]
        %v3597 = vld [vmem:[#allocation13 + $0x40] sm:$0xff]
        %v3598 = vld [vmem:[#allocation13 + $0x48] sm:$0xff]
        %v3599 = vld [vmem:[#allocation13 + $0x50] sm:$0xff]
        %v3600 = vld [vmem:[#allocation13 + $0x58] sm:$0xff]
        %v3601 = vld [vmem:[#allocation13 + $0x60] sm:$0xff]
        %v3602 = vld [vmem:[#allocation13 + $0x68] sm:$0xff]
        %v3603 = vld [vmem:[#allocation13 + $0x70] sm:$0xff]
        %v3604 = vld [vmem:[#allocation13 + $0x78] sm:$0xff]
        %v3605 = vld [vmem:[#allocation13 + $0x80] sm:$0xff]
        %v3606 = vld [vmem:[#allocation13 + $0x88] sm:$0xff]
        %v3607 = vld [vmem:[#allocation13 + $0x90] sm:$0xff]
        %v3608 = vld [vmem:[#allocation13 + $0x98] sm:$0xff]
        %v3609 = vld [vmem:[#allocation13 + $0xa0] sm:$0xff]
        %v3610 = vld [vmem:[#allocation13 + $0xa8] sm:$0xff]
        %v3611 = vld [vmem:[#allocation13 + $0xb0] sm:$0xff]
        %v3612 = vld [vmem:[#allocation13 + $0xb8] sm:$0xff]
        %v3613 = vld [vmem:[#allocation13 + $0xc0] sm:$0xff]
        %v3614 = vld [vmem:[#allocation13 + $0xc8] sm:$0xff]
        %v3615 = vld [vmem:[#allocation13 + $0xd0] sm:$0xff]
        %v3616 = vld [vmem:[#allocation13 + $0xd8] sm:$0xff]
        %v3617 = vld [vmem:[#allocation13 + $0xe0] sm:$0xff]
        %v3618 = vld [vmem:[#allocation13 + $0xe8] sm:$0xff]
        %v3619 = vld [vmem:[#allocation13 + $0xf0] sm:$0xff]
        %v3620 = vld [vmem:[#allocation13 + $0xf8] sm:$0xff]
        %v3621 = vld [vmem:[#allocation13 + $0x100] sm:$0xff]
        %v3622 = vld [vmem:[#allocation13 + $0x108] sm:$0xff]
        %v3623 = vld [vmem:[#allocation13 + $0x110] sm:$0xff]
        %v3624 = vld [vmem:[#allocation13 + $0x118] sm:$0xff]
        %v3625 = vld [vmem:[#allocation13 + $0x120] sm:$0xff]
        %v3626 = vld [vmem:[#allocation13 + $0x128] sm:$0xff]
        %v3627 = vld [vmem:[#allocation13 + $0x130] sm:$0xff]
        %v3628 = vld [vmem:[#allocation13 + $0x138] sm:$0xff]
        %v3629 = vld [vmem:[#allocation13 + $0x140] sm:$0xff]
        %v3630 = vld [vmem:[#allocation13 + $0x148] sm:$0xff]
        %v3631 = vld [vmem:[#allocation13 + $0x150] sm:$0xff]
        %v3632 = vld [vmem:[#allocation13 + $0x158] sm:$0xff]
        %v3633 = vld [vmem:[#allocation13 + $0x160] sm:$0xff]
        %v3634 = vld [vmem:[#allocation13 + $0x168] sm:$0xff]
        %v3635 = vld [vmem:[#allocation13 + $0x170] sm:$0xff]
        %v3636 = vld [vmem:[#allocation13 + $0x178] sm:$0xff]
        %v3637 = vld [vmem:[#allocation13 + $0x180] sm:$0xff]
        %v3638 = vld [vmem:[#allocation13 + $0x188] sm:$0xff]
        %v3639 = vld [vmem:[#allocation13 + $0x190] sm:$0xff]
        %v3640 = vld [vmem:[#allocation13 + $0x198] sm:$0xff]
        %v3641 = vld [vmem:[#allocation13 + $0x1a0] sm:$0xff]
        %v3642 = vld [vmem:[#allocation13 + $0x1a8] sm:$0xff]
        %v3643 = vld [vmem:[#allocation13 + $0x1b0] sm:$0xff]
        %v3644 = vld [vmem:[#allocation13 + $0x1b8] sm:$0xff]
        %v3645 = vld [vmem:[#allocation13 + $0x1c0] sm:$0xff]
        %v3646 = vld [vmem:[#allocation13 + $0x1c8] sm:$0xff]
        %v3647 = vld [vmem:[#allocation13 + $0x1d0] sm:$0xff]
        %v3648 = vld [vmem:[#allocation13 + $0x1d8] sm:$0xff]
        %v3649 = vld [vmem:[#allocation13 + $0x1e0] sm:$0xff]
        %v3650 = vld [vmem:[#allocation13 + $0x1e8] sm:$0xff]
        %v3651 = vld [vmem:[#allocation13 + $0x1f0] sm:$0xff]
        %v3652 = vld [vmem:[#allocation13 + $0x1f8] sm:$0xff]
        %v3653 = vld [vmem:[#allocation13 + $0x200] sm:$0xff]
        %v3654 = vld [vmem:[#allocation13 + $0x208] sm:$0xff]
        %v3655 = vld [vmem:[#allocation13 + $0x210] sm:$0xff]
        %v3656 = vld [vmem:[#allocation13 + $0x218] sm:$0xff]
        %v3657 = vld [vmem:[#allocation13 + $0x220] sm:$0xff]
        %v3658 = vld [vmem:[#allocation13 + $0x228] sm:$0xff]
        %v3659 = vld [vmem:[#allocation13 + $0x230] sm:$0xff]
        %v3660 = vld [vmem:[#allocation13 + $0x238] sm:$0xff]
        %v3661 = vld [vmem:[#allocation13 + $0x240] sm:$0xff]
        %v3662 = vld [vmem:[#allocation13 + $0x248] sm:$0xff]
        %v3663 = vld [vmem:[#allocation13 + $0x250] sm:$0xff]
        %v3664 = vld [vmem:[#allocation13 + $0x258] sm:$0xff]
        %v3665 = vld [vmem:[#allocation13 + $0x260] sm:$0xff]
        %v3666 = vld [vmem:[#allocation13 + $0x268] sm:$0xff]
        %v3667 = vld [vmem:[#allocation13 + $0x270] sm:$0xff]
        %v3668 = vld [vmem:[#allocation13 + $0x278] sm:$0xff]
        %v3669 = vld [vmem:[#allocation13 + $0x280] sm:$0xff]
        %v3670 = vld [vmem:[#allocation13 + $0x288] sm:$0xff]
        %v3671 = vld [vmem:[#allocation13 + $0x290] sm:$0xff]
        %v3672 = vld [vmem:[#allocation13 + $0x298] sm:$0xff]
        %v3673 = vld [vmem:[#allocation13 + $0x2a0] sm:$0xff]
        %v3674 = vld [vmem:[#allocation13 + $0x2a8] sm:$0xff]
        %v3675 = vld [vmem:[#allocation13 + $0x2b0] sm:$0xff]
        %v3676 = vld [vmem:[#allocation13 + $0x2b8] sm:$0xff]
        %v3677 = vld [vmem:[#allocation13 + $0x2c0] sm:$0xff]
        %v3678 = vld [vmem:[#allocation13 + $0x2c8] sm:$0xff]
        %v3679 = vld [vmem:[#allocation13 + $0x2d0] sm:$0xff]
        %v3680 = vld [vmem:[#allocation13 + $0x2d8] sm:$0xff]
        %v3681 = vld [vmem:[#allocation13 + $0x2e0] sm:$0xff]
        %v3682 = vld [vmem:[#allocation13 + $0x2e8] sm:$0xff]
        %v3683 = vld [vmem:[#allocation13 + $0x2f0] sm:$0xff]
        %v3684 = vld [vmem:[#allocation13 + $0x2f8] sm:$0xff]
        %v3685 = vld [vmem:[%s8] sm:$0x3]
        %v3687 = vlaneseq
        %v3688 = vshrl.u32 %v3687, 7
        %v3689 = vsub.s32 0, %v3688
        %v3690 = vrot.slane %v3685, %v3689
        %v3691 = vlaneseq
        %v3692 = vshrl.u32 %v3691, 7
        %v3693 = vsub.s32 1, %v3692
        %v3694 = vrot.slane %v3685, %v3693
        %v3712 = vunpack.c.l.b16 %v3574
        %v3713 = vunpack.c.h.b16 %v3574
        %v3714 = vunpack.c.l.b16 %v3575
        %v3715 = vunpack.c.h.b16 %v3575
        %v3716 = vunpack.c.l.b16 %v3576
        %v3717 = vunpack.c.h.b16 %v3576
        %v3718 = vunpack.c.l.b16 %v3577
        %v3719 = vunpack.c.h.b16 %v3577
        %v3720 = vunpack.c.l.b16 %v3578
        %v3721 = vunpack.c.h.b16 %v3578
        %v3722 = vunpack.c.l.b16 %v3579
        %v3723 = vunpack.c.h.b16 %v3579
        %v3724 = vunpack.c.l.b16 %v3580
        %v3725 = vunpack.c.h.b16 %v3580
        %v3726 = vunpack.c.l.b16 %v3581
        %v3727 = vunpack.c.h.b16 %v3581
        %v3728 = vunpack.c.l.b16 %v3582
        %v3729 = vunpack.c.h.b16 %v3582
        %v3730 = vunpack.c.l.b16 %v3583
        %v3731 = vunpack.c.h.b16 %v3583
        %v3732 = vunpack.c.l.b16 %v3584
        %v3733 = vunpack.c.h.b16 %v3584
        %v3734 = vunpack.c.l.b16 %v3585
        %v3735 = vunpack.c.h.b16 %v3585
        %v3736 = vunpack.c.l.b16 %v3586
        %v3737 = vunpack.c.h.b16 %v3586
        %v3738 = vunpack.c.l.b16 %v3587
        %v3739 = vunpack.c.h.b16 %v3587
        %v3740 = vunpack.c.l.b16 %v3588
        %v3741 = vunpack.c.h.b16 %v3588
        %v3742 = vpack.c.b16 %v3718, %v3712
        %v3743 = vpack.c.b16 %v3719, %v3713
        %v3744 = vpack.c.b16 %v3720, %v3714
        %v3745 = vpack.c.b16 %v3721, %v3715
        %v3746 = vpack.c.b16 %v3722, %v3716
        %v3747 = vpack.c.b16 %v3723, %v3717
        %v3748 = vpack.c.b16 %v3730, %v3724
        %v3749 = vpack.c.b16 %v3731, %v3725
        %v3750 = vpack.c.b16 %v3732, %v3726
        %v3751 = vpack.c.b16 %v3733, %v3727
        %v3752 = vpack.c.b16 %v3734, %v3728
        %v3753 = vpack.c.b16 %v3735, %v3729
        %v3754 = vpack.c.b16 %v3736, %v3736
        %v3755 = vpack.c.b16 %v3737, %v3737
        %v3756 = vpack.c.b16 %v3738, %v3738
        %v3757 = vpack.c.b16 %v3739, %v3739
        %v3758 = vpack.c.b16 %v3740, %v3740
        %v3759 = vpack.c.b16 %v3741, %v3741
        %v3874 = vunpack.c.l.b16 %v3589
        %v3875 = vunpack.c.h.b16 %v3589
        %v3876 = vunpack.c.l.b16 %v3590
        %v3877 = vunpack.c.h.b16 %v3590
        %v3878 = vunpack.c.l.b16 %v3591
        %v3879 = vunpack.c.h.b16 %v3591
        %v3880 = vunpack.c.l.b16 %v3592
        %v3881 = vunpack.c.h.b16 %v3592
        %v3882 = vunpack.c.l.b16 %v3593
        %v3883 = vunpack.c.h.b16 %v3593
        %v3884 = vunpack.c.l.b16 %v3594
        %v3885 = vunpack.c.h.b16 %v3594
        %v3886 = vunpack.c.l.b16 %v3595
        %v3887 = vunpack.c.h.b16 %v3595
        %v3888 = vunpack.c.l.b16 %v3596
        %v3889 = vunpack.c.h.b16 %v3596
        %v3890 = vunpack.c.l.b16 %v3597
        %v3891 = vunpack.c.h.b16 %v3597
        %v3892 = vunpack.c.l.b16 %v3598
        %v3893 = vunpack.c.h.b16 %v3598
        %v3894 = vunpack.c.l.b16 %v3599
        %v3895 = vunpack.c.h.b16 %v3599
        %v3896 = vunpack.c.l.b16 %v3600
        %v3897 = vunpack.c.h.b16 %v3600
        %v3898 = vunpack.c.l.b16 %v3601
        %v3899 = vunpack.c.h.b16 %v3601
        %v3900 = vunpack.c.l.b16 %v3602
        %v3901 = vunpack.c.h.b16 %v3602
        %v3902 = vunpack.c.l.b16 %v3603
        %v3903 = vunpack.c.h.b16 %v3603
        %v3904 = vunpack.c.l.b16 %v3604
        %v3905 = vunpack.c.h.b16 %v3604
        %v3906 = vunpack.c.l.b16 %v3605
        %v3907 = vunpack.c.h.b16 %v3605
        %v3908 = vunpack.c.l.b16 %v3606
        %v3909 = vunpack.c.h.b16 %v3606
        %v3910 = vunpack.c.l.b16 %v3607
        %v3911 = vunpack.c.h.b16 %v3607
        %v3912 = vunpack.c.l.b16 %v3608
        %v3913 = vunpack.c.h.b16 %v3608
        %v3914 = vunpack.c.l.b16 %v3609
        %v3915 = vunpack.c.h.b16 %v3609
        %v3916 = vunpack.c.l.b16 %v3610
        %v3917 = vunpack.c.h.b16 %v3610
        %v3918 = vunpack.c.l.b16 %v3611
        %v3919 = vunpack.c.h.b16 %v3611
        %v3920 = vunpack.c.l.b16 %v3612
        %v3921 = vunpack.c.h.b16 %v3612
        %v3922 = vunpack.c.l.b16 %v3613
        %v3923 = vunpack.c.h.b16 %v3613
        %v3924 = vunpack.c.l.b16 %v3614
        %v3925 = vunpack.c.h.b16 %v3614
        %v3926 = vunpack.c.l.b16 %v3615
        %v3927 = vunpack.c.h.b16 %v3615
        %v3928 = vunpack.c.l.b16 %v3616
        %v3929 = vunpack.c.h.b16 %v3616
        %v3930 = vunpack.c.l.b16 %v3617
        %v3931 = vunpack.c.h.b16 %v3617
        %v3932 = vunpack.c.l.b16 %v3618
        %v3933 = vunpack.c.h.b16 %v3618
        %v3934 = vunpack.c.l.b16 %v3619
        %v3935 = vunpack.c.h.b16 %v3619
        %v3936 = vunpack.c.l.b16 %v3620
        %v3937 = vunpack.c.h.b16 %v3620
        %v3938 = vunpack.c.l.b16 %v3621
        %v3939 = vunpack.c.h.b16 %v3621
        %v3940 = vunpack.c.l.b16 %v3622
        %v3941 = vunpack.c.h.b16 %v3622
        %v3942 = vunpack.c.l.b16 %v3623
        %v3943 = vunpack.c.h.b16 %v3623
        %v3944 = vunpack.c.l.b16 %v3624
        %v3945 = vunpack.c.h.b16 %v3624
        %v3946 = vunpack.c.l.b16 %v3625
        %v3947 = vunpack.c.h.b16 %v3625
        %v3948 = vunpack.c.l.b16 %v3626
        %v3949 = vunpack.c.h.b16 %v3626
        %v3950 = vunpack.c.l.b16 %v3627
        %v3951 = vunpack.c.h.b16 %v3627
        %v3952 = vunpack.c.l.b16 %v3628
        %v3953 = vunpack.c.h.b16 %v3628
        %v3954 = vunpack.c.l.b16 %v3629
        %v3955 = vunpack.c.h.b16 %v3629
        %v3956 = vunpack.c.l.b16 %v3630
        %v3957 = vunpack.c.h.b16 %v3630
        %v3958 = vunpack.c.l.b16 %v3631
        %v3959 = vunpack.c.h.b16 %v3631
        %v3960 = vunpack.c.l.b16 %v3632
        %v3961 = vunpack.c.h.b16 %v3632
        %v3962 = vunpack.c.l.b16 %v3633
        %v3963 = vunpack.c.h.b16 %v3633
        %v3964 = vunpack.c.l.b16 %v3634
        %v3965 = vunpack.c.h.b16 %v3634
        %v3966 = vunpack.c.l.b16 %v3635
        %v3967 = vunpack.c.h.b16 %v3635
        %v3968 = vunpack.c.l.b16 %v3636
        %v3969 = vunpack.c.h.b16 %v3636
        %v3970 = vunpack.c.l.b16 %v3637
        %v3971 = vunpack.c.h.b16 %v3637
        %v3972 = vunpack.c.l.b16 %v3638
        %v3973 = vunpack.c.h.b16 %v3638
        %v3974 = vunpack.c.l.b16 %v3639
        %v3975 = vunpack.c.h.b16 %v3639
        %v3976 = vunpack.c.l.b16 %v3640
        %v3977 = vunpack.c.h.b16 %v3640
        %v3978 = vunpack.c.l.b16 %v3641
        %v3979 = vunpack.c.h.b16 %v3641
        %v3980 = vunpack.c.l.b16 %v3642
        %v3981 = vunpack.c.h.b16 %v3642
        %v3982 = vunpack.c.l.b16 %v3643
        %v3983 = vunpack.c.h.b16 %v3643
        %v3984 = vunpack.c.l.b16 %v3644
        %v3985 = vunpack.c.h.b16 %v3644
        %v3986 = vunpack.c.l.b16 %v3645
        %v3987 = vunpack.c.h.b16 %v3645
        %v3988 = vunpack.c.l.b16 %v3646
        %v3989 = vunpack.c.h.b16 %v3646
        %v3990 = vunpack.c.l.b16 %v3647
        %v3991 = vunpack.c.h.b16 %v3647
        %v3992 = vunpack.c.l.b16 %v3648
        %v3993 = vunpack.c.h.b16 %v3648
        %v3994 = vunpack.c.l.b16 %v3649
        %v3995 = vunpack.c.h.b16 %v3649
        %v3996 = vunpack.c.l.b16 %v3650
        %v3997 = vunpack.c.h.b16 %v3650
        %v3998 = vunpack.c.l.b16 %v3651
        %v3999 = vunpack.c.h.b16 %v3651
        %v4000 = vunpack.c.l.b16 %v3652
        %v4001 = vunpack.c.h.b16 %v3652
        %v4002 = vunpack.c.l.b16 %v3653
        %v4003 = vunpack.c.h.b16 %v3653
        %v4004 = vunpack.c.l.b16 %v3654
        %v4005 = vunpack.c.h.b16 %v3654
        %v4006 = vunpack.c.l.b16 %v3655
        %v4007 = vunpack.c.h.b16 %v3655
        %v4008 = vunpack.c.l.b16 %v3656
        %v4009 = vunpack.c.h.b16 %v3656
        %v4010 = vunpack.c.l.b16 %v3657
        %v4011 = vunpack.c.h.b16 %v3657
        %v4012 = vunpack.c.l.b16 %v3658
        %v4013 = vunpack.c.h.b16 %v3658
        %v4014 = vunpack.c.l.b16 %v3659
        %v4015 = vunpack.c.h.b16 %v3659
        %v4016 = vunpack.c.l.b16 %v3660
        %v4017 = vunpack.c.h.b16 %v3660
        %v4018 = vunpack.c.l.b16 %v3661
        %v4019 = vunpack.c.h.b16 %v3661
        %v4020 = vunpack.c.l.b16 %v3662
        %v4021 = vunpack.c.h.b16 %v3662
        %v4022 = vunpack.c.l.b16 %v3663
        %v4023 = vunpack.c.h.b16 %v3663
        %v4024 = vunpack.c.l.b16 %v3664
        %v4025 = vunpack.c.h.b16 %v3664
        %v4026 = vunpack.c.l.b16 %v3665
        %v4027 = vunpack.c.h.b16 %v3665
        %v4028 = vunpack.c.l.b16 %v3666
        %v4029 = vunpack.c.h.b16 %v3666
        %v4030 = vunpack.c.l.b16 %v3667
        %v4031 = vunpack.c.h.b16 %v3667
        %v4032 = vunpack.c.l.b16 %v3668
        %v4033 = vunpack.c.h.b16 %v3668
        %v4034 = vunpack.c.l.b16 %v3669
        %v4035 = vunpack.c.h.b16 %v3669
        %v4036 = vunpack.c.l.b16 %v3670
        %v4037 = vunpack.c.h.b16 %v3670
        %v4038 = vunpack.c.l.b16 %v3671
        %v4039 = vunpack.c.h.b16 %v3671
        %v4040 = vunpack.c.l.b16 %v3672
        %v4041 = vunpack.c.h.b16 %v3672
        %v4042 = vunpack.c.l.b16 %v3673
        %v4043 = vunpack.c.h.b16 %v3673
        %v4044 = vunpack.c.l.b16 %v3674
        %v4045 = vunpack.c.h.b16 %v3674
        %v4046 = vunpack.c.l.b16 %v3675
        %v4047 = vunpack.c.h.b16 %v3675
        %v4048 = vunpack.c.l.b16 %v3676
        %v4049 = vunpack.c.h.b16 %v3676
        %v4050 = vunpack.c.l.b16 %v3677
        %v4051 = vunpack.c.h.b16 %v3677
        %v4052 = vunpack.c.l.b16 %v3678
        %v4053 = vunpack.c.h.b16 %v3678
        %v4054 = vunpack.c.l.b16 %v3679
        %v4055 = vunpack.c.h.b16 %v3679
        %v4056 = vunpack.c.l.b16 %v3680
        %v4057 = vunpack.c.h.b16 %v3680
        %v4058 = vunpack.c.l.b16 %v3681
        %v4059 = vunpack.c.h.b16 %v3681
        %v4060 = vunpack.c.l.b16 %v3682
        %v4061 = vunpack.c.h.b16 %v3682
        %v4062 = vunpack.c.l.b16 %v3683
        %v4063 = vunpack.c.h.b16 %v3683
        %v4064 = vunpack.c.l.b16 %v3684
        %v4065 = vunpack.c.h.b16 %v3684
        %v4066 = vpack.c.b16 %v3876, %v3874
        %v4067 = vpack.c.b16 %v3877, %v3875
        %v4068 = vpack.c.b16 %v3880, %v3878
        %v4069 = vpack.c.b16 %v3881, %v3879
        %v4070 = vpack.c.b16 %v3884, %v3882
        %v4071 = vpack.c.b16 %v3885, %v3883
        %v4072 = vpack.c.b16 %v3888, %v3886
        %v4073 = vpack.c.b16 %v3889, %v3887
        %v4074 = vpack.c.b16 %v3892, %v3890
        %v4075 = vpack.c.b16 %v3893, %v3891
        %v4076 = vpack.c.b16 %v3896, %v3894
        %v4077 = vpack.c.b16 %v3897, %v3895
        %v4078 = vpack.c.b16 %v3900, %v3898
        %v4079 = vpack.c.b16 %v3901, %v3899
        %v4080 = vpack.c.b16 %v3904, %v3902
        %v4081 = vpack.c.b16 %v3905, %v3903
        %v4082 = vpack.c.b16 %v3908, %v3906
        %v4083 = vpack.c.b16 %v3909, %v3907
        %v4084 = vpack.c.b16 %v3912, %v3910
        %v4085 = vpack.c.b16 %v3913, %v3911
        %v4086 = vpack.c.b16 %v3916, %v3914
        %v4087 = vpack.c.b16 %v3917, %v3915
        %v4088 = vpack.c.b16 %v3920, %v3918
        %v4089 = vpack.c.b16 %v3921, %v3919
        %v4090 = vpack.c.b16 %v3924, %v3922
        %v4091 = vpack.c.b16 %v3925, %v3923
        %v4092 = vpack.c.b16 %v3928, %v3926
        %v4093 = vpack.c.b16 %v3929, %v3927
        %v4094 = vpack.c.b16 %v3932, %v3930
        %v4095 = vpack.c.b16 %v3933, %v3931
        %v4096 = vpack.c.b16 %v3936, %v3934
        %v4097 = vpack.c.b16 %v3937, %v3935
        %v4098 = vpack.c.b16 %v3940, %v3938
        %v4099 = vpack.c.b16 %v3941, %v3939
        %v4100 = vpack.c.b16 %v3944, %v3942
        %v4101 = vpack.c.b16 %v3945, %v3943
        %v4102 = vpack.c.b16 %v3948, %v3946
        %v4103 = vpack.c.b16 %v3949, %v3947
        %v4104 = vpack.c.b16 %v3952, %v3950
        %v4105 = vpack.c.b16 %v3953, %v3951
        %v4106 = vpack.c.b16 %v3956, %v3954
        %v4107 = vpack.c.b16 %v3957, %v3955
        %v4108 = vpack.c.b16 %v3960, %v3958
        %v4109 = vpack.c.b16 %v3961, %v3959
        %v4110 = vpack.c.b16 %v3964, %v3962
        %v4111 = vpack.c.b16 %v3965, %v3963
        %v4112 = vpack.c.b16 %v3968, %v3966
        %v4113 = vpack.c.b16 %v3969, %v3967
        %v4114 = vpack.c.b16 %v3972, %v3970
        %v4115 = vpack.c.b16 %v3973, %v3971
        %v4116 = vpack.c.b16 %v3976, %v3974
        %v4117 = vpack.c.b16 %v3977, %v3975
        %v4118 = vpack.c.b16 %v3980, %v3978
        %v4119 = vpack.c.b16 %v3981, %v3979
        %v4120 = vpack.c.b16 %v3984, %v3982
        %v4121 = vpack.c.b16 %v3985, %v3983
        %v4122 = vpack.c.b16 %v3988, %v3986
        %v4123 = vpack.c.b16 %v3989, %v3987
        %v4124 = vpack.c.b16 %v3992, %v3990
        %v4125 = vpack.c.b16 %v3993, %v3991
        %v4126 = vpack.c.b16 %v3996, %v3994
        %v4127 = vpack.c.b16 %v3997, %v3995
        %v4128 = vpack.c.b16 %v4000, %v3998
        %v4129 = vpack.c.b16 %v4001, %v3999
        %v4130 = vpack.c.b16 %v4004, %v4002
        %v4131 = vpack.c.b16 %v4005, %v4003
        %v4132 = vpack.c.b16 %v4008, %v4006
        %v4133 = vpack.c.b16 %v4009, %v4007
        %v4134 = vpack.c.b16 %v4012, %v4010
        %v4135 = vpack.c.b16 %v4013, %v4011
        %v4136 = vpack.c.b16 %v4016, %v4014
        %v4137 = vpack.c.b16 %v4017, %v4015
        %v4138 = vpack.c.b16 %v4020, %v4018
        %v4139 = vpack.c.b16 %v4021, %v4019
        %v4140 = vpack.c.b16 %v4024, %v4022
        %v4141 = vpack.c.b16 %v4025, %v4023
        %v4142 = vpack.c.b16 %v4028, %v4026
        %v4143 = vpack.c.b16 %v4029, %v4027
        %v4144 = vpack.c.b16 %v4032, %v4030
        %v4145 = vpack.c.b16 %v4033, %v4031
        %v4146 = vpack.c.b16 %v4036, %v4034
        %v4147 = vpack.c.b16 %v4037, %v4035
        %v4148 = vpack.c.b16 %v4040, %v4038
        %v4149 = vpack.c.b16 %v4041, %v4039
        %v4150 = vpack.c.b16 %v4044, %v4042
        %v4151 = vpack.c.b16 %v4045, %v4043
        %v4152 = vpack.c.b16 %v4048, %v4046
        %v4153 = vpack.c.b16 %v4049, %v4047
        %v4154 = vpack.c.b16 %v4052, %v4050
        %v4155 = vpack.c.b16 %v4053, %v4051
        %v4156 = vpack.c.b16 %v4056, %v4054
        %v4157 = vpack.c.b16 %v4057, %v4055
        %v4158 = vpack.c.b16 %v4060, %v4058
        %v4159 = vpack.c.b16 %v4061, %v4059
        %v4160 = vpack.c.b16 %v4064, %v4062
        %v4161 = vpack.c.b16 %v4065, %v4063
        %4258 = vmatprep.subr.bf16.mxu0 %v4067
        %4259 = vmatpush1.bf16.msra.mxu0 %v4066
        %4260 = vmatprep.subr.bf16.mxu0 %v4069
        %4261 = vmatpush1.bf16.msra.mxu0 %v4068
        %4262 = vmatprep.subr.bf16.mxu0 %v4071
        %4263 = vmatpush1.bf16.msra.mxu0 %v4070
        %4264 = vmatprep.subr.bf16.mxu0 %v4073
        %4265 = vmatpush1.bf16.msra.mxu0 %v4072
        %4266 = vmatprep.subr.bf16.mxu0 %v4075
        %4267 = vmatpush1.bf16.msra.mxu0 %v4074
        %4268 = vmatprep.subr.bf16.mxu0 %v4077
        %4269 = vmatpush1.bf16.msra.mxu0 %v4076
        %4270 = vmatprep.subr.bf16.mxu0 %v4079
        %4271 = vmatpush1.bf16.msra.mxu0 %v4078
        %4272 = vmatprep.subr.bf16.mxu0 %v4081
        %4273 = vmatpush1.bf16.msra.mxu0 %v4080
        %4274 = vmatprep.subr.bf16.mxu0 %v4083
        %4275 = vmatpush1.bf16.msra.mxu0 %v4082
        %4276 = vmatprep.subr.bf16.mxu0 %v4085
        %4277 = vmatpush1.bf16.msra.mxu0 %v4084
        %4278 = vmatprep.subr.bf16.mxu0 %v4087
        %4279 = vmatpush1.bf16.msra.mxu0 %v4086
        %4280 = vmatprep.subr.bf16.mxu0 %v4089
        %4281 = vmatpush1.bf16.msra.mxu0 %v4088
        %4282 = vmatprep.subr.bf16.mxu0 %v4091
        %4283 = vmatpush1.bf16.msra.mxu0 %v4090
        %4284 = vmatprep.subr.bf16.mxu0 %v4093
        %4285 = vmatpush1.bf16.msra.mxu0 %v4092
        %4286 = vmatprep.subr.bf16.mxu0 %v4095
        %4287 = vmatpush1.bf16.msra.mxu0 %v4094
        %4288 = vmatprep.subr.bf16.mxu0 %v4097
        %4289 = vmatpush1.bf16.msra.mxu0 %v4096
        %4290 = vmatprep.mubr.bf16.mxu0 %v3743
        %4291 = vmatmul.mubr.bf16.gmra.mrb[0].mxu0 %v3742
        %v4292 = vpop.f32.mrb[0].mxu0
        %v4293 = vadd.f32 %v3690, %v4292
        %v4294 = vpop.f32.mrb[0].mxu0
        %v4295 = vadd.f32 %v3694, %v4294
        %v4296 = vpop.f32.mrb[0].mxu0
        %v4297 = vadd.f32 %v3690, %v4296
        %v4298 = vpop.f32.mrb[0].mxu0
        %v4299 = vadd.f32 %v3694, %v4298
        %4300 = vmatprep.mubr.bf16.mxu0 %v3749
        %4301 = vmatmul.mubr.bf16.gmra.mrb[0].mxu0 %v3748
        %v4302 = vpop.f32.mrb[0].mxu0
        %v4303 = vadd.f32 %v3690, %v4302
        %v4304 = vpop.f32.mrb[0].mxu0
        %v4305 = vadd.f32 %v3694, %v4304
        %v4306 = vpop.f32.mrb[0].mxu0
        %v4307 = vadd.f32 %v3690, %v4306
        %v4308 = vpop.f32.mrb[0].mxu0
        %v4309 = vadd.f32 %v3694, %v4308
        %4310 = vmatprep.mubr.bf16.mxu0 %v3755
        %4311 = vmatmul.mubr.bf16.gmra.mrb[0].mxu0 %v3754
        %v4312 = vpop.f32.mrb[0].mxu0
        %v4313 = vadd.f32 %v3690, %v4312
        %v4314 = vpop.f32.mrb[0].mxu0
        %v4315 = vadd.f32 %v3694, %v4314
        %v4316 = vpop.f32.mrb[0].mxu0
        %v4317 = vpop.f32.mrb[0].mxu0
        %4318 = vdwg.mxu0
        %4319 = vmatprep.subr.bf16.mxu0 %v4099
        %4320 = vmatpush1.bf16.msra.mxu0 %v4098
        %4321 = vmatprep.subr.bf16.mxu0 %v4101
        %4322 = vmatpush1.bf16.msra.mxu0 %v4100
        %4323 = vmatprep.subr.bf16.mxu0 %v4103
        %4324 = vmatpush1.bf16.msra.mxu0 %v4102
        %4325 = vmatprep.subr.bf16.mxu0 %v4105
        %4326 = vmatpush1.bf16.msra.mxu0 %v4104
        %4327 = vmatprep.subr.bf16.mxu0 %v4107
        %4328 = vmatpush1.bf16.msra.mxu0 %v4106
        %4329 = vmatprep.subr.bf16.mxu0 %v4109
        %4330 = vmatpush1.bf16.msra.mxu0 %v4108
        %4331 = vmatprep.subr.bf16.mxu0 %v4111
        %4332 = vmatpush1.bf16.msra.mxu0 %v4110
        %4333 = vmatprep.subr.bf16.mxu0 %v4113
        %4334 = vmatpush1.bf16.msra.mxu0 %v4112
        %4335 = vmatprep.subr.bf16.mxu0 %v4115
        %4336 = vmatpush1.bf16.msra.mxu0 %v4114
        %4337 = vmatprep.subr.bf16.mxu0 %v4117
        %4338 = vmatpush1.bf16.msra.mxu0 %v4116
        %4339 = vmatprep.subr.bf16.mxu0 %v4119
        %4340 = vmatpush1.bf16.msra.mxu0 %v4118
        %4341 = vmatprep.subr.bf16.mxu0 %v4121
        %4342 = vmatpush1.bf16.msra.mxu0 %v4120
        %4343 = vmatprep.subr.bf16.mxu0 %v4123
        %4344 = vmatpush1.bf16.msra.mxu0 %v4122
        %4345 = vmatprep.subr.bf16.mxu0 %v4125
        %4346 = vmatpush1.bf16.msra.mxu0 %v4124
        %4347 = vmatprep.subr.bf16.mxu0 %v4127
        %4348 = vmatpush1.bf16.msra.mxu0 %v4126
        %4349 = vmatprep.subr.bf16.mxu0 %v4129
        %4350 = vmatpush1.bf16.msra.mxu0 %v4128
        %4351 = vmatprep.mubr.bf16.mxu0 %v3745
        %4352 = vmatmul.mubr.bf16.gmra.mrb[0].mxu0 %v3744
        %v4353 = vpop.f32.mrb[0].mxu0
        %v4354 = vadd.f32 %v4293, %v4353
        %v4355 = vpop.f32.mrb[0].mxu0
        %v4356 = vadd.f32 %v4295, %v4355
        %v4357 = vpop.f32.mrb[0].mxu0
        %v4358 = vadd.f32 %v4297, %v4357
        %v4359 = vpop.f32.mrb[0].mxu0
        %v4360 = vadd.f32 %v4299, %v4359
        %4361 = vmatprep.mubr.bf16.mxu0 %v3751
        %4362 = vmatmul.mubr.bf16.gmra.mrb[0].mxu0 %v3750
        %v4363 = vpop.f32.mrb[0].mxu0
        %v4364 = vadd.f32 %v4303, %v4363
        %v4365 = vpop.f32.mrb[0].mxu0
        %v4366 = vadd.f32 %v4305, %v4365
        %v4367 = vpop.f32.mrb[0].mxu0
        %v4368 = vadd.f32 %v4307, %v4367
        %v4369 = vpop.f32.mrb[0].mxu0
        %v4370 = vadd.f32 %v4309, %v4369
        %4371 = vmatprep.mubr.bf16.mxu0 %v3757
        %4372 = vmatmul.mubr.bf16.gmra.mrb[0].mxu0 %v3756
        %v4373 = vpop.f32.mrb[0].mxu0
        %v4374 = vadd.f32 %v4313, %v4373
        %v4375 = vpop.f32.mrb[0].mxu0
        %v4376 = vadd.f32 %v4315, %v4375
        %v4377 = vpop.f32.mrb[0].mxu0
        %v4378 = vpop.f32.mrb[0].mxu0
        %4379 = vdwg.mxu0
        %4380 = vmatprep.subr.bf16.mxu0 %v4131
        %4381 = vmatpush1.bf16.msra.mxu0 %v4130
        %4382 = vmatprep.subr.bf16.mxu0 %v4133
        %4383 = vmatpush1.bf16.msra.mxu0 %v4132
        %4384 = vmatprep.subr.bf16.mxu0 %v4135
        %4385 = vmatpush1.bf16.msra.mxu0 %v4134
        %4386 = vmatprep.subr.bf16.mxu0 %v4137
        %4387 = vmatpush1.bf16.msra.mxu0 %v4136
        %4388 = vmatprep.subr.bf16.mxu0 %v4139
        %4389 = vmatpush1.bf16.msra.mxu0 %v4138
        %4390 = vmatprep.subr.bf16.mxu0 %v4141
        %4391 = vmatpush1.bf16.msra.mxu0 %v4140
        %4392 = vmatprep.subr.bf16.mxu0 %v4143
        %4393 = vmatpush1.bf16.msra.mxu0 %v4142
        %4394 = vmatprep.subr.bf16.mxu0 %v4145
        %4395 = vmatpush1.bf16.msra.mxu0 %v4144
        %4396 = vmatprep.subr.bf16.mxu0 %v4147
        %4397 = vmatpush1.bf16.msra.mxu0 %v4146
        %4398 = vmatprep.subr.bf16.mxu0 %v4149
        %4399 = vmatpush1.bf16.msra.mxu0 %v4148
        %4400 = vmatprep.subr.bf16.mxu0 %v4151
        %4401 = vmatpush1.bf16.msra.mxu0 %v4150
        %4402 = vmatprep.subr.bf16.mxu0 %v4153
        %4403 = vmatpush1.bf16.msra.mxu0 %v4152
        %4404 = vmatprep.subr.bf16.mxu0 %v4155
        %4405 = vmatpush1.bf16.msra.mxu0 %v4154
        %4406 = vmatprep.subr.bf16.mxu0 %v4157
        %4407 = vmatpush1.bf16.msra.mxu0 %v4156
        %4408 = vmatprep.subr.bf16.mxu0 %v4159
        %4409 = vmatpush1.bf16.msra.mxu0 %v4158
        %4410 = vmatprep.subr.bf16.mxu0 %v4161
        %4411 = vmatpush1.bf16.msra.mxu0 %v4160
        %4412 = vmatprep.mubr.bf16.mxu0 %v3747
        %4413 = vmatmul.mubr.bf16.gmra.mrb[0].mxu0 %v3746
        %v4414 = vpop.f32.mrb[0].mxu0
        %v4415 = vadd.f32 %v4354, %v4414
        %v4416 = vpop.f32.mrb[0].mxu0
        %v4417 = vadd.f32 %v4356, %v4416
        %v4418 = vpop.f32.mrb[0].mxu0
        %v4419 = vadd.f32 %v4358, %v4418
        %v4420 = vpop.f32.mrb[0].mxu0
        %v4421 = vadd.f32 %v4360, %v4420
        %4422 = vmatprep.mubr.bf16.mxu0 %v3753
        %4423 = vmatmul.mubr.bf16.gmra.mrb[0].mxu0 %v3752
        %v4424 = vpop.f32.mrb[0].mxu0
        %v4425 = vadd.f32 %v4364, %v4424
        %v4426 = vpop.f32.mrb[0].mxu0
        %v4427 = vadd.f32 %v4366, %v4426
        %v4428 = vpop.f32.mrb[0].mxu0
        %v4429 = vadd.f32 %v4368, %v4428
        %v4430 = vpop.f32.mrb[0].mxu0
        %v4431 = vadd.f32 %v4370, %v4430
        %4432 = vmatprep.mubr.bf16.mxu0 %v3759
        %4433 = vmatmul.mubr.bf16.gmra.mrb[0].mxu0 %v3758
        %v4434 = vpop.f32.mrb[0].mxu0
        %v4435 = vadd.f32 %v4374, %v4434
        %v4436 = vpop.f32.mrb[0].mxu0
        %v4437 = vadd.f32 %v4376, %v4436
        %v4438 = vpop.f32.mrb[0].mxu0
        %v4439 = vpop.f32.mrb[0].mxu0
        %4440 = vdwg.mxu0
        %v4441 = vmax.f32 %v4415, 0.0
        %v4442 = vmax.f32 %v4417, 0.0
        %v4443 = vmax.f32 %v4419, 0.0
        %v4444 = vmax.f32 %v4421, 0.0
        %v4445 = vmax.f32 %v4425, 0.0
        %v4446 = vmax.f32 %v4427, 0.0
        %v4447 = vmax.f32 %v4429, 0.0
        %v4448 = vmax.f32 %v4431, 0.0
        %v4449 = vmax.f32 %v4435, 0.0
        %v4450 = vmax.f32 %v4437, 0.0
        %4451 = vst [vmem:[%s414] sm:$0xff] %v4441
        %4452 = vst [vmem:[%s414 + $0x8] sm:$0xff] %v4442
        %4453 = vst [vmem:[%s414 + $0x10] sm:$0xff] %v4443
        %4454 = vst [vmem:[%s414 + $0x18] sm:$0xff] %v4444
        %vm4461 = vcmask 1045504
        %v4462 = vrot.slane %v4445, 2
        %v4463 = vrot.slane %v4447, 2
        %v4464 = vsel %vm4461, %v4462, %v4463
        %v4465 = vrot.slane %v4446, 2
        %v4466 = vrot.slane %v4448, 2
        %v4467 = vsel %vm4461, %v4465, %v4466
        %v4468 = vrot.slane %v4449, 2
        %v4469 = vsel %vm4461, %v4463, %v4468
        %v4470 = vrot.slane %v4450, 2
        %v4471 = vsel %vm4461, %v4466, %v4470
        %s4476 = scalar_lea.vmem %s414, 32
        %4477 = vst [vmem:[%s4476] sm:$0xff] %v4464
        %4478 = vst [vmem:[%s4476 + $0x8] sm:$0xff] %v4467
        %4479 = vst [vmem:[%s4476 + $0x10] sm:$0xff] %v4469
        %4480 = vst [vmem:[%s4476 + $0x18] sm:$0xff] %v4471
        %s4481 = smul.u32 2, %s25
        %p4482 = scmp.lt.s32.totalorder %s4481, 3
        %s4483 = scalar_select %p4482, %s4481, 3
        %s4484 = smul.addr %s4483, 4
        %s4485 = smul.addr %s4484, 8
        %s4486 = scalar_lea.vmem %s9, %s4485
        // Predicated region
        $region77: #{features4layer_forward.1} parent=55 // pred_check
          %p4487 = pneg %p237
        $region78: #{features4layer_forward.1} parent=55 // pred_check_branch
          %4489 = sbr.rel (%p4487) target = $region80
        $region79: #{features4layer_forward.1} parent=55 // pred_region
          %s4490 = smul.u32 2, %s25
        $region80: #{features4layer_forward.1} parent=55 // pred_fallthru
          _
      $region56: #{features4layer_forward.1} parent=5 // pred_fallthru
        _
      %p4491 = scmp.le.s32.totalorder 2, %s20
      // Predicated region
      $region81: #{features4layer_forward.1} parent=5 // pred_check
        %p4492 = pneg %p4491
      $region82: #{features4layer_forward.1} parent=5 // pred_check_branch
        %4494 = sbr.rel (%p4492) target = $region84
      $region83: #{features4layer_forward.1} parent=5 // pred_region
        %s4495 = ssub.s32 %s20, 2
        // Predicated region
        $region85: #{features4layer_forward.1} parent=83 // pred_check
          %p4496 = pneg %p243
        $region86: #{features4layer_forward.1} parent=83 // pred_check_branch
          %4498 = sbr.rel (%p4496) target = $region88
        $region87: #{features4layer_forward.1} parent=83 // pred_region
          %s4499 = smul.u32 2, %s26
          %p4500 = scmp.lt.s32.totalorder %s4499, 3
          %s4501 = scalar_select %p4500, %s4499, 3
          %s4502 = smul.addr %s4501, 4
          %s4503 = smul.addr %s4502, 8
          %s4504 = scalar_lea.vmem %s9, %s4503
        $region88: #{features4layer_forward.1} parent=83 // pred_fallthru
          _
      $region84: #{features4layer_forward.1} parent=5 // pred_fallthru
        _
    $region6: #{features4layer_forward.1} parent=1 // loop_footer
      %s24 = sadd.s32 1, %s20
    $region7: #{features4layer_forward.1} parent=1 // loop_footer_branch
      %19 = sbr.rel target = $region3
    $region8: #{features4layer_forward.1} parent=1 // loop_exit
      _
    %4505 = vsyncpa [#allocation7], 1
    %s4506 = scalar_lea.sflag [#allocation7], 1
    %4507 = vsyncpa %s4506, 1
    %4508 = vsyncpa [#allocation9], 1
    %4509 = vsyncpa [#allocation12], 1

</llo_original>
